<compile_context>
chip_gen: v5e
topology: v5e:2x2
jax: 0.10.0
libtpu: 0.0.40
codegen_flags: <defaults>
</compile_context>

<pallas_src>
import functools

import jax
import jax.numpy as jnp
from jax.experimental import pallas as pl
from jax.experimental.pallas import tpu as pltpu

BN_EPS = 1e-5


# ----------------------------------------------------------------------------
# Fused Inception block kernel (one image per grid step)
# ----------------------------------------------------------------------------
def _inception_kernel(x_ref, w1_ref, b1_ref,
                      w21_ref, b21_ref,
                      w31_ref, b31_ref,
                      w32_ref, b32_ref,
                      w4_ref, b4_ref,
                      out_ref,
                      mp_pad, p2_pad, p3a_pad, p3b_pad,
                      *, c0, c1, c3):
    _, H, W, cin = x_ref.shape
    M = H * W

    x = x_ref[0]                       # (H, W, Cin)
    x2d = x.reshape(M, cin)            # collapse leading dims (minor dim intact)

    # ---- fused 1x1 ConvBn+ReLU for [b1_0 | b2_0 | b3_0] (BN scale folded in w)
    y1 = jnp.dot(x2d, w1_ref[...], preferred_element_type=jnp.float32)
    y1 = jnp.maximum(y1 + b1_ref[...], 0.0)          # (M, c0+c1+c3)
    y_b1 = y1[:, :c0]                                 # (M, c0)
    t_b2 = y1[:, c0:c0 + c1]                          # (M, c1)
    t_b3 = y1[:, c0 + c1:c0 + c1 + c3]                # (M, c3)

    # ---- 3x3 ConvBn+ReLU (stride 1, pad 1) as 9 shifted-slice matmuls over a
    #      zero-padded VMEM scratch; weight rows ordered (dy, dx, cin).
    def conv3x3(t2d, pad_ref, w_ref, b_ref):
        ci = pad_ref.shape[-1]
        co = w_ref.shape[-1]
        pad_ref[...] = jnp.zeros(pad_ref.shape, pad_ref.dtype)
        pad_ref[1:H + 1, 1:W + 1, :] = t2d.reshape(H, W, ci)
        acc = jnp.zeros((M, co), jnp.float32)
        for dy in range(3):
            for dx in range(3):
                tap = dy * 3 + dx
                xs = pad_ref[dy:dy + H, dx:dx + W, :].reshape(M, ci)
                acc = acc + jnp.dot(xs, w_ref[tap * ci:(tap + 1) * ci, :],
                                    preferred_element_type=jnp.float32)
        return jnp.maximum(acc + b_ref[...], 0.0)

    y_b2 = conv3x3(t_b2, p2_pad, w21_ref, b21_ref)     # (M, c2)
    t3 = conv3x3(t_b3, p3a_pad, w31_ref, b31_ref)      # (M, c4)
    y_b3 = conv3x3(t3, p3b_pad, w32_ref, b32_ref)      # (M, c4)

    # ---- b4: MaxPool2d(3,1,1) with in-kernel -inf border, then 1x1 ConvBn+ReLU
    mp_pad[...] = jnp.full(mp_pad.shape, -jnp.inf, mp_pad.dtype)
    mp_pad[1:H + 1, 1:W + 1, :] = x
    pooled = x                                        # center tap (dy=dx=1)
    for dy in range(3):
        for dx in range(3):
            if dy == 1 and dx == 1:
                continue
            pooled = jnp.maximum(pooled, mp_pad[dy:dy + H, dx:dx + W, :])
    y_b4 = jnp.dot(pooled.reshape(M, cin), w4_ref[...],
                   preferred_element_type=jnp.float32)
    y_b4 = jnp.maximum(y_b4 + b4_ref[...], 0.0)        # (M, c5)

    # ---- write branch outputs into channel-offset slices of the single output
    c2 = y_b2.shape[-1]
    c4 = y_b3.shape[-1]
    c5 = y_b4.shape[-1]
    out_ref[0, :, 0:c0] = y_b1
    out_ref[0, :, c0:c0 + c2] = y_b2
    out_ref[0, :, c0 + c2:c0 + c2 + c4] = y_b3
    out_ref[0, :, c0 + c2 + c4:c0 + c2 + c4 + c5] = y_b4


# ----------------------------------------------------------------------------
# BN folding / weight packing (trace time, XLA)
# ----------------------------------------------------------------------------
def _fold_bn(p):
    scale = p["gamma"] * jax.lax.rsqrt(p["var"] + BN_EPS)
    bias = (p["b"] - p["mean"]) * scale + p["beta"]
    return scale, bias


def _w1x1(p, scale):
    cout, cin = p["w"].shape[0], p["w"].shape[1]
    return p["w"].reshape(cout, cin).T * scale[None, :]          # (Cin, Cout)


def _w3x3(p, scale):
    cout, cin = p["w"].shape[0], p["w"].shape[1]
    w = jnp.transpose(p["w"], (2, 3, 1, 0)).reshape(9 * cin, cout)  # (dy,dx,ci)
    return w * scale[None, :]


# ----------------------------------------------------------------------------
# Wrapper
# ----------------------------------------------------------------------------
@functools.partial(jax.jit, static_argnames=("cfg",))
def inception_v2_block(x_nchw, params, cfg):
    """Forward pass; input/output are NCHW like the PyTorch module."""
    c0, c1, c2, c3, c4, c5 = cfg
    N, cin, H, W = x_nchw.shape
    M = H * W
    c_total = c0 + c2 + c4 + c5

    s, b = _fold_bn(params["b1_0"])
    w1_parts, b1_parts = [_w1x1(params["b1_0"], s)], [b]
    s, b = _fold_bn(params["b2_0"])
    w1_parts.append(_w1x1(params["b2_0"], s)); b1_parts.append(b)
    s, b = _fold_bn(params["b3_0"])
    w1_parts.append(_w1x1(params["b3_0"], s)); b1_parts.append(b)
    w1 = jnp.concatenate(w1_parts, axis=1)                    # (Cin, c0+c1+c3)
    b1 = jnp.concatenate(b1_parts)[None, :]                   # (1, c0+c1+c3)

    s, bb = _fold_bn(params["b2_1"]); w21, b21 = _w3x3(params["b2_1"], s), bb[None, :]
    s, bb = _fold_bn(params["b3_1"]); w31, b31 = _w3x3(params["b3_1"], s), bb[None, :]
    s, bb = _fold_bn(params["b3_2"]); w32, b32 = _w3x3(params["b3_2"], s), bb[None, :]
    s, bb = _fold_bn(params["b4_1"]); w4, b4 = _w1x1(params["b4_1"], s), bb[None, :]

    x_nhwc = jnp.transpose(x_nchw, (0, 2, 3, 1))               # (N, H, W, Cin)

    def _rep(shape):
        nd = len(shape)
        return pl.BlockSpec(shape, lambda n, _nd=nd: (0,) * _nd)

    grid_spec = pltpu.PrefetchScalarGridSpec(
        num_scalar_prefetch=0,
        grid=(N,),
        in_specs=[
            pl.BlockSpec((1, H, W, cin), lambda n: (n, 0, 0, 0)),
            _rep(w1.shape), _rep(b1.shape),
            _rep(w21.shape), _rep(b21.shape),
            _rep(w31.shape), _rep(b31.shape),
            _rep(w32.shape), _rep(b32.shape),
            _rep(w4.shape), _rep(b4.shape),
        ],
        out_specs=pl.BlockSpec((1, M, c_total), lambda n: (n, 0, 0)),
        scratch_shapes=[
            pltpu.VMEM((H + 2, W + 2, cin), jnp.float32),   # maxpool (-inf pad)
            pltpu.VMEM((H + 2, W + 2, c1), jnp.float32),    # b2_1 input (0 pad)
            pltpu.VMEM((H + 2, W + 2, c3), jnp.float32),    # b3_1 input (0 pad)
            pltpu.VMEM((H + 2, W + 2, c4), jnp.float32),    # b3_2 input (0 pad)
        ],
    )

    out = pl.pallas_call(
        functools.partial(_inception_kernel, c0=c0, c1=c1, c3=c3),
        grid_spec=grid_spec,
        out_shape=jax.ShapeDtypeStruct((N, M, c_total), jnp.float32),
        compiler_params=pltpu.CompilerParams(
            dimension_semantics=("parallel",)),
    )(x_nhwc, w1, b1, w21, b21, w31, b31, w32, b32, w4, b4)

    return jnp.transpose(out.reshape(N, H, W, c_total), (0, 3, 1, 2))  # NCHW


# ----------------------------------------------------------------------------
# Parameter init (deterministic, matches the PyTorch module layout)
# ----------------------------------------------------------------------------
def _make_convbn_params(key, cin, cout, k):
    k1, k2, k3, k4, k5, k6 = jax.random.split(key, 6)
    return dict(
        w=0.1 * jax.random.normal(k1, (cout, cin, k, k), jnp.float32),  # OIHW
        b=0.1 * jax.random.normal(k2, (cout,), jnp.float32),
        gamma=1.0 + 0.1 * jax.random.normal(k3, (cout,), jnp.float32),
        beta=0.1 * jax.random.normal(k4, (cout,), jnp.float32),
        mean=0.1 * jax.random.normal(k5, (cout,), jnp.float32),
        var=1.0 + 0.1 * jnp.abs(jax.random.normal(k6, (cout,), jnp.float32)),
    )


def init_inception_v2_params(key, in_channels, cfg):
    assert len(cfg) == 6, "normal block must have 6 channels config"
    keys = jax.random.split(key, 7)
    return {
        "b1_0": _make_convbn_params(keys[0], in_channels, cfg[0], 1),
        "b2_0": _make_convbn_params(keys[1], in_channels, cfg[1], 1),
        "b2_1": _make_convbn_params(keys[2], cfg[1], cfg[2], 3),
        "b3_0": _make_convbn_params(keys[3], in_channels, cfg[3], 1),
        "b3_1": _make_convbn_params(keys[4], cfg[3], cfg[4], 3),
        "b3_2": _make_convbn_params(keys[5], cfg[4], cfg[4], 3),
        "b4_1": _make_convbn_params(keys[6], in_channels, cfg[5], 1),
    }


# ----------------------------------------------------------------------------
# Pure-JAX reference (eval-mode BN), for correctness check
# ----------------------------------------------------------------------------
def _ref_convbn(x, p, pad):
    y = jax.lax.conv_general_dilated(
        x, p["w"], window_strides=(1, 1),
        padding=((pad, pad), (pad, pad)),
        dimension_numbers=("NCHW", "OIHW", "NCHW"),
        precision=jax.lax.Precision.HIGHEST)
    y = y + p["b"][None, :, None, None]
    scale = p["gamma"] / jnp.sqrt(p["var"] + BN_EPS)
    y = ((y - p["mean"][None, :, None, None]) * scale[None, :, None, None]
         + p["beta"][None, :, None, None])
    return jnp.maximum(y, 0.0)


def _ref_block(x, params):
    y1 = _ref_convbn(x, params["b1_0"], 0)
    y2 = _ref_convbn(_ref_convbn(x, params["b2_0"], 0), params["b2_1"], 1)
    t = _ref_convbn(_ref_convbn(x, params["b3_0"], 0), params["b3_1"], 1)
    y3 = _ref_convbn(t, params["b3_2"], 1)
    pooled = jax.lax.reduce_window(x, -jnp.inf, jax.lax.max,
                                   (1, 1, 3, 3), (1, 1, 1, 1),
                                   ((0, 0), (0, 0), (1, 1), (1, 1)))
    y4 = _ref_convbn(pooled, params["b4_1"], 0)
    return jnp.concatenate([y1, y2, y3, y4], axis=1)


# ----------------------------------------------------------------------------
# main
# ----------------------------------------------------------------------------
if __name__ == "__main__":
    key = jax.random.PRNGKey(0)
    k_x, k_p = jax.random.split(key)

    batch, in_channels, spatial = 2, 4, 16
    channels_config = (8, 6, 8, 4, 6, 4)   # normal (non-downsample) block

    x = jax.random.normal(k_x, (batch, in_channels, spatial, spatial),
                          jnp.float32)
    params = init_inception_v2_params(k_p, in_channels, channels_config)

    out = inception_v2_block(x, params, channels_config)
    out = jax.block_until_ready(out)

    expected_c = (channels_config[0] + channels_config[2]
                  + channels_config[4] + channels_config[5])
    assert out.shape == (batch, expected_c, spatial, spatial), out.shape
    assert bool(jnp.all(jnp.isfinite(out))) and bool(jnp.all(out >= 0.0))

    ref = _ref_block(x, params)
    max_err = float(jnp.max(jnp.abs(out - ref)))
    assert bool(jnp.allclose(out, ref, atol=2e-2, rtol=2e-2)), max_err

    print("KERNEL_OK")
</pallas_src>

<mosaic_0001>
module attributes {stable_mosaic.version = 11 : i64} {
  func.func @_inception_kernel(%arg0: i32, %arg1: memref<1x16x16x4xf32, #tpu.memory_space<vmem>>, %arg2: memref<4x18xf32, #tpu.memory_space<vmem>>, %arg3: memref<1x18xf32, #tpu.memory_space<vmem>>, %arg4: memref<54x8xf32, #tpu.memory_space<vmem>>, %arg5: memref<1x8xf32, #tpu.memory_space<vmem>>, %arg6: memref<36x6xf32, #tpu.memory_space<vmem>>, %arg7: memref<1x6xf32, #tpu.memory_space<vmem>>, %arg8: memref<54x6xf32, #tpu.memory_space<vmem>>, %arg9: memref<1x6xf32, #tpu.memory_space<vmem>>, %arg10: memref<4x4xf32, #tpu.memory_space<vmem>>, %arg11: memref<1x4xf32, #tpu.memory_space<vmem>>, %arg12: memref<1x256x26xf32, #tpu.memory_space<vmem>>, %arg13: memref<18x18x4xf32, #tpu.memory_space<vmem>>, %arg14: memref<18x18x6xf32, #tpu.memory_space<vmem>>, %arg15: memref<18x18x4xf32, #tpu.memory_space<vmem>>, %arg16: memref<18x18x6xf32, #tpu.memory_space<vmem>>) attributes {dimension_semantics = [#tpu.dimension_semantics<parallel>], iteration_bounds = array<i64: 2>, scalar_prefetch = 0 : i64, scratch_operands = 4 : i64, tpu.core_type = #tpu.core_type<tc>, window_params = [{transform_indices = @transform_0, window_bounds = array<i64: 1, 16, 16, 4>}, {pipeline_mode = #tpu.pipeline_mode<synchronous>, transform_indices = @transform_1, window_bounds = array<i64: 4, 18>}, {pipeline_mode = #tpu.pipeline_mode<synchronous>, transform_indices = @transform_2, window_bounds = array<i64: 1, 18>}, {pipeline_mode = #tpu.pipeline_mode<synchronous>, transform_indices = @transform_3, window_bounds = array<i64: 54, 8>}, {pipeline_mode = #tpu.pipeline_mode<synchronous>, transform_indices = @transform_4, window_bounds = array<i64: 1, 8>}, {pipeline_mode = #tpu.pipeline_mode<synchronous>, transform_indices = @transform_5, window_bounds = array<i64: 36, 6>}, {pipeline_mode = #tpu.pipeline_mode<synchronous>, transform_indices = @transform_6, window_bounds = array<i64: 1, 6>}, {pipeline_mode = #tpu.pipeline_mode<synchronous>, transform_indices = @transform_7, window_bounds = array<i64: 54, 6>}, {pipeline_mode = #tpu.pipeline_mode<synchronous>, transform_indices = @transform_8, window_bounds = array<i64: 1, 6>}, {pipeline_mode = #tpu.pipeline_mode<synchronous>, transform_indices = @transform_9, window_bounds = array<i64: 4, 4>}, {pipeline_mode = #tpu.pipeline_mode<synchronous>, transform_indices = @transform_10, window_bounds = array<i64: 1, 4>}, {transform_indices = @transform_11, window_bounds = array<i64: 1, 256, 26>}]} {
    %c0 = arith.constant 0 : index
    %c0_0 = arith.constant 0 : index
    %c0_1 = arith.constant 0 : index
    %c0_2 = arith.constant 0 : index
    %0 = vector.load %arg1[%c0, %c0_0, %c0_1, %c0_2] : memref<1x16x16x4xf32, #tpu.memory_space<vmem>>, vector<1x16x16x4xf32>
    %1 = vector.shape_cast %0 : vector<1x16x16x4xf32> to vector<16x16x4xf32>
    %2 = vector.shape_cast %1 : vector<16x16x4xf32> to vector<256x4xf32>
    %c0_3 = arith.constant 0 : index
    %c0_4 = arith.constant 0 : index
    %3 = vector.load %arg2[%c0_3, %c0_4] : memref<4x18xf32, #tpu.memory_space<vmem>>, vector<4x18xf32>
    %cst = arith.constant dense<0.000000e+00> : vector<256x18xf32>
    %4 = tpu.matmul %2, %3, %cst {dimension_numbers = #tpu.dot_dimension_numbers<[1], [0], [0], [1], [0, 0, 1, 1], [], []>} : vector<256x4xf32>, vector<4x18xf32>, vector<256x18xf32> -> vector<256x18xf32>
    %c0_5 = arith.constant 0 : index
    %c0_6 = arith.constant 0 : index
    %5 = vector.load %arg3[%c0_5, %c0_6] : memref<1x18xf32, #tpu.memory_space<vmem>>, vector<1x18xf32>
    %6 = vector.broadcast %5 : vector<1x18xf32> to vector<256x18xf32>
    %7 = arith.addf %4, %6 : vector<256x18xf32>
    %cst_7 = arith.constant 0.000000e+00 : f32
    %8 = vector.broadcast %cst_7 : f32 to vector<256x18xf32>
    %9 = arith.maximumf %7, %8 : vector<256x18xf32>
    %10 = vector.extract_strided_slice %9 {offsets = [0, 0], sizes = [256, 8], strides = [1, 1]} : vector<256x18xf32> to vector<256x8xf32>
    %11 = vector.extract_strided_slice %9 {offsets = [0, 8], sizes = [256, 6], strides = [1, 1]} : vector<256x18xf32> to vector<256x6xf32>
    %12 = vector.extract_strided_slice %9 {offsets = [0, 14], sizes = [256, 4], strides = [1, 1]} : vector<256x18xf32> to vector<256x4xf32>
    %cst_8 = arith.constant 0.000000e+00 : f32
    %13 = vector.broadcast %cst_8 : f32 to vector<18x18x6xf32>
    %c0_9 = arith.constant 0 : index
    %c0_10 = arith.constant 0 : index
    %c0_11 = arith.constant 0 : index
    %14 = vector.load %arg14[%c0_9, %c0_10, %c0_11] : memref<18x18x6xf32, #tpu.memory_space<vmem>>, vector<18x18x6xf32>
    tpu.vector_store %arg14[%c0_9, %c0_10, %c0_11], %13 {strides = array<i32>} : memref<18x18x6xf32, #tpu.memory_space<vmem>>, vector<18x18x6xf32>,
    %15 = vector.shape_cast %11 : vector<256x6xf32> to vector<16x16x6xf32>
    %c1 = arith.constant 1 : index
    %c1_12 = arith.constant 1 : index
    %c0_13 = arith.constant 0 : index
    %16 = vector.load %arg14[%c1, %c1_12, %c0_13] : memref<18x18x6xf32, #tpu.memory_space<vmem>>, vector<16x16x6xf32>
    tpu.vector_store %arg14[%c1, %c1_12, %c0_13], %15 {strides = array<i32>} : memref<18x18x6xf32, #tpu.memory_space<vmem>>, vector<16x16x6xf32>,
    %cst_14 = arith.constant 0.000000e+00 : f32
    %17 = vector.broadcast %cst_14 : f32 to vector<256x8xf32>
    %c0_15 = arith.constant 0 : index
    %c0_16 = arith.constant 0 : index
    %c0_17 = arith.constant 0 : index
    %18 = vector.load %arg14[%c0_15, %c0_16, %c0_17] : memref<18x18x6xf32, #tpu.memory_space<vmem>>, vector<16x16x6xf32>
    %19 = vector.shape_cast %18 : vector<16x16x6xf32> to vector<256x6xf32>
    %c0_18 = arith.constant 0 : index
    %c0_19 = arith.constant 0 : index
    %20 = vector.load %arg4[%c0_18, %c0_19] : memref<54x8xf32, #tpu.memory_space<vmem>>, vector<6x8xf32>
    %cst_20 = arith.constant dense<0.000000e+00> : vector<256x8xf32>
    %21 = tpu.matmul %19, %20, %cst_20 {dimension_numbers = #tpu.dot_dimension_numbers<[1], [0], [0], [1], [0, 0, 1, 1], [], []>} : vector<256x6xf32>, vector<6x8xf32>, vector<256x8xf32> -> vector<256x8xf32>
    %22 = arith.addf %17, %21 : vector<256x8xf32>
    %c0_21 = arith.constant 0 : index
    %c1_22 = arith.constant 1 : index
    %c0_23 = arith.constant 0 : index
    %23 = vector.load %arg14[%c0_21, %c1_22, %c0_23] : memref<18x18x6xf32, #tpu.memory_space<vmem>>, vector<16x16x6xf32>
    %24 = vector.shape_cast %23 : vector<16x16x6xf32> to vector<256x6xf32>
    %c6 = arith.constant 6 : index
    %c0_24 = arith.constant 0 : index
    %25 = vector.load %arg4[%c6, %c0_24] : memref<54x8xf32, #tpu.memory_space<vmem>>, vector<6x8xf32>
    %cst_25 = arith.constant dense<0.000000e+00> : vector<256x8xf32>
    %26 = tpu.matmul %24, %25, %cst_25 {dimension_numbers = #tpu.dot_dimension_numbers<[1], [0], [0], [1], [0, 0, 1, 1], [], []>} : vector<256x6xf32>, vector<6x8xf32>, vector<256x8xf32> -> vector<256x8xf32>
    %27 = arith.addf %22, %26 : vector<256x8xf32>
    %c0_26 = arith.constant 0 : index
    %c2 = arith.constant 2 : index
    %c0_27 = arith.constant 0 : index
    %28 = vector.load %arg14[%c0_26, %c2, %c0_27] : memref<18x18x6xf32, #tpu.memory_space<vmem>>, vector<16x16x6xf32>
    %29 = vector.shape_cast %28 : vector<16x16x6xf32> to vector<256x6xf32>
    %c12 = arith.constant 12 : index
    %c0_28 = arith.constant 0 : index
    %30 = vector.load %arg4[%c12, %c0_28] : memref<54x8xf32, #tpu.memory_space<vmem>>, vector<6x8xf32>
    %cst_29 = arith.constant dense<0.000000e+00> : vector<256x8xf32>
    %31 = tpu.matmul %29, %30, %cst_29 {dimension_numbers = #tpu.dot_dimension_numbers<[1], [0], [0], [1], [0, 0, 1, 1], [], []>} : vector<256x6xf32>, vector<6x8xf32>, vector<256x8xf32> -> vector<256x8xf32>
    %32 = arith.addf %27, %31 : vector<256x8xf32>
    %c1_30 = arith.constant 1 : index
    %c0_31 = arith.constant 0 : index
    %c0_32 = arith.constant 0 : index
    %33 = vector.load %arg14[%c1_30, %c0_31, %c0_32] : memref<18x18x6xf32, #tpu.memory_space<vmem>>, vector<16x16x6xf32>
    %34 = vector.shape_cast %33 : vector<16x16x6xf32> to vector<256x6xf32>
    %c18 = arith.constant 18 : index
    %c0_33 = arith.constant 0 : index
    %35 = vector.load %arg4[%c18, %c0_33] : memref<54x8xf32, #tpu.memory_space<vmem>>, vector<6x8xf32>
    %cst_34 = arith.constant dense<0.000000e+00> : vector<256x8xf32>
    %36 = tpu.matmul %34, %35, %cst_34 {dimension_numbers = #tpu.dot_dimension_numbers<[1], [0], [0], [1], [0, 0, 1, 1], [], []>} : vector<256x6xf32>, vector<6x8xf32>, vector<256x8xf32> -> vector<256x8xf32>
    %37 = arith.addf %32, %36 : vector<256x8xf32>
    %c1_35 = arith.constant 1 : index
    %c1_36 = arith.constant 1 : index
    %c0_37 = arith.constant 0 : index
    %38 = vector.load %arg14[%c1_35, %c1_36, %c0_37] : memref<18x18x6xf32, #tpu.memory_space<vmem>>, vector<16x16x6xf32>
    %39 = vector.shape_cast %38 : vector<16x16x6xf32> to vector<256x6xf32>
    %c24 = arith.constant 24 : index
    %c0_38 = arith.constant 0 : index
    %40 = vector.load %arg4[%c24, %c0_38] : memref<54x8xf32, #tpu.memory_space<vmem>>, vector<6x8xf32>
    %cst_39 = arith.constant dense<0.000000e+00> : vector<256x8xf32>
    %41 = tpu.matmul %39, %40, %cst_39 {dimension_numbers = #tpu.dot_dimension_numbers<[1], [0], [0], [1], [0, 0, 1, 1], [], []>} : vector<256x6xf32>, vector<6x8xf32>, vector<256x8xf32> -> vector<256x8xf32>
    %42 = arith.addf %37, %41 : vector<256x8xf32>
    %c1_40 = arith.constant 1 : index
    %c2_41 = arith.constant 2 : index
    %c0_42 = arith.constant 0 : index
    %43 = vector.load %arg14[%c1_40, %c2_41, %c0_42] : memref<18x18x6xf32, #tpu.memory_space<vmem>>, vector<16x16x6xf32>
    %44 = vector.shape_cast %43 : vector<16x16x6xf32> to vector<256x6xf32>
    %c30 = arith.constant 30 : index
    %c0_43 = arith.constant 0 : index
    %45 = vector.load %arg4[%c30, %c0_43] : memref<54x8xf32, #tpu.memory_space<vmem>>, vector<6x8xf32>
    %cst_44 = arith.constant dense<0.000000e+00> : vector<256x8xf32>
    %46 = tpu.matmul %44, %45, %cst_44 {dimension_numbers = #tpu.dot_dimension_numbers<[1], [0], [0], [1], [0, 0, 1, 1], [], []>} : vector<256x6xf32>, vector<6x8xf32>, vector<256x8xf32> -> vector<256x8xf32>
    %47 = arith.addf %42, %46 : vector<256x8xf32>
    %c2_45 = arith.constant 2 : index
    %c0_46 = arith.constant 0 : index
    %c0_47 = arith.constant 0 : index
    %48 = vector.load %arg14[%c2_45, %c0_46, %c0_47] : memref<18x18x6xf32, #tpu.memory_space<vmem>>, vector<16x16x6xf32>
    %49 = vector.shape_cast %48 : vector<16x16x6xf32> to vector<256x6xf32>
    %c36 = arith.constant 36 : index
    %c0_48 = arith.constant 0 : index
    %50 = vector.load %arg4[%c36, %c0_48] : memref<54x8xf32, #tpu.memory_space<vmem>>, vector<6x8xf32>
    %cst_49 = arith.constant dense<0.000000e+00> : vector<256x8xf32>
    %51 = tpu.matmul %49, %50, %cst_49 {dimension_numbers = #tpu.dot_dimension_numbers<[1], [0], [0], [1], [0, 0, 1, 1], [], []>} : vector<256x6xf32>, vector<6x8xf32>, vector<256x8xf32> -> vector<256x8xf32>
    %52 = arith.addf %47, %51 : vector<256x8xf32>
    %c2_50 = arith.constant 2 : index
    %c1_51 = arith.constant 1 : index
    %c0_52 = arith.constant 0 : index
    %53 = vector.load %arg14[%c2_50, %c1_51, %c0_52] : memref<18x18x6xf32, #tpu.memory_space<vmem>>, vector<16x16x6xf32>
    %54 = vector.shape_cast %53 : vector<16x16x6xf32> to vector<256x6xf32>
    %c42 = arith.constant 42 : index
    %c0_53 = arith.constant 0 : index
    %55 = vector.load %arg4[%c42, %c0_53] : memref<54x8xf32, #tpu.memory_space<vmem>>, vector<6x8xf32>
    %cst_54 = arith.constant dense<0.000000e+00> : vector<256x8xf32>
    %56 = tpu.matmul %54, %55, %cst_54 {dimension_numbers = #tpu.dot_dimension_numbers<[1], [0], [0], [1], [0, 0, 1, 1], [], []>} : vector<256x6xf32>, vector<6x8xf32>, vector<256x8xf32> -> vector<256x8xf32>
    %57 = arith.addf %52, %56 : vector<256x8xf32>
    %c2_55 = arith.constant 2 : index
    %c2_56 = arith.constant 2 : index
    %c0_57 = arith.constant 0 : index
    %58 = vector.load %arg14[%c2_55, %c2_56, %c0_57] : memref<18x18x6xf32, #tpu.memory_space<vmem>>, vector<16x16x6xf32>
    %59 = vector.shape_cast %58 : vector<16x16x6xf32> to vector<256x6xf32>
    %c48 = arith.constant 48 : index
    %c0_58 = arith.constant 0 : index
    %60 = vector.load %arg4[%c48, %c0_58] : memref<54x8xf32, #tpu.memory_space<vmem>>, vector<6x8xf32>
    %cst_59 = arith.constant dense<0.000000e+00> : vector<256x8xf32>
    %61 = tpu.matmul %59, %60, %cst_59 {dimension_numbers = #tpu.dot_dimension_numbers<[1], [0], [0], [1], [0, 0, 1, 1], [], []>} : vector<256x6xf32>, vector<6x8xf32>, vector<256x8xf32> -> vector<256x8xf32>
    %62 = arith.addf %57, %61 : vector<256x8xf32>
    %c0_60 = arith.constant 0 : index
    %c0_61 = arith.constant 0 : index
    %63 = vector.load %arg5[%c0_60, %c0_61] : memref<1x8xf32, #tpu.memory_space<vmem>>, vector<1x8xf32>
    %64 = vector.broadcast %63 : vector<1x8xf32> to vector<256x8xf32>
    %65 = arith.addf %62, %64 : vector<256x8xf32>
    %cst_62 = arith.constant 0.000000e+00 : f32
    %66 = vector.broadcast %cst_62 : f32 to vector<256x8xf32>
    %67 = arith.maximumf %65, %66 : vector<256x8xf32>
    %cst_63 = arith.constant 0.000000e+00 : f32
    %68 = vector.broadcast %cst_63 : f32 to vector<18x18x4xf32>
    %c0_64 = arith.constant 0 : index
    %c0_65 = arith.constant 0 : index
    %c0_66 = arith.constant 0 : index
    %69 = vector.load %arg15[%c0_64, %c0_65, %c0_66] : memref<18x18x4xf32, #tpu.memory_space<vmem>>, vector<18x18x4xf32>
    tpu.vector_store %arg15[%c0_64, %c0_65, %c0_66], %68 {strides = array<i32>} : memref<18x18x4xf32, #tpu.memory_space<vmem>>, vector<18x18x4xf32>,
    %70 = vector.shape_cast %12 : vector<256x4xf32> to vector<16x16x4xf32>
    %c1_67 = arith.constant 1 : index
    %c1_68 = arith.constant 1 : index
    %c0_69 = arith.constant 0 : index
    %71 = vector.load %arg15[%c1_67, %c1_68, %c0_69] : memref<18x18x4xf32, #tpu.memory_space<vmem>>, vector<16x16x4xf32>
    tpu.vector_store %arg15[%c1_67, %c1_68, %c0_69], %70 {strides = array<i32>} : memref<18x18x4xf32, #tpu.memory_space<vmem>>, vector<16x16x4xf32>,
    %cst_70 = arith.constant 0.000000e+00 : f32
    %72 = vector.broadcast %cst_70 : f32 to vector<256x6xf32>
    %c0_71 = arith.constant 0 : index
    %c0_72 = arith.constant 0 : index
    %c0_73 = arith.constant 0 : index
    %73 = vector.load %arg15[%c0_71, %c0_72, %c0_73] : memref<18x18x4xf32, #tpu.memory_space<vmem>>, vector<16x16x4xf32>
    %74 = vector.shape_cast %73 : vector<16x16x4xf32> to vector<256x4xf32>
    %c0_74 = arith.constant 0 : index
    %c0_75 = arith.constant 0 : index
    %75 = vector.load %arg6[%c0_74, %c0_75] : memref<36x6xf32, #tpu.memory_space<vmem>>, vector<4x6xf32>
    %cst_76 = arith.constant dense<0.000000e+00> : vector<256x6xf32>
    %76 = tpu.matmul %74, %75, %cst_76 {dimension_numbers = #tpu.dot_dimension_numbers<[1], [0], [0], [1], [0, 0, 1, 1], [], []>} : vector<256x4xf32>, vector<4x6xf32>, vector<256x6xf32> -> vector<256x6xf32>
    %77 = arith.addf %72, %76 : vector<256x6xf32>
    %c0_77 = arith.constant 0 : index
    %c1_78 = arith.constant 1 : index
    %c0_79 = arith.constant 0 : index
    %78 = vector.load %arg15[%c0_77, %c1_78, %c0_79] : memref<18x18x4xf32, #tpu.memory_space<vmem>>, vector<16x16x4xf32>
    %79 = vector.shape_cast %78 : vector<16x16x4xf32> to vector<256x4xf32>
    %c4 = arith.constant 4 : index
    %c0_80 = arith.constant 0 : index
    %80 = vector.load %arg6[%c4, %c0_80] : memref<36x6xf32, #tpu.memory_space<vmem>>, vector<4x6xf32>
    %cst_81 = arith.constant dense<0.000000e+00> : vector<256x6xf32>
    %81 = tpu.matmul %79, %80, %cst_81 {dimension_numbers = #tpu.dot_dimension_numbers<[1], [0], [0], [1], [0, 0, 1, 1], [], []>} : vector<256x4xf32>, vector<4x6xf32>, vector<256x6xf32> -> vector<256x6xf32>
    %82 = arith.addf %77, %81 : vector<256x6xf32>
    %c0_82 = arith.constant 0 : index
    %c2_83 = arith.constant 2 : index
    %c0_84 = arith.constant 0 : index
    %83 = vector.load %arg15[%c0_82, %c2_83, %c0_84] : memref<18x18x4xf32, #tpu.memory_space<vmem>>, vector<16x16x4xf32>
    %84 = vector.shape_cast %83 : vector<16x16x4xf32> to vector<256x4xf32>
    %c8 = arith.constant 8 : index
    %c0_85 = arith.constant 0 : index
    %85 = vector.load %arg6[%c8, %c0_85] : memref<36x6xf32, #tpu.memory_space<vmem>>, vector<4x6xf32>
    %cst_86 = arith.constant dense<0.000000e+00> : vector<256x6xf32>
    %86 = tpu.matmul %84, %85, %cst_86 {dimension_numbers = #tpu.dot_dimension_numbers<[1], [0], [0], [1], [0, 0, 1, 1], [], []>} : vector<256x4xf32>, vector<4x6xf32>, vector<256x6xf32> -> vector<256x6xf32>
    %87 = arith.addf %82, %86 : vector<256x6xf32>
    %c1_87 = arith.constant 1 : index
    %c0_88 = arith.constant 0 : index
    %c0_89 = arith.constant 0 : index
    %88 = vector.load %arg15[%c1_87, %c0_88, %c0_89] : memref<18x18x4xf32, #tpu.memory_space<vmem>>, vector<16x16x4xf32>
    %89 = vector.shape_cast %88 : vector<16x16x4xf32> to vector<256x4xf32>
    %c12_90 = arith.constant 12 : index
    %c0_91 = arith.constant 0 : index
    %90 = vector.load %arg6[%c12_90, %c0_91] : memref<36x6xf32, #tpu.memory_space<vmem>>, vector<4x6xf32>
    %cst_92 = arith.constant dense<0.000000e+00> : vector<256x6xf32>
    %91 = tpu.matmul %89, %90, %cst_92 {dimension_numbers = #tpu.dot_dimension_numbers<[1], [0], [0], [1], [0, 0, 1, 1], [], []>} : vector<256x4xf32>, vector<4x6xf32>, vector<256x6xf32> -> vector<256x6xf32>
    %92 = arith.addf %87, %91 : vector<256x6xf32>
    %c1_93 = arith.constant 1 : index
    %c1_94 = arith.constant 1 : index
    %c0_95 = arith.constant 0 : index
    %93 = vector.load %arg15[%c1_93, %c1_94, %c0_95] : memref<18x18x4xf32, #tpu.memory_space<vmem>>, vector<16x16x4xf32>
    %94 = vector.shape_cast %93 : vector<16x16x4xf32> to vector<256x4xf32>
    %c16 = arith.constant 16 : index
    %c0_96 = arith.constant 0 : index
    %95 = vector.load %arg6[%c16, %c0_96] : memref<36x6xf32, #tpu.memory_space<vmem>>, vector<4x6xf32>
    %cst_97 = arith.constant dense<0.000000e+00> : vector<256x6xf32>
    %96 = tpu.matmul %94, %95, %cst_97 {dimension_numbers = #tpu.dot_dimension_numbers<[1], [0], [0], [1], [0, 0, 1, 1], [], []>} : vector<256x4xf32>, vector<4x6xf32>, vector<256x6xf32> -> vector<256x6xf32>
    %97 = arith.addf %92, %96 : vector<256x6xf32>
    %c1_98 = arith.constant 1 : index
    %c2_99 = arith.constant 2 : index
    %c0_100 = arith.constant 0 : index
    %98 = vector.load %arg15[%c1_98, %c2_99, %c0_100] : memref<18x18x4xf32, #tpu.memory_space<vmem>>, vector<16x16x4xf32>
    %99 = vector.shape_cast %98 : vector<16x16x4xf32> to vector<256x4xf32>
    %c20 = arith.constant 20 : index
    %c0_101 = arith.constant 0 : index
    %100 = vector.load %arg6[%c20, %c0_101] : memref<36x6xf32, #tpu.memory_space<vmem>>, vector<4x6xf32>
    %cst_102 = arith.constant dense<0.000000e+00> : vector<256x6xf32>
    %101 = tpu.matmul %99, %100, %cst_102 {dimension_numbers = #tpu.dot_dimension_numbers<[1], [0], [0], [1], [0, 0, 1, 1], [], []>} : vector<256x4xf32>, vector<4x6xf32>, vector<256x6xf32> -> vector<256x6xf32>
    %102 = arith.addf %97, %101 : vector<256x6xf32>
    %c2_103 = arith.constant 2 : index
    %c0_104 = arith.constant 0 : index
    %c0_105 = arith.constant 0 : index
    %103 = vector.load %arg15[%c2_103, %c0_104, %c0_105] : memref<18x18x4xf32, #tpu.memory_space<vmem>>, vector<16x16x4xf32>
    %104 = vector.shape_cast %103 : vector<16x16x4xf32> to vector<256x4xf32>
    %c24_106 = arith.constant 24 : index
    %c0_107 = arith.constant 0 : index
    %105 = vector.load %arg6[%c24_106, %c0_107] : memref<36x6xf32, #tpu.memory_space<vmem>>, vector<4x6xf32>
    %cst_108 = arith.constant dense<0.000000e+00> : vector<256x6xf32>
    %106 = tpu.matmul %104, %105, %cst_108 {dimension_numbers = #tpu.dot_dimension_numbers<[1], [0], [0], [1], [0, 0, 1, 1], [], []>} : vector<256x4xf32>, vector<4x6xf32>, vector<256x6xf32> -> vector<256x6xf32>
    %107 = arith.addf %102, %106 : vector<256x6xf32>
    %c2_109 = arith.constant 2 : index
    %c1_110 = arith.constant 1 : index
    %c0_111 = arith.constant 0 : index
    %108 = vector.load %arg15[%c2_109, %c1_110, %c0_111] : memref<18x18x4xf32, #tpu.memory_space<vmem>>, vector<16x16x4xf32>
    %109 = vector.shape_cast %108 : vector<16x16x4xf32> to vector<256x4xf32>
    %c28 = arith.constant 28 : index
    %c0_112 = arith.constant 0 : index
    %110 = vector.load %arg6[%c28, %c0_112] : memref<36x6xf32, #tpu.memory_space<vmem>>, vector<4x6xf32>
    %cst_113 = arith.constant dense<0.000000e+00> : vector<256x6xf32>
    %111 = tpu.matmul %109, %110, %cst_113 {dimension_numbers = #tpu.dot_dimension_numbers<[1], [0], [0], [1], [0, 0, 1, 1], [], []>} : vector<256x4xf32>, vector<4x6xf32>, vector<256x6xf32> -> vector<256x6xf32>
    %112 = arith.addf %107, %111 : vector<256x6xf32>
    %c2_114 = arith.constant 2 : index
    %c2_115 = arith.constant 2 : index
    %c0_116 = arith.constant 0 : index
    %113 = vector.load %arg15[%c2_114, %c2_115, %c0_116] : memref<18x18x4xf32, #tpu.memory_space<vmem>>, vector<16x16x4xf32>
    %114 = vector.shape_cast %113 : vector<16x16x4xf32> to vector<256x4xf32>
    %c32 = arith.constant 32 : index
    %c0_117 = arith.constant 0 : index
    %115 = vector.load %arg6[%c32, %c0_117] : memref<36x6xf32, #tpu.memory_space<vmem>>, vector<4x6xf32>
    %cst_118 = arith.constant dense<0.000000e+00> : vector<256x6xf32>
    %116 = tpu.matmul %114, %115, %cst_118 {dimension_numbers = #tpu.dot_dimension_numbers<[1], [0], [0], [1], [0, 0, 1, 1], [], []>} : vector<256x4xf32>, vector<4x6xf32>, vector<256x6xf32> -> vector<256x6xf32>
    %117 = arith.addf %112, %116 : vector<256x6xf32>
    %c0_119 = arith.constant 0 : index
    %c0_120 = arith.constant 0 : index
    %118 = vector.load %arg7[%c0_119, %c0_120] : memref<1x6xf32, #tpu.memory_space<vmem>>, vector<1x6xf32>
    %119 = vector.broadcast %118 : vector<1x6xf32> to vector<256x6xf32>
    %120 = arith.addf %117, %119 : vector<256x6xf32>
    %cst_121 = arith.constant 0.000000e+00 : f32
    %121 = vector.broadcast %cst_121 : f32 to vector<256x6xf32>
    %122 = arith.maximumf %120, %121 : vector<256x6xf32>
    %cst_122 = arith.constant 0.000000e+00 : f32
    %123 = vector.broadcast %cst_122 : f32 to vector<18x18x6xf32>
    %c0_123 = arith.constant 0 : index
    %c0_124 = arith.constant 0 : index
    %c0_125 = arith.constant 0 : index
    %124 = vector.load %arg16[%c0_123, %c0_124, %c0_125] : memref<18x18x6xf32, #tpu.memory_space<vmem>>, vector<18x18x6xf32>
    tpu.vector_store %arg16[%c0_123, %c0_124, %c0_125], %123 {strides = array<i32>} : memref<18x18x6xf32, #tpu.memory_space<vmem>>, vector<18x18x6xf32>,
    %125 = vector.shape_cast %122 : vector<256x6xf32> to vector<16x16x6xf32>
    %c1_126 = arith.constant 1 : index
    %c1_127 = arith.constant 1 : index
    %c0_128 = arith.constant 0 : index
    %126 = vector.load %arg16[%c1_126, %c1_127, %c0_128] : memref<18x18x6xf32, #tpu.memory_space<vmem>>, vector<16x16x6xf32>
    tpu.vector_store %arg16[%c1_126, %c1_127, %c0_128], %125 {strides = array<i32>} : memref<18x18x6xf32, #tpu.memory_space<vmem>>, vector<16x16x6xf32>,
    %cst_129 = arith.constant 0.000000e+00 : f32
    %127 = vector.broadcast %cst_129 : f32 to vector<256x6xf32>
    %c0_130 = arith.constant 0 : index
    %c0_131 = arith.constant 0 : index
    %c0_132 = arith.constant 0 : index
    %128 = vector.load %arg16[%c0_130, %c0_131, %c0_132] : memref<18x18x6xf32, #tpu.memory_space<vmem>>, vector<16x16x6xf32>
    %129 = vector.shape_cast %128 : vector<16x16x6xf32> to vector<256x6xf32>
    %c0_133 = arith.constant 0 : index
    %c0_134 = arith.constant 0 : index
    %130 = vector.load %arg8[%c0_133, %c0_134] : memref<54x6xf32, #tpu.memory_space<vmem>>, vector<6x6xf32>
    %cst_135 = arith.constant dense<0.000000e+00> : vector<256x6xf32>
    %131 = tpu.matmul %129, %130, %cst_135 {dimension_numbers = #tpu.dot_dimension_numbers<[1], [0], [0], [1], [0, 0, 1, 1], [], []>} : vector<256x6xf32>, vector<6x6xf32>, vector<256x6xf32> -> vector<256x6xf32>
    %132 = arith.addf %127, %131 : vector<256x6xf32>
    %c0_136 = arith.constant 0 : index
    %c1_137 = arith.constant 1 : index
    %c0_138 = arith.constant 0 : index
    %133 = vector.load %arg16[%c0_136, %c1_137, %c0_138] : memref<18x18x6xf32, #tpu.memory_space<vmem>>, vector<16x16x6xf32>
    %134 = vector.shape_cast %133 : vector<16x16x6xf32> to vector<256x6xf32>
    %c6_139 = arith.constant 6 : index
    %c0_140 = arith.constant 0 : index
    %135 = vector.load %arg8[%c6_139, %c0_140] : memref<54x6xf32, #tpu.memory_space<vmem>>, vector<6x6xf32>
    %cst_141 = arith.constant dense<0.000000e+00> : vector<256x6xf32>
    %136 = tpu.matmul %134, %135, %cst_141 {dimension_numbers = #tpu.dot_dimension_numbers<[1], [0], [0], [1], [0, 0, 1, 1], [], []>} : vector<256x6xf32>, vector<6x6xf32>, vector<256x6xf32> -> vector<256x6xf32>
    %137 = arith.addf %132, %136 : vector<256x6xf32>
    %c0_142 = arith.constant 0 : index
    %c2_143 = arith.constant 2 : index
    %c0_144 = arith.constant 0 : index
    %138 = vector.load %arg16[%c0_142, %c2_143, %c0_144] : memref<18x18x6xf32, #tpu.memory_space<vmem>>, vector<16x16x6xf32>
    %139 = vector.shape_cast %138 : vector<16x16x6xf32> to vector<256x6xf32>
    %c12_145 = arith.constant 12 : index
    %c0_146 = arith.constant 0 : index
    %140 = vector.load %arg8[%c12_145, %c0_146] : memref<54x6xf32, #tpu.memory_space<vmem>>, vector<6x6xf32>
    %cst_147 = arith.constant dense<0.000000e+00> : vector<256x6xf32>
    %141 = tpu.matmul %139, %140, %cst_147 {dimension_numbers = #tpu.dot_dimension_numbers<[1], [0], [0], [1], [0, 0, 1, 1], [], []>} : vector<256x6xf32>, vector<6x6xf32>, vector<256x6xf32> -> vector<256x6xf32>
    %142 = arith.addf %137, %141 : vector<256x6xf32>
    %c1_148 = arith.constant 1 : index
    %c0_149 = arith.constant 0 : index
    %c0_150 = arith.constant 0 : index
    %143 = vector.load %arg16[%c1_148, %c0_149, %c0_150] : memref<18x18x6xf32, #tpu.memory_space<vmem>>, vector<16x16x6xf32>
    %144 = vector.shape_cast %143 : vector<16x16x6xf32> to vector<256x6xf32>
    %c18_151 = arith.constant 18 : index
    %c0_152 = arith.constant 0 : index
    %145 = vector.load %arg8[%c18_151, %c0_152] : memref<54x6xf32, #tpu.memory_space<vmem>>, vector<6x6xf32>
    %cst_153 = arith.constant dense<0.000000e+00> : vector<256x6xf32>
    %146 = tpu.matmul %144, %145, %cst_153 {dimension_numbers = #tpu.dot_dimension_numbers<[1], [0], [0], [1], [0, 0, 1, 1], [], []>} : vector<256x6xf32>, vector<6x6xf32>, vector<256x6xf32> -> vector<256x6xf32>
    %147 = arith.addf %142, %146 : vector<256x6xf32>
    %c1_154 = arith.constant 1 : index
    %c1_155 = arith.constant 1 : index
    %c0_156 = arith.constant 0 : index
    %148 = vector.load %arg16[%c1_154, %c1_155, %c0_156] : memref<18x18x6xf32, #tpu.memory_space<vmem>>, vector<16x16x6xf32>
    %149 = vector.shape_cast %148 : vector<16x16x6xf32> to vector<256x6xf32>
    %c24_157 = arith.constant 24 : index
    %c0_158 = arith.constant 0 : index
    %150 = vector.load %arg8[%c24_157, %c0_158] : memref<54x6xf32, #tpu.memory_space<vmem>>, vector<6x6xf32>
    %cst_159 = arith.constant dense<0.000000e+00> : vector<256x6xf32>
    %151 = tpu.matmul %149, %150, %cst_159 {dimension_numbers = #tpu.dot_dimension_numbers<[1], [0], [0], [1], [0, 0, 1, 1], [], []>} : vector<256x6xf32>, vector<6x6xf32>, vector<256x6xf32> -> vector<256x6xf32>
    %152 = arith.addf %147, %151 : vector<256x6xf32>
    %c1_160 = arith.constant 1 : index
    %c2_161 = arith.constant 2 : index
    %c0_162 = arith.constant 0 : index
    %153 = vector.load %arg16[%c1_160, %c2_161, %c0_162] : memref<18x18x6xf32, #tpu.memory_space<vmem>>, vector<16x16x6xf32>
    %154 = vector.shape_cast %153 : vector<16x16x6xf32> to vector<256x6xf32>
    %c30_163 = arith.constant 30 : index
    %c0_164 = arith.constant 0 : index
    %155 = vector.load %arg8[%c30_163, %c0_164] : memref<54x6xf32, #tpu.memory_space<vmem>>, vector<6x6xf32>
    %cst_165 = arith.constant dense<0.000000e+00> : vector<256x6xf32>
    %156 = tpu.matmul %154, %155, %cst_165 {dimension_numbers = #tpu.dot_dimension_numbers<[1], [0], [0], [1], [0, 0, 1, 1], [], []>} : vector<256x6xf32>, vector<6x6xf32>, vector<256x6xf32> -> vector<256x6xf32>
    %157 = arith.addf %152, %156 : vector<256x6xf32>
    %c2_166 = arith.constant 2 : index
    %c0_167 = arith.constant 0 : index
    %c0_168 = arith.constant 0 : index
    %158 = vector.load %arg16[%c2_166, %c0_167, %c0_168] : memref<18x18x6xf32, #tpu.memory_space<vmem>>, vector<16x16x6xf32>
    %159 = vector.shape_cast %158 : vector<16x16x6xf32> to vector<256x6xf32>
    %c36_169 = arith.constant 36 : index
    %c0_170 = arith.constant 0 : index
    %160 = vector.load %arg8[%c36_169, %c0_170] : memref<54x6xf32, #tpu.memory_space<vmem>>, vector<6x6xf32>
    %cst_171 = arith.constant dense<0.000000e+00> : vector<256x6xf32>
    %161 = tpu.matmul %159, %160, %cst_171 {dimension_numbers = #tpu.dot_dimension_numbers<[1], [0], [0], [1], [0, 0, 1, 1], [], []>} : vector<256x6xf32>, vector<6x6xf32>, vector<256x6xf32> -> vector<256x6xf32>
    %162 = arith.addf %157, %161 : vector<256x6xf32>
    %c2_172 = arith.constant 2 : index
    %c1_173 = arith.constant 1 : index
    %c0_174 = arith.constant 0 : index
    %163 = vector.load %arg16[%c2_172, %c1_173, %c0_174] : memref<18x18x6xf32, #tpu.memory_space<vmem>>, vector<16x16x6xf32>
    %164 = vector.shape_cast %163 : vector<16x16x6xf32> to vector<256x6xf32>
    %c42_175 = arith.constant 42 : index
    %c0_176 = arith.constant 0 : index
    %165 = vector.load %arg8[%c42_175, %c0_176] : memref<54x6xf32, #tpu.memory_space<vmem>>, vector<6x6xf32>
    %cst_177 = arith.constant dense<0.000000e+00> : vector<256x6xf32>
    %166 = tpu.matmul %164, %165, %cst_177 {dimension_numbers = #tpu.dot_dimension_numbers<[1], [0], [0], [1], [0, 0, 1, 1], [], []>} : vector<256x6xf32>, vector<6x6xf32>, vector<256x6xf32> -> vector<256x6xf32>
    %167 = arith.addf %162, %166 : vector<256x6xf32>
    %c2_178 = arith.constant 2 : index
    %c2_179 = arith.constant 2 : index
    %c0_180 = arith.constant 0 : index
    %168 = vector.load %arg16[%c2_178, %c2_179, %c0_180] : memref<18x18x6xf32, #tpu.memory_space<vmem>>, vector<16x16x6xf32>
    %169 = vector.shape_cast %168 : vector<16x16x6xf32> to vector<256x6xf32>
    %c48_181 = arith.constant 48 : index
    %c0_182 = arith.constant 0 : index
    %170 = vector.load %arg8[%c48_181, %c0_182] : memref<54x6xf32, #tpu.memory_space<vmem>>, vector<6x6xf32>
    %cst_183 = arith.constant dense<0.000000e+00> : vector<256x6xf32>
    %171 = tpu.matmul %169, %170, %cst_183 {dimension_numbers = #tpu.dot_dimension_numbers<[1], [0], [0], [1], [0, 0, 1, 1], [], []>} : vector<256x6xf32>, vector<6x6xf32>, vector<256x6xf32> -> vector<256x6xf32>
    %172 = arith.addf %167, %171 : vector<256x6xf32>
    %c0_184 = arith.constant 0 : index
    %c0_185 = arith.constant 0 : index
    %173 = vector.load %arg9[%c0_184, %c0_185] : memref<1x6xf32, #tpu.memory_space<vmem>>, vector<1x6xf32>
    %174 = vector.broadcast %173 : vector<1x6xf32> to vector<256x6xf32>
    %175 = arith.addf %172, %174 : vector<256x6xf32>
    %cst_186 = arith.constant 0.000000e+00 : f32
    %176 = vector.broadcast %cst_186 : f32 to vector<256x6xf32>
    %177 = arith.maximumf %175, %176 : vector<256x6xf32>
    %cst_187 = arith.constant 0xFF800000 : f32
    %178 = vector.broadcast %cst_187 : f32 to vector<18x18x4xf32>
    %c0_188 = arith.constant 0 : index
    %c0_189 = arith.constant 0 : index
    %c0_190 = arith.constant 0 : index
    %179 = vector.load %arg13[%c0_188, %c0_189, %c0_190] : memref<18x18x4xf32, #tpu.memory_space<vmem>>, vector<18x18x4xf32>
    tpu.vector_store %arg13[%c0_188, %c0_189, %c0_190], %178 {strides = array<i32>} : memref<18x18x4xf32, #tpu.memory_space<vmem>>, vector<18x18x4xf32>,
    %c1_191 = arith.constant 1 : index
    %c1_192 = arith.constant 1 : index
    %c0_193 = arith.constant 0 : index
    %180 = vector.load %arg13[%c1_191, %c1_192, %c0_193] : memref<18x18x4xf32, #tpu.memory_space<vmem>>, vector<16x16x4xf32>
    tpu.vector_store %arg13[%c1_191, %c1_192, %c0_193], %1 {strides = array<i32>} : memref<18x18x4xf32, #tpu.memory_space<vmem>>, vector<16x16x4xf32>,
    %c0_194 = arith.constant 0 : index
    %c0_195 = arith.constant 0 : index
    %c0_196 = arith.constant 0 : index
    %181 = vector.load %arg13[%c0_194, %c0_195, %c0_196] : memref<18x18x4xf32, #tpu.memory_space<vmem>>, vector<16x16x4xf32>
    %182 = arith.maximumf %1, %181 : vector<16x16x4xf32>
    %c0_197 = arith.constant 0 : index
    %c1_198 = arith.constant 1 : index
    %c0_199 = arith.constant 0 : index
    %183 = vector.load %arg13[%c0_197, %c1_198, %c0_199] : memref<18x18x4xf32, #tpu.memory_space<vmem>>, vector<16x16x4xf32>
    %184 = arith.maximumf %182, %183 : vector<16x16x4xf32>
    %c0_200 = arith.constant 0 : index
    %c2_201 = arith.constant 2 : index
    %c0_202 = arith.constant 0 : index
    %185 = vector.load %arg13[%c0_200, %c2_201, %c0_202] : memref<18x18x4xf32, #tpu.memory_space<vmem>>, vector<16x16x4xf32>
    %186 = arith.maximumf %184, %185 : vector<16x16x4xf32>
    %c1_203 = arith.constant 1 : index
    %c0_204 = arith.constant 0 : index
    %c0_205 = arith.constant 0 : index
    %187 = vector.load %arg13[%c1_203, %c0_204, %c0_205] : memref<18x18x4xf32, #tpu.memory_space<vmem>>, vector<16x16x4xf32>
    %188 = arith.maximumf %186, %187 : vector<16x16x4xf32>
    %c1_206 = arith.constant 1 : index
    %c2_207 = arith.constant 2 : index
    %c0_208 = arith.constant 0 : index
    %189 = vector.load %arg13[%c1_206, %c2_207, %c0_208] : memref<18x18x4xf32, #tpu.memory_space<vmem>>, vector<16x16x4xf32>
    %190 = arith.maximumf %188, %189 : vector<16x16x4xf32>
    %c2_209 = arith.constant 2 : index
    %c0_210 = arith.constant 0 : index
    %c0_211 = arith.constant 0 : index
    %191 = vector.load %arg13[%c2_209, %c0_210, %c0_211] : memref<18x18x4xf32, #tpu.memory_space<vmem>>, vector<16x16x4xf32>
    %192 = arith.maximumf %190, %191 : vector<16x16x4xf32>
    %c2_212 = arith.constant 2 : index
    %c1_213 = arith.constant 1 : index
    %c0_214 = arith.constant 0 : index
    %193 = vector.load %arg13[%c2_212, %c1_213, %c0_214] : memref<18x18x4xf32, #tpu.memory_space<vmem>>, vector<16x16x4xf32>
    %194 = arith.maximumf %192, %193 : vector<16x16x4xf32>
    %c2_215 = arith.constant 2 : index
    %c2_216 = arith.constant 2 : index
    %c0_217 = arith.constant 0 : index
    %195 = vector.load %arg13[%c2_215, %c2_216, %c0_217] : memref<18x18x4xf32, #tpu.memory_space<vmem>>, vector<16x16x4xf32>
    %196 = arith.maximumf %194, %195 : vector<16x16x4xf32>
    %197 = vector.shape_cast %196 : vector<16x16x4xf32> to vector<256x4xf32>
    %c0_218 = arith.constant 0 : index
    %c0_219 = arith.constant 0 : index
    %198 = vector.load %arg10[%c0_218, %c0_219] : memref<4x4xf32, #tpu.memory_space<vmem>>, vector<4x4xf32>
    %cst_220 = arith.constant dense<0.000000e+00> : vector<256x4xf32>
    %199 = tpu.matmul %197, %198, %cst_220 {dimension_numbers = #tpu.dot_dimension_numbers<[1], [0], [0], [1], [0, 0, 1, 1], [], []>} : vector<256x4xf32>, vector<4x4xf32>, vector<256x4xf32> -> vector<256x4xf32>
    %c0_221 = arith.constant 0 : index
    %c0_222 = arith.constant 0 : index
    %200 = vector.load %arg11[%c0_221, %c0_222] : memref<1x4xf32, #tpu.memory_space<vmem>>, vector<1x4xf32>
    %201 = vector.broadcast %200 : vector<1x4xf32> to vector<256x4xf32>
    %202 = arith.addf %199, %201 : vector<256x4xf32>
    %cst_223 = arith.constant 0.000000e+00 : f32
    %203 = vector.broadcast %cst_223 : f32 to vector<256x4xf32>
    %204 = arith.maximumf %202, %203 : vector<256x4xf32>
    %c0_224 = arith.constant 0 : index
    %c0_225 = arith.constant 0 : index
    %c0_226 = arith.constant 0 : index
    %205 = vector.load %arg12[%c0_224, %c0_225, %c0_226] : memref<1x256x26xf32, #tpu.memory_space<vmem>>, vector<1x256x8xf32>
    %206 = vector.shape_cast %205 : vector<1x256x8xf32> to vector<256x8xf32>
    %207 = vector.shape_cast %10 : vector<256x8xf32> to vector<1x256x8xf32>
    tpu.vector_store %arg12[%c0_224, %c0_225, %c0_226], %207 {strides = array<i32>} : memref<1x256x26xf32, #tpu.memory_space<vmem>>, vector<1x256x8xf32>,
    %c0_227 = arith.constant 0 : index
    %c0_228 = arith.constant 0 : index
    %c8_229 = arith.constant 8 : index
    %208 = vector.load %arg12[%c0_227, %c0_228, %c8_229] : memref<1x256x26xf32, #tpu.memory_space<vmem>>, vector<1x256x8xf32>
    %209 = vector.shape_cast %208 : vector<1x256x8xf32> to vector<256x8xf32>
    %210 = vector.shape_cast %67 : vector<256x8xf32> to vector<1x256x8xf32>
    tpu.vector_store %arg12[%c0_227, %c0_228, %c8_229], %210 {strides = array<i32>} : memref<1x256x26xf32, #tpu.memory_space<vmem>>, vector<1x256x8xf32>,
    %c0_230 = arith.constant 0 : index
    %c0_231 = arith.constant 0 : index
    %c16_232 = arith.constant 16 : index
    %211 = vector.load %arg12[%c0_230, %c0_231, %c16_232] : memref<1x256x26xf32, #tpu.memory_space<vmem>>, vector<1x256x6xf32>
    %212 = vector.shape_cast %211 : vector<1x256x6xf32> to vector<256x6xf32>
    %213 = vector.shape_cast %177 : vector<256x6xf32> to vector<1x256x6xf32>
    tpu.vector_store %arg12[%c0_230, %c0_231, %c16_232], %213 {strides = array<i32>} : memref<1x256x26xf32, #tpu.memory_space<vmem>>, vector<1x256x6xf32>,
    %c0_233 = arith.constant 0 : index
    %c0_234 = arith.constant 0 : index
    %c22 = arith.constant 22 : index
    %214 = vector.load %arg12[%c0_233, %c0_234, %c22] : memref<1x256x26xf32, #tpu.memory_space<vmem>>, vector<1x256x4xf32>
    %215 = vector.shape_cast %214 : vector<1x256x4xf32> to vector<256x4xf32>
    %216 = vector.shape_cast %204 : vector<256x4xf32> to vector<1x256x4xf32>
    tpu.vector_store %arg12[%c0_233, %c0_234, %c22], %216 {strides = array<i32>} : memref<1x256x26xf32, #tpu.memory_space<vmem>>, vector<1x256x4xf32>,
    return
  }
  func.func @transform_0(%arg0: i32) -> (i32, i32, i32, i32) {
    %c0_i32 = arith.constant 0 : i32
    %c0_i32_0 = arith.constant 0 : i32
    %c0_i32_1 = arith.constant 0 : i32
    %c0_i32_2 = arith.constant 0 : i32
    return %arg0, %c0_i32, %c0_i32_0, %c0_i32_1 : i32, i32, i32, i32
  }
  func.func @transform_1(%arg0: i32) -> (i32, i32) {
    %c0_i32 = arith.constant 0 : i32
    %c0_i32_0 = arith.constant 0 : i32
    %c0_i32_1 = arith.constant 0 : i32
    return %c0_i32, %c0_i32_0 : i32, i32
  }
  func.func @transform_2(%arg0: i32) -> (i32, i32) {
    %c0_i32 = arith.constant 0 : i32
    %c0_i32_0 = arith.constant 0 : i32
    %c0_i32_1 = arith.constant 0 : i32
    return %c0_i32, %c0_i32_0 : i32, i32
  }
  func.func @transform_3(%arg0: i32) -> (i32, i32) {
    %c0_i32 = arith.constant 0 : i32
    %c0_i32_0 = arith.constant 0 : i32
    %c0_i32_1 = arith.constant 0 : i32
    return %c0_i32, %c0_i32_0 : i32, i32
  }
  func.func @transform_4(%arg0: i32) -> (i32, i32) {
    %c0_i32 = arith.constant 0 : i32
    %c0_i32_0 = arith.constant 0 : i32
    %c0_i32_1 = arith.constant 0 : i32
    return %c0_i32, %c0_i32_0 : i32, i32
  }
  func.func @transform_5(%arg0: i32) -> (i32, i32) {
    %c0_i32 = arith.constant 0 : i32
    %c0_i32_0 = arith.constant 0 : i32
    %c0_i32_1 = arith.constant 0 : i32
    return %c0_i32, %c0_i32_0 : i32, i32
  }
  func.func @transform_6(%arg0: i32) -> (i32, i32) {
    %c0_i32 = arith.constant 0 : i32
    %c0_i32_0 = arith.constant 0 : i32
    %c0_i32_1 = arith.constant 0 : i32
    return %c0_i32, %c0_i32_0 : i32, i32
  }
  func.func @transform_7(%arg0: i32) -> (i32, i32) {
    %c0_i32 = arith.constant 0 : i32
    %c0_i32_0 = arith.constant 0 : i32
    %c0_i32_1 = arith.constant 0 : i32
    return %c0_i32, %c0_i32_0 : i32, i32
  }
  func.func @transform_8(%arg0: i32) -> (i32, i32) {
    %c0_i32 = arith.constant 0 : i32
    %c0_i32_0 = arith.constant 0 : i32
    %c0_i32_1 = arith.constant 0 : i32
    return %c0_i32, %c0_i32_0 : i32, i32
  }
  func.func @transform_9(%arg0: i32) -> (i32, i32) {
    %c0_i32 = arith.constant 0 : i32
    %c0_i32_0 = arith.constant 0 : i32
    %c0_i32_1 = arith.constant 0 : i32
    return %c0_i32, %c0_i32_0 : i32, i32
  }
  func.func @transform_10(%arg0: i32) -> (i32, i32) {
    %c0_i32 = arith.constant 0 : i32
    %c0_i32_0 = arith.constant 0 : i32
    %c0_i32_1 = arith.constant 0 : i32
    return %c0_i32, %c0_i32_0 : i32, i32
  }
  func.func @transform_11(%arg0: i32) -> (i32, i32, i32) {
    %c0_i32 = arith.constant 0 : i32
    %c0_i32_0 = arith.constant 0 : i32
    %c0_i32_1 = arith.constant 0 : i32
    return %arg0, %c0_i32, %c0_i32_0 : i32, i32, i32
  }
}

</mosaic_0001>

<llo_original>
// kernel: inception_v2_block.1
$region0: #{inception_v2_block.1}
  #allocation0 [shape = 'u32[]', space=smem, size = 0x4, offset = 0x4, fixed_abs, tag = 'smem constant byte address 0x4 - core index']
  #allocation1 [shape = 'u32[72,128]{1,0:T(1,128)}', space=vmem, size = 0x9000, scoped, tag = 'internal scratch']
  #allocation2 [shape = 'f32[18,18,4]{2,1,0:T(8,128)}', space=vmem, size = 0x36000, scoped, tag = 'scratch operand']
  #allocation3 [shape = 'f32[18,18,6]{2,1,0:T(8,128)}', space=vmem, size = 0x36000, scoped, tag = 'scratch operand']
  #allocation4 [shape = 'f32[18,18,4]{2,1,0:T(8,128)}', space=vmem, size = 0x36000, scoped, tag = 'scratch operand']
  #allocation5 [shape = 'f32[18,18,6]{2,1,0:T(8,128)}', space=vmem, size = 0x36000, scoped, tag = 'scratch operand']
  %s0 = inlined_call_operand.vmem [shape: f32[2,16,16,4], index: 0, kind: input, shape index: {}]
  %s1 = inlined_call_operand.vmem [shape: f32[4,18], index: 1, kind: input, shape index: {}]
  %s2 = inlined_call_operand.vmem [shape: f32[1,18], index: 2, kind: input, shape index: {}]
  %s3 = inlined_call_operand.vmem [shape: f32[54,8], index: 3, kind: input, shape index: {}]
  %s4 = inlined_call_operand.vmem [shape: f32[1,8], index: 4, kind: input, shape index: {}]
  %s5 = inlined_call_operand.vmem [shape: f32[36,6], index: 5, kind: input, shape index: {}]
  %s6 = inlined_call_operand.vmem [shape: f32[1,6], index: 6, kind: input, shape index: {}]
  %s7 = inlined_call_operand.vmem [shape: f32[54,6], index: 7, kind: input, shape index: {}]
  %s8 = inlined_call_operand.vmem [shape: f32[1,6], index: 8, kind: input, shape index: {}]
  %s9 = inlined_call_operand.vmem [shape: f32[4,4], index: 9, kind: input, shape index: {}]
  %s10 = inlined_call_operand.vmem [shape: f32[1,4], index: 10, kind: input, shape index: {}]
  %s11 = inlined_call_operand.hbm [shape: f32[2,256,26], index: 11, kind: output, shape index: {}]
  %s12 = sld [smem:[#allocation0]]
  $region77: #{inception_v2_block.1} parent=0
    _
  %s14 = ssub.s32 1, %s12
  %s15 = scalar_select 0, %s14, %s12
  $region1: #{inception_v2_block.1} parent=0
    #allocation6 [shape = 'u8[262144]{0}', space=vmem, size = 0x40000, scoped, tag = 'output window, operand 0']
    #allocation7 [shape = 's32[2]{0}', space=sflag, size = 0x8, scoped, tag = 'scoped memory for inception_v2_block.1']
    %16 = vsyncpa [#allocation7], 0
    %s17 = scalar_lea.sflag [#allocation7], 1
    %18 = vsyncpa %s17, 0
    loop: start=0, step=1, limit=4
    $region2: #{inception_v2_block.1} parent=1 // loop_pre_header
      _
    $region3: #{inception_v2_block.1} parent=1 // loop_header
      %s20 = sphi 0, %s24
      %p21 = scmp.ge.s32.totalorder %s20, 4
      %s30 = sphi 0, %s32
      %s33 = sphi 0, %s30
      %s34 = sphi 0, %s33
      %s50 = sphi 0, %s34
      %s54 = sphi 0, %s54
      %s56 = sphi 0, %s54
      %s57 = sphi 0, %s56
      %s71 = sphi 0, %s57
      %s75 = sphi 0, %s75
      %s77 = sphi 0, %s75
      %s78 = sphi 0, %s77
      %s92 = sphi 0, %s78
      %s96 = sphi 0, %s96
      %s98 = sphi 0, %s96
      %s99 = sphi 0, %s98
      %s113 = sphi 0, %s99
      %s117 = sphi 0, %s117
      %s119 = sphi 0, %s117
      %s120 = sphi 0, %s119
      %s134 = sphi 0, %s120
      %s138 = sphi 0, %s138
      %s140 = sphi 0, %s138
      %s141 = sphi 0, %s140
      %s155 = sphi 0, %s141
      %s159 = sphi 0, %s159
      %s161 = sphi 0, %s159
      %s162 = sphi 0, %s161
      %s176 = sphi 0, %s162
      %s180 = sphi 0, %s180
      %s182 = sphi 0, %s180
      %s183 = sphi 0, %s182
      %s197 = sphi 0, %s183
      %s201 = sphi 0, %s201
      %s203 = sphi 0, %s201
      %s204 = sphi 0, %s203
      %s218 = sphi 0, %s204
      %s222 = sphi 0, %s222
      %s224 = sphi 0, %s222
      %s225 = sphi 0, %s224
      %s239 = sphi 0, %s225
      %s243 = sphi 0, %s243
      %s245 = sphi 0, %s243
      %s246 = sphi 0, %s245
      %s260 = sphi 0, %s246
      %s266 = sphi 0, %s268
      %s269 = sphi 0, %s266
      %s270 = sphi 0, %s269
      %s286 = sphi 0, %s270
    $region4: #{inception_v2_block.1} parent=1 // loop_header_branch
      %23 = sbr.rel (%p21) target = $region8
    $region5: #{inception_v2_block.1} parent=1 // loop_body
      %s25 = ssub.s32 %s20, 1
      %s26 = ssub.s32 %s20, 2
      %s27 = sadd.s32 %s20, 1
      %s28 = ssub.s32 %s20, %s27
      %p29 = scmp.eq.s32.totalorder %s28, 0
      %s31 = sadd.s32 %s30, 1
      %s32 = scalar_select %p29, %s30, %s31
      %p35 = pneg %p29
      %p36 = scmp.eq.s32.totalorder %s20, 1
      %p37 = por %p35, %p36
      %p38 = scmp.ne.s32.totalorder %s30, %s33
      %p39 = scmp.eq.s32.totalorder %s20, 0
      %p40 = por %p38, %p39
      %p41 = scmp.ne.s32.totalorder %s30, %s33
      %p42 = scmp.eq.s32.totalorder %s25, 1
      %p43 = por %p41, %p42
      %p44 = scmp.ne.s32.totalorder %s33, %s34
      %p45 = scmp.eq.s32.totalorder %s25, 0
      %p46 = por %p44, %p45
      %p47 = scmp.ne.s32.totalorder %s33, %s34
      %p48 = scmp.eq.s32.totalorder %s26, 1
      %p49 = por %p47, %p48
      %p51 = scmp.ne.s32.totalorder %s34, %s50
      %p52 = scmp.eq.s32.totalorder %s26, 0
      %p53 = por %p51, %p52
      %s55 = sadd.s32 %s54, 1
      %p58 = scmp.eq.s32.totalorder %s20, 1
      %p59 = scmp.ne.s32.totalorder %s54, %s56
      %p60 = scmp.eq.s32.totalorder %s20, 0
      %p61 = por %p59, %p60
      %p62 = scmp.ne.s32.totalorder %s54, %s56
      %p63 = scmp.eq.s32.totalorder %s25, 1
      %p64 = por %p62, %p63
      %p65 = scmp.ne.s32.totalorder %s56, %s57
      %p66 = scmp.eq.s32.totalorder %s25, 0
      %p67 = por %p65, %p66
      %p68 = scmp.ne.s32.totalorder %s56, %s57
      %p69 = scmp.eq.s32.totalorder %s26, 1
      %p70 = por %p68, %p69
      %p72 = scmp.ne.s32.totalorder %s57, %s71
      %p73 = scmp.eq.s32.totalorder %s26, 0
      %p74 = por %p72, %p73
      %s76 = sadd.s32 %s75, 1
      %p79 = scmp.eq.s32.totalorder %s20, 1
      %p80 = scmp.ne.s32.totalorder %s75, %s77
      %p81 = scmp.eq.s32.totalorder %s20, 0
      %p82 = por %p80, %p81
      %p83 = scmp.ne.s32.totalorder %s75, %s77
      %p84 = scmp.eq.s32.totalorder %s25, 1
      %p85 = por %p83, %p84
      %p86 = scmp.ne.s32.totalorder %s77, %s78
      %p87 = scmp.eq.s32.totalorder %s25, 0
      %p88 = por %p86, %p87
      %p89 = scmp.ne.s32.totalorder %s77, %s78
      %p90 = scmp.eq.s32.totalorder %s26, 1
      %p91 = por %p89, %p90
      %p93 = scmp.ne.s32.totalorder %s78, %s92
      %p94 = scmp.eq.s32.totalorder %s26, 0
      %p95 = por %p93, %p94
      %s97 = sadd.s32 %s96, 1
      %p100 = scmp.eq.s32.totalorder %s20, 1
      %p101 = scmp.ne.s32.totalorder %s96, %s98
      %p102 = scmp.eq.s32.totalorder %s20, 0
      %p103 = por %p101, %p102
      %p104 = scmp.ne.s32.totalorder %s96, %s98
      %p105 = scmp.eq.s32.totalorder %s25, 1
      %p106 = por %p104, %p105
      %p107 = scmp.ne.s32.totalorder %s98, %s99
      %p108 = scmp.eq.s32.totalorder %s25, 0
      %p109 = por %p107, %p108
      %p110 = scmp.ne.s32.totalorder %s98, %s99
      %p111 = scmp.eq.s32.totalorder %s26, 1
      %p112 = por %p110, %p111
      %p114 = scmp.ne.s32.totalorder %s99, %s113
      %p115 = scmp.eq.s32.totalorder %s26, 0
      %p116 = por %p114, %p115
      %s118 = sadd.s32 %s117, 1
      %p121 = scmp.eq.s32.totalorder %s20, 1
      %p122 = scmp.ne.s32.totalorder %s117, %s119
      %p123 = scmp.eq.s32.totalorder %s20, 0
      %p124 = por %p122, %p123
      %p125 = scmp.ne.s32.totalorder %s117, %s119
      %p126 = scmp.eq.s32.totalorder %s25, 1
      %p127 = por %p125, %p126
      %p128 = scmp.ne.s32.totalorder %s119, %s120
      %p129 = scmp.eq.s32.totalorder %s25, 0
      %p130 = por %p128, %p129
      %p131 = scmp.ne.s32.totalorder %s119, %s120
      %p132 = scmp.eq.s32.totalorder %s26, 1
      %p133 = por %p131, %p132
      %p135 = scmp.ne.s32.totalorder %s120, %s134
      %p136 = scmp.eq.s32.totalorder %s26, 0
      %p137 = por %p135, %p136
      %s139 = sadd.s32 %s138, 1
      %p142 = scmp.eq.s32.totalorder %s20, 1
      %p143 = scmp.ne.s32.totalorder %s138, %s140
      %p144 = scmp.eq.s32.totalorder %s20, 0
      %p145 = por %p143, %p144
      %p146 = scmp.ne.s32.totalorder %s138, %s140
      %p147 = scmp.eq.s32.totalorder %s25, 1
      %p148 = por %p146, %p147
      %p149 = scmp.ne.s32.totalorder %s140, %s141
      %p150 = scmp.eq.s32.totalorder %s25, 0
      %p151 = por %p149, %p150
      %p152 = scmp.ne.s32.totalorder %s140, %s141
      %p153 = scmp.eq.s32.totalorder %s26, 1
      %p154 = por %p152, %p153
      %p156 = scmp.ne.s32.totalorder %s141, %s155
      %p157 = scmp.eq.s32.totalorder %s26, 0
      %p158 = por %p156, %p157
      %s160 = sadd.s32 %s159, 1
      %p163 = scmp.eq.s32.totalorder %s20, 1
      %p164 = scmp.ne.s32.totalorder %s159, %s161
      %p165 = scmp.eq.s32.totalorder %s20, 0
      %p166 = por %p164, %p165
      %p167 = scmp.ne.s32.totalorder %s159, %s161
      %p168 = scmp.eq.s32.totalorder %s25, 1
      %p169 = por %p167, %p168
      %p170 = scmp.ne.s32.totalorder %s161, %s162
      %p171 = scmp.eq.s32.totalorder %s25, 0
      %p172 = por %p170, %p171
      %p173 = scmp.ne.s32.totalorder %s161, %s162
      %p174 = scmp.eq.s32.totalorder %s26, 1
      %p175 = por %p173, %p174
      %p177 = scmp.ne.s32.totalorder %s162, %s176
      %p178 = scmp.eq.s32.totalorder %s26, 0
      %p179 = por %p177, %p178
      %s181 = sadd.s32 %s180, 1
      %p184 = scmp.eq.s32.totalorder %s20, 1
      %p185 = scmp.ne.s32.totalorder %s180, %s182
      %p186 = scmp.eq.s32.totalorder %s20, 0
      %p187 = por %p185, %p186
      %p188 = scmp.ne.s32.totalorder %s180, %s182
      %p189 = scmp.eq.s32.totalorder %s25, 1
      %p190 = por %p188, %p189
      %p191 = scmp.ne.s32.totalorder %s182, %s183
      %p192 = scmp.eq.s32.totalorder %s25, 0
      %p193 = por %p191, %p192
      %p194 = scmp.ne.s32.totalorder %s182, %s183
      %p195 = scmp.eq.s32.totalorder %s26, 1
      %p196 = por %p194, %p195
      %p198 = scmp.ne.s32.totalorder %s183, %s197
      %p199 = scmp.eq.s32.totalorder %s26, 0
      %p200 = por %p198, %p199
      %s202 = sadd.s32 %s201, 1
      %p205 = scmp.eq.s32.totalorder %s20, 1
      %p206 = scmp.ne.s32.totalorder %s201, %s203
      %p207 = scmp.eq.s32.totalorder %s20, 0
      %p208 = por %p206, %p207
      %p209 = scmp.ne.s32.totalorder %s201, %s203
      %p210 = scmp.eq.s32.totalorder %s25, 1
      %p211 = por %p209, %p210
      %p212 = scmp.ne.s32.totalorder %s203, %s204
      %p213 = scmp.eq.s32.totalorder %s25, 0
      %p214 = por %p212, %p213
      %p215 = scmp.ne.s32.totalorder %s203, %s204
      %p216 = scmp.eq.s32.totalorder %s26, 1
      %p217 = por %p215, %p216
      %p219 = scmp.ne.s32.totalorder %s204, %s218
      %p220 = scmp.eq.s32.totalorder %s26, 0
      %p221 = por %p219, %p220
      %s223 = sadd.s32 %s222, 1
      %p226 = scmp.eq.s32.totalorder %s20, 1
      %p227 = scmp.ne.s32.totalorder %s222, %s224
      %p228 = scmp.eq.s32.totalorder %s20, 0
      %p229 = por %p227, %p228
      %p230 = scmp.ne.s32.totalorder %s222, %s224
      %p231 = scmp.eq.s32.totalorder %s25, 1
      %p232 = por %p230, %p231
      %p233 = scmp.ne.s32.totalorder %s224, %s225
      %p234 = scmp.eq.s32.totalorder %s25, 0
      %p235 = por %p233, %p234
      %p236 = scmp.ne.s32.totalorder %s224, %s225
      %p237 = scmp.eq.s32.totalorder %s26, 1
      %p238 = por %p236, %p237
      %p240 = scmp.ne.s32.totalorder %s225, %s239
      %p241 = scmp.eq.s32.totalorder %s26, 0
      %p242 = por %p240, %p241
      %s244 = sadd.s32 %s243, 1
      %p247 = scmp.eq.s32.totalorder %s20, 1
      %p248 = scmp.ne.s32.totalorder %s243, %s245
      %p249 = scmp.eq.s32.totalorder %s20, 0
      %p250 = por %p248, %p249
      %p251 = scmp.ne.s32.totalorder %s243, %s245
      %p252 = scmp.eq.s32.totalorder %s25, 1
      %p253 = por %p251, %p252
      %p254 = scmp.ne.s32.totalorder %s245, %s246
      %p255 = scmp.eq.s32.totalorder %s25, 0
      %p256 = por %p254, %p255
      %p257 = scmp.ne.s32.totalorder %s245, %s246
      %p258 = scmp.eq.s32.totalorder %s26, 1
      %p259 = por %p257, %p258
      %p261 = scmp.ne.s32.totalorder %s246, %s260
      %p262 = scmp.eq.s32.totalorder %s26, 0
      %p263 = por %p261, %p262
      %s264 = ssub.s32 %s20, %s27
      %p265 = scmp.eq.s32.totalorder %s264, 0
      %s267 = sadd.s32 %s266, 1
      %s268 = scalar_select %p265, %s266, %s267
      %p271 = pneg %p265
      %p272 = scmp.eq.s32.totalorder %s20, 1
      %p273 = por %p271, %p272
      %p274 = scmp.ne.s32.totalorder %s266, %s269
      %p275 = scmp.eq.s32.totalorder %s20, 0
      %p276 = por %p274, %p275
      %p277 = scmp.ne.s32.totalorder %s266, %s269
      %p278 = scmp.eq.s32.totalorder %s25, 1
      %p279 = por %p277, %p278
      %p280 = scmp.ne.s32.totalorder %s269, %s270
      %p281 = scmp.eq.s32.totalorder %s25, 0
      %p282 = por %p280, %p281
      %p283 = scmp.ne.s32.totalorder %s269, %s270
      %p284 = scmp.eq.s32.totalorder %s26, 1
      %p285 = por %p283, %p284
      %p287 = scmp.ne.s32.totalorder %s270, %s286
      %p288 = scmp.eq.s32.totalorder %s26, 0
      %p289 = por %p287, %p288
      %p290 = scmp.le.s32.totalorder 1, %s20
      %p291 = scmp.lt.s32.totalorder %s20, 3
      %p292 = pnand %p290, %p291
      %p293 = pneg %p292
      // Predicated region
      $region9: #{inception_v2_block.1} parent=5 // pred_check
        _
      $region10: #{inception_v2_block.1} parent=5 // pred_check_branch
        %295 = sbr.rel (%p292) target = $region12
      $region11: #{inception_v2_block.1} parent=5 // pred_region
        %s296 = ssub.s32 %s20, 1
        // Predicated region
        $region13: #{inception_v2_block.1} parent=11 // pred_check
          %p297 = pneg %p67
        $region14: #{inception_v2_block.1} parent=11 // pred_check_branch
          %299 = sbr.rel (%p297) target = $region16
        $region15: #{inception_v2_block.1} parent=11 // pred_region
          _
        $region16: #{inception_v2_block.1} parent=11 // pred_fallthru
          _
        // Predicated region
        $region17: #{inception_v2_block.1} parent=11 // pred_check
          %p300 = pneg %p88
        $region18: #{inception_v2_block.1} parent=11 // pred_check_branch
          %302 = sbr.rel (%p300) target = $region20
        $region19: #{inception_v2_block.1} parent=11 // pred_region
          _
        $region20: #{inception_v2_block.1} parent=11 // pred_fallthru
          _
        // Predicated region
        $region21: #{inception_v2_block.1} parent=11 // pred_check
          %p303 = pneg %p109
        $region22: #{inception_v2_block.1} parent=11 // pred_check_branch
          %305 = sbr.rel (%p303) target = $region24
        $region23: #{inception_v2_block.1} parent=11 // pred_region
          _
        $region24: #{inception_v2_block.1} parent=11 // pred_fallthru
          _
        // Predicated region
        $region25: #{inception_v2_block.1} parent=11 // pred_check
          %p306 = pneg %p130
        $region26: #{inception_v2_block.1} parent=11 // pred_check_branch
          %308 = sbr.rel (%p306) target = $region28
        $region27: #{inception_v2_block.1} parent=11 // pred_region
          _
        $region28: #{inception_v2_block.1} parent=11 // pred_fallthru
          _
        // Predicated region
        $region29: #{inception_v2_block.1} parent=11 // pred_check
          %p309 = pneg %p151
        $region30: #{inception_v2_block.1} parent=11 // pred_check_branch
          %311 = sbr.rel (%p309) target = $region32
        $region31: #{inception_v2_block.1} parent=11 // pred_region
          _
        $region32: #{inception_v2_block.1} parent=11 // pred_fallthru
          _
        // Predicated region
        $region33: #{inception_v2_block.1} parent=11 // pred_check
          %p312 = pneg %p172
        $region34: #{inception_v2_block.1} parent=11 // pred_check_branch
          %314 = sbr.rel (%p312) target = $region36
        $region35: #{inception_v2_block.1} parent=11 // pred_region
          _
        $region36: #{inception_v2_block.1} parent=11 // pred_fallthru
          _
        // Predicated region
        $region37: #{inception_v2_block.1} parent=11 // pred_check
          %p315 = pneg %p193
        $region38: #{inception_v2_block.1} parent=11 // pred_check_branch
          %317 = sbr.rel (%p315) target = $region40
        $region39: #{inception_v2_block.1} parent=11 // pred_region
          _
        $region40: #{inception_v2_block.1} parent=11 // pred_fallthru
          _
        // Predicated region
        $region41: #{inception_v2_block.1} parent=11 // pred_check
          %p318 = pneg %p214
        $region42: #{inception_v2_block.1} parent=11 // pred_check_branch
          %320 = sbr.rel (%p318) target = $region44
        $region43: #{inception_v2_block.1} parent=11 // pred_region
          _
        $region44: #{inception_v2_block.1} parent=11 // pred_fallthru
          _
        // Predicated region
        $region45: #{inception_v2_block.1} parent=11 // pred_check
          %p321 = pneg %p235
        $region46: #{inception_v2_block.1} parent=11 // pred_check_branch
          %323 = sbr.rel (%p321) target = $region48
        $region47: #{inception_v2_block.1} parent=11 // pred_region
          _
        $region48: #{inception_v2_block.1} parent=11 // pred_fallthru
          _
        // Predicated region
        $region49: #{inception_v2_block.1} parent=11 // pred_check
          %p324 = pneg %p256
        $region50: #{inception_v2_block.1} parent=11 // pred_check_branch
          %326 = sbr.rel (%p324) target = $region52
        $region51: #{inception_v2_block.1} parent=11 // pred_region
          _
        $region52: #{inception_v2_block.1} parent=11 // pred_fallthru
          _
      $region12: #{inception_v2_block.1} parent=5 // pred_fallthru
        _
      %p327 = scmp.lt.s32.totalorder %s20, 2
      // Predicated region
      $region53: #{inception_v2_block.1} parent=5 // pred_check
        %p328 = pneg %p327
      $region54: #{inception_v2_block.1} parent=5 // pred_check_branch
        %330 = sbr.rel (%p328) target = $region56
      $region55: #{inception_v2_block.1} parent=5 // pred_region
        // Predicated region
        $region57: #{inception_v2_block.1} parent=55 // pred_check
          %p331 = pneg %p40
        $region58: #{inception_v2_block.1} parent=55 // pred_check_branch
          %333 = sbr.rel (%p331) target = $region60
        $region59: #{inception_v2_block.1} parent=55 // pred_region
          %p334 = scmp.lt.s32.totalorder %s20, 1
          %s335 = scalar_select %p334, %s20, 1
          %s336 = smul.addr %s335, 32
          %s337 = smul.addr %s336, 8
          %s338 = scalar_lea.vmem %s0, %s337
        $region60: #{inception_v2_block.1} parent=55 // pred_fallthru
          _
      $region56: #{inception_v2_block.1} parent=5 // pred_fallthru
        _
      %p339 = scmp.le.s32.totalorder 1, %s20
      %p340 = scmp.lt.s32.totalorder %s20, 3
      %p341 = pnand %p339, %p340
      %p342 = pneg %p341
      // Predicated region
      $region61: #{inception_v2_block.1} parent=5 // pred_check
        _
      $region62: #{inception_v2_block.1} parent=5 // pred_check_branch
        %344 = sbr.rel (%p341) target = $region64
      $region63: #{inception_v2_block.1} parent=5 // pred_region
        %s345 = ssub.s32 %s20, 1
        %p346 = scmp.lt.s32.totalorder %s25, 1
        %s347 = scalar_select %p346, %s25, 1
        %s348 = smul.addr %s347, 32
        %s349 = smul.addr %s348, 8
        %s350 = scalar_lea.vmem %s0, %s349
        %p351 = pneg %p46
        %p352 = pneg %p43
        %p353 = pneg %p67
        %p354 = pneg %p64
        %p355 = pneg %p88
        %p356 = pneg %p85
        %p357 = pneg %p109
        %p358 = pneg %p106
        %p359 = pneg %p130
        %p360 = pneg %p127
        %p361 = pneg %p151
        %p362 = pneg %p148
        %p363 = pneg %p172
        %p364 = pneg %p169
        %p365 = pneg %p193
        %p366 = pneg %p190
        %p367 = pneg %p214
        %p368 = pneg %p211
        %p369 = pneg %p235
        %p370 = pneg %p232
        %p371 = pneg %p256
        %p372 = pneg %p253
        %p373 = pneg %p282
        %p374 = pneg %p279
        %s375 = sand.u32 %s269, 1
        %s376 = scalar_lea.sflag [#allocation7], %s375
        %s377 = sand.u32 %s269, 1
        %s378 = smul.addr %s377, 256
        %s379 = scalar_lea.vmem [#allocation6], %s378
        %p380 = scmp.lt.s32.totalorder %s25, 1
        %s381 = scalar_select %p380, %s25, 1
        %s382 = smul.addr %s381, 32
        %s383 = smul.addr %s382, 8
        %s384 = scalar_lea.vmem %s0, %s383
        %v385 = vld [vmem:[%s384] sm:$0xff]
        %v386 = vld [vmem:[%s384 + $0x8] sm:$0xff]
        %v387 = vld [vmem:[%s384 + $0x10] sm:$0xff]
        %v388 = vld [vmem:[%s384 + $0x18] sm:$0xff]
        %v389 = vld [vmem:[%s384 + $0x20] sm:$0xff]
        %v390 = vld [vmem:[%s384 + $0x28] sm:$0xff]
        %v391 = vld [vmem:[%s384 + $0x30] sm:$0xff]
        %v392 = vld [vmem:[%s384 + $0x38] sm:$0xff]
        %v393 = vld [vmem:[%s384 + $0x40] sm:$0xff]
        %v394 = vld [vmem:[%s384 + $0x48] sm:$0xff]
        %v395 = vld [vmem:[%s384 + $0x50] sm:$0xff]
        %v396 = vld [vmem:[%s384 + $0x58] sm:$0xff]
        %v397 = vld [vmem:[%s384 + $0x60] sm:$0xff]
        %v398 = vld [vmem:[%s384 + $0x68] sm:$0xff]
        %v399 = vld [vmem:[%s384 + $0x70] sm:$0xff]
        %v400 = vld [vmem:[%s384 + $0x78] sm:$0xff]
        %v401 = vld [vmem:[%s384 + $0x80] sm:$0xff]
        %v402 = vld [vmem:[%s384 + $0x88] sm:$0xff]
        %v403 = vld [vmem:[%s384 + $0x90] sm:$0xff]
        %v404 = vld [vmem:[%s384 + $0x98] sm:$0xff]
        %v405 = vld [vmem:[%s384 + $0xa0] sm:$0xff]
        %v406 = vld [vmem:[%s384 + $0xa8] sm:$0xff]
        %v407 = vld [vmem:[%s384 + $0xb0] sm:$0xff]
        %v408 = vld [vmem:[%s384 + $0xb8] sm:$0xff]
        %v409 = vld [vmem:[%s384 + $0xc0] sm:$0xff]
        %v410 = vld [vmem:[%s384 + $0xc8] sm:$0xff]
        %v411 = vld [vmem:[%s384 + $0xd0] sm:$0xff]
        %v412 = vld [vmem:[%s384 + $0xd8] sm:$0xff]
        %v413 = vld [vmem:[%s384 + $0xe0] sm:$0xff]
        %v414 = vld [vmem:[%s384 + $0xe8] sm:$0xff]
        %v415 = vld [vmem:[%s384 + $0xf0] sm:$0xff]
        %v416 = vld [vmem:[%s384 + $0xf8] sm:$0xff]
        %v417 = vld [vmem:[%s1] sm:$0xf]
        %v418 = vld [vmem:[%s2] sm:$0x1]
        %v420 = vperm.slane %v418, 0
        %vm422 = vcmask 31744
        %v424 = vsel %vm422, %v385, 0
        %v427 = vsel %vm422, %v386, 0
        %v430 = vsel %vm422, %v387, 0
        %v433 = vsel %vm422, %v388, 0
        %v436 = vsel %vm422, %v389, 0
        %v439 = vsel %vm422, %v390, 0
        %v442 = vsel %vm422, %v391, 0
        %v445 = vsel %vm422, %v392, 0
        %v448 = vsel %vm422, %v393, 0
        %v451 = vsel %vm422, %v394, 0
        %v454 = vsel %vm422, %v395, 0
        %v457 = vsel %vm422, %v396, 0
        %v460 = vsel %vm422, %v397, 0
        %v463 = vsel %vm422, %v398, 0
        %v466 = vsel %vm422, %v399, 0
        %v469 = vsel %vm422, %v400, 0
        %v472 = vsel %vm422, %v401, 0
        %v475 = vsel %vm422, %v402, 0
        %v478 = vsel %vm422, %v403, 0
        %v481 = vsel %vm422, %v404, 0
        %v484 = vsel %vm422, %v405, 0
        %v487 = vsel %vm422, %v406, 0
        %v490 = vsel %vm422, %v407, 0
        %v493 = vsel %vm422, %v408, 0
        %v496 = vsel %vm422, %v409, 0
        %v499 = vsel %vm422, %v410, 0
        %v502 = vsel %vm422, %v411, 0
        %v505 = vsel %vm422, %v412, 0
        %v508 = vsel %vm422, %v413, 0
        %v511 = vsel %vm422, %v414, 0
        %v514 = vsel %vm422, %v415, 0
        %v517 = vsel %vm422, %v416, 0
        %vm519 = vcmask 1043456
        %v521 = vsel %vm519, %v417, 0
        %523 = vmatpush.msra.mxu0 0.0
        %524 = vmatpush.msra.mxu0 0.0
        %525 = vmatpush.msra.mxu0 0.0
        %526 = vmatpush.msra.mxu0 0.0
        %527 = vmatpush.msra.mxu0 0.0
        %528 = vmatpush.msra.mxu0 0.0
        %529 = vmatpush.msra.mxu0 0.0
        %530 = vmatpush.msra.mxu0 0.0
        %531 = vmatpush.msra.mxu0 0.0
        %532 = vmatpush.msra.mxu0 0.0
        %533 = vmatpush.msra.mxu0 0.0
        %534 = vmatpush.msra.mxu0 0.0
        %535 = vmatpush.msra.mxu0 0.0
        %536 = vmatpush.msra.mxu0 0.0
        %537 = vmatpush.msra.mxu0 0.0
        %538 = vmatpush.msra.mxu0 %v521
        %539 = vmatmul.f32.gmra.mxu0 %v424
        %v540 = vpop.f32.mrf.mxu0
        %v541 = vadd.f32 %v420, %v540
        %542 = vmatmul.f32.gmra.mxu0 %v427
        %v543 = vpop.f32.mrf.mxu0
        %v544 = vadd.f32 %v420, %v543
        %545 = vmatmul.f32.gmra.mxu0 %v430
        %v546 = vpop.f32.mrf.mxu0
        %v547 = vadd.f32 %v420, %v546
        %548 = vmatmul.f32.gmra.mxu0 %v433
        %v549 = vpop.f32.mrf.mxu0
        %v550 = vadd.f32 %v420, %v549
        %551 = vmatmul.f32.gmra.mxu0 %v436
        %v552 = vpop.f32.mrf.mxu0
        %v553 = vadd.f32 %v420, %v552
        %554 = vmatmul.f32.gmra.mxu0 %v439
        %v555 = vpop.f32.mrf.mxu0
        %v556 = vadd.f32 %v420, %v555
        %557 = vmatmul.f32.gmra.mxu0 %v442
        %v558 = vpop.f32.mrf.mxu0
        %v559 = vadd.f32 %v420, %v558
        %560 = vmatmul.f32.gmra.mxu0 %v445
        %v561 = vpop.f32.mrf.mxu0
        %v562 = vadd.f32 %v420, %v561
        %563 = vmatmul.f32.gmra.mxu0 %v448
        %v564 = vpop.f32.mrf.mxu0
        %v565 = vadd.f32 %v420, %v564
        %566 = vmatmul.f32.gmra.mxu0 %v451
        %v567 = vpop.f32.mrf.mxu0
        %v568 = vadd.f32 %v420, %v567
        %569 = vmatmul.f32.gmra.mxu0 %v454
        %v570 = vpop.f32.mrf.mxu0
        %v571 = vadd.f32 %v420, %v570
        %572 = vmatmul.f32.gmra.mxu0 %v457
        %v573 = vpop.f32.mrf.mxu0
        %v574 = vadd.f32 %v420, %v573
        %575 = vmatmul.f32.gmra.mxu0 %v460
        %v576 = vpop.f32.mrf.mxu0
        %v577 = vadd.f32 %v420, %v576
        %578 = vmatmul.f32.gmra.mxu0 %v463
        %v579 = vpop.f32.mrf.mxu0
        %v580 = vadd.f32 %v420, %v579
        %581 = vmatmul.f32.gmra.mxu0 %v466
        %v582 = vpop.f32.mrf.mxu0
        %v583 = vadd.f32 %v420, %v582
        %584 = vmatmul.f32.gmra.mxu0 %v469
        %v585 = vpop.f32.mrf.mxu0
        %v586 = vadd.f32 %v420, %v585
        %587 = vmatmul.f32.gmra.mxu0 %v472
        %v588 = vpop.f32.mrf.mxu0
        %v589 = vadd.f32 %v420, %v588
        %590 = vmatmul.f32.gmra.mxu0 %v475
        %v591 = vpop.f32.mrf.mxu0
        %v592 = vadd.f32 %v420, %v591
        %593 = vmatmul.f32.gmra.mxu0 %v478
        %v594 = vpop.f32.mrf.mxu0
        %v595 = vadd.f32 %v420, %v594
        %596 = vmatmul.f32.gmra.mxu0 %v481
        %v597 = vpop.f32.mrf.mxu0
        %v598 = vadd.f32 %v420, %v597
        %599 = vmatmul.f32.gmra.mxu0 %v484
        %v600 = vpop.f32.mrf.mxu0
        %v601 = vadd.f32 %v420, %v600
        %602 = vmatmul.f32.gmra.mxu0 %v487
        %v603 = vpop.f32.mrf.mxu0
        %v604 = vadd.f32 %v420, %v603
        %605 = vmatmul.f32.gmra.mxu0 %v490
        %v606 = vpop.f32.mrf.mxu0
        %v607 = vadd.f32 %v420, %v606
        %608 = vmatmul.f32.gmra.mxu0 %v493
        %v609 = vpop.f32.mrf.mxu0
        %v610 = vadd.f32 %v420, %v609
        %611 = vmatmul.f32.gmra.mxu0 %v496
        %v612 = vpop.f32.mrf.mxu0
        %v613 = vadd.f32 %v420, %v612
        %614 = vmatmul.f32.gmra.mxu0 %v499
        %v615 = vpop.f32.mrf.mxu0
        %v616 = vadd.f32 %v420, %v615
        %617 = vmatmul.f32.gmra.mxu0 %v502
        %v618 = vpop.f32.mrf.mxu0
        %v619 = vadd.f32 %v420, %v618
        %620 = vmatmul.f32.gmra.mxu0 %v505
        %v621 = vpop.f32.mrf.mxu0
        %v622 = vadd.f32 %v420, %v621
        %623 = vmatmul.f32.gmra.mxu0 %v508
        %v624 = vpop.f32.mrf.mxu0
        %v625 = vadd.f32 %v420, %v624
        %626 = vmatmul.f32.gmra.mxu0 %v511
        %v627 = vpop.f32.mrf.mxu0
        %v628 = vadd.f32 %v420, %v627
        %629 = vmatmul.f32.gmra.mxu0 %v514
        %v630 = vpop.f32.mrf.mxu0
        %v631 = vadd.f32 %v420, %v630
        %632 = vmatmul.f32.gmra.mxu0 %v517
        %v633 = vpop.f32.mrf.mxu0
        %v634 = vadd.f32 %v420, %v633
        %635 = vdwg.mxu0
        %v636 = vmax.f32 %v541, 0.0
        %v637 = vmax.f32 %v544, 0.0
        %v638 = vmax.f32 %v547, 0.0
        %v639 = vmax.f32 %v550, 0.0
        %v640 = vmax.f32 %v553, 0.0
        %v641 = vmax.f32 %v556, 0.0
        %v642 = vmax.f32 %v559, 0.0
        %v643 = vmax.f32 %v562, 0.0
        %v644 = vmax.f32 %v565, 0.0
        %v645 = vmax.f32 %v568, 0.0
        %v646 = vmax.f32 %v571, 0.0
        %v647 = vmax.f32 %v574, 0.0
        %v648 = vmax.f32 %v577, 0.0
        %v649 = vmax.f32 %v580, 0.0
        %v650 = vmax.f32 %v583, 0.0
        %v651 = vmax.f32 %v586, 0.0
        %v652 = vmax.f32 %v589, 0.0
        %v653 = vmax.f32 %v592, 0.0
        %v654 = vmax.f32 %v595, 0.0
        %v655 = vmax.f32 %v598, 0.0
        %v656 = vmax.f32 %v601, 0.0
        %v657 = vmax.f32 %v604, 0.0
        %v658 = vmax.f32 %v607, 0.0
        %v659 = vmax.f32 %v610, 0.0
        %v660 = vmax.f32 %v613, 0.0
        %v661 = vmax.f32 %v616, 0.0
        %v662 = vmax.f32 %v619, 0.0
        %v663 = vmax.f32 %v622, 0.0
        %v664 = vmax.f32 %v625, 0.0
        %v665 = vmax.f32 %v628, 0.0
        %v666 = vmax.f32 %v631, 0.0
        %v667 = vmax.f32 %v634, 0.0
        %vm668 = vcmask 48128
        %669 = vst.msk [vmem:[#allocation3] sm:$0xff] %vm668, 0.0
        %670 = vst.msk [vmem:[#allocation3 + $0x8] sm:$0xff] %vm668, 0.0
        %vm671 = vcmask 41984
        %672 = vst.msk [vmem:[#allocation3 + $0x10] sm:$0x3] %vm671, 0.0
        %673 = vst.msk [vmem:[#allocation3 + $0x18] sm:$0xff] %vm668, 0.0
        %674 = vst.msk [vmem:[#allocation3 + $0x20] sm:$0xff] %vm668, 0.0
        %675 = vst.msk [vmem:[#allocation3 + $0x28] sm:$0x3] %vm671, 0.0
        %676 = vst.msk [vmem:[#allocation3 + $0x30] sm:$0xff] %vm668, 0.0
        %677 = vst.msk [vmem:[#allocation3 + $0x38] sm:$0xff] %vm668, 0.0
        %678 = vst.msk [vmem:[#allocation3 + $0x40] sm:$0x3] %vm671, 0.0
        %679 = vst.msk [vmem:[#allocation3 + $0x48] sm:$0xff] %vm668, 0.0
        %680 = vst.msk [vmem:[#allocation3 + $0x50] sm:$0xff] %vm668, 0.0
        %681 = vst.msk [vmem:[#allocation3 + $0x58] sm:$0x3] %vm671, 0.0
        %682 = vst.msk [vmem:[#allocation3 + $0x60] sm:$0xff] %vm668, 0.0
        %683 = vst.msk [vmem:[#allocation3 + $0x68] sm:$0xff] %vm668, 0.0
        %684 = vst.msk [vmem:[#allocation3 + $0x70] sm:$0x3] %vm671, 0.0
        %685 = vst.msk [vmem:[#allocation3 + $0x78] sm:$0xff] %vm668, 0.0
        %686 = vst.msk [vmem:[#allocation3 + $0x80] sm:$0xff] %vm668, 0.0
        %687 = vst.msk [vmem:[#allocation3 + $0x88] sm:$0x3] %vm671, 0.0
        %688 = vst.msk [vmem:[#allocation3 + $0x90] sm:$0xff] %vm668, 0.0
        %689 = vst.msk [vmem:[#allocation3 + $0x98] sm:$0xff] %vm668, 0.0
        %690 = vst.msk [vmem:[#allocation3 + $0xa0] sm:$0x3] %vm671, 0.0
        %691 = vst.msk [vmem:[#allocation3 + $0xa8] sm:$0xff] %vm668, 0.0
        %692 = vst.msk [vmem:[#allocation3 + $0xb0] sm:$0xff] %vm668, 0.0
        %693 = vst.msk [vmem:[#allocation3 + $0xb8] sm:$0x3] %vm671, 0.0
        %694 = vst.msk [vmem:[#allocation3 + $0xc0] sm:$0xff] %vm668, 0.0
        %695 = vst.msk [vmem:[#allocation3 + $0xc8] sm:$0xff] %vm668, 0.0
        %696 = vst.msk [vmem:[#allocation3 + $0xd0] sm:$0x3] %vm671, 0.0
        %697 = vst.msk [vmem:[#allocation3 + $0xd8] sm:$0xff] %vm668, 0.0
        %698 = vst.msk [vmem:[#allocation3 + $0xe0] sm:$0xff] %vm668, 0.0
        %699 = vst.msk [vmem:[#allocation3 + $0xe8] sm:$0x3] %vm671, 0.0
        %700 = vst.msk [vmem:[#allocation3 + $0xf0] sm:$0xff] %vm668, 0.0
        %701 = vst.msk [vmem:[#allocation3 + $0xf8] sm:$0xff] %vm668, 0.0
        %702 = vst.msk [vmem:[#allocation3 + $0x100] sm:$0x3] %vm671, 0.0
        %703 = vst.msk [vmem:[#allocation3 + $0x108] sm:$0xff] %vm668, 0.0
        %704 = vst.msk [vmem:[#allocation3 + $0x110] sm:$0xff] %vm668, 0.0
        %705 = vst.msk [vmem:[#allocation3 + $0x118] sm:$0x3] %vm671, 0.0
        %706 = vst.msk [vmem:[#allocation3 + $0x120] sm:$0xff] %vm668, 0.0
        %707 = vst.msk [vmem:[#allocation3 + $0x128] sm:$0xff] %vm668, 0.0
        %708 = vst.msk [vmem:[#allocation3 + $0x130] sm:$0x3] %vm671, 0.0
        %709 = vst.msk [vmem:[#allocation3 + $0x138] sm:$0xff] %vm668, 0.0
        %710 = vst.msk [vmem:[#allocation3 + $0x140] sm:$0xff] %vm668, 0.0
        %711 = vst.msk [vmem:[#allocation3 + $0x148] sm:$0x3] %vm671, 0.0
        %712 = vst.msk [vmem:[#allocation3 + $0x150] sm:$0xff] %vm668, 0.0
        %713 = vst.msk [vmem:[#allocation3 + $0x158] sm:$0xff] %vm668, 0.0
        %714 = vst.msk [vmem:[#allocation3 + $0x160] sm:$0x3] %vm671, 0.0
        %715 = vst.msk [vmem:[#allocation3 + $0x168] sm:$0xff] %vm668, 0.0
        %716 = vst.msk [vmem:[#allocation3 + $0x170] sm:$0xff] %vm668, 0.0
        %717 = vst.msk [vmem:[#allocation3 + $0x178] sm:$0x3] %vm671, 0.0
        %718 = vst.msk [vmem:[#allocation3 + $0x180] sm:$0xff] %vm668, 0.0
        %719 = vst.msk [vmem:[#allocation3 + $0x188] sm:$0xff] %vm668, 0.0
        %720 = vst.msk [vmem:[#allocation3 + $0x190] sm:$0x3] %vm671, 0.0
        %721 = vst.msk [vmem:[#allocation3 + $0x198] sm:$0xff] %vm668, 0.0
        %722 = vst.msk [vmem:[#allocation3 + $0x1a0] sm:$0xff] %vm668, 0.0
        %723 = vst.msk [vmem:[#allocation3 + $0x1a8] sm:$0x3] %vm671, 0.0
        %756 = vrot.lane.b32.xlu0 %v636, 120
        %v757 = vpop.permute.xlu0 %756
        %758 = vrot.lane.b32.xlu0 %v637, 120
        %v759 = vpop.permute.xlu0 %758
        %760 = vrot.lane.b32.xlu0 %v638, 120
        %v761 = vpop.permute.xlu0 %760
        %762 = vrot.lane.b32.xlu0 %v639, 120
        %v763 = vpop.permute.xlu0 %762
        %764 = vrot.lane.b32.xlu0 %v640, 120
        %v765 = vpop.permute.xlu0 %764
        %766 = vrot.lane.b32.xlu0 %v641, 120
        %v767 = vpop.permute.xlu0 %766
        %768 = vrot.lane.b32.xlu0 %v642, 120
        %v769 = vpop.permute.xlu0 %768
        %770 = vrot.lane.b32.xlu0 %v643, 120
        %v771 = vpop.permute.xlu0 %770
        %772 = vrot.lane.b32.xlu0 %v644, 120
        %v773 = vpop.permute.xlu0 %772
        %774 = vrot.lane.b32.xlu0 %v645, 120
        %v775 = vpop.permute.xlu0 %774
        %776 = vrot.lane.b32.xlu0 %v646, 120
        %v777 = vpop.permute.xlu0 %776
        %778 = vrot.lane.b32.xlu0 %v647, 120
        %v779 = vpop.permute.xlu0 %778
        %780 = vrot.lane.b32.xlu0 %v648, 120
        %v781 = vpop.permute.xlu0 %780
        %782 = vrot.lane.b32.xlu0 %v649, 120
        %v783 = vpop.permute.xlu0 %782
        %784 = vrot.lane.b32.xlu0 %v650, 120
        %v785 = vpop.permute.xlu0 %784
        %786 = vrot.lane.b32.xlu0 %v651, 120
        %v787 = vpop.permute.xlu0 %786
        %788 = vrot.lane.b32.xlu0 %v652, 120
        %v789 = vpop.permute.xlu0 %788
        %790 = vrot.lane.b32.xlu0 %v653, 120
        %v791 = vpop.permute.xlu0 %790
        %792 = vrot.lane.b32.xlu0 %v654, 120
        %v793 = vpop.permute.xlu0 %792
        %794 = vrot.lane.b32.xlu0 %v655, 120
        %v795 = vpop.permute.xlu0 %794
        %796 = vrot.lane.b32.xlu0 %v656, 120
        %v797 = vpop.permute.xlu0 %796
        %798 = vrot.lane.b32.xlu0 %v657, 120
        %v799 = vpop.permute.xlu0 %798
        %800 = vrot.lane.b32.xlu0 %v658, 120
        %v801 = vpop.permute.xlu0 %800
        %802 = vrot.lane.b32.xlu0 %v659, 120
        %v803 = vpop.permute.xlu0 %802
        %804 = vrot.lane.b32.xlu0 %v660, 120
        %v805 = vpop.permute.xlu0 %804
        %806 = vrot.lane.b32.xlu0 %v661, 120
        %v807 = vpop.permute.xlu0 %806
        %808 = vrot.lane.b32.xlu0 %v662, 120
        %v809 = vpop.permute.xlu0 %808
        %810 = vrot.lane.b32.xlu0 %v663, 120
        %v811 = vpop.permute.xlu0 %810
        %812 = vrot.lane.b32.xlu0 %v664, 120
        %v813 = vpop.permute.xlu0 %812
        %814 = vrot.lane.b32.xlu0 %v665, 120
        %v815 = vpop.permute.xlu0 %814
        %816 = vrot.lane.b32.xlu0 %v666, 120
        %v817 = vpop.permute.xlu0 %816
        %818 = vrot.lane.b32.xlu0 %v667, 120
        %v819 = vpop.permute.xlu0 %818
        %s852 = scalar_lea.vmem [#allocation3], 24
        %853 = vst.msk [vmem:[%s852 + $0x1] sm:$0xff] %vm668, %v757
        %854 = vst.msk [vmem:[%s852 + $0x9] sm:$0xff] %vm668, %v759
        %855 = vst.msk [vmem:[%s852 + $0x19] sm:$0xff] %vm668, %v761
        %856 = vst.msk [vmem:[%s852 + $0x21] sm:$0xff] %vm668, %v763
        %857 = vst.msk [vmem:[%s852 + $0x31] sm:$0xff] %vm668, %v765
        %858 = vst.msk [vmem:[%s852 + $0x39] sm:$0xff] %vm668, %v767
        %859 = vst.msk [vmem:[%s852 + $0x49] sm:$0xff] %vm668, %v769
        %860 = vst.msk [vmem:[%s852 + $0x51] sm:$0xff] %vm668, %v771
        %861 = vst.msk [vmem:[%s852 + $0x61] sm:$0xff] %vm668, %v773
        %862 = vst.msk [vmem:[%s852 + $0x69] sm:$0xff] %vm668, %v775
        %863 = vst.msk [vmem:[%s852 + $0x79] sm:$0xff] %vm668, %v777
        %864 = vst.msk [vmem:[%s852 + $0x81] sm:$0xff] %vm668, %v779
        %865 = vst.msk [vmem:[%s852 + $0x91] sm:$0xff] %vm668, %v781
        %866 = vst.msk [vmem:[%s852 + $0x99] sm:$0xff] %vm668, %v783
        %867 = vst.msk [vmem:[%s852 + $0xa9] sm:$0xff] %vm668, %v785
        %868 = vst.msk [vmem:[%s852 + $0xb1] sm:$0xff] %vm668, %v787
        %869 = vst.msk [vmem:[%s852 + $0xc1] sm:$0xff] %vm668, %v789
        %870 = vst.msk [vmem:[%s852 + $0xc9] sm:$0xff] %vm668, %v791
        %871 = vst.msk [vmem:[%s852 + $0xd9] sm:$0xff] %vm668, %v793
        %872 = vst.msk [vmem:[%s852 + $0xe1] sm:$0xff] %vm668, %v795
        %873 = vst.msk [vmem:[%s852 + $0xf1] sm:$0xff] %vm668, %v797
        %874 = vst.msk [vmem:[%s852 + $0xf9] sm:$0xff] %vm668, %v799
        %875 = vst.msk [vmem:[%s852 + $0x109] sm:$0xff] %vm668, %v801
        %876 = vst.msk [vmem:[%s852 + $0x111] sm:$0xff] %vm668, %v803
        %877 = vst.msk [vmem:[%s852 + $0x121] sm:$0xff] %vm668, %v805
        %878 = vst.msk [vmem:[%s852 + $0x129] sm:$0xff] %vm668, %v807
        %879 = vst.msk [vmem:[%s852 + $0x139] sm:$0xff] %vm668, %v809
        %880 = vst.msk [vmem:[%s852 + $0x141] sm:$0xff] %vm668, %v811
        %881 = vst.msk [vmem:[%s852 + $0x151] sm:$0xff] %vm668, %v813
        %882 = vst.msk [vmem:[%s852 + $0x159] sm:$0xff] %vm668, %v815
        %883 = vst.msk [vmem:[%s852 + $0x169] sm:$0xff] %vm668, %v817
        %884 = vst.msk [vmem:[%s852 + $0x171] sm:$0xff] %vm668, %v819
        %v885 = vld [vmem:[#allocation3] sm:$0xff]
        %v886 = vld [vmem:[#allocation3 + $0x8] sm:$0xff]
        %v887 = vld [vmem:[#allocation3 + $0x18] sm:$0xff]
        %v888 = vld [vmem:[#allocation3 + $0x20] sm:$0xff]
        %v889 = vld [vmem:[#allocation3 + $0x30] sm:$0xff]
        %v890 = vld [vmem:[#allocation3 + $0x38] sm:$0xff]
        %v891 = vld [vmem:[#allocation3 + $0x48] sm:$0xff]
        %v892 = vld [vmem:[#allocation3 + $0x50] sm:$0xff]
        %v893 = vld [vmem:[#allocation3 + $0x60] sm:$0xff]
        %v894 = vld [vmem:[#allocation3 + $0x68] sm:$0xff]
        %v895 = vld [vmem:[#allocation3 + $0x78] sm:$0xff]
        %v896 = vld [vmem:[#allocation3 + $0x80] sm:$0xff]
        %v897 = vld [vmem:[#allocation3 + $0x90] sm:$0xff]
        %v898 = vld [vmem:[#allocation3 + $0x98] sm:$0xff]
        %v899 = vld [vmem:[#allocation3 + $0xa8] sm:$0xff]
        %v900 = vld [vmem:[#allocation3 + $0xb0] sm:$0xff]
        %v901 = vld [vmem:[#allocation3 + $0xc0] sm:$0xff]
        %v902 = vld [vmem:[#allocation3 + $0xc8] sm:$0xff]
        %v903 = vld [vmem:[#allocation3 + $0xd8] sm:$0xff]
        %v904 = vld [vmem:[#allocation3 + $0xe0] sm:$0xff]
        %v905 = vld [vmem:[#allocation3 + $0xf0] sm:$0xff]
        %v906 = vld [vmem:[#allocation3 + $0xf8] sm:$0xff]
        %v907 = vld [vmem:[#allocation3 + $0x108] sm:$0xff]
        %v908 = vld [vmem:[#allocation3 + $0x110] sm:$0xff]
        %v909 = vld [vmem:[#allocation3 + $0x120] sm:$0xff]
        %v910 = vld [vmem:[#allocation3 + $0x128] sm:$0xff]
        %v911 = vld [vmem:[#allocation3 + $0x138] sm:$0xff]
        %v912 = vld [vmem:[#allocation3 + $0x140] sm:$0xff]
        %v913 = vld [vmem:[#allocation3 + $0x150] sm:$0xff]
        %v914 = vld [vmem:[#allocation3 + $0x158] sm:$0xff]
        %v915 = vld [vmem:[#allocation3 + $0x168] sm:$0xff]
        %v916 = vld [vmem:[#allocation3 + $0x170] sm:$0xff]
        %v917 = vld [vmem:[%s3] sm:$0x3f]
        %v918 = vld [vmem:[#allocation3 + $0x1] sm:$0xff]
        %v919 = vld [vmem:[#allocation3 + $0x9] sm:$0xff]
        %v920 = vld [vmem:[#allocation3 + $0x19] sm:$0xff]
        %v921 = vld [vmem:[#allocation3 + $0x21] sm:$0xff]
        %v922 = vld [vmem:[#allocation3 + $0x31] sm:$0xff]
        %v923 = vld [vmem:[#allocation3 + $0x39] sm:$0xff]
        %v924 = vld [vmem:[#allocation3 + $0x49] sm:$0xff]
        %v925 = vld [vmem:[#allocation3 + $0x51] sm:$0xff]
        %v926 = vld [vmem:[#allocation3 + $0x61] sm:$0xff]
        %v927 = vld [vmem:[#allocation3 + $0x69] sm:$0xff]
        %v928 = vld [vmem:[#allocation3 + $0x79] sm:$0xff]
        %v929 = vld [vmem:[#allocation3 + $0x81] sm:$0xff]
        %v930 = vld [vmem:[#allocation3 + $0x91] sm:$0xff]
        %v931 = vld [vmem:[#allocation3 + $0x99] sm:$0xff]
        %v932 = vld [vmem:[#allocation3 + $0xa9] sm:$0xff]
        %v933 = vld [vmem:[#allocation3 + $0xb1] sm:$0xff]
        %v934 = vld [vmem:[#allocation3 + $0xc1] sm:$0xff]
        %v935 = vld [vmem:[#allocation3 + $0xc9] sm:$0xff]
        %v936 = vld [vmem:[#allocation3 + $0xd9] sm:$0xff]
        %v937 = vld [vmem:[#allocation3 + $0xe1] sm:$0xff]
        %v938 = vld [vmem:[#allocation3 + $0xf1] sm:$0xff]
        %v939 = vld [vmem:[#allocation3 + $0xf9] sm:$0xff]
        %v940 = vld [vmem:[#allocation3 + $0x109] sm:$0xff]
        %v941 = vld [vmem:[#allocation3 + $0x111] sm:$0xff]
        %v942 = vld [vmem:[#allocation3 + $0x121] sm:$0xff]
        %v943 = vld [vmem:[#allocation3 + $0x129] sm:$0xff]
        %v944 = vld [vmem:[#allocation3 + $0x139] sm:$0xff]
        %v945 = vld [vmem:[#allocation3 + $0x141] sm:$0xff]
        %v946 = vld [vmem:[#allocation3 + $0x151] sm:$0xff]
        %v947 = vld [vmem:[#allocation3 + $0x159] sm:$0xff]
        %v948 = vld [vmem:[#allocation3 + $0x169] sm:$0xff]
        %v949 = vld [vmem:[#allocation3 + $0x171] sm:$0xff]
        %v950 = vld [vmem:[%s3 + $0x6] sm:$0x3f]
        %v952 = vsel %vm668, %v918, 0
        %v955 = vsel %vm668, %v919, 0
        %v958 = vsel %vm668, %v920, 0
        %v961 = vsel %vm668, %v921, 0
        %v964 = vsel %vm668, %v922, 0
        %v967 = vsel %vm668, %v923, 0
        %v970 = vsel %vm668, %v924, 0
        %v973 = vsel %vm668, %v925, 0
        %v976 = vsel %vm668, %v926, 0
        %v979 = vsel %vm668, %v927, 0
        %v982 = vsel %vm668, %v928, 0
        %v985 = vsel %vm668, %v929, 0
        %v988 = vsel %vm668, %v930, 0
        %v991 = vsel %vm668, %v931, 0
        %v994 = vsel %vm668, %v932, 0
        %v997 = vsel %vm668, %v933, 0
        %v1000 = vsel %vm668, %v934, 0
        %v1003 = vsel %vm668, %v935, 0
        %v1006 = vsel %vm668, %v936, 0
        %v1009 = vsel %vm668, %v937, 0
        %v1012 = vsel %vm668, %v938, 0
        %v1015 = vsel %vm668, %v939, 0
        %v1018 = vsel %vm668, %v940, 0
        %v1021 = vsel %vm668, %v941, 0
        %v1024 = vsel %vm668, %v942, 0
        %v1027 = vsel %vm668, %v943, 0
        %v1030 = vsel %vm668, %v944, 0
        %v1033 = vsel %vm668, %v945, 0
        %v1036 = vsel %vm668, %v946, 0
        %v1039 = vsel %vm668, %v947, 0
        %v1042 = vsel %vm668, %v948, 0
        %v1045 = vsel %vm668, %v949, 0
        %vm1047 = vcmask 1045504
        %v1049 = vsel %vm1047, %v950, 0
        %1051 = vmatpush.msra.mxu0 0.0
        %1052 = vmatpush.msra.mxu0 0.0
        %1053 = vmatpush.msra.mxu0 0.0
        %1054 = vmatpush.msra.mxu0 0.0
        %1055 = vmatpush.msra.mxu0 0.0
        %1056 = vmatpush.msra.mxu0 0.0
        %1057 = vmatpush.msra.mxu0 0.0
        %1058 = vmatpush.msra.mxu0 0.0
        %1059 = vmatpush.msra.mxu0 0.0
        %1060 = vmatpush.msra.mxu0 0.0
        %1061 = vmatpush.msra.mxu0 0.0
        %1062 = vmatpush.msra.mxu0 0.0
        %1063 = vmatpush.msra.mxu0 0.0
        %1064 = vmatpush.msra.mxu0 0.0
        %1065 = vmatpush.msra.mxu0 0.0
        %1066 = vmatpush.msra.mxu0 %v1049
        %1067 = vmatmul.f32.gmra.mxu0 %v952
        %v1068 = vpop.f32.mrf.mxu0
        %v1069 = vadd.f32 0.0, %v1068
        %1070 = vmatmul.f32.gmra.mxu0 %v955
        %v1071 = vpop.f32.mrf.mxu0
        %v1072 = vadd.f32 0.0, %v1071
        %1073 = vmatmul.f32.gmra.mxu0 %v958
        %v1074 = vpop.f32.mrf.mxu0
        %v1075 = vadd.f32 0.0, %v1074
        %1076 = vmatmul.f32.gmra.mxu0 %v961
        %v1077 = vpop.f32.mrf.mxu0
        %v1078 = vadd.f32 0.0, %v1077
        %1079 = vmatmul.f32.gmra.mxu0 %v964
        %v1080 = vpop.f32.mrf.mxu0
        %v1081 = vadd.f32 0.0, %v1080
        %1082 = vmatmul.f32.gmra.mxu0 %v967
        %v1083 = vpop.f32.mrf.mxu0
        %v1084 = vadd.f32 0.0, %v1083
        %1085 = vmatmul.f32.gmra.mxu0 %v970
        %v1086 = vpop.f32.mrf.mxu0
        %v1087 = vadd.f32 0.0, %v1086
        %1088 = vmatmul.f32.gmra.mxu0 %v973
        %v1089 = vpop.f32.mrf.mxu0
        %v1090 = vadd.f32 0.0, %v1089
        %1091 = vmatmul.f32.gmra.mxu0 %v976
        %v1092 = vpop.f32.mrf.mxu0
        %v1093 = vadd.f32 0.0, %v1092
        %1094 = vmatmul.f32.gmra.mxu0 %v979
        %v1095 = vpop.f32.mrf.mxu0
        %v1096 = vadd.f32 0.0, %v1095
        %1097 = vmatmul.f32.gmra.mxu0 %v982
        %v1098 = vpop.f32.mrf.mxu0
        %v1099 = vadd.f32 0.0, %v1098
        %1100 = vmatmul.f32.gmra.mxu0 %v985
        %v1101 = vpop.f32.mrf.mxu0
        %v1102 = vadd.f32 0.0, %v1101
        %1103 = vmatmul.f32.gmra.mxu0 %v988
        %v1104 = vpop.f32.mrf.mxu0
        %v1105 = vadd.f32 0.0, %v1104
        %1106 = vmatmul.f32.gmra.mxu0 %v991
        %v1107 = vpop.f32.mrf.mxu0
        %v1108 = vadd.f32 0.0, %v1107
        %1109 = vmatmul.f32.gmra.mxu0 %v994
        %v1110 = vpop.f32.mrf.mxu0
        %v1111 = vadd.f32 0.0, %v1110
        %1112 = vmatmul.f32.gmra.mxu0 %v997
        %v1113 = vpop.f32.mrf.mxu0
        %v1114 = vadd.f32 0.0, %v1113
        %1115 = vmatmul.f32.gmra.mxu0 %v1000
        %v1116 = vpop.f32.mrf.mxu0
        %v1117 = vadd.f32 0.0, %v1116
        %1118 = vmatmul.f32.gmra.mxu0 %v1003
        %v1119 = vpop.f32.mrf.mxu0
        %v1120 = vadd.f32 0.0, %v1119
        %1121 = vmatmul.f32.gmra.mxu0 %v1006
        %v1122 = vpop.f32.mrf.mxu0
        %v1123 = vadd.f32 0.0, %v1122
        %1124 = vmatmul.f32.gmra.mxu0 %v1009
        %v1125 = vpop.f32.mrf.mxu0
        %v1126 = vadd.f32 0.0, %v1125
        %1127 = vmatmul.f32.gmra.mxu0 %v1012
        %v1128 = vpop.f32.mrf.mxu0
        %v1129 = vadd.f32 0.0, %v1128
        %1130 = vmatmul.f32.gmra.mxu0 %v1015
        %v1131 = vpop.f32.mrf.mxu0
        %v1132 = vadd.f32 0.0, %v1131
        %1133 = vmatmul.f32.gmra.mxu0 %v1018
        %v1134 = vpop.f32.mrf.mxu0
        %v1135 = vadd.f32 0.0, %v1134
        %1136 = vmatmul.f32.gmra.mxu0 %v1021
        %v1137 = vpop.f32.mrf.mxu0
        %v1138 = vadd.f32 0.0, %v1137
        %1139 = vmatmul.f32.gmra.mxu0 %v1024
        %v1140 = vpop.f32.mrf.mxu0
        %v1141 = vadd.f32 0.0, %v1140
        %1142 = vmatmul.f32.gmra.mxu0 %v1027
        %v1143 = vpop.f32.mrf.mxu0
        %v1144 = vadd.f32 0.0, %v1143
        %1145 = vmatmul.f32.gmra.mxu0 %v1030
        %v1146 = vpop.f32.mrf.mxu0
        %v1147 = vadd.f32 0.0, %v1146
        %1148 = vmatmul.f32.gmra.mxu0 %v1033
        %v1149 = vpop.f32.mrf.mxu0
        %v1150 = vadd.f32 0.0, %v1149
        %1151 = vmatmul.f32.gmra.mxu0 %v1036
        %v1152 = vpop.f32.mrf.mxu0
        %v1153 = vadd.f32 0.0, %v1152
        %1154 = vmatmul.f32.gmra.mxu0 %v1039
        %v1155 = vpop.f32.mrf.mxu0
        %v1156 = vadd.f32 0.0, %v1155
        %1157 = vmatmul.f32.gmra.mxu0 %v1042
        %v1158 = vpop.f32.mrf.mxu0
        %v1159 = vadd.f32 0.0, %v1158
        %1160 = vmatmul.f32.gmra.mxu0 %v1045
        %v1161 = vpop.f32.mrf.mxu0
        %v1162 = vadd.f32 0.0, %v1161
        %1163 = vdwg.mxu0
        %v1165 = vsel %vm668, %v885, 0
        %v1168 = vsel %vm668, %v886, 0
        %v1171 = vsel %vm668, %v887, 0
        %v1174 = vsel %vm668, %v888, 0
        %v1177 = vsel %vm668, %v889, 0
        %v1180 = vsel %vm668, %v890, 0
        %v1183 = vsel %vm668, %v891, 0
        %v1186 = vsel %vm668, %v892, 0
        %v1189 = vsel %vm668, %v893, 0
        %v1192 = vsel %vm668, %v894, 0
        %v1195 = vsel %vm668, %v895, 0
        %v1198 = vsel %vm668, %v896, 0
        %v1201 = vsel %vm668, %v897, 0
        %v1204 = vsel %vm668, %v898, 0
        %v1207 = vsel %vm668, %v899, 0
        %v1210 = vsel %vm668, %v900, 0
        %v1213 = vsel %vm668, %v901, 0
        %v1216 = vsel %vm668, %v902, 0
        %v1219 = vsel %vm668, %v903, 0
        %v1222 = vsel %vm668, %v904, 0
        %v1225 = vsel %vm668, %v905, 0
        %v1228 = vsel %vm668, %v906, 0
        %v1231 = vsel %vm668, %v907, 0
        %v1234 = vsel %vm668, %v908, 0
        %v1237 = vsel %vm668, %v909, 0
        %v1240 = vsel %vm668, %v910, 0
        %v1243 = vsel %vm668, %v911, 0
        %v1246 = vsel %vm668, %v912, 0
        %v1249 = vsel %vm668, %v913, 0
        %v1252 = vsel %vm668, %v914, 0
        %v1255 = vsel %vm668, %v915, 0
        %v1258 = vsel %vm668, %v916, 0
        %v1261 = vsel %vm1047, %v917, 0
        %1263 = vmatpush.msra.mxu0 0.0
        %1264 = vmatpush.msra.mxu0 0.0
        %1265 = vmatpush.msra.mxu0 0.0
        %1266 = vmatpush.msra.mxu0 0.0
        %1267 = vmatpush.msra.mxu0 0.0
        %1268 = vmatpush.msra.mxu0 0.0
        %1269 = vmatpush.msra.mxu0 0.0
        %1270 = vmatpush.msra.mxu0 0.0
        %1271 = vmatpush.msra.mxu0 0.0
        %1272 = vmatpush.msra.mxu0 0.0
        %1273 = vmatpush.msra.mxu0 0.0
        %1274 = vmatpush.msra.mxu0 0.0
        %1275 = vmatpush.msra.mxu0 0.0
        %1276 = vmatpush.msra.mxu0 0.0
        %1277 = vmatpush.msra.mxu0 0.0
        %1278 = vmatpush.msra.mxu0 %v1261
        %1279 = vmatmul.f32.gmra.mxu0 %v1165
        %v1280 = vpop.f32.mrf.mxu0
        %v1281 = vadd.f32 %v1069, %v1280
        %1282 = vmatmul.f32.gmra.mxu0 %v1168
        %v1283 = vpop.f32.mrf.mxu0
        %v1284 = vadd.f32 %v1072, %v1283
        %1285 = vmatmul.f32.gmra.mxu0 %v1171
        %v1286 = vpop.f32.mrf.mxu0
        %v1287 = vadd.f32 %v1075, %v1286
        %1288 = vmatmul.f32.gmra.mxu0 %v1174
        %v1289 = vpop.f32.mrf.mxu0
        %v1290 = vadd.f32 %v1078, %v1289
        %1291 = vmatmul.f32.gmra.mxu0 %v1177
        %v1292 = vpop.f32.mrf.mxu0
        %v1293 = vadd.f32 %v1081, %v1292
        %1294 = vmatmul.f32.gmra.mxu0 %v1180
        %v1295 = vpop.f32.mrf.mxu0
        %v1296 = vadd.f32 %v1084, %v1295
        %1297 = vmatmul.f32.gmra.mxu0 %v1183
        %v1298 = vpop.f32.mrf.mxu0
        %v1299 = vadd.f32 %v1087, %v1298
        %1300 = vmatmul.f32.gmra.mxu0 %v1186
        %v1301 = vpop.f32.mrf.mxu0
        %v1302 = vadd.f32 %v1090, %v1301
        %1303 = vmatmul.f32.gmra.mxu0 %v1189
        %v1304 = vpop.f32.mrf.mxu0
        %v1305 = vadd.f32 %v1093, %v1304
        %1306 = vmatmul.f32.gmra.mxu0 %v1192
        %v1307 = vpop.f32.mrf.mxu0
        %v1308 = vadd.f32 %v1096, %v1307
        %1309 = vmatmul.f32.gmra.mxu0 %v1195
        %v1310 = vpop.f32.mrf.mxu0
        %v1311 = vadd.f32 %v1099, %v1310
        %1312 = vmatmul.f32.gmra.mxu0 %v1198
        %v1313 = vpop.f32.mrf.mxu0
        %v1314 = vadd.f32 %v1102, %v1313
        %1315 = vmatmul.f32.gmra.mxu0 %v1201
        %v1316 = vpop.f32.mrf.mxu0
        %v1317 = vadd.f32 %v1105, %v1316
        %1318 = vmatmul.f32.gmra.mxu0 %v1204
        %v1319 = vpop.f32.mrf.mxu0
        %v1320 = vadd.f32 %v1108, %v1319
        %1321 = vmatmul.f32.gmra.mxu0 %v1207
        %v1322 = vpop.f32.mrf.mxu0
        %v1323 = vadd.f32 %v1111, %v1322
        %1324 = vmatmul.f32.gmra.mxu0 %v1210
        %v1325 = vpop.f32.mrf.mxu0
        %v1326 = vadd.f32 %v1114, %v1325
        %1327 = vmatmul.f32.gmra.mxu0 %v1213
        %v1328 = vpop.f32.mrf.mxu0
        %v1329 = vadd.f32 %v1117, %v1328
        %1330 = vmatmul.f32.gmra.mxu0 %v1216
        %v1331 = vpop.f32.mrf.mxu0
        %v1332 = vadd.f32 %v1120, %v1331
        %1333 = vmatmul.f32.gmra.mxu0 %v1219
        %v1334 = vpop.f32.mrf.mxu0
        %v1335 = vadd.f32 %v1123, %v1334
        %1336 = vmatmul.f32.gmra.mxu0 %v1222
        %v1337 = vpop.f32.mrf.mxu0
        %v1338 = vadd.f32 %v1126, %v1337
        %1339 = vmatmul.f32.gmra.mxu0 %v1225
        %v1340 = vpop.f32.mrf.mxu0
        %v1341 = vadd.f32 %v1129, %v1340
        %1342 = vmatmul.f32.gmra.mxu0 %v1228
        %v1343 = vpop.f32.mrf.mxu0
        %v1344 = vadd.f32 %v1132, %v1343
        %1345 = vmatmul.f32.gmra.mxu0 %v1231
        %v1346 = vpop.f32.mrf.mxu0
        %v1347 = vadd.f32 %v1135, %v1346
        %1348 = vmatmul.f32.gmra.mxu0 %v1234
        %v1349 = vpop.f32.mrf.mxu0
        %v1350 = vadd.f32 %v1138, %v1349
        %1351 = vmatmul.f32.gmra.mxu0 %v1237
        %v1352 = vpop.f32.mrf.mxu0
        %v1353 = vadd.f32 %v1141, %v1352
        %1354 = vmatmul.f32.gmra.mxu0 %v1240
        %v1355 = vpop.f32.mrf.mxu0
        %v1356 = vadd.f32 %v1144, %v1355
        %1357 = vmatmul.f32.gmra.mxu0 %v1243
        %v1358 = vpop.f32.mrf.mxu0
        %v1359 = vadd.f32 %v1147, %v1358
        %1360 = vmatmul.f32.gmra.mxu0 %v1246
        %v1361 = vpop.f32.mrf.mxu0
        %v1362 = vadd.f32 %v1150, %v1361
        %1363 = vmatmul.f32.gmra.mxu0 %v1249
        %v1364 = vpop.f32.mrf.mxu0
        %v1365 = vadd.f32 %v1153, %v1364
        %1366 = vmatmul.f32.gmra.mxu0 %v1252
        %v1367 = vpop.f32.mrf.mxu0
        %v1368 = vadd.f32 %v1156, %v1367
        %1369 = vmatmul.f32.gmra.mxu0 %v1255
        %v1370 = vpop.f32.mrf.mxu0
        %v1371 = vadd.f32 %v1159, %v1370
        %1372 = vmatmul.f32.gmra.mxu0 %v1258
        %v1373 = vpop.f32.mrf.mxu0
        %v1374 = vadd.f32 %v1162, %v1373
        %1375 = vdwg.mxu0
        %v1376 = vld [vmem:[#allocation3 + $0x2] sm:$0xff]
        %v1377 = vld [vmem:[#allocation3 + $0xa] sm:$0xff]
        %v1378 = vld [vmem:[#allocation3 + $0x1a] sm:$0xff]
        %v1379 = vld [vmem:[#allocation3 + $0x22] sm:$0xff]
        %v1380 = vld [vmem:[#allocation3 + $0x32] sm:$0xff]
        %v1381 = vld [vmem:[#allocation3 + $0x3a] sm:$0xff]
        %v1382 = vld [vmem:[#allocation3 + $0x4a] sm:$0xff]
        %v1383 = vld [vmem:[#allocation3 + $0x52] sm:$0xff]
        %v1384 = vld [vmem:[#allocation3 + $0x62] sm:$0xff]
        %v1385 = vld [vmem:[#allocation3 + $0x6a] sm:$0xff]
        %v1386 = vld [vmem:[#allocation3 + $0x7a] sm:$0xff]
        %v1387 = vld [vmem:[#allocation3 + $0x82] sm:$0xff]
        %v1388 = vld [vmem:[#allocation3 + $0x92] sm:$0xff]
        %v1389 = vld [vmem:[#allocation3 + $0x9a] sm:$0xff]
        %v1390 = vld [vmem:[#allocation3 + $0xaa] sm:$0xff]
        %v1391 = vld [vmem:[#allocation3 + $0xb2] sm:$0xff]
        %v1392 = vld [vmem:[#allocation3 + $0xc2] sm:$0xff]
        %v1393 = vld [vmem:[#allocation3 + $0xca] sm:$0xff]
        %v1394 = vld [vmem:[#allocation3 + $0xda] sm:$0xff]
        %v1395 = vld [vmem:[#allocation3 + $0xe2] sm:$0xff]
        %v1396 = vld [vmem:[#allocation3 + $0xf2] sm:$0xff]
        %v1397 = vld [vmem:[#allocation3 + $0xfa] sm:$0xff]
        %v1398 = vld [vmem:[#allocation3 + $0x10a] sm:$0xff]
        %v1399 = vld [vmem:[#allocation3 + $0x112] sm:$0xff]
        %v1400 = vld [vmem:[#allocation3 + $0x122] sm:$0xff]
        %v1401 = vld [vmem:[#allocation3 + $0x12a] sm:$0xff]
        %v1402 = vld [vmem:[#allocation3 + $0x13a] sm:$0xff]
        %v1403 = vld [vmem:[#allocation3 + $0x142] sm:$0xff]
        %v1404 = vld [vmem:[#allocation3 + $0x152] sm:$0xff]
        %v1405 = vld [vmem:[#allocation3 + $0x15a] sm:$0xff]
        %v1406 = vld [vmem:[#allocation3 + $0x16a] sm:$0xff]
        %v1407 = vld [vmem:[#allocation3 + $0x172] sm:$0xff]
        %v1408 = vld [vmem:[%s3 + $0xc] sm:$0x3f]
        %v1410 = vsel %vm668, %v1376, 0
        %v1413 = vsel %vm668, %v1377, 0
        %v1416 = vsel %vm668, %v1378, 0
        %v1419 = vsel %vm668, %v1379, 0
        %v1422 = vsel %vm668, %v1380, 0
        %v1425 = vsel %vm668, %v1381, 0
        %v1428 = vsel %vm668, %v1382, 0
        %v1431 = vsel %vm668, %v1383, 0
        %v1434 = vsel %vm668, %v1384, 0
        %v1437 = vsel %vm668, %v1385, 0
        %v1440 = vsel %vm668, %v1386, 0
        %v1443 = vsel %vm668, %v1387, 0
        %v1446 = vsel %vm668, %v1388, 0
        %v1449 = vsel %vm668, %v1389, 0
        %v1452 = vsel %vm668, %v1390, 0
        %v1455 = vsel %vm668, %v1391, 0
        %v1458 = vsel %vm668, %v1392, 0
        %v1461 = vsel %vm668, %v1393, 0
        %v1464 = vsel %vm668, %v1394, 0
        %v1467 = vsel %vm668, %v1395, 0
        %v1470 = vsel %vm668, %v1396, 0
        %v1473 = vsel %vm668, %v1397, 0
        %v1476 = vsel %vm668, %v1398, 0
        %v1479 = vsel %vm668, %v1399, 0
        %v1482 = vsel %vm668, %v1400, 0
        %v1485 = vsel %vm668, %v1401, 0
        %v1488 = vsel %vm668, %v1402, 0
        %v1491 = vsel %vm668, %v1403, 0
        %v1494 = vsel %vm668, %v1404, 0
        %v1497 = vsel %vm668, %v1405, 0
        %v1500 = vsel %vm668, %v1406, 0
        %v1503 = vsel %vm668, %v1407, 0
        %v1506 = vsel %vm1047, %v1408, 0
        %1508 = vmatpush.msra.mxu0 0.0
        %1509 = vmatpush.msra.mxu0 0.0
        %1510 = vmatpush.msra.mxu0 0.0
        %1511 = vmatpush.msra.mxu0 0.0
        %1512 = vmatpush.msra.mxu0 0.0
        %1513 = vmatpush.msra.mxu0 0.0
        %1514 = vmatpush.msra.mxu0 0.0
        %1515 = vmatpush.msra.mxu0 0.0
        %1516 = vmatpush.msra.mxu0 0.0
        %1517 = vmatpush.msra.mxu0 0.0
        %1518 = vmatpush.msra.mxu0 0.0
        %1519 = vmatpush.msra.mxu0 0.0
        %1520 = vmatpush.msra.mxu0 0.0
        %1521 = vmatpush.msra.mxu0 0.0
        %1522 = vmatpush.msra.mxu0 0.0
        %1523 = vmatpush.msra.mxu0 %v1506
        %1524 = vmatmul.f32.gmra.mxu0 %v1410
        %v1525 = vpop.f32.mrf.mxu0
        %v1526 = vadd.f32 0.0, %v1525
        %1527 = vmatmul.f32.gmra.mxu0 %v1413
        %v1528 = vpop.f32.mrf.mxu0
        %v1529 = vadd.f32 0.0, %v1528
        %1530 = vmatmul.f32.gmra.mxu0 %v1416
        %v1531 = vpop.f32.mrf.mxu0
        %v1532 = vadd.f32 0.0, %v1531
        %1533 = vmatmul.f32.gmra.mxu0 %v1419
        %v1534 = vpop.f32.mrf.mxu0
        %v1535 = vadd.f32 0.0, %v1534
        %1536 = vmatmul.f32.gmra.mxu0 %v1422
        %v1537 = vpop.f32.mrf.mxu0
        %v1538 = vadd.f32 0.0, %v1537
        %1539 = vmatmul.f32.gmra.mxu0 %v1425
        %v1540 = vpop.f32.mrf.mxu0
        %v1541 = vadd.f32 0.0, %v1540
        %1542 = vmatmul.f32.gmra.mxu0 %v1428
        %v1543 = vpop.f32.mrf.mxu0
        %v1544 = vadd.f32 0.0, %v1543
        %1545 = vmatmul.f32.gmra.mxu0 %v1431
        %v1546 = vpop.f32.mrf.mxu0
        %v1547 = vadd.f32 0.0, %v1546
        %1548 = vmatmul.f32.gmra.mxu0 %v1434
        %v1549 = vpop.f32.mrf.mxu0
        %v1550 = vadd.f32 0.0, %v1549
        %1551 = vmatmul.f32.gmra.mxu0 %v1437
        %v1552 = vpop.f32.mrf.mxu0
        %v1553 = vadd.f32 0.0, %v1552
        %1554 = vmatmul.f32.gmra.mxu0 %v1440
        %v1555 = vpop.f32.mrf.mxu0
        %v1556 = vadd.f32 0.0, %v1555
        %1557 = vmatmul.f32.gmra.mxu0 %v1443
        %v1558 = vpop.f32.mrf.mxu0
        %v1559 = vadd.f32 0.0, %v1558
        %1560 = vmatmul.f32.gmra.mxu0 %v1446
        %v1561 = vpop.f32.mrf.mxu0
        %v1562 = vadd.f32 0.0, %v1561
        %1563 = vmatmul.f32.gmra.mxu0 %v1449
        %v1564 = vpop.f32.mrf.mxu0
        %v1565 = vadd.f32 0.0, %v1564
        %1566 = vmatmul.f32.gmra.mxu0 %v1452
        %v1567 = vpop.f32.mrf.mxu0
        %v1568 = vadd.f32 0.0, %v1567
        %1569 = vmatmul.f32.gmra.mxu0 %v1455
        %v1570 = vpop.f32.mrf.mxu0
        %v1571 = vadd.f32 0.0, %v1570
        %1572 = vmatmul.f32.gmra.mxu0 %v1458
        %v1573 = vpop.f32.mrf.mxu0
        %v1574 = vadd.f32 0.0, %v1573
        %1575 = vmatmul.f32.gmra.mxu0 %v1461
        %v1576 = vpop.f32.mrf.mxu0
        %v1577 = vadd.f32 0.0, %v1576
        %1578 = vmatmul.f32.gmra.mxu0 %v1464
        %v1579 = vpop.f32.mrf.mxu0
        %v1580 = vadd.f32 0.0, %v1579
        %1581 = vmatmul.f32.gmra.mxu0 %v1467
        %v1582 = vpop.f32.mrf.mxu0
        %v1583 = vadd.f32 0.0, %v1582
        %1584 = vmatmul.f32.gmra.mxu0 %v1470
        %v1585 = vpop.f32.mrf.mxu0
        %v1586 = vadd.f32 0.0, %v1585
        %1587 = vmatmul.f32.gmra.mxu0 %v1473
        %v1588 = vpop.f32.mrf.mxu0
        %v1589 = vadd.f32 0.0, %v1588
        %1590 = vmatmul.f32.gmra.mxu0 %v1476
        %v1591 = vpop.f32.mrf.mxu0
        %v1592 = vadd.f32 0.0, %v1591
        %1593 = vmatmul.f32.gmra.mxu0 %v1479
        %v1594 = vpop.f32.mrf.mxu0
        %v1595 = vadd.f32 0.0, %v1594
        %1596 = vmatmul.f32.gmra.mxu0 %v1482
        %v1597 = vpop.f32.mrf.mxu0
        %v1598 = vadd.f32 0.0, %v1597
        %1599 = vmatmul.f32.gmra.mxu0 %v1485
        %v1600 = vpop.f32.mrf.mxu0
        %v1601 = vadd.f32 0.0, %v1600
        %1602 = vmatmul.f32.gmra.mxu0 %v1488
        %v1603 = vpop.f32.mrf.mxu0
        %v1604 = vadd.f32 0.0, %v1603
        %1605 = vmatmul.f32.gmra.mxu0 %v1491
        %v1606 = vpop.f32.mrf.mxu0
        %v1607 = vadd.f32 0.0, %v1606
        %1608 = vmatmul.f32.gmra.mxu0 %v1494
        %v1609 = vpop.f32.mrf.mxu0
        %v1610 = vadd.f32 0.0, %v1609
        %1611 = vmatmul.f32.gmra.mxu0 %v1497
        %v1612 = vpop.f32.mrf.mxu0
        %v1613 = vadd.f32 0.0, %v1612
        %1614 = vmatmul.f32.gmra.mxu0 %v1500
        %v1615 = vpop.f32.mrf.mxu0
        %v1616 = vadd.f32 0.0, %v1615
        %1617 = vmatmul.f32.gmra.mxu0 %v1503
        %v1618 = vpop.f32.mrf.mxu0
        %v1619 = vadd.f32 0.0, %v1618
        %1620 = vdwg.mxu0
        %v1621 = vadd.f32 %v1281, %v1526
        %v1622 = vadd.f32 %v1284, %v1529
        %v1623 = vadd.f32 %v1287, %v1532
        %v1624 = vadd.f32 %v1290, %v1535
        %v1625 = vadd.f32 %v1293, %v1538
        %v1626 = vadd.f32 %v1296, %v1541
        %v1627 = vadd.f32 %v1299, %v1544
        %v1628 = vadd.f32 %v1302, %v1547
        %v1629 = vadd.f32 %v1305, %v1550
        %v1630 = vadd.f32 %v1308, %v1553
        %v1631 = vadd.f32 %v1311, %v1556
        %v1632 = vadd.f32 %v1314, %v1559
        %v1633 = vadd.f32 %v1317, %v1562
        %v1634 = vadd.f32 %v1320, %v1565
        %v1635 = vadd.f32 %v1323, %v1568
        %v1636 = vadd.f32 %v1326, %v1571
        %v1637 = vadd.f32 %v1329, %v1574
        %v1638 = vadd.f32 %v1332, %v1577
        %v1639 = vadd.f32 %v1335, %v1580
        %v1640 = vadd.f32 %v1338, %v1583
        %v1641 = vadd.f32 %v1341, %v1586
        %v1642 = vadd.f32 %v1344, %v1589
        %v1643 = vadd.f32 %v1347, %v1592
        %v1644 = vadd.f32 %v1350, %v1595
        %v1645 = vadd.f32 %v1353, %v1598
        %v1646 = vadd.f32 %v1356, %v1601
        %v1647 = vadd.f32 %v1359, %v1604
        %v1648 = vadd.f32 %v1362, %v1607
        %v1649 = vadd.f32 %v1365, %v1610
        %v1650 = vadd.f32 %v1368, %v1613
        %v1651 = vadd.f32 %v1371, %v1616
        %v1652 = vadd.f32 %v1374, %v1619
        %v1653 = vld [vmem:[%s852] sm:$0xff]
        %v1654 = vld [vmem:[%s852 + $0x8] sm:$0xff]
        %v1655 = vld [vmem:[%s852 + $0x18] sm:$0xff]
        %v1656 = vld [vmem:[%s852 + $0x20] sm:$0xff]
        %v1657 = vld [vmem:[%s852 + $0x30] sm:$0xff]
        %v1658 = vld [vmem:[%s852 + $0x38] sm:$0xff]
        %v1659 = vld [vmem:[%s852 + $0x48] sm:$0xff]
        %v1660 = vld [vmem:[%s852 + $0x50] sm:$0xff]
        %v1661 = vld [vmem:[%s852 + $0x60] sm:$0xff]
        %v1662 = vld [vmem:[%s852 + $0x68] sm:$0xff]
        %v1663 = vld [vmem:[%s852 + $0x78] sm:$0xff]
        %v1664 = vld [vmem:[%s852 + $0x80] sm:$0xff]
        %v1665 = vld [vmem:[%s852 + $0x90] sm:$0xff]
        %v1666 = vld [vmem:[%s852 + $0x98] sm:$0xff]
        %v1667 = vld [vmem:[%s852 + $0xa8] sm:$0xff]
        %v1668 = vld [vmem:[%s852 + $0xb0] sm:$0xff]
        %v1669 = vld [vmem:[%s852 + $0xc0] sm:$0xff]
        %v1670 = vld [vmem:[%s852 + $0xc8] sm:$0xff]
        %v1671 = vld [vmem:[%s852 + $0xd8] sm:$0xff]
        %v1672 = vld [vmem:[%s852 + $0xe0] sm:$0xff]
        %v1673 = vld [vmem:[%s852 + $0xf0] sm:$0xff]
        %v1674 = vld [vmem:[%s852 + $0xf8] sm:$0xff]
        %v1675 = vld [vmem:[%s852 + $0x108] sm:$0xff]
        %v1676 = vld [vmem:[%s852 + $0x110] sm:$0xff]
        %v1677 = vld [vmem:[%s852 + $0x120] sm:$0xff]
        %v1678 = vld [vmem:[%s852 + $0x128] sm:$0xff]
        %v1679 = vld [vmem:[%s852 + $0x138] sm:$0xff]
        %v1680 = vld [vmem:[%s852 + $0x140] sm:$0xff]
        %v1681 = vld [vmem:[%s852 + $0x150] sm:$0xff]
        %v1682 = vld [vmem:[%s852 + $0x158] sm:$0xff]
        %v1683 = vld [vmem:[%s852 + $0x168] sm:$0xff]
        %v1684 = vld [vmem:[%s852 + $0x170] sm:$0xff]
        %v1685 = vld [vmem:[%s3 + $0x12] sm:$0x3f]
        %v1687 = vsel %vm668, %v1653, 0
        %v1690 = vsel %vm668, %v1654, 0
        %v1693 = vsel %vm668, %v1655, 0
        %v1696 = vsel %vm668, %v1656, 0
        %v1699 = vsel %vm668, %v1657, 0
        %v1702 = vsel %vm668, %v1658, 0
        %v1705 = vsel %vm668, %v1659, 0
        %v1708 = vsel %vm668, %v1660, 0
        %v1711 = vsel %vm668, %v1661, 0
        %v1714 = vsel %vm668, %v1662, 0
        %v1717 = vsel %vm668, %v1663, 0
        %v1720 = vsel %vm668, %v1664, 0
        %v1723 = vsel %vm668, %v1665, 0
        %v1726 = vsel %vm668, %v1666, 0
        %v1729 = vsel %vm668, %v1667, 0
        %v1732 = vsel %vm668, %v1668, 0
        %v1735 = vsel %vm668, %v1669, 0
        %v1738 = vsel %vm668, %v1670, 0
        %v1741 = vsel %vm668, %v1671, 0
        %v1744 = vsel %vm668, %v1672, 0
        %v1747 = vsel %vm668, %v1673, 0
        %v1750 = vsel %vm668, %v1674, 0
        %v1753 = vsel %vm668, %v1675, 0
        %v1756 = vsel %vm668, %v1676, 0
        %v1759 = vsel %vm668, %v1677, 0
        %v1762 = vsel %vm668, %v1678, 0
        %v1765 = vsel %vm668, %v1679, 0
        %v1768 = vsel %vm668, %v1680, 0
        %v1771 = vsel %vm668, %v1681, 0
        %v1774 = vsel %vm668, %v1682, 0
        %v1777 = vsel %vm668, %v1683, 0
        %v1780 = vsel %vm668, %v1684, 0
        %v1783 = vsel %vm1047, %v1685, 0
        %1785 = vmatpush.msra.mxu0 0.0
        %1786 = vmatpush.msra.mxu0 0.0
        %1787 = vmatpush.msra.mxu0 0.0
        %1788 = vmatpush.msra.mxu0 0.0
        %1789 = vmatpush.msra.mxu0 0.0
        %1790 = vmatpush.msra.mxu0 0.0
        %1791 = vmatpush.msra.mxu0 0.0
        %1792 = vmatpush.msra.mxu0 0.0
        %1793 = vmatpush.msra.mxu0 0.0
        %1794 = vmatpush.msra.mxu0 0.0
        %1795 = vmatpush.msra.mxu0 0.0
        %1796 = vmatpush.msra.mxu0 0.0
        %1797 = vmatpush.msra.mxu0 0.0
        %1798 = vmatpush.msra.mxu0 0.0
        %1799 = vmatpush.msra.mxu0 0.0
        %1800 = vmatpush.msra.mxu0 %v1783
        %1801 = vmatmul.f32.gmra.mxu0 %v1687
        %v1802 = vpop.f32.mrf.mxu0
        %v1803 = vadd.f32 0.0, %v1802
        %1804 = vmatmul.f32.gmra.mxu0 %v1690
        %v1805 = vpop.f32.mrf.mxu0
        %v1806 = vadd.f32 0.0, %v1805
        %1807 = vmatmul.f32.gmra.mxu0 %v1693
        %v1808 = vpop.f32.mrf.mxu0
        %v1809 = vadd.f32 0.0, %v1808
        %1810 = vmatmul.f32.gmra.mxu0 %v1696
        %v1811 = vpop.f32.mrf.mxu0
        %v1812 = vadd.f32 0.0, %v1811
        %1813 = vmatmul.f32.gmra.mxu0 %v1699
        %v1814 = vpop.f32.mrf.mxu0
        %v1815 = vadd.f32 0.0, %v1814
        %1816 = vmatmul.f32.gmra.mxu0 %v1702
        %v1817 = vpop.f32.mrf.mxu0
        %v1818 = vadd.f32 0.0, %v1817
        %1819 = vmatmul.f32.gmra.mxu0 %v1705
        %v1820 = vpop.f32.mrf.mxu0
        %v1821 = vadd.f32 0.0, %v1820
        %1822 = vmatmul.f32.gmra.mxu0 %v1708
        %v1823 = vpop.f32.mrf.mxu0
        %v1824 = vadd.f32 0.0, %v1823
        %1825 = vmatmul.f32.gmra.mxu0 %v1711
        %v1826 = vpop.f32.mrf.mxu0
        %v1827 = vadd.f32 0.0, %v1826
        %1828 = vmatmul.f32.gmra.mxu0 %v1714
        %v1829 = vpop.f32.mrf.mxu0
        %v1830 = vadd.f32 0.0, %v1829
        %1831 = vmatmul.f32.gmra.mxu0 %v1717
        %v1832 = vpop.f32.mrf.mxu0
        %v1833 = vadd.f32 0.0, %v1832
        %1834 = vmatmul.f32.gmra.mxu0 %v1720
        %v1835 = vpop.f32.mrf.mxu0
        %v1836 = vadd.f32 0.0, %v1835
        %1837 = vmatmul.f32.gmra.mxu0 %v1723
        %v1838 = vpop.f32.mrf.mxu0
        %v1839 = vadd.f32 0.0, %v1838
        %1840 = vmatmul.f32.gmra.mxu0 %v1726
        %v1841 = vpop.f32.mrf.mxu0
        %v1842 = vadd.f32 0.0, %v1841
        %1843 = vmatmul.f32.gmra.mxu0 %v1729
        %v1844 = vpop.f32.mrf.mxu0
        %v1845 = vadd.f32 0.0, %v1844
        %1846 = vmatmul.f32.gmra.mxu0 %v1732
        %v1847 = vpop.f32.mrf.mxu0
        %v1848 = vadd.f32 0.0, %v1847
        %1849 = vmatmul.f32.gmra.mxu0 %v1735
        %v1850 = vpop.f32.mrf.mxu0
        %v1851 = vadd.f32 0.0, %v1850
        %1852 = vmatmul.f32.gmra.mxu0 %v1738
        %v1853 = vpop.f32.mrf.mxu0
        %v1854 = vadd.f32 0.0, %v1853
        %1855 = vmatmul.f32.gmra.mxu0 %v1741
        %v1856 = vpop.f32.mrf.mxu0
        %v1857 = vadd.f32 0.0, %v1856
        %1858 = vmatmul.f32.gmra.mxu0 %v1744
        %v1859 = vpop.f32.mrf.mxu0
        %v1860 = vadd.f32 0.0, %v1859
        %1861 = vmatmul.f32.gmra.mxu0 %v1747
        %v1862 = vpop.f32.mrf.mxu0
        %v1863 = vadd.f32 0.0, %v1862
        %1864 = vmatmul.f32.gmra.mxu0 %v1750
        %v1865 = vpop.f32.mrf.mxu0
        %v1866 = vadd.f32 0.0, %v1865
        %1867 = vmatmul.f32.gmra.mxu0 %v1753
        %v1868 = vpop.f32.mrf.mxu0
        %v1869 = vadd.f32 0.0, %v1868
        %1870 = vmatmul.f32.gmra.mxu0 %v1756
        %v1871 = vpop.f32.mrf.mxu0
        %v1872 = vadd.f32 0.0, %v1871
        %1873 = vmatmul.f32.gmra.mxu0 %v1759
        %v1874 = vpop.f32.mrf.mxu0
        %v1875 = vadd.f32 0.0, %v1874
        %1876 = vmatmul.f32.gmra.mxu0 %v1762
        %v1877 = vpop.f32.mrf.mxu0
        %v1878 = vadd.f32 0.0, %v1877
        %1879 = vmatmul.f32.gmra.mxu0 %v1765
        %v1880 = vpop.f32.mrf.mxu0
        %v1881 = vadd.f32 0.0, %v1880
        %1882 = vmatmul.f32.gmra.mxu0 %v1768
        %v1883 = vpop.f32.mrf.mxu0
        %v1884 = vadd.f32 0.0, %v1883
        %1885 = vmatmul.f32.gmra.mxu0 %v1771
        %v1886 = vpop.f32.mrf.mxu0
        %v1887 = vadd.f32 0.0, %v1886
        %1888 = vmatmul.f32.gmra.mxu0 %v1774
        %v1889 = vpop.f32.mrf.mxu0
        %v1890 = vadd.f32 0.0, %v1889
        %1891 = vmatmul.f32.gmra.mxu0 %v1777
        %v1892 = vpop.f32.mrf.mxu0
        %v1893 = vadd.f32 0.0, %v1892
        %1894 = vmatmul.f32.gmra.mxu0 %v1780
        %v1895 = vpop.f32.mrf.mxu0
        %v1896 = vadd.f32 0.0, %v1895
        %1897 = vdwg.mxu0
        %v1898 = vadd.f32 %v1621, %v1803
        %v1899 = vadd.f32 %v1622, %v1806
        %v1900 = vadd.f32 %v1623, %v1809
        %v1901 = vadd.f32 %v1624, %v1812
        %v1902 = vadd.f32 %v1625, %v1815
        %v1903 = vadd.f32 %v1626, %v1818
        %v1904 = vadd.f32 %v1627, %v1821
        %v1905 = vadd.f32 %v1628, %v1824
        %v1906 = vadd.f32 %v1629, %v1827
        %v1907 = vadd.f32 %v1630, %v1830
        %v1908 = vadd.f32 %v1631, %v1833
        %v1909 = vadd.f32 %v1632, %v1836
        %v1910 = vadd.f32 %v1633, %v1839
        %v1911 = vadd.f32 %v1634, %v1842
        %v1912 = vadd.f32 %v1635, %v1845
        %v1913 = vadd.f32 %v1636, %v1848
        %v1914 = vadd.f32 %v1637, %v1851
        %v1915 = vadd.f32 %v1638, %v1854
        %v1916 = vadd.f32 %v1639, %v1857
        %v1917 = vadd.f32 %v1640, %v1860
        %v1918 = vadd.f32 %v1641, %v1863
        %v1919 = vadd.f32 %v1642, %v1866
        %v1920 = vadd.f32 %v1643, %v1869
        %v1921 = vadd.f32 %v1644, %v1872
        %v1922 = vadd.f32 %v1645, %v1875
        %v1923 = vadd.f32 %v1646, %v1878
        %v1924 = vadd.f32 %v1647, %v1881
        %v1925 = vadd.f32 %v1648, %v1884
        %v1926 = vadd.f32 %v1649, %v1887
        %v1927 = vadd.f32 %v1650, %v1890
        %v1928 = vadd.f32 %v1651, %v1893
        %v1929 = vadd.f32 %v1652, %v1896
        %v1930 = vld [vmem:[%s852 + $0x1] sm:$0xff]
        %v1931 = vld [vmem:[%s852 + $0x9] sm:$0xff]
        %v1932 = vld [vmem:[%s852 + $0x19] sm:$0xff]
        %v1933 = vld [vmem:[%s852 + $0x21] sm:$0xff]
        %v1934 = vld [vmem:[%s852 + $0x31] sm:$0xff]
        %v1935 = vld [vmem:[%s852 + $0x39] sm:$0xff]
        %v1936 = vld [vmem:[%s852 + $0x49] sm:$0xff]
        %v1937 = vld [vmem:[%s852 + $0x51] sm:$0xff]
        %v1938 = vld [vmem:[%s852 + $0x61] sm:$0xff]
        %v1939 = vld [vmem:[%s852 + $0x69] sm:$0xff]
        %v1940 = vld [vmem:[%s852 + $0x79] sm:$0xff]
        %v1941 = vld [vmem:[%s852 + $0x81] sm:$0xff]
        %v1942 = vld [vmem:[%s852 + $0x91] sm:$0xff]
        %v1943 = vld [vmem:[%s852 + $0x99] sm:$0xff]
        %v1944 = vld [vmem:[%s852 + $0xa9] sm:$0xff]
        %v1945 = vld [vmem:[%s852 + $0xb1] sm:$0xff]
        %v1946 = vld [vmem:[%s852 + $0xc1] sm:$0xff]
        %v1947 = vld [vmem:[%s852 + $0xc9] sm:$0xff]
        %v1948 = vld [vmem:[%s852 + $0xd9] sm:$0xff]
        %v1949 = vld [vmem:[%s852 + $0xe1] sm:$0xff]
        %v1950 = vld [vmem:[%s852 + $0xf1] sm:$0xff]
        %v1951 = vld [vmem:[%s852 + $0xf9] sm:$0xff]
        %v1952 = vld [vmem:[%s852 + $0x109] sm:$0xff]
        %v1953 = vld [vmem:[%s852 + $0x111] sm:$0xff]
        %v1954 = vld [vmem:[%s852 + $0x121] sm:$0xff]
        %v1955 = vld [vmem:[%s852 + $0x129] sm:$0xff]
        %v1956 = vld [vmem:[%s852 + $0x139] sm:$0xff]
        %v1957 = vld [vmem:[%s852 + $0x141] sm:$0xff]
        %v1958 = vld [vmem:[%s852 + $0x151] sm:$0xff]
        %v1959 = vld [vmem:[%s852 + $0x159] sm:$0xff]
        %v1960 = vld [vmem:[%s852 + $0x169] sm:$0xff]
        %v1961 = vld [vmem:[%s852 + $0x171] sm:$0xff]
        %v1962 = vld [vmem:[%s3 + $0x18] sm:$0x3f]
        %v1964 = vsel %vm668, %v1930, 0
        %v1967 = vsel %vm668, %v1931, 0
        %v1970 = vsel %vm668, %v1932, 0
        %v1973 = vsel %vm668, %v1933, 0
        %v1976 = vsel %vm668, %v1934, 0
        %v1979 = vsel %vm668, %v1935, 0
        %v1982 = vsel %vm668, %v1936, 0
        %v1985 = vsel %vm668, %v1937, 0
        %v1988 = vsel %vm668, %v1938, 0
        %v1991 = vsel %vm668, %v1939, 0
        %v1994 = vsel %vm668, %v1940, 0
        %v1997 = vsel %vm668, %v1941, 0
        %v2000 = vsel %vm668, %v1942, 0
        %v2003 = vsel %vm668, %v1943, 0
        %v2006 = vsel %vm668, %v1944, 0
        %v2009 = vsel %vm668, %v1945, 0
        %v2012 = vsel %vm668, %v1946, 0
        %v2015 = vsel %vm668, %v1947, 0
        %v2018 = vsel %vm668, %v1948, 0
        %v2021 = vsel %vm668, %v1949, 0
        %v2024 = vsel %vm668, %v1950, 0
        %v2027 = vsel %vm668, %v1951, 0
        %v2030 = vsel %vm668, %v1952, 0
        %v2033 = vsel %vm668, %v1953, 0
        %v2036 = vsel %vm668, %v1954, 0
        %v2039 = vsel %vm668, %v1955, 0
        %v2042 = vsel %vm668, %v1956, 0
        %v2045 = vsel %vm668, %v1957, 0
        %v2048 = vsel %vm668, %v1958, 0
        %v2051 = vsel %vm668, %v1959, 0
        %v2054 = vsel %vm668, %v1960, 0
        %v2057 = vsel %vm668, %v1961, 0
        %v2060 = vsel %vm1047, %v1962, 0
        %2062 = vmatpush.msra.mxu0 0.0
        %2063 = vmatpush.msra.mxu0 0.0
        %2064 = vmatpush.msra.mxu0 0.0
        %2065 = vmatpush.msra.mxu0 0.0
        %2066 = vmatpush.msra.mxu0 0.0
        %2067 = vmatpush.msra.mxu0 0.0
        %2068 = vmatpush.msra.mxu0 0.0
        %2069 = vmatpush.msra.mxu0 0.0
        %2070 = vmatpush.msra.mxu0 0.0
        %2071 = vmatpush.msra.mxu0 0.0
        %2072 = vmatpush.msra.mxu0 0.0
        %2073 = vmatpush.msra.mxu0 0.0
        %2074 = vmatpush.msra.mxu0 0.0
        %2075 = vmatpush.msra.mxu0 0.0
        %2076 = vmatpush.msra.mxu0 0.0
        %2077 = vmatpush.msra.mxu0 %v2060
        %2078 = vmatmul.f32.gmra.mxu0 %v1964
        %v2079 = vpop.f32.mrf.mxu0
        %v2080 = vadd.f32 0.0, %v2079
        %2081 = vmatmul.f32.gmra.mxu0 %v1967
        %v2082 = vpop.f32.mrf.mxu0
        %v2083 = vadd.f32 0.0, %v2082
        %2084 = vmatmul.f32.gmra.mxu0 %v1970
        %v2085 = vpop.f32.mrf.mxu0
        %v2086 = vadd.f32 0.0, %v2085
        %2087 = vmatmul.f32.gmra.mxu0 %v1973
        %v2088 = vpop.f32.mrf.mxu0
        %v2089 = vadd.f32 0.0, %v2088
        %2090 = vmatmul.f32.gmra.mxu0 %v1976
        %v2091 = vpop.f32.mrf.mxu0
        %v2092 = vadd.f32 0.0, %v2091
        %2093 = vmatmul.f32.gmra.mxu0 %v1979
        %v2094 = vpop.f32.mrf.mxu0
        %v2095 = vadd.f32 0.0, %v2094
        %2096 = vmatmul.f32.gmra.mxu0 %v1982
        %v2097 = vpop.f32.mrf.mxu0
        %v2098 = vadd.f32 0.0, %v2097
        %2099 = vmatmul.f32.gmra.mxu0 %v1985
        %v2100 = vpop.f32.mrf.mxu0
        %v2101 = vadd.f32 0.0, %v2100
        %2102 = vmatmul.f32.gmra.mxu0 %v1988
        %v2103 = vpop.f32.mrf.mxu0
        %v2104 = vadd.f32 0.0, %v2103
        %2105 = vmatmul.f32.gmra.mxu0 %v1991
        %v2106 = vpop.f32.mrf.mxu0
        %v2107 = vadd.f32 0.0, %v2106
        %2108 = vmatmul.f32.gmra.mxu0 %v1994
        %v2109 = vpop.f32.mrf.mxu0
        %v2110 = vadd.f32 0.0, %v2109
        %2111 = vmatmul.f32.gmra.mxu0 %v1997
        %v2112 = vpop.f32.mrf.mxu0
        %v2113 = vadd.f32 0.0, %v2112
        %2114 = vmatmul.f32.gmra.mxu0 %v2000
        %v2115 = vpop.f32.mrf.mxu0
        %v2116 = vadd.f32 0.0, %v2115
        %2117 = vmatmul.f32.gmra.mxu0 %v2003
        %v2118 = vpop.f32.mrf.mxu0
        %v2119 = vadd.f32 0.0, %v2118
        %2120 = vmatmul.f32.gmra.mxu0 %v2006
        %v2121 = vpop.f32.mrf.mxu0
        %v2122 = vadd.f32 0.0, %v2121
        %2123 = vmatmul.f32.gmra.mxu0 %v2009
        %v2124 = vpop.f32.mrf.mxu0
        %v2125 = vadd.f32 0.0, %v2124
        %2126 = vmatmul.f32.gmra.mxu0 %v2012
        %v2127 = vpop.f32.mrf.mxu0
        %v2128 = vadd.f32 0.0, %v2127
        %2129 = vmatmul.f32.gmra.mxu0 %v2015
        %v2130 = vpop.f32.mrf.mxu0
        %v2131 = vadd.f32 0.0, %v2130
        %2132 = vmatmul.f32.gmra.mxu0 %v2018
        %v2133 = vpop.f32.mrf.mxu0
        %v2134 = vadd.f32 0.0, %v2133
        %2135 = vmatmul.f32.gmra.mxu0 %v2021
        %v2136 = vpop.f32.mrf.mxu0
        %v2137 = vadd.f32 0.0, %v2136
        %2138 = vmatmul.f32.gmra.mxu0 %v2024
        %v2139 = vpop.f32.mrf.mxu0
        %v2140 = vadd.f32 0.0, %v2139
        %2141 = vmatmul.f32.gmra.mxu0 %v2027
        %v2142 = vpop.f32.mrf.mxu0
        %v2143 = vadd.f32 0.0, %v2142
        %2144 = vmatmul.f32.gmra.mxu0 %v2030
        %v2145 = vpop.f32.mrf.mxu0
        %v2146 = vadd.f32 0.0, %v2145
        %2147 = vmatmul.f32.gmra.mxu0 %v2033
        %v2148 = vpop.f32.mrf.mxu0
        %v2149 = vadd.f32 0.0, %v2148
        %2150 = vmatmul.f32.gmra.mxu0 %v2036
        %v2151 = vpop.f32.mrf.mxu0
        %v2152 = vadd.f32 0.0, %v2151
        %2153 = vmatmul.f32.gmra.mxu0 %v2039
        %v2154 = vpop.f32.mrf.mxu0
        %v2155 = vadd.f32 0.0, %v2154
        %2156 = vmatmul.f32.gmra.mxu0 %v2042
        %v2157 = vpop.f32.mrf.mxu0
        %v2158 = vadd.f32 0.0, %v2157
        %2159 = vmatmul.f32.gmra.mxu0 %v2045
        %v2160 = vpop.f32.mrf.mxu0
        %v2161 = vadd.f32 0.0, %v2160
        %2162 = vmatmul.f32.gmra.mxu0 %v2048
        %v2163 = vpop.f32.mrf.mxu0
        %v2164 = vadd.f32 0.0, %v2163
        %2165 = vmatmul.f32.gmra.mxu0 %v2051
        %v2166 = vpop.f32.mrf.mxu0
        %v2167 = vadd.f32 0.0, %v2166
        %2168 = vmatmul.f32.gmra.mxu0 %v2054
        %v2169 = vpop.f32.mrf.mxu0
        %v2170 = vadd.f32 0.0, %v2169
        %2171 = vmatmul.f32.gmra.mxu0 %v2057
        %v2172 = vpop.f32.mrf.mxu0
        %v2173 = vadd.f32 0.0, %v2172
        %2174 = vdwg.mxu0
        %v2175 = vadd.f32 %v1898, %v2080
        %v2176 = vadd.f32 %v1899, %v2083
        %v2177 = vadd.f32 %v1900, %v2086
        %v2178 = vadd.f32 %v1901, %v2089
        %v2179 = vadd.f32 %v1902, %v2092
        %v2180 = vadd.f32 %v1903, %v2095
        %v2181 = vadd.f32 %v1904, %v2098
        %v2182 = vadd.f32 %v1905, %v2101
        %v2183 = vadd.f32 %v1906, %v2104
        %v2184 = vadd.f32 %v1907, %v2107
        %v2185 = vadd.f32 %v1908, %v2110
        %v2186 = vadd.f32 %v1909, %v2113
        %v2187 = vadd.f32 %v1910, %v2116
        %v2188 = vadd.f32 %v1911, %v2119
        %v2189 = vadd.f32 %v1912, %v2122
        %v2190 = vadd.f32 %v1913, %v2125
        %v2191 = vadd.f32 %v1914, %v2128
        %v2192 = vadd.f32 %v1915, %v2131
        %v2193 = vadd.f32 %v1916, %v2134
        %v2194 = vadd.f32 %v1917, %v2137
        %v2195 = vadd.f32 %v1918, %v2140
        %v2196 = vadd.f32 %v1919, %v2143
        %v2197 = vadd.f32 %v1920, %v2146
        %v2198 = vadd.f32 %v1921, %v2149
        %v2199 = vadd.f32 %v1922, %v2152
        %v2200 = vadd.f32 %v1923, %v2155
        %v2201 = vadd.f32 %v1924, %v2158
        %v2202 = vadd.f32 %v1925, %v2161
        %v2203 = vadd.f32 %v1926, %v2164
        %v2204 = vadd.f32 %v1927, %v2167
        %v2205 = vadd.f32 %v1928, %v2170
        %v2206 = vadd.f32 %v1929, %v2173
        %v2207 = vld [vmem:[%s852 + $0x2] sm:$0xff]
        %v2208 = vld [vmem:[%s852 + $0xa] sm:$0xff]
        %v2209 = vld [vmem:[%s852 + $0x1a] sm:$0xff]
        %v2210 = vld [vmem:[%s852 + $0x22] sm:$0xff]
        %v2211 = vld [vmem:[%s852 + $0x32] sm:$0xff]
        %v2212 = vld [vmem:[%s852 + $0x3a] sm:$0xff]
        %v2213 = vld [vmem:[%s852 + $0x4a] sm:$0xff]
        %v2214 = vld [vmem:[%s852 + $0x52] sm:$0xff]
        %v2215 = vld [vmem:[%s852 + $0x62] sm:$0xff]
        %v2216 = vld [vmem:[%s852 + $0x6a] sm:$0xff]
        %v2217 = vld [vmem:[%s852 + $0x7a] sm:$0xff]
        %v2218 = vld [vmem:[%s852 + $0x82] sm:$0xff]
        %v2219 = vld [vmem:[%s852 + $0x92] sm:$0xff]
        %v2220 = vld [vmem:[%s852 + $0x9a] sm:$0xff]
        %v2221 = vld [vmem:[%s852 + $0xaa] sm:$0xff]
        %v2222 = vld [vmem:[%s852 + $0xb2] sm:$0xff]
        %v2223 = vld [vmem:[%s852 + $0xc2] sm:$0xff]
        %v2224 = vld [vmem:[%s852 + $0xca] sm:$0xff]
        %v2225 = vld [vmem:[%s852 + $0xda] sm:$0xff]
        %v2226 = vld [vmem:[%s852 + $0xe2] sm:$0xff]
        %v2227 = vld [vmem:[%s852 + $0xf2] sm:$0xff]
        %v2228 = vld [vmem:[%s852 + $0xfa] sm:$0xff]
        %v2229 = vld [vmem:[%s852 + $0x10a] sm:$0xff]
        %v2230 = vld [vmem:[%s852 + $0x112] sm:$0xff]
        %v2231 = vld [vmem:[%s852 + $0x122] sm:$0xff]
        %v2232 = vld [vmem:[%s852 + $0x12a] sm:$0xff]
        %v2233 = vld [vmem:[%s852 + $0x13a] sm:$0xff]
        %v2234 = vld [vmem:[%s852 + $0x142] sm:$0xff]
        %v2235 = vld [vmem:[%s852 + $0x152] sm:$0xff]
        %v2236 = vld [vmem:[%s852 + $0x15a] sm:$0xff]
        %v2237 = vld [vmem:[%s852 + $0x16a] sm:$0xff]
        %v2238 = vld [vmem:[%s852 + $0x172] sm:$0xff]
        %v2239 = vld [vmem:[%s3 + $0x1e] sm:$0x3f]
        %v2241 = vsel %vm668, %v2207, 0
        %v2244 = vsel %vm668, %v2208, 0
        %v2247 = vsel %vm668, %v2209, 0
        %v2250 = vsel %vm668, %v2210, 0
        %v2253 = vsel %vm668, %v2211, 0
        %v2256 = vsel %vm668, %v2212, 0
        %v2259 = vsel %vm668, %v2213, 0
        %v2262 = vsel %vm668, %v2214, 0
        %v2265 = vsel %vm668, %v2215, 0
        %v2268 = vsel %vm668, %v2216, 0
        %v2271 = vsel %vm668, %v2217, 0
        %v2274 = vsel %vm668, %v2218, 0
        %v2277 = vsel %vm668, %v2219, 0
        %v2280 = vsel %vm668, %v2220, 0
        %v2283 = vsel %vm668, %v2221, 0
        %v2286 = vsel %vm668, %v2222, 0
        %v2289 = vsel %vm668, %v2223, 0
        %v2292 = vsel %vm668, %v2224, 0
        %v2295 = vsel %vm668, %v2225, 0
        %v2298 = vsel %vm668, %v2226, 0
        %v2301 = vsel %vm668, %v2227, 0
        %v2304 = vsel %vm668, %v2228, 0
        %v2307 = vsel %vm668, %v2229, 0
        %v2310 = vsel %vm668, %v2230, 0
        %v2313 = vsel %vm668, %v2231, 0
        %v2316 = vsel %vm668, %v2232, 0
        %v2319 = vsel %vm668, %v2233, 0
        %v2322 = vsel %vm668, %v2234, 0
        %v2325 = vsel %vm668, %v2235, 0
        %v2328 = vsel %vm668, %v2236, 0
        %v2331 = vsel %vm668, %v2237, 0
        %v2334 = vsel %vm668, %v2238, 0
        %v2337 = vsel %vm1047, %v2239, 0
        %2339 = vmatpush.msra.mxu0 0.0
        %2340 = vmatpush.msra.mxu0 0.0
        %2341 = vmatpush.msra.mxu0 0.0
        %2342 = vmatpush.msra.mxu0 0.0
        %2343 = vmatpush.msra.mxu0 0.0
        %2344 = vmatpush.msra.mxu0 0.0
        %2345 = vmatpush.msra.mxu0 0.0
        %2346 = vmatpush.msra.mxu0 0.0
        %2347 = vmatpush.msra.mxu0 0.0
        %2348 = vmatpush.msra.mxu0 0.0
        %2349 = vmatpush.msra.mxu0 0.0
        %2350 = vmatpush.msra.mxu0 0.0
        %2351 = vmatpush.msra.mxu0 0.0
        %2352 = vmatpush.msra.mxu0 0.0
        %2353 = vmatpush.msra.mxu0 0.0
        %2354 = vmatpush.msra.mxu0 %v2337
        %2355 = vmatmul.f32.gmra.mxu0 %v2241
        %v2356 = vpop.f32.mrf.mxu0
        %v2357 = vadd.f32 0.0, %v2356
        %2358 = vmatmul.f32.gmra.mxu0 %v2244
        %v2359 = vpop.f32.mrf.mxu0
        %v2360 = vadd.f32 0.0, %v2359
        %2361 = vmatmul.f32.gmra.mxu0 %v2247
        %v2362 = vpop.f32.mrf.mxu0
        %v2363 = vadd.f32 0.0, %v2362
        %2364 = vmatmul.f32.gmra.mxu0 %v2250
        %v2365 = vpop.f32.mrf.mxu0
        %v2366 = vadd.f32 0.0, %v2365
        %2367 = vmatmul.f32.gmra.mxu0 %v2253
        %v2368 = vpop.f32.mrf.mxu0
        %v2369 = vadd.f32 0.0, %v2368
        %2370 = vmatmul.f32.gmra.mxu0 %v2256
        %v2371 = vpop.f32.mrf.mxu0
        %v2372 = vadd.f32 0.0, %v2371
        %2373 = vmatmul.f32.gmra.mxu0 %v2259
        %v2374 = vpop.f32.mrf.mxu0
        %v2375 = vadd.f32 0.0, %v2374
        %2376 = vmatmul.f32.gmra.mxu0 %v2262
        %v2377 = vpop.f32.mrf.mxu0
        %v2378 = vadd.f32 0.0, %v2377
        %2379 = vmatmul.f32.gmra.mxu0 %v2265
        %v2380 = vpop.f32.mrf.mxu0
        %v2381 = vadd.f32 0.0, %v2380
        %2382 = vmatmul.f32.gmra.mxu0 %v2268
        %v2383 = vpop.f32.mrf.mxu0
        %v2384 = vadd.f32 0.0, %v2383
        %2385 = vmatmul.f32.gmra.mxu0 %v2271
        %v2386 = vpop.f32.mrf.mxu0
        %v2387 = vadd.f32 0.0, %v2386
        %2388 = vmatmul.f32.gmra.mxu0 %v2274
        %v2389 = vpop.f32.mrf.mxu0
        %v2390 = vadd.f32 0.0, %v2389
        %2391 = vmatmul.f32.gmra.mxu0 %v2277
        %v2392 = vpop.f32.mrf.mxu0
        %v2393 = vadd.f32 0.0, %v2392
        %2394 = vmatmul.f32.gmra.mxu0 %v2280
        %v2395 = vpop.f32.mrf.mxu0
        %v2396 = vadd.f32 0.0, %v2395
        %2397 = vmatmul.f32.gmra.mxu0 %v2283
        %v2398 = vpop.f32.mrf.mxu0
        %v2399 = vadd.f32 0.0, %v2398
        %2400 = vmatmul.f32.gmra.mxu0 %v2286
        %v2401 = vpop.f32.mrf.mxu0
        %v2402 = vadd.f32 0.0, %v2401
        %2403 = vmatmul.f32.gmra.mxu0 %v2289
        %v2404 = vpop.f32.mrf.mxu0
        %v2405 = vadd.f32 0.0, %v2404
        %2406 = vmatmul.f32.gmra.mxu0 %v2292
        %v2407 = vpop.f32.mrf.mxu0
        %v2408 = vadd.f32 0.0, %v2407
        %2409 = vmatmul.f32.gmra.mxu0 %v2295
        %v2410 = vpop.f32.mrf.mxu0
        %v2411 = vadd.f32 0.0, %v2410
        %2412 = vmatmul.f32.gmra.mxu0 %v2298
        %v2413 = vpop.f32.mrf.mxu0
        %v2414 = vadd.f32 0.0, %v2413
        %2415 = vmatmul.f32.gmra.mxu0 %v2301
        %v2416 = vpop.f32.mrf.mxu0
        %v2417 = vadd.f32 0.0, %v2416
        %2418 = vmatmul.f32.gmra.mxu0 %v2304
        %v2419 = vpop.f32.mrf.mxu0
        %v2420 = vadd.f32 0.0, %v2419
        %2421 = vmatmul.f32.gmra.mxu0 %v2307
        %v2422 = vpop.f32.mrf.mxu0
        %v2423 = vadd.f32 0.0, %v2422
        %2424 = vmatmul.f32.gmra.mxu0 %v2310
        %v2425 = vpop.f32.mrf.mxu0
        %v2426 = vadd.f32 0.0, %v2425
        %2427 = vmatmul.f32.gmra.mxu0 %v2313
        %v2428 = vpop.f32.mrf.mxu0
        %v2429 = vadd.f32 0.0, %v2428
        %2430 = vmatmul.f32.gmra.mxu0 %v2316
        %v2431 = vpop.f32.mrf.mxu0
        %v2432 = vadd.f32 0.0, %v2431
        %2433 = vmatmul.f32.gmra.mxu0 %v2319
        %v2434 = vpop.f32.mrf.mxu0
        %v2435 = vadd.f32 0.0, %v2434
        %2436 = vmatmul.f32.gmra.mxu0 %v2322
        %v2437 = vpop.f32.mrf.mxu0
        %v2438 = vadd.f32 0.0, %v2437
        %2439 = vmatmul.f32.gmra.mxu0 %v2325
        %v2440 = vpop.f32.mrf.mxu0
        %v2441 = vadd.f32 0.0, %v2440
        %2442 = vmatmul.f32.gmra.mxu0 %v2328
        %v2443 = vpop.f32.mrf.mxu0
        %v2444 = vadd.f32 0.0, %v2443
        %2445 = vmatmul.f32.gmra.mxu0 %v2331
        %v2446 = vpop.f32.mrf.mxu0
        %v2447 = vadd.f32 0.0, %v2446
        %2448 = vmatmul.f32.gmra.mxu0 %v2334
        %v2449 = vpop.f32.mrf.mxu0
        %v2450 = vadd.f32 0.0, %v2449
        %2451 = vdwg.mxu0
        %v2452 = vadd.f32 %v2175, %v2357
        %v2453 = vadd.f32 %v2176, %v2360
        %v2454 = vadd.f32 %v2177, %v2363
        %v2455 = vadd.f32 %v2178, %v2366
        %v2456 = vadd.f32 %v2179, %v2369
        %v2457 = vadd.f32 %v2180, %v2372
        %v2458 = vadd.f32 %v2181, %v2375
        %v2459 = vadd.f32 %v2182, %v2378
        %v2460 = vadd.f32 %v2183, %v2381
        %v2461 = vadd.f32 %v2184, %v2384
        %v2462 = vadd.f32 %v2185, %v2387
        %v2463 = vadd.f32 %v2186, %v2390
        %v2464 = vadd.f32 %v2187, %v2393
        %v2465 = vadd.f32 %v2188, %v2396
        %v2466 = vadd.f32 %v2189, %v2399
        %v2467 = vadd.f32 %v2190, %v2402
        %v2468 = vadd.f32 %v2191, %v2405
        %v2469 = vadd.f32 %v2192, %v2408
        %v2470 = vadd.f32 %v2193, %v2411
        %v2471 = vadd.f32 %v2194, %v2414
        %v2472 = vadd.f32 %v2195, %v2417
        %v2473 = vadd.f32 %v2196, %v2420
        %v2474 = vadd.f32 %v2197, %v2423
        %v2475 = vadd.f32 %v2198, %v2426
        %v2476 = vadd.f32 %v2199, %v2429
        %v2477 = vadd.f32 %v2200, %v2432
        %v2478 = vadd.f32 %v2201, %v2435
        %v2479 = vadd.f32 %v2202, %v2438
        %v2480 = vadd.f32 %v2203, %v2441
        %v2481 = vadd.f32 %v2204, %v2444
        %v2482 = vadd.f32 %v2205, %v2447
        %v2483 = vadd.f32 %v2206, %v2450
        %s2484 = scalar_lea.vmem [#allocation3], 48
        %v2485 = vld [vmem:[%s2484] sm:$0xff]
        %v2486 = vld [vmem:[%s2484 + $0x8] sm:$0xff]
        %v2487 = vld [vmem:[%s2484 + $0x18] sm:$0xff]
        %v2488 = vld [vmem:[%s2484 + $0x20] sm:$0xff]
        %v2489 = vld [vmem:[%s2484 + $0x30] sm:$0xff]
        %v2490 = vld [vmem:[%s2484 + $0x38] sm:$0xff]
        %v2491 = vld [vmem:[%s2484 + $0x48] sm:$0xff]
        %v2492 = vld [vmem:[%s2484 + $0x50] sm:$0xff]
        %v2493 = vld [vmem:[%s2484 + $0x60] sm:$0xff]
        %v2494 = vld [vmem:[%s2484 + $0x68] sm:$0xff]
        %v2495 = vld [vmem:[%s2484 + $0x78] sm:$0xff]
        %v2496 = vld [vmem:[%s2484 + $0x80] sm:$0xff]
        %v2497 = vld [vmem:[%s2484 + $0x90] sm:$0xff]
        %v2498 = vld [vmem:[%s2484 + $0x98] sm:$0xff]
        %v2499 = vld [vmem:[%s2484 + $0xa8] sm:$0xff]
        %v2500 = vld [vmem:[%s2484 + $0xb0] sm:$0xff]
        %v2501 = vld [vmem:[%s2484 + $0xc0] sm:$0xff]
        %v2502 = vld [vmem:[%s2484 + $0xc8] sm:$0xff]
        %v2503 = vld [vmem:[%s2484 + $0xd8] sm:$0xff]
        %v2504 = vld [vmem:[%s2484 + $0xe0] sm:$0xff]
        %v2505 = vld [vmem:[%s2484 + $0xf0] sm:$0xff]
        %v2506 = vld [vmem:[%s2484 + $0xf8] sm:$0xff]
        %v2507 = vld [vmem:[%s2484 + $0x108] sm:$0xff]
        %v2508 = vld [vmem:[%s2484 + $0x110] sm:$0xff]
        %v2509 = vld [vmem:[%s2484 + $0x120] sm:$0xff]
        %v2510 = vld [vmem:[%s2484 + $0x128] sm:$0xff]
        %v2511 = vld [vmem:[%s2484 + $0x138] sm:$0xff]
        %v2512 = vld [vmem:[%s2484 + $0x140] sm:$0xff]
        %v2513 = vld [vmem:[%s2484 + $0x150] sm:$0xff]
        %v2514 = vld [vmem:[%s2484 + $0x158] sm:$0xff]
        %v2515 = vld [vmem:[%s2484 + $0x168] sm:$0xff]
        %v2516 = vld [vmem:[%s2484 + $0x170] sm:$0xff]
        %v2517 = vld [vmem:[%s3 + $0x24] sm:$0x3f]
        %v2519 = vsel %vm668, %v2485, 0
        %v2522 = vsel %vm668, %v2486, 0
        %v2525 = vsel %vm668, %v2487, 0
        %v2528 = vsel %vm668, %v2488, 0
        %v2531 = vsel %vm668, %v2489, 0
        %v2534 = vsel %vm668, %v2490, 0
        %v2537 = vsel %vm668, %v2491, 0
        %v2540 = vsel %vm668, %v2492, 0
        %v2543 = vsel %vm668, %v2493, 0
        %v2546 = vsel %vm668, %v2494, 0
        %v2549 = vsel %vm668, %v2495, 0
        %v2552 = vsel %vm668, %v2496, 0
        %v2555 = vsel %vm668, %v2497, 0
        %v2558 = vsel %vm668, %v2498, 0
        %v2561 = vsel %vm668, %v2499, 0
        %v2564 = vsel %vm668, %v2500, 0
        %v2567 = vsel %vm668, %v2501, 0
        %v2570 = vsel %vm668, %v2502, 0
        %v2573 = vsel %vm668, %v2503, 0
        %v2576 = vsel %vm668, %v2504, 0
        %v2579 = vsel %vm668, %v2505, 0
        %v2582 = vsel %vm668, %v2506, 0
        %v2585 = vsel %vm668, %v2507, 0
        %v2588 = vsel %vm668, %v2508, 0
        %v2591 = vsel %vm668, %v2509, 0
        %v2594 = vsel %vm668, %v2510, 0
        %v2597 = vsel %vm668, %v2511, 0
        %v2600 = vsel %vm668, %v2512, 0
        %v2603 = vsel %vm668, %v2513, 0
        %v2606 = vsel %vm668, %v2514, 0
        %v2609 = vsel %vm668, %v2515, 0
        %v2612 = vsel %vm668, %v2516, 0
        %v2615 = vsel %vm1047, %v2517, 0
        %2617 = vmatpush.msra.mxu0 0.0
        %2618 = vmatpush.msra.mxu0 0.0
        %2619 = vmatpush.msra.mxu0 0.0
        %2620 = vmatpush.msra.mxu0 0.0
        %2621 = vmatpush.msra.mxu0 0.0
        %2622 = vmatpush.msra.mxu0 0.0
        %2623 = vmatpush.msra.mxu0 0.0
        %2624 = vmatpush.msra.mxu0 0.0
        %2625 = vmatpush.msra.mxu0 0.0
        %2626 = vmatpush.msra.mxu0 0.0
        %2627 = vmatpush.msra.mxu0 0.0
        %2628 = vmatpush.msra.mxu0 0.0
        %2629 = vmatpush.msra.mxu0 0.0
        %2630 = vmatpush.msra.mxu0 0.0
        %2631 = vmatpush.msra.mxu0 0.0
        %2632 = vmatpush.msra.mxu0 %v2615
        %2633 = vmatmul.f32.gmra.mxu0 %v2519
        %v2634 = vpop.f32.mrf.mxu0
        %v2635 = vadd.f32 0.0, %v2634
        %2636 = vmatmul.f32.gmra.mxu0 %v2522
        %v2637 = vpop.f32.mrf.mxu0
        %v2638 = vadd.f32 0.0, %v2637
        %2639 = vmatmul.f32.gmra.mxu0 %v2525
        %v2640 = vpop.f32.mrf.mxu0
        %v2641 = vadd.f32 0.0, %v2640
        %2642 = vmatmul.f32.gmra.mxu0 %v2528
        %v2643 = vpop.f32.mrf.mxu0
        %v2644 = vadd.f32 0.0, %v2643
        %2645 = vmatmul.f32.gmra.mxu0 %v2531
        %v2646 = vpop.f32.mrf.mxu0
        %v2647 = vadd.f32 0.0, %v2646
        %2648 = vmatmul.f32.gmra.mxu0 %v2534
        %v2649 = vpop.f32.mrf.mxu0
        %v2650 = vadd.f32 0.0, %v2649
        %2651 = vmatmul.f32.gmra.mxu0 %v2537
        %v2652 = vpop.f32.mrf.mxu0
        %v2653 = vadd.f32 0.0, %v2652
        %2654 = vmatmul.f32.gmra.mxu0 %v2540
        %v2655 = vpop.f32.mrf.mxu0
        %v2656 = vadd.f32 0.0, %v2655
        %2657 = vmatmul.f32.gmra.mxu0 %v2543
        %v2658 = vpop.f32.mrf.mxu0
        %v2659 = vadd.f32 0.0, %v2658
        %2660 = vmatmul.f32.gmra.mxu0 %v2546
        %v2661 = vpop.f32.mrf.mxu0
        %v2662 = vadd.f32 0.0, %v2661
        %2663 = vmatmul.f32.gmra.mxu0 %v2549
        %v2664 = vpop.f32.mrf.mxu0
        %v2665 = vadd.f32 0.0, %v2664
        %2666 = vmatmul.f32.gmra.mxu0 %v2552
        %v2667 = vpop.f32.mrf.mxu0
        %v2668 = vadd.f32 0.0, %v2667
        %2669 = vmatmul.f32.gmra.mxu0 %v2555
        %v2670 = vpop.f32.mrf.mxu0
        %v2671 = vadd.f32 0.0, %v2670
        %2672 = vmatmul.f32.gmra.mxu0 %v2558
        %v2673 = vpop.f32.mrf.mxu0
        %v2674 = vadd.f32 0.0, %v2673
        %2675 = vmatmul.f32.gmra.mxu0 %v2561
        %v2676 = vpop.f32.mrf.mxu0
        %v2677 = vadd.f32 0.0, %v2676
        %2678 = vmatmul.f32.gmra.mxu0 %v2564
        %v2679 = vpop.f32.mrf.mxu0
        %v2680 = vadd.f32 0.0, %v2679
        %2681 = vmatmul.f32.gmra.mxu0 %v2567
        %v2682 = vpop.f32.mrf.mxu0
        %v2683 = vadd.f32 0.0, %v2682
        %2684 = vmatmul.f32.gmra.mxu0 %v2570
        %v2685 = vpop.f32.mrf.mxu0
        %v2686 = vadd.f32 0.0, %v2685
        %2687 = vmatmul.f32.gmra.mxu0 %v2573
        %v2688 = vpop.f32.mrf.mxu0
        %v2689 = vadd.f32 0.0, %v2688
        %2690 = vmatmul.f32.gmra.mxu0 %v2576
        %v2691 = vpop.f32.mrf.mxu0
        %v2692 = vadd.f32 0.0, %v2691
        %2693 = vmatmul.f32.gmra.mxu0 %v2579
        %v2694 = vpop.f32.mrf.mxu0
        %v2695 = vadd.f32 0.0, %v2694
        %2696 = vmatmul.f32.gmra.mxu0 %v2582
        %v2697 = vpop.f32.mrf.mxu0
        %v2698 = vadd.f32 0.0, %v2697
        %2699 = vmatmul.f32.gmra.mxu0 %v2585
        %v2700 = vpop.f32.mrf.mxu0
        %v2701 = vadd.f32 0.0, %v2700
        %2702 = vmatmul.f32.gmra.mxu0 %v2588
        %v2703 = vpop.f32.mrf.mxu0
        %v2704 = vadd.f32 0.0, %v2703
        %2705 = vmatmul.f32.gmra.mxu0 %v2591
        %v2706 = vpop.f32.mrf.mxu0
        %v2707 = vadd.f32 0.0, %v2706
        %2708 = vmatmul.f32.gmra.mxu0 %v2594
        %v2709 = vpop.f32.mrf.mxu0
        %v2710 = vadd.f32 0.0, %v2709
        %2711 = vmatmul.f32.gmra.mxu0 %v2597
        %v2712 = vpop.f32.mrf.mxu0
        %v2713 = vadd.f32 0.0, %v2712
        %2714 = vmatmul.f32.gmra.mxu0 %v2600
        %v2715 = vpop.f32.mrf.mxu0
        %v2716 = vadd.f32 0.0, %v2715
        %2717 = vmatmul.f32.gmra.mxu0 %v2603
        %v2718 = vpop.f32.mrf.mxu0
        %v2719 = vadd.f32 0.0, %v2718
        %2720 = vmatmul.f32.gmra.mxu0 %v2606
        %v2721 = vpop.f32.mrf.mxu0
        %v2722 = vadd.f32 0.0, %v2721
        %2723 = vmatmul.f32.gmra.mxu0 %v2609
        %v2724 = vpop.f32.mrf.mxu0
        %v2725 = vadd.f32 0.0, %v2724
        %2726 = vmatmul.f32.gmra.mxu0 %v2612
        %v2727 = vpop.f32.mrf.mxu0
        %v2728 = vadd.f32 0.0, %v2727
        %2729 = vdwg.mxu0
        %v2730 = vadd.f32 %v2452, %v2635
        %v2731 = vadd.f32 %v2453, %v2638
        %v2732 = vadd.f32 %v2454, %v2641
        %v2733 = vadd.f32 %v2455, %v2644
        %v2734 = vadd.f32 %v2456, %v2647
        %v2735 = vadd.f32 %v2457, %v2650
        %v2736 = vadd.f32 %v2458, %v2653
        %v2737 = vadd.f32 %v2459, %v2656
        %v2738 = vadd.f32 %v2460, %v2659
        %v2739 = vadd.f32 %v2461, %v2662
        %v2740 = vadd.f32 %v2462, %v2665
        %v2741 = vadd.f32 %v2463, %v2668
        %v2742 = vadd.f32 %v2464, %v2671
        %v2743 = vadd.f32 %v2465, %v2674
        %v2744 = vadd.f32 %v2466, %v2677
        %v2745 = vadd.f32 %v2467, %v2680
        %v2746 = vadd.f32 %v2468, %v2683
        %v2747 = vadd.f32 %v2469, %v2686
        %v2748 = vadd.f32 %v2470, %v2689
        %v2749 = vadd.f32 %v2471, %v2692
        %v2750 = vadd.f32 %v2472, %v2695
        %v2751 = vadd.f32 %v2473, %v2698
        %v2752 = vadd.f32 %v2474, %v2701
        %v2753 = vadd.f32 %v2475, %v2704
        %v2754 = vadd.f32 %v2476, %v2707
        %v2755 = vadd.f32 %v2477, %v2710
        %v2756 = vadd.f32 %v2478, %v2713
        %v2757 = vadd.f32 %v2479, %v2716
        %v2758 = vadd.f32 %v2480, %v2719
        %v2759 = vadd.f32 %v2481, %v2722
        %v2760 = vadd.f32 %v2482, %v2725
        %v2761 = vadd.f32 %v2483, %v2728
        %v2762 = vld [vmem:[%s2484 + $0x1] sm:$0xff]
        %v2763 = vld [vmem:[%s2484 + $0x9] sm:$0xff]
        %v2764 = vld [vmem:[%s2484 + $0x19] sm:$0xff]
        %v2765 = vld [vmem:[%s2484 + $0x21] sm:$0xff]
        %v2766 = vld [vmem:[%s2484 + $0x31] sm:$0xff]
        %v2767 = vld [vmem:[%s2484 + $0x39] sm:$0xff]
        %v2768 = vld [vmem:[%s2484 + $0x49] sm:$0xff]
        %v2769 = vld [vmem:[%s2484 + $0x51] sm:$0xff]
        %v2770 = vld [vmem:[%s2484 + $0x61] sm:$0xff]
        %v2771 = vld [vmem:[%s2484 + $0x69] sm:$0xff]
        %v2772 = vld [vmem:[%s2484 + $0x79] sm:$0xff]
        %v2773 = vld [vmem:[%s2484 + $0x81] sm:$0xff]
        %v2774 = vld [vmem:[%s2484 + $0x91] sm:$0xff]
        %v2775 = vld [vmem:[%s2484 + $0x99] sm:$0xff]
        %v2776 = vld [vmem:[%s2484 + $0xa9] sm:$0xff]
        %v2777 = vld [vmem:[%s2484 + $0xb1] sm:$0xff]
        %v2778 = vld [vmem:[%s2484 + $0xc1] sm:$0xff]
        %v2779 = vld [vmem:[%s2484 + $0xc9] sm:$0xff]
        %v2780 = vld [vmem:[%s2484 + $0xd9] sm:$0xff]
        %v2781 = vld [vmem:[%s2484 + $0xe1] sm:$0xff]
        %v2782 = vld [vmem:[%s2484 + $0xf1] sm:$0xff]
        %v2783 = vld [vmem:[%s2484 + $0xf9] sm:$0xff]
        %v2784 = vld [vmem:[%s2484 + $0x109] sm:$0xff]
        %v2785 = vld [vmem:[%s2484 + $0x111] sm:$0xff]
        %v2786 = vld [vmem:[%s2484 + $0x121] sm:$0xff]
        %v2787 = vld [vmem:[%s2484 + $0x129] sm:$0xff]
        %v2788 = vld [vmem:[%s2484 + $0x139] sm:$0xff]
        %v2789 = vld [vmem:[%s2484 + $0x141] sm:$0xff]
        %v2790 = vld [vmem:[%s2484 + $0x151] sm:$0xff]
        %v2791 = vld [vmem:[%s2484 + $0x159] sm:$0xff]
        %v2792 = vld [vmem:[%s2484 + $0x169] sm:$0xff]
        %v2793 = vld [vmem:[%s2484 + $0x171] sm:$0xff]
        %v2794 = vld [vmem:[%s3 + $0x2a] sm:$0x3f]
        %v2796 = vsel %vm668, %v2762, 0
        %v2799 = vsel %vm668, %v2763, 0
        %v2802 = vsel %vm668, %v2764, 0
        %v2805 = vsel %vm668, %v2765, 0
        %v2808 = vsel %vm668, %v2766, 0
        %v2811 = vsel %vm668, %v2767, 0
        %v2814 = vsel %vm668, %v2768, 0
        %v2817 = vsel %vm668, %v2769, 0
        %v2820 = vsel %vm668, %v2770, 0
        %v2823 = vsel %vm668, %v2771, 0
        %v2826 = vsel %vm668, %v2772, 0
        %v2829 = vsel %vm668, %v2773, 0
        %v2832 = vsel %vm668, %v2774, 0
        %v2835 = vsel %vm668, %v2775, 0
        %v2838 = vsel %vm668, %v2776, 0
        %v2841 = vsel %vm668, %v2777, 0
        %v2844 = vsel %vm668, %v2778, 0
        %v2847 = vsel %vm668, %v2779, 0
        %v2850 = vsel %vm668, %v2780, 0
        %v2853 = vsel %vm668, %v2781, 0
        %v2856 = vsel %vm668, %v2782, 0
        %v2859 = vsel %vm668, %v2783, 0
        %v2862 = vsel %vm668, %v2784, 0
        %v2865 = vsel %vm668, %v2785, 0
        %v2868 = vsel %vm668, %v2786, 0
        %v2871 = vsel %vm668, %v2787, 0
        %v2874 = vsel %vm668, %v2788, 0
        %v2877 = vsel %vm668, %v2789, 0
        %v2880 = vsel %vm668, %v2790, 0
        %v2883 = vsel %vm668, %v2791, 0
        %v2886 = vsel %vm668, %v2792, 0
        %v2889 = vsel %vm668, %v2793, 0
        %v2892 = vsel %vm1047, %v2794, 0
        %2894 = vmatpush.msra.mxu0 0.0
        %2895 = vmatpush.msra.mxu0 0.0
        %2896 = vmatpush.msra.mxu0 0.0
        %2897 = vmatpush.msra.mxu0 0.0
        %2898 = vmatpush.msra.mxu0 0.0
        %2899 = vmatpush.msra.mxu0 0.0
        %2900 = vmatpush.msra.mxu0 0.0
        %2901 = vmatpush.msra.mxu0 0.0
        %2902 = vmatpush.msra.mxu0 0.0
        %2903 = vmatpush.msra.mxu0 0.0
        %2904 = vmatpush.msra.mxu0 0.0
        %2905 = vmatpush.msra.mxu0 0.0
        %2906 = vmatpush.msra.mxu0 0.0
        %2907 = vmatpush.msra.mxu0 0.0
        %2908 = vmatpush.msra.mxu0 0.0
        %2909 = vmatpush.msra.mxu0 %v2892
        %2910 = vmatmul.f32.gmra.mxu0 %v2796
        %v2911 = vpop.f32.mrf.mxu0
        %v2912 = vadd.f32 0.0, %v2911
        %2913 = vmatmul.f32.gmra.mxu0 %v2799
        %v2914 = vpop.f32.mrf.mxu0
        %v2915 = vadd.f32 0.0, %v2914
        %2916 = vmatmul.f32.gmra.mxu0 %v2802
        %v2917 = vpop.f32.mrf.mxu0
        %v2918 = vadd.f32 0.0, %v2917
        %2919 = vmatmul.f32.gmra.mxu0 %v2805
        %v2920 = vpop.f32.mrf.mxu0
        %v2921 = vadd.f32 0.0, %v2920
        %2922 = vmatmul.f32.gmra.mxu0 %v2808
        %v2923 = vpop.f32.mrf.mxu0
        %v2924 = vadd.f32 0.0, %v2923
        %2925 = vmatmul.f32.gmra.mxu0 %v2811
        %v2926 = vpop.f32.mrf.mxu0
        %v2927 = vadd.f32 0.0, %v2926
        %2928 = vmatmul.f32.gmra.mxu0 %v2814
        %v2929 = vpop.f32.mrf.mxu0
        %v2930 = vadd.f32 0.0, %v2929
        %2931 = vmatmul.f32.gmra.mxu0 %v2817
        %v2932 = vpop.f32.mrf.mxu0
        %v2933 = vadd.f32 0.0, %v2932
        %2934 = vmatmul.f32.gmra.mxu0 %v2820
        %v2935 = vpop.f32.mrf.mxu0
        %v2936 = vadd.f32 0.0, %v2935
        %2937 = vmatmul.f32.gmra.mxu0 %v2823
        %v2938 = vpop.f32.mrf.mxu0
        %v2939 = vadd.f32 0.0, %v2938
        %2940 = vmatmul.f32.gmra.mxu0 %v2826
        %v2941 = vpop.f32.mrf.mxu0
        %v2942 = vadd.f32 0.0, %v2941
        %2943 = vmatmul.f32.gmra.mxu0 %v2829
        %v2944 = vpop.f32.mrf.mxu0
        %v2945 = vadd.f32 0.0, %v2944
        %2946 = vmatmul.f32.gmra.mxu0 %v2832
        %v2947 = vpop.f32.mrf.mxu0
        %v2948 = vadd.f32 0.0, %v2947
        %2949 = vmatmul.f32.gmra.mxu0 %v2835
        %v2950 = vpop.f32.mrf.mxu0
        %v2951 = vadd.f32 0.0, %v2950
        %2952 = vmatmul.f32.gmra.mxu0 %v2838
        %v2953 = vpop.f32.mrf.mxu0
        %v2954 = vadd.f32 0.0, %v2953
        %2955 = vmatmul.f32.gmra.mxu0 %v2841
        %v2956 = vpop.f32.mrf.mxu0
        %v2957 = vadd.f32 0.0, %v2956
        %2958 = vmatmul.f32.gmra.mxu0 %v2844
        %v2959 = vpop.f32.mrf.mxu0
        %v2960 = vadd.f32 0.0, %v2959
        %2961 = vmatmul.f32.gmra.mxu0 %v2847
        %v2962 = vpop.f32.mrf.mxu0
        %v2963 = vadd.f32 0.0, %v2962
        %2964 = vmatmul.f32.gmra.mxu0 %v2850
        %v2965 = vpop.f32.mrf.mxu0
        %v2966 = vadd.f32 0.0, %v2965
        %2967 = vmatmul.f32.gmra.mxu0 %v2853
        %v2968 = vpop.f32.mrf.mxu0
        %v2969 = vadd.f32 0.0, %v2968
        %2970 = vmatmul.f32.gmra.mxu0 %v2856
        %v2971 = vpop.f32.mrf.mxu0
        %v2972 = vadd.f32 0.0, %v2971
        %2973 = vmatmul.f32.gmra.mxu0 %v2859
        %v2974 = vpop.f32.mrf.mxu0
        %v2975 = vadd.f32 0.0, %v2974
        %2976 = vmatmul.f32.gmra.mxu0 %v2862
        %v2977 = vpop.f32.mrf.mxu0
        %v2978 = vadd.f32 0.0, %v2977
        %2979 = vmatmul.f32.gmra.mxu0 %v2865
        %v2980 = vpop.f32.mrf.mxu0
        %v2981 = vadd.f32 0.0, %v2980
        %2982 = vmatmul.f32.gmra.mxu0 %v2868
        %v2983 = vpop.f32.mrf.mxu0
        %v2984 = vadd.f32 0.0, %v2983
        %2985 = vmatmul.f32.gmra.mxu0 %v2871
        %v2986 = vpop.f32.mrf.mxu0
        %v2987 = vadd.f32 0.0, %v2986
        %2988 = vmatmul.f32.gmra.mxu0 %v2874
        %v2989 = vpop.f32.mrf.mxu0
        %v2990 = vadd.f32 0.0, %v2989
        %2991 = vmatmul.f32.gmra.mxu0 %v2877
        %v2992 = vpop.f32.mrf.mxu0
        %v2993 = vadd.f32 0.0, %v2992
        %2994 = vmatmul.f32.gmra.mxu0 %v2880
        %v2995 = vpop.f32.mrf.mxu0
        %v2996 = vadd.f32 0.0, %v2995
        %2997 = vmatmul.f32.gmra.mxu0 %v2883
        %v2998 = vpop.f32.mrf.mxu0
        %v2999 = vadd.f32 0.0, %v2998
        %3000 = vmatmul.f32.gmra.mxu0 %v2886
        %v3001 = vpop.f32.mrf.mxu0
        %v3002 = vadd.f32 0.0, %v3001
        %3003 = vmatmul.f32.gmra.mxu0 %v2889
        %v3004 = vpop.f32.mrf.mxu0
        %v3005 = vadd.f32 0.0, %v3004
        %3006 = vdwg.mxu0
        %v3007 = vadd.f32 %v2730, %v2912
        %v3008 = vadd.f32 %v2731, %v2915
        %v3009 = vadd.f32 %v2732, %v2918
        %v3010 = vadd.f32 %v2733, %v2921
        %v3011 = vadd.f32 %v2734, %v2924
        %v3012 = vadd.f32 %v2735, %v2927
        %v3013 = vadd.f32 %v2736, %v2930
        %v3014 = vadd.f32 %v2737, %v2933
        %v3015 = vadd.f32 %v2738, %v2936
        %v3016 = vadd.f32 %v2739, %v2939
        %v3017 = vadd.f32 %v2740, %v2942
        %v3018 = vadd.f32 %v2741, %v2945
        %v3019 = vadd.f32 %v2742, %v2948
        %v3020 = vadd.f32 %v2743, %v2951
        %v3021 = vadd.f32 %v2744, %v2954
        %v3022 = vadd.f32 %v2745, %v2957
        %v3023 = vadd.f32 %v2746, %v2960
        %v3024 = vadd.f32 %v2747, %v2963
        %v3025 = vadd.f32 %v2748, %v2966
        %v3026 = vadd.f32 %v2749, %v2969
        %v3027 = vadd.f32 %v2750, %v2972
        %v3028 = vadd.f32 %v2751, %v2975
        %v3029 = vadd.f32 %v2752, %v2978
        %v3030 = vadd.f32 %v2753, %v2981
        %v3031 = vadd.f32 %v2754, %v2984
        %v3032 = vadd.f32 %v2755, %v2987
        %v3033 = vadd.f32 %v2756, %v2990
        %v3034 = vadd.f32 %v2757, %v2993
        %v3035 = vadd.f32 %v2758, %v2996
        %v3036 = vadd.f32 %v2759, %v2999
        %v3037 = vadd.f32 %v2760, %v3002
        %v3038 = vadd.f32 %v2761, %v3005
        %v3039 = vld [vmem:[%s2484 + $0x2] sm:$0xff]
        %v3040 = vld [vmem:[%s2484 + $0xa] sm:$0xff]
        %v3041 = vld [vmem:[%s2484 + $0x1a] sm:$0xff]
        %v3042 = vld [vmem:[%s2484 + $0x22] sm:$0xff]
        %v3043 = vld [vmem:[%s2484 + $0x32] sm:$0xff]
        %v3044 = vld [vmem:[%s2484 + $0x3a] sm:$0xff]
        %v3045 = vld [vmem:[%s2484 + $0x4a] sm:$0xff]
        %v3046 = vld [vmem:[%s2484 + $0x52] sm:$0xff]
        %v3047 = vld [vmem:[%s2484 + $0x62] sm:$0xff]
        %v3048 = vld [vmem:[%s2484 + $0x6a] sm:$0xff]
        %v3049 = vld [vmem:[%s2484 + $0x7a] sm:$0xff]
        %v3050 = vld [vmem:[%s2484 + $0x82] sm:$0xff]
        %v3051 = vld [vmem:[%s2484 + $0x92] sm:$0xff]
        %v3052 = vld [vmem:[%s2484 + $0x9a] sm:$0xff]
        %v3053 = vld [vmem:[%s2484 + $0xaa] sm:$0xff]
        %v3054 = vld [vmem:[%s2484 + $0xb2] sm:$0xff]
        %v3055 = vld [vmem:[%s2484 + $0xc2] sm:$0xff]
        %v3056 = vld [vmem:[%s2484 + $0xca] sm:$0xff]
        %v3057 = vld [vmem:[%s2484 + $0xda] sm:$0xff]
        %v3058 = vld [vmem:[%s2484 + $0xe2] sm:$0xff]
        %v3059 = vld [vmem:[%s2484 + $0xf2] sm:$0xff]
        %v3060 = vld [vmem:[%s2484 + $0xfa] sm:$0xff]
        %v3061 = vld [vmem:[%s2484 + $0x10a] sm:$0xff]
        %v3062 = vld [vmem:[%s2484 + $0x112] sm:$0xff]
        %v3063 = vld [vmem:[%s2484 + $0x122] sm:$0xff]
        %v3064 = vld [vmem:[%s2484 + $0x12a] sm:$0xff]
        %v3065 = vld [vmem:[%s2484 + $0x13a] sm:$0xff]
        %v3066 = vld [vmem:[%s2484 + $0x142] sm:$0xff]
        %v3067 = vld [vmem:[%s2484 + $0x152] sm:$0xff]
        %v3068 = vld [vmem:[%s2484 + $0x15a] sm:$0xff]
        %v3069 = vld [vmem:[%s2484 + $0x16a] sm:$0xff]
        %v3070 = vld [vmem:[%s2484 + $0x172] sm:$0xff]
        %v3071 = vld [vmem:[%s3 + $0x30] sm:$0x3f]
        %v3073 = vsel %vm668, %v3039, 0
        %v3076 = vsel %vm668, %v3040, 0
        %v3079 = vsel %vm668, %v3041, 0
        %v3082 = vsel %vm668, %v3042, 0
        %v3085 = vsel %vm668, %v3043, 0
        %v3088 = vsel %vm668, %v3044, 0
        %v3091 = vsel %vm668, %v3045, 0
        %v3094 = vsel %vm668, %v3046, 0
        %v3097 = vsel %vm668, %v3047, 0
        %v3100 = vsel %vm668, %v3048, 0
        %v3103 = vsel %vm668, %v3049, 0
        %v3106 = vsel %vm668, %v3050, 0
        %v3109 = vsel %vm668, %v3051, 0
        %v3112 = vsel %vm668, %v3052, 0
        %v3115 = vsel %vm668, %v3053, 0
        %v3118 = vsel %vm668, %v3054, 0
        %v3121 = vsel %vm668, %v3055, 0
        %v3124 = vsel %vm668, %v3056, 0
        %v3127 = vsel %vm668, %v3057, 0
        %v3130 = vsel %vm668, %v3058, 0
        %v3133 = vsel %vm668, %v3059, 0
        %v3136 = vsel %vm668, %v3060, 0
        %v3139 = vsel %vm668, %v3061, 0
        %v3142 = vsel %vm668, %v3062, 0
        %v3145 = vsel %vm668, %v3063, 0
        %v3148 = vsel %vm668, %v3064, 0
        %v3151 = vsel %vm668, %v3065, 0
        %v3154 = vsel %vm668, %v3066, 0
        %v3157 = vsel %vm668, %v3067, 0
        %v3160 = vsel %vm668, %v3068, 0
        %v3163 = vsel %vm668, %v3069, 0
        %v3166 = vsel %vm668, %v3070, 0
        %v3169 = vsel %vm1047, %v3071, 0
        %3171 = vmatpush.msra.mxu0 0.0
        %3172 = vmatpush.msra.mxu0 0.0
        %3173 = vmatpush.msra.mxu0 0.0
        %3174 = vmatpush.msra.mxu0 0.0
        %3175 = vmatpush.msra.mxu0 0.0
        %3176 = vmatpush.msra.mxu0 0.0
        %3177 = vmatpush.msra.mxu0 0.0
        %3178 = vmatpush.msra.mxu0 0.0
        %3179 = vmatpush.msra.mxu0 0.0
        %3180 = vmatpush.msra.mxu0 0.0
        %3181 = vmatpush.msra.mxu0 0.0
        %3182 = vmatpush.msra.mxu0 0.0
        %3183 = vmatpush.msra.mxu0 0.0
        %3184 = vmatpush.msra.mxu0 0.0
        %3185 = vmatpush.msra.mxu0 0.0
        %3186 = vmatpush.msra.mxu0 %v3169
        %3187 = vmatmul.f32.gmra.mxu0 %v3073
        %v3188 = vpop.f32.mrf.mxu0
        %v3189 = vadd.f32 0.0, %v3188
        %3190 = vmatmul.f32.gmra.mxu0 %v3076
        %v3191 = vpop.f32.mrf.mxu0
        %v3192 = vadd.f32 0.0, %v3191
        %3193 = vmatmul.f32.gmra.mxu0 %v3079
        %v3194 = vpop.f32.mrf.mxu0
        %v3195 = vadd.f32 0.0, %v3194
        %3196 = vmatmul.f32.gmra.mxu0 %v3082
        %v3197 = vpop.f32.mrf.mxu0
        %v3198 = vadd.f32 0.0, %v3197
        %3199 = vmatmul.f32.gmra.mxu0 %v3085
        %v3200 = vpop.f32.mrf.mxu0
        %v3201 = vadd.f32 0.0, %v3200
        %3202 = vmatmul.f32.gmra.mxu0 %v3088
        %v3203 = vpop.f32.mrf.mxu0
        %v3204 = vadd.f32 0.0, %v3203
        %3205 = vmatmul.f32.gmra.mxu0 %v3091
        %v3206 = vpop.f32.mrf.mxu0
        %v3207 = vadd.f32 0.0, %v3206
        %3208 = vmatmul.f32.gmra.mxu0 %v3094
        %v3209 = vpop.f32.mrf.mxu0
        %v3210 = vadd.f32 0.0, %v3209
        %3211 = vmatmul.f32.gmra.mxu0 %v3097
        %v3212 = vpop.f32.mrf.mxu0
        %v3213 = vadd.f32 0.0, %v3212
        %3214 = vmatmul.f32.gmra.mxu0 %v3100
        %v3215 = vpop.f32.mrf.mxu0
        %v3216 = vadd.f32 0.0, %v3215
        %3217 = vmatmul.f32.gmra.mxu0 %v3103
        %v3218 = vpop.f32.mrf.mxu0
        %v3219 = vadd.f32 0.0, %v3218
        %3220 = vmatmul.f32.gmra.mxu0 %v3106
        %v3221 = vpop.f32.mrf.mxu0
        %v3222 = vadd.f32 0.0, %v3221
        %3223 = vmatmul.f32.gmra.mxu0 %v3109
        %v3224 = vpop.f32.mrf.mxu0
        %v3225 = vadd.f32 0.0, %v3224
        %3226 = vmatmul.f32.gmra.mxu0 %v3112
        %v3227 = vpop.f32.mrf.mxu0
        %v3228 = vadd.f32 0.0, %v3227
        %3229 = vmatmul.f32.gmra.mxu0 %v3115
        %v3230 = vpop.f32.mrf.mxu0
        %v3231 = vadd.f32 0.0, %v3230
        %3232 = vmatmul.f32.gmra.mxu0 %v3118
        %v3233 = vpop.f32.mrf.mxu0
        %v3234 = vadd.f32 0.0, %v3233
        %3235 = vmatmul.f32.gmra.mxu0 %v3121
        %v3236 = vpop.f32.mrf.mxu0
        %v3237 = vadd.f32 0.0, %v3236
        %3238 = vmatmul.f32.gmra.mxu0 %v3124
        %v3239 = vpop.f32.mrf.mxu0
        %v3240 = vadd.f32 0.0, %v3239
        %3241 = vmatmul.f32.gmra.mxu0 %v3127
        %v3242 = vpop.f32.mrf.mxu0
        %v3243 = vadd.f32 0.0, %v3242
        %3244 = vmatmul.f32.gmra.mxu0 %v3130
        %v3245 = vpop.f32.mrf.mxu0
        %v3246 = vadd.f32 0.0, %v3245
        %3247 = vmatmul.f32.gmra.mxu0 %v3133
        %v3248 = vpop.f32.mrf.mxu0
        %v3249 = vadd.f32 0.0, %v3248
        %3250 = vmatmul.f32.gmra.mxu0 %v3136
        %v3251 = vpop.f32.mrf.mxu0
        %v3252 = vadd.f32 0.0, %v3251
        %3253 = vmatmul.f32.gmra.mxu0 %v3139
        %v3254 = vpop.f32.mrf.mxu0
        %v3255 = vadd.f32 0.0, %v3254
        %3256 = vmatmul.f32.gmra.mxu0 %v3142
        %v3257 = vpop.f32.mrf.mxu0
        %v3258 = vadd.f32 0.0, %v3257
        %3259 = vmatmul.f32.gmra.mxu0 %v3145
        %v3260 = vpop.f32.mrf.mxu0
        %v3261 = vadd.f32 0.0, %v3260
        %3262 = vmatmul.f32.gmra.mxu0 %v3148
        %v3263 = vpop.f32.mrf.mxu0
        %v3264 = vadd.f32 0.0, %v3263
        %3265 = vmatmul.f32.gmra.mxu0 %v3151
        %v3266 = vpop.f32.mrf.mxu0
        %v3267 = vadd.f32 0.0, %v3266
        %3268 = vmatmul.f32.gmra.mxu0 %v3154
        %v3269 = vpop.f32.mrf.mxu0
        %v3270 = vadd.f32 0.0, %v3269
        %3271 = vmatmul.f32.gmra.mxu0 %v3157
        %v3272 = vpop.f32.mrf.mxu0
        %v3273 = vadd.f32 0.0, %v3272
        %3274 = vmatmul.f32.gmra.mxu0 %v3160
        %v3275 = vpop.f32.mrf.mxu0
        %v3276 = vadd.f32 0.0, %v3275
        %3277 = vmatmul.f32.gmra.mxu0 %v3163
        %v3278 = vpop.f32.mrf.mxu0
        %v3279 = vadd.f32 0.0, %v3278
        %3280 = vmatmul.f32.gmra.mxu0 %v3166
        %v3281 = vpop.f32.mrf.mxu0
        %v3282 = vadd.f32 0.0, %v3281
        %3283 = vdwg.mxu0
        %v3284 = vadd.f32 %v3007, %v3189
        %v3285 = vadd.f32 %v3008, %v3192
        %v3286 = vadd.f32 %v3009, %v3195
        %v3287 = vadd.f32 %v3010, %v3198
        %v3288 = vadd.f32 %v3011, %v3201
        %v3289 = vadd.f32 %v3012, %v3204
        %v3290 = vadd.f32 %v3013, %v3207
        %v3291 = vadd.f32 %v3014, %v3210
        %v3292 = vadd.f32 %v3015, %v3213
        %v3293 = vadd.f32 %v3016, %v3216
        %v3294 = vadd.f32 %v3017, %v3219
        %v3295 = vadd.f32 %v3018, %v3222
        %v3296 = vadd.f32 %v3019, %v3225
        %v3297 = vadd.f32 %v3020, %v3228
        %v3298 = vadd.f32 %v3021, %v3231
        %v3299 = vadd.f32 %v3022, %v3234
        %v3300 = vadd.f32 %v3023, %v3237
        %v3301 = vadd.f32 %v3024, %v3240
        %v3302 = vadd.f32 %v3025, %v3243
        %v3303 = vadd.f32 %v3026, %v3246
        %v3304 = vadd.f32 %v3027, %v3249
        %v3305 = vadd.f32 %v3028, %v3252
        %v3306 = vadd.f32 %v3029, %v3255
        %v3307 = vadd.f32 %v3030, %v3258
        %v3308 = vadd.f32 %v3031, %v3261
        %v3309 = vadd.f32 %v3032, %v3264
        %v3310 = vadd.f32 %v3033, %v3267
        %v3311 = vadd.f32 %v3034, %v3270
        %v3312 = vadd.f32 %v3035, %v3273
        %v3313 = vadd.f32 %v3036, %v3276
        %v3314 = vadd.f32 %v3037, %v3279
        %v3315 = vadd.f32 %v3038, %v3282
        %v3316 = vld [vmem:[%s4] sm:$0x1]
        %v3318 = vperm.slane %v3316, 0
        %v3320 = vadd.f32 %v3284, %v3318
        %v3321 = vadd.f32 %v3285, %v3318
        %v3322 = vadd.f32 %v3286, %v3318
        %v3323 = vadd.f32 %v3287, %v3318
        %v3324 = vadd.f32 %v3288, %v3318
        %v3325 = vadd.f32 %v3289, %v3318
        %v3326 = vadd.f32 %v3290, %v3318
        %v3327 = vadd.f32 %v3291, %v3318
        %v3328 = vadd.f32 %v3292, %v3318
        %v3329 = vadd.f32 %v3293, %v3318
        %v3330 = vadd.f32 %v3294, %v3318
        %v3331 = vadd.f32 %v3295, %v3318
        %v3332 = vadd.f32 %v3296, %v3318
        %v3333 = vadd.f32 %v3297, %v3318
        %v3334 = vadd.f32 %v3298, %v3318
        %v3335 = vadd.f32 %v3299, %v3318
        %v3336 = vadd.f32 %v3300, %v3318
        %v3337 = vadd.f32 %v3301, %v3318
        %v3338 = vadd.f32 %v3302, %v3318
        %v3339 = vadd.f32 %v3303, %v3318
        %v3340 = vadd.f32 %v3304, %v3318
        %v3341 = vadd.f32 %v3305, %v3318
        %v3342 = vadd.f32 %v3306, %v3318
        %v3343 = vadd.f32 %v3307, %v3318
        %v3344 = vadd.f32 %v3308, %v3318
        %v3345 = vadd.f32 %v3309, %v3318
        %v3346 = vadd.f32 %v3310, %v3318
        %v3347 = vadd.f32 %v3311, %v3318
        %v3348 = vadd.f32 %v3312, %v3318
        %v3349 = vadd.f32 %v3313, %v3318
        %v3350 = vadd.f32 %v3314, %v3318
        %v3351 = vadd.f32 %v3315, %v3318
        %v3352 = vmax.f32 %v3320, 0.0
        %v3353 = vmax.f32 %v3321, 0.0
        %v3354 = vmax.f32 %v3322, 0.0
        %v3355 = vmax.f32 %v3323, 0.0
        %v3356 = vmax.f32 %v3324, 0.0
        %v3357 = vmax.f32 %v3325, 0.0
        %v3358 = vmax.f32 %v3326, 0.0
        %v3359 = vmax.f32 %v3327, 0.0
        %v3360 = vmax.f32 %v3328, 0.0
        %v3361 = vmax.f32 %v3329, 0.0
        %v3362 = vmax.f32 %v3330, 0.0
        %v3363 = vmax.f32 %v3331, 0.0
        %v3364 = vmax.f32 %v3332, 0.0
        %v3365 = vmax.f32 %v3333, 0.0
        %v3366 = vmax.f32 %v3334, 0.0
        %v3367 = vmax.f32 %v3335, 0.0
        %v3368 = vmax.f32 %v3336, 0.0
        %v3369 = vmax.f32 %v3337, 0.0
        %v3370 = vmax.f32 %v3338, 0.0
        %v3371 = vmax.f32 %v3339, 0.0
        %v3372 = vmax.f32 %v3340, 0.0
        %v3373 = vmax.f32 %v3341, 0.0
        %v3374 = vmax.f32 %v3342, 0.0
        %v3375 = vmax.f32 %v3343, 0.0
        %v3376 = vmax.f32 %v3344, 0.0
        %v3377 = vmax.f32 %v3345, 0.0
        %v3378 = vmax.f32 %v3346, 0.0
        %v3379 = vmax.f32 %v3347, 0.0
        %v3380 = vmax.f32 %v3348, 0.0
        %v3381 = vmax.f32 %v3349, 0.0
        %v3382 = vmax.f32 %v3350, 0.0
        %v3383 = vmax.f32 %v3351, 0.0
        %3384 = vst.msk [vmem:[#allocation4] sm:$0xff] %vm422, 0.0
        %3385 = vst.msk [vmem:[#allocation4 + $0x8] sm:$0xff] %vm422, 0.0
        %vm3386 = vcmask 25600
        %3387 = vst.msk [vmem:[#allocation4 + $0x10] sm:$0x3] %vm3386, 0.0
        %3388 = vst.msk [vmem:[#allocation4 + $0x18] sm:$0xff] %vm422, 0.0
        %3389 = vst.msk [vmem:[#allocation4 + $0x20] sm:$0xff] %vm422, 0.0
        %3390 = vst.msk [vmem:[#allocation4 + $0x28] sm:$0x3] %vm3386, 0.0
        %3391 = vst.msk [vmem:[#allocation4 + $0x30] sm:$0xff] %vm422, 0.0
        %3392 = vst.msk [vmem:[#allocation4 + $0x38] sm:$0xff] %vm422, 0.0
        %3393 = vst.msk [vmem:[#allocation4 + $0x40] sm:$0x3] %vm3386, 0.0
        %3394 = vst.msk [vmem:[#allocation4 + $0x48] sm:$0xff] %vm422, 0.0
        %3395 = vst.msk [vmem:[#allocation4 + $0x50] sm:$0xff] %vm422, 0.0
        %3396 = vst.msk [vmem:[#allocation4 + $0x58] sm:$0x3] %vm3386, 0.0
        %3397 = vst.msk [vmem:[#allocation4 + $0x60] sm:$0xff] %vm422, 0.0
        %3398 = vst.msk [vmem:[#allocation4 + $0x68] sm:$0xff] %vm422, 0.0
        %3399 = vst.msk [vmem:[#allocation4 + $0x70] sm:$0x3] %vm3386, 0.0
        %3400 = vst.msk [vmem:[#allocation4 + $0x78] sm:$0xff] %vm422, 0.0
        %3401 = vst.msk [vmem:[#allocation4 + $0x80] sm:$0xff] %vm422, 0.0
        %3402 = vst.msk [vmem:[#allocation4 + $0x88] sm:$0x3] %vm3386, 0.0
        %3403 = vst.msk [vmem:[#allocation4 + $0x90] sm:$0xff] %vm422, 0.0
        %3404 = vst.msk [vmem:[#allocation4 + $0x98] sm:$0xff] %vm422, 0.0
        %3405 = vst.msk [vmem:[#allocation4 + $0xa0] sm:$0x3] %vm3386, 0.0
        %3406 = vst.msk [vmem:[#allocation4 + $0xa8] sm:$0xff] %vm422, 0.0
        %3407 = vst.msk [vmem:[#allocation4 + $0xb0] sm:$0xff] %vm422, 0.0
        %3408 = vst.msk [vmem:[#allocation4 + $0xb8] sm:$0x3] %vm3386, 0.0
        %3409 = vst.msk [vmem:[#allocation4 + $0xc0] sm:$0xff] %vm422, 0.0
        %3410 = vst.msk [vmem:[#allocation4 + $0xc8] sm:$0xff] %vm422, 0.0
        %3411 = vst.msk [vmem:[#allocation4 + $0xd0] sm:$0x3] %vm3386, 0.0
        %3412 = vst.msk [vmem:[#allocation4 + $0xd8] sm:$0xff] %vm422, 0.0
        %3413 = vst.msk [vmem:[#allocation4 + $0xe0] sm:$0xff] %vm422, 0.0
        %3414 = vst.msk [vmem:[#allocation4 + $0xe8] sm:$0x3] %vm3386, 0.0
        %3415 = vst.msk [vmem:[#allocation4 + $0xf0] sm:$0xff] %vm422, 0.0
        %3416 = vst.msk [vmem:[#allocation4 + $0xf8] sm:$0xff] %vm422, 0.0
        %3417 = vst.msk [vmem:[#allocation4 + $0x100] sm:$0x3] %vm3386, 0.0
        %3418 = vst.msk [vmem:[#allocation4 + $0x108] sm:$0xff] %vm422, 0.0
        %3419 = vst.msk [vmem:[#allocation4 + $0x110] sm:$0xff] %vm422, 0.0
        %3420 = vst.msk [vmem:[#allocation4 + $0x118] sm:$0x3] %vm3386, 0.0
        %3421 = vst.msk [vmem:[#allocation4 + $0x120] sm:$0xff] %vm422, 0.0
        %3422 = vst.msk [vmem:[#allocation4 + $0x128] sm:$0xff] %vm422, 0.0
        %3423 = vst.msk [vmem:[#allocation4 + $0x130] sm:$0x3] %vm3386, 0.0
        %3424 = vst.msk [vmem:[#allocation4 + $0x138] sm:$0xff] %vm422, 0.0
        %3425 = vst.msk [vmem:[#allocation4 + $0x140] sm:$0xff] %vm422, 0.0
        %3426 = vst.msk [vmem:[#allocation4 + $0x148] sm:$0x3] %vm3386, 0.0
        %3427 = vst.msk [vmem:[#allocation4 + $0x150] sm:$0xff] %vm422, 0.0
        %3428 = vst.msk [vmem:[#allocation4 + $0x158] sm:$0xff] %vm422, 0.0
        %3429 = vst.msk [vmem:[#allocation4 + $0x160] sm:$0x3] %vm3386, 0.0
        %3430 = vst.msk [vmem:[#allocation4 + $0x168] sm:$0xff] %vm422, 0.0
        %3431 = vst.msk [vmem:[#allocation4 + $0x170] sm:$0xff] %vm422, 0.0
        %3432 = vst.msk [vmem:[#allocation4 + $0x178] sm:$0x3] %vm3386, 0.0
        %3433 = vst.msk [vmem:[#allocation4 + $0x180] sm:$0xff] %vm422, 0.0
        %3434 = vst.msk [vmem:[#allocation4 + $0x188] sm:$0xff] %vm422, 0.0
        %3435 = vst.msk [vmem:[#allocation4 + $0x190] sm:$0x3] %vm3386, 0.0
        %3436 = vst.msk [vmem:[#allocation4 + $0x198] sm:$0xff] %vm422, 0.0
        %3437 = vst.msk [vmem:[#allocation4 + $0x1a0] sm:$0xff] %vm422, 0.0
        %3438 = vst.msk [vmem:[#allocation4 + $0x1a8] sm:$0x3] %vm3386, 0.0
        %3439 = vrot.lane.b32.xlu0 %v636, 114
        %v3440 = vpop.permute.xlu0 %3439
        %3441 = vrot.lane.b32.xlu0 %v637, 114
        %v3442 = vpop.permute.xlu0 %3441
        %3443 = vrot.lane.b32.xlu0 %v638, 114
        %v3444 = vpop.permute.xlu0 %3443
        %3445 = vrot.lane.b32.xlu0 %v639, 114
        %v3446 = vpop.permute.xlu0 %3445
        %3447 = vrot.lane.b32.xlu0 %v640, 114
        %v3448 = vpop.permute.xlu0 %3447
        %3449 = vrot.lane.b32.xlu0 %v641, 114
        %v3450 = vpop.permute.xlu0 %3449
        %3451 = vrot.lane.b32.xlu0 %v642, 114
        %v3452 = vpop.permute.xlu0 %3451
        %3453 = vrot.lane.b32.xlu0 %v643, 114
        %v3454 = vpop.permute.xlu0 %3453
        %3455 = vrot.lane.b32.xlu0 %v644, 114
        %v3456 = vpop.permute.xlu0 %3455
        %3457 = vrot.lane.b32.xlu0 %v645, 114
        %v3458 = vpop.permute.xlu0 %3457
        %3459 = vrot.lane.b32.xlu0 %v646, 114
        %v3460 = vpop.permute.xlu0 %3459
        %3461 = vrot.lane.b32.xlu0 %v647, 114
        %v3462 = vpop.permute.xlu0 %3461
        %3463 = vrot.lane.b32.xlu0 %v648, 114
        %v3464 = vpop.permute.xlu0 %3463
        %3465 = vrot.lane.b32.xlu0 %v649, 114
        %v3466 = vpop.permute.xlu0 %3465
        %3467 = vrot.lane.b32.xlu0 %v650, 114
        %v3468 = vpop.permute.xlu0 %3467
        %3469 = vrot.lane.b32.xlu0 %v651, 114
        %v3470 = vpop.permute.xlu0 %3469
        %3471 = vrot.lane.b32.xlu0 %v652, 114
        %v3472 = vpop.permute.xlu0 %3471
        %3473 = vrot.lane.b32.xlu0 %v653, 114
        %v3474 = vpop.permute.xlu0 %3473
        %3475 = vrot.lane.b32.xlu0 %v654, 114
        %v3476 = vpop.permute.xlu0 %3475
        %3477 = vrot.lane.b32.xlu0 %v655, 114
        %v3478 = vpop.permute.xlu0 %3477
        %3479 = vrot.lane.b32.xlu0 %v656, 114
        %v3480 = vpop.permute.xlu0 %3479
        %3481 = vrot.lane.b32.xlu0 %v657, 114
        %v3482 = vpop.permute.xlu0 %3481
        %3483 = vrot.lane.b32.xlu0 %v658, 114
        %v3484 = vpop.permute.xlu0 %3483
        %3485 = vrot.lane.b32.xlu0 %v659, 114
        %v3486 = vpop.permute.xlu0 %3485
        %3487 = vrot.lane.b32.xlu0 %v660, 114
        %v3488 = vpop.permute.xlu0 %3487
        %3489 = vrot.lane.b32.xlu0 %v661, 114
        %v3490 = vpop.permute.xlu0 %3489
        %3491 = vrot.lane.b32.xlu0 %v662, 114
        %v3492 = vpop.permute.xlu0 %3491
        %3493 = vrot.lane.b32.xlu0 %v663, 114
        %v3494 = vpop.permute.xlu0 %3493
        %3495 = vrot.lane.b32.xlu0 %v664, 114
        %v3496 = vpop.permute.xlu0 %3495
        %3497 = vrot.lane.b32.xlu0 %v665, 114
        %v3498 = vpop.permute.xlu0 %3497
        %3499 = vrot.lane.b32.xlu0 %v666, 114
        %v3500 = vpop.permute.xlu0 %3499
        %3501 = vrot.lane.b32.xlu0 %v667, 114
        %v3502 = vpop.permute.xlu0 %3501
        %s3535 = scalar_lea.vmem [#allocation4], 24
        %3536 = vst.msk [vmem:[%s3535 + $0x1] sm:$0xff] %vm422, %v3440
        %3537 = vst.msk [vmem:[%s3535 + $0x9] sm:$0xff] %vm422, %v3442
        %3538 = vst.msk [vmem:[%s3535 + $0x19] sm:$0xff] %vm422, %v3444
        %3539 = vst.msk [vmem:[%s3535 + $0x21] sm:$0xff] %vm422, %v3446
        %3540 = vst.msk [vmem:[%s3535 + $0x31] sm:$0xff] %vm422, %v3448
        %3541 = vst.msk [vmem:[%s3535 + $0x39] sm:$0xff] %vm422, %v3450
        %3542 = vst.msk [vmem:[%s3535 + $0x49] sm:$0xff] %vm422, %v3452
        %3543 = vst.msk [vmem:[%s3535 + $0x51] sm:$0xff] %vm422, %v3454
        %3544 = vst.msk [vmem:[%s3535 + $0x61] sm:$0xff] %vm422, %v3456
        %3545 = vst.msk [vmem:[%s3535 + $0x69] sm:$0xff] %vm422, %v3458
        %3546 = vst.msk [vmem:[%s3535 + $0x79] sm:$0xff] %vm422, %v3460
        %3547 = vst.msk [vmem:[%s3535 + $0x81] sm:$0xff] %vm422, %v3462
        %3548 = vst.msk [vmem:[%s3535 + $0x91] sm:$0xff] %vm422, %v3464
        %3549 = vst.msk [vmem:[%s3535 + $0x99] sm:$0xff] %vm422, %v3466
        %3550 = vst.msk [vmem:[%s3535 + $0xa9] sm:$0xff] %vm422, %v3468
        %3551 = vst.msk [vmem:[%s3535 + $0xb1] sm:$0xff] %vm422, %v3470
        %3552 = vst.msk [vmem:[%s3535 + $0xc1] sm:$0xff] %vm422, %v3472
        %3553 = vst.msk [vmem:[%s3535 + $0xc9] sm:$0xff] %vm422, %v3474
        %3554 = vst.msk [vmem:[%s3535 + $0xd9] sm:$0xff] %vm422, %v3476
        %3555 = vst.msk [vmem:[%s3535 + $0xe1] sm:$0xff] %vm422, %v3478
        %3556 = vst.msk [vmem:[%s3535 + $0xf1] sm:$0xff] %vm422, %v3480
        %3557 = vst.msk [vmem:[%s3535 + $0xf9] sm:$0xff] %vm422, %v3482
        %3558 = vst.msk [vmem:[%s3535 + $0x109] sm:$0xff] %vm422, %v3484
        %3559 = vst.msk [vmem:[%s3535 + $0x111] sm:$0xff] %vm422, %v3486
        %3560 = vst.msk [vmem:[%s3535 + $0x121] sm:$0xff] %vm422, %v3488
        %3561 = vst.msk [vmem:[%s3535 + $0x129] sm:$0xff] %vm422, %v3490
        %3562 = vst.msk [vmem:[%s3535 + $0x139] sm:$0xff] %vm422, %v3492
        %3563 = vst.msk [vmem:[%s3535 + $0x141] sm:$0xff] %vm422, %v3494
        %3564 = vst.msk [vmem:[%s3535 + $0x151] sm:$0xff] %vm422, %v3496
        %3565 = vst.msk [vmem:[%s3535 + $0x159] sm:$0xff] %vm422, %v3498
        %3566 = vst.msk [vmem:[%s3535 + $0x169] sm:$0xff] %vm422, %v3500
        %3567 = vst.msk [vmem:[%s3535 + $0x171] sm:$0xff] %vm422, %v3502
        %v3568 = vld [vmem:[#allocation4] sm:$0xff]
        %v3569 = vld [vmem:[#allocation4 + $0x8] sm:$0xff]
        %v3570 = vld [vmem:[#allocation4 + $0x18] sm:$0xff]
        %v3571 = vld [vmem:[#allocation4 + $0x20] sm:$0xff]
        %v3572 = vld [vmem:[#allocation4 + $0x30] sm:$0xff]
        %v3573 = vld [vmem:[#allocation4 + $0x38] sm:$0xff]
        %v3574 = vld [vmem:[#allocation4 + $0x48] sm:$0xff]
        %v3575 = vld [vmem:[#allocation4 + $0x50] sm:$0xff]
        %v3576 = vld [vmem:[#allocation4 + $0x60] sm:$0xff]
        %v3577 = vld [vmem:[#allocation4 + $0x68] sm:$0xff]
        %v3578 = vld [vmem:[#allocation4 + $0x78] sm:$0xff]
        %v3579 = vld [vmem:[#allocation4 + $0x80] sm:$0xff]
        %v3580 = vld [vmem:[#allocation4 + $0x90] sm:$0xff]
        %v3581 = vld [vmem:[#allocation4 + $0x98] sm:$0xff]
        %v3582 = vld [vmem:[#allocation4 + $0xa8] sm:$0xff]
        %v3583 = vld [vmem:[#allocation4 + $0xb0] sm:$0xff]
        %v3584 = vld [vmem:[#allocation4 + $0xc0] sm:$0xff]
        %v3585 = vld [vmem:[#allocation4 + $0xc8] sm:$0xff]
        %v3586 = vld [vmem:[#allocation4 + $0xd8] sm:$0xff]
        %v3587 = vld [vmem:[#allocation4 + $0xe0] sm:$0xff]
        %v3588 = vld [vmem:[#allocation4 + $0xf0] sm:$0xff]
        %v3589 = vld [vmem:[#allocation4 + $0xf8] sm:$0xff]
        %v3590 = vld [vmem:[#allocation4 + $0x108] sm:$0xff]
        %v3591 = vld [vmem:[#allocation4 + $0x110] sm:$0xff]
        %v3592 = vld [vmem:[#allocation4 + $0x120] sm:$0xff]
        %v3593 = vld [vmem:[#allocation4 + $0x128] sm:$0xff]
        %v3594 = vld [vmem:[#allocation4 + $0x138] sm:$0xff]
        %v3595 = vld [vmem:[#allocation4 + $0x140] sm:$0xff]
        %v3596 = vld [vmem:[#allocation4 + $0x150] sm:$0xff]
        %v3597 = vld [vmem:[#allocation4 + $0x158] sm:$0xff]
        %v3598 = vld [vmem:[#allocation4 + $0x168] sm:$0xff]
        %v3599 = vld [vmem:[#allocation4 + $0x170] sm:$0xff]
        %v3600 = vld [vmem:[%s5] sm:$0xf]
        %v3601 = vld [vmem:[#allocation4 + $0x1] sm:$0xff]
        %v3602 = vld [vmem:[#allocation4 + $0x9] sm:$0xff]
        %v3603 = vld [vmem:[#allocation4 + $0x19] sm:$0xff]
        %v3604 = vld [vmem:[#allocation4 + $0x21] sm:$0xff]
        %v3605 = vld [vmem:[#allocation4 + $0x31] sm:$0xff]
        %v3606 = vld [vmem:[#allocation4 + $0x39] sm:$0xff]
        %v3607 = vld [vmem:[#allocation4 + $0x49] sm:$0xff]
        %v3608 = vld [vmem:[#allocation4 + $0x51] sm:$0xff]
        %v3609 = vld [vmem:[#allocation4 + $0x61] sm:$0xff]
        %v3610 = vld [vmem:[#allocation4 + $0x69] sm:$0xff]
        %v3611 = vld [vmem:[#allocation4 + $0x79] sm:$0xff]
        %v3612 = vld [vmem:[#allocation4 + $0x81] sm:$0xff]
        %v3613 = vld [vmem:[#allocation4 + $0x91] sm:$0xff]
        %v3614 = vld [vmem:[#allocation4 + $0x99] sm:$0xff]
        %v3615 = vld [vmem:[#allocation4 + $0xa9] sm:$0xff]
        %v3616 = vld [vmem:[#allocation4 + $0xb1] sm:$0xff]
        %v3617 = vld [vmem:[#allocation4 + $0xc1] sm:$0xff]
        %v3618 = vld [vmem:[#allocation4 + $0xc9] sm:$0xff]
        %v3619 = vld [vmem:[#allocation4 + $0xd9] sm:$0xff]
        %v3620 = vld [vmem:[#allocation4 + $0xe1] sm:$0xff]
        %v3621 = vld [vmem:[#allocation4 + $0xf1] sm:$0xff]
        %v3622 = vld [vmem:[#allocation4 + $0xf9] sm:$0xff]
        %v3623 = vld [vmem:[#allocation4 + $0x109] sm:$0xff]
        %v3624 = vld [vmem:[#allocation4 + $0x111] sm:$0xff]
        %v3625 = vld [vmem:[#allocation4 + $0x121] sm:$0xff]
        %v3626 = vld [vmem:[#allocation4 + $0x129] sm:$0xff]
        %v3627 = vld [vmem:[#allocation4 + $0x139] sm:$0xff]
        %v3628 = vld [vmem:[#allocation4 + $0x141] sm:$0xff]
        %v3629 = vld [vmem:[#allocation4 + $0x151] sm:$0xff]
        %v3630 = vld [vmem:[#allocation4 + $0x159] sm:$0xff]
        %v3631 = vld [vmem:[#allocation4 + $0x169] sm:$0xff]
        %v3632 = vld [vmem:[#allocation4 + $0x171] sm:$0xff]
        %v3633 = vld [vmem:[%s5 + $0x4] sm:$0xf]
        %v3635 = vsel %vm422, %v3601, 0
        %v3638 = vsel %vm422, %v3602, 0
        %v3641 = vsel %vm422, %v3603, 0
        %v3644 = vsel %vm422, %v3604, 0
        %v3647 = vsel %vm422, %v3605, 0
        %v3650 = vsel %vm422, %v3606, 0
        %v3653 = vsel %vm422, %v3607, 0
        %v3656 = vsel %vm422, %v3608, 0
        %v3659 = vsel %vm422, %v3609, 0
        %v3662 = vsel %vm422, %v3610, 0
        %v3665 = vsel %vm422, %v3611, 0
        %v3668 = vsel %vm422, %v3612, 0
        %v3671 = vsel %vm422, %v3613, 0
        %v3674 = vsel %vm422, %v3614, 0
        %v3677 = vsel %vm422, %v3615, 0
        %v3680 = vsel %vm422, %v3616, 0
        %v3683 = vsel %vm422, %v3617, 0
        %v3686 = vsel %vm422, %v3618, 0
        %v3689 = vsel %vm422, %v3619, 0
        %v3692 = vsel %vm422, %v3620, 0
        %v3695 = vsel %vm422, %v3621, 0
        %v3698 = vsel %vm422, %v3622, 0
        %v3701 = vsel %vm422, %v3623, 0
        %v3704 = vsel %vm422, %v3624, 0
        %v3707 = vsel %vm422, %v3625, 0
        %v3710 = vsel %vm422, %v3626, 0
        %v3713 = vsel %vm422, %v3627, 0
        %v3716 = vsel %vm422, %v3628, 0
        %v3719 = vsel %vm422, %v3629, 0
        %v3722 = vsel %vm422, %v3630, 0
        %v3725 = vsel %vm422, %v3631, 0
        %v3728 = vsel %vm422, %v3632, 0
        %v3731 = vsel %vm519, %v3633, 0
        %3733 = vmatpush.msra.mxu0 0.0
        %3734 = vmatpush.msra.mxu0 0.0
        %3735 = vmatpush.msra.mxu0 0.0
        %3736 = vmatpush.msra.mxu0 0.0
        %3737 = vmatpush.msra.mxu0 0.0
        %3738 = vmatpush.msra.mxu0 0.0
        %3739 = vmatpush.msra.mxu0 0.0
        %3740 = vmatpush.msra.mxu0 0.0
        %3741 = vmatpush.msra.mxu0 0.0
        %3742 = vmatpush.msra.mxu0 0.0
        %3743 = vmatpush.msra.mxu0 0.0
        %3744 = vmatpush.msra.mxu0 0.0
        %3745 = vmatpush.msra.mxu0 0.0
        %3746 = vmatpush.msra.mxu0 0.0
        %3747 = vmatpush.msra.mxu0 0.0
        %3748 = vmatpush.msra.mxu0 %v3731
        %3749 = vmatmul.f32.gmra.mxu0 %v3635
        %v3750 = vpop.f32.mrf.mxu0
        %v3751 = vadd.f32 0.0, %v3750
        %3752 = vmatmul.f32.gmra.mxu0 %v3638
        %v3753 = vpop.f32.mrf.mxu0
        %v3754 = vadd.f32 0.0, %v3753
        %3755 = vmatmul.f32.gmra.mxu0 %v3641
        %v3756 = vpop.f32.mrf.mxu0
        %v3757 = vadd.f32 0.0, %v3756
        %3758 = vmatmul.f32.gmra.mxu0 %v3644
        %v3759 = vpop.f32.mrf.mxu0
        %v3760 = vadd.f32 0.0, %v3759
        %3761 = vmatmul.f32.gmra.mxu0 %v3647
        %v3762 = vpop.f32.mrf.mxu0
        %v3763 = vadd.f32 0.0, %v3762
        %3764 = vmatmul.f32.gmra.mxu0 %v3650
        %v3765 = vpop.f32.mrf.mxu0
        %v3766 = vadd.f32 0.0, %v3765
        %3767 = vmatmul.f32.gmra.mxu0 %v3653
        %v3768 = vpop.f32.mrf.mxu0
        %v3769 = vadd.f32 0.0, %v3768
        %3770 = vmatmul.f32.gmra.mxu0 %v3656
        %v3771 = vpop.f32.mrf.mxu0
        %v3772 = vadd.f32 0.0, %v3771
        %3773 = vmatmul.f32.gmra.mxu0 %v3659
        %v3774 = vpop.f32.mrf.mxu0
        %v3775 = vadd.f32 0.0, %v3774
        %3776 = vmatmul.f32.gmra.mxu0 %v3662
        %v3777 = vpop.f32.mrf.mxu0
        %v3778 = vadd.f32 0.0, %v3777
        %3779 = vmatmul.f32.gmra.mxu0 %v3665
        %v3780 = vpop.f32.mrf.mxu0
        %v3781 = vadd.f32 0.0, %v3780
        %3782 = vmatmul.f32.gmra.mxu0 %v3668
        %v3783 = vpop.f32.mrf.mxu0
        %v3784 = vadd.f32 0.0, %v3783
        %3785 = vmatmul.f32.gmra.mxu0 %v3671
        %v3786 = vpop.f32.mrf.mxu0
        %v3787 = vadd.f32 0.0, %v3786
        %3788 = vmatmul.f32.gmra.mxu0 %v3674
        %v3789 = vpop.f32.mrf.mxu0
        %v3790 = vadd.f32 0.0, %v3789
        %3791 = vmatmul.f32.gmra.mxu0 %v3677
        %v3792 = vpop.f32.mrf.mxu0
        %v3793 = vadd.f32 0.0, %v3792
        %3794 = vmatmul.f32.gmra.mxu0 %v3680
        %v3795 = vpop.f32.mrf.mxu0
        %v3796 = vadd.f32 0.0, %v3795
        %3797 = vmatmul.f32.gmra.mxu0 %v3683
        %v3798 = vpop.f32.mrf.mxu0
        %v3799 = vadd.f32 0.0, %v3798
        %3800 = vmatmul.f32.gmra.mxu0 %v3686
        %v3801 = vpop.f32.mrf.mxu0
        %v3802 = vadd.f32 0.0, %v3801
        %3803 = vmatmul.f32.gmra.mxu0 %v3689
        %v3804 = vpop.f32.mrf.mxu0
        %v3805 = vadd.f32 0.0, %v3804
        %3806 = vmatmul.f32.gmra.mxu0 %v3692
        %v3807 = vpop.f32.mrf.mxu0
        %v3808 = vadd.f32 0.0, %v3807
        %3809 = vmatmul.f32.gmra.mxu0 %v3695
        %v3810 = vpop.f32.mrf.mxu0
        %v3811 = vadd.f32 0.0, %v3810
        %3812 = vmatmul.f32.gmra.mxu0 %v3698
        %v3813 = vpop.f32.mrf.mxu0
        %v3814 = vadd.f32 0.0, %v3813
        %3815 = vmatmul.f32.gmra.mxu0 %v3701
        %v3816 = vpop.f32.mrf.mxu0
        %v3817 = vadd.f32 0.0, %v3816
        %3818 = vmatmul.f32.gmra.mxu0 %v3704
        %v3819 = vpop.f32.mrf.mxu0
        %v3820 = vadd.f32 0.0, %v3819
        %3821 = vmatmul.f32.gmra.mxu0 %v3707
        %v3822 = vpop.f32.mrf.mxu0
        %v3823 = vadd.f32 0.0, %v3822
        %3824 = vmatmul.f32.gmra.mxu0 %v3710
        %v3825 = vpop.f32.mrf.mxu0
        %v3826 = vadd.f32 0.0, %v3825
        %3827 = vmatmul.f32.gmra.mxu0 %v3713
        %v3828 = vpop.f32.mrf.mxu0
        %v3829 = vadd.f32 0.0, %v3828
        %3830 = vmatmul.f32.gmra.mxu0 %v3716
        %v3831 = vpop.f32.mrf.mxu0
        %v3832 = vadd.f32 0.0, %v3831
        %3833 = vmatmul.f32.gmra.mxu0 %v3719
        %v3834 = vpop.f32.mrf.mxu0
        %v3835 = vadd.f32 0.0, %v3834
        %3836 = vmatmul.f32.gmra.mxu0 %v3722
        %v3837 = vpop.f32.mrf.mxu0
        %v3838 = vadd.f32 0.0, %v3837
        %3839 = vmatmul.f32.gmra.mxu0 %v3725
        %v3840 = vpop.f32.mrf.mxu0
        %v3841 = vadd.f32 0.0, %v3840
        %3842 = vmatmul.f32.gmra.mxu0 %v3728
        %v3843 = vpop.f32.mrf.mxu0
        %v3844 = vadd.f32 0.0, %v3843
        %3845 = vdwg.mxu0
        %v3847 = vsel %vm422, %v3568, 0
        %v3850 = vsel %vm422, %v3569, 0
        %v3853 = vsel %vm422, %v3570, 0
        %v3856 = vsel %vm422, %v3571, 0
        %v3859 = vsel %vm422, %v3572, 0
        %v3862 = vsel %vm422, %v3573, 0
        %v3865 = vsel %vm422, %v3574, 0
        %v3868 = vsel %vm422, %v3575, 0
        %v3871 = vsel %vm422, %v3576, 0
        %v3874 = vsel %vm422, %v3577, 0
        %v3877 = vsel %vm422, %v3578, 0
        %v3880 = vsel %vm422, %v3579, 0
        %v3883 = vsel %vm422, %v3580, 0
        %v3886 = vsel %vm422, %v3581, 0
        %v3889 = vsel %vm422, %v3582, 0
        %v3892 = vsel %vm422, %v3583, 0
        %v3895 = vsel %vm422, %v3584, 0
        %v3898 = vsel %vm422, %v3585, 0
        %v3901 = vsel %vm422, %v3586, 0
        %v3904 = vsel %vm422, %v3587, 0
        %v3907 = vsel %vm422, %v3588, 0
        %v3910 = vsel %vm422, %v3589, 0
        %v3913 = vsel %vm422, %v3590, 0
        %v3916 = vsel %vm422, %v3591, 0
        %v3919 = vsel %vm422, %v3592, 0
        %v3922 = vsel %vm422, %v3593, 0
        %v3925 = vsel %vm422, %v3594, 0
        %v3928 = vsel %vm422, %v3595, 0
        %v3931 = vsel %vm422, %v3596, 0
        %v3934 = vsel %vm422, %v3597, 0
        %v3937 = vsel %vm422, %v3598, 0
        %v3940 = vsel %vm422, %v3599, 0
        %v3943 = vsel %vm519, %v3600, 0
        %3945 = vmatpush.msra.mxu0 0.0
        %3946 = vmatpush.msra.mxu0 0.0
        %3947 = vmatpush.msra.mxu0 0.0
        %3948 = vmatpush.msra.mxu0 0.0
        %3949 = vmatpush.msra.mxu0 0.0
        %3950 = vmatpush.msra.mxu0 0.0
        %3951 = vmatpush.msra.mxu0 0.0
        %3952 = vmatpush.msra.mxu0 0.0
        %3953 = vmatpush.msra.mxu0 0.0
        %3954 = vmatpush.msra.mxu0 0.0
        %3955 = vmatpush.msra.mxu0 0.0
        %3956 = vmatpush.msra.mxu0 0.0
        %3957 = vmatpush.msra.mxu0 0.0
        %3958 = vmatpush.msra.mxu0 0.0
        %3959 = vmatpush.msra.mxu0 0.0
        %3960 = vmatpush.msra.mxu0 %v3943
        %3961 = vmatmul.f32.gmra.mxu0 %v3847
        %v3962 = vpop.f32.mrf.mxu0
        %v3963 = vadd.f32 %v3751, %v3962
        %3964 = vmatmul.f32.gmra.mxu0 %v3850
        %v3965 = vpop.f32.mrf.mxu0
        %v3966 = vadd.f32 %v3754, %v3965
        %3967 = vmatmul.f32.gmra.mxu0 %v3853
        %v3968 = vpop.f32.mrf.mxu0
        %v3969 = vadd.f32 %v3757, %v3968
        %3970 = vmatmul.f32.gmra.mxu0 %v3856
        %v3971 = vpop.f32.mrf.mxu0
        %v3972 = vadd.f32 %v3760, %v3971
        %3973 = vmatmul.f32.gmra.mxu0 %v3859
        %v3974 = vpop.f32.mrf.mxu0
        %v3975 = vadd.f32 %v3763, %v3974
        %3976 = vmatmul.f32.gmra.mxu0 %v3862
        %v3977 = vpop.f32.mrf.mxu0
        %v3978 = vadd.f32 %v3766, %v3977
        %3979 = vmatmul.f32.gmra.mxu0 %v3865
        %v3980 = vpop.f32.mrf.mxu0
        %v3981 = vadd.f32 %v3769, %v3980
        %3982 = vmatmul.f32.gmra.mxu0 %v3868
        %v3983 = vpop.f32.mrf.mxu0
        %v3984 = vadd.f32 %v3772, %v3983
        %3985 = vmatmul.f32.gmra.mxu0 %v3871
        %v3986 = vpop.f32.mrf.mxu0
        %v3987 = vadd.f32 %v3775, %v3986
        %3988 = vmatmul.f32.gmra.mxu0 %v3874
        %v3989 = vpop.f32.mrf.mxu0
        %v3990 = vadd.f32 %v3778, %v3989
        %3991 = vmatmul.f32.gmra.mxu0 %v3877
        %v3992 = vpop.f32.mrf.mxu0
        %v3993 = vadd.f32 %v3781, %v3992
        %3994 = vmatmul.f32.gmra.mxu0 %v3880
        %v3995 = vpop.f32.mrf.mxu0
        %v3996 = vadd.f32 %v3784, %v3995
        %3997 = vmatmul.f32.gmra.mxu0 %v3883
        %v3998 = vpop.f32.mrf.mxu0
        %v3999 = vadd.f32 %v3787, %v3998
        %4000 = vmatmul.f32.gmra.mxu0 %v3886
        %v4001 = vpop.f32.mrf.mxu0
        %v4002 = vadd.f32 %v3790, %v4001
        %4003 = vmatmul.f32.gmra.mxu0 %v3889
        %v4004 = vpop.f32.mrf.mxu0
        %v4005 = vadd.f32 %v3793, %v4004
        %4006 = vmatmul.f32.gmra.mxu0 %v3892
        %v4007 = vpop.f32.mrf.mxu0
        %v4008 = vadd.f32 %v3796, %v4007
        %4009 = vmatmul.f32.gmra.mxu0 %v3895
        %v4010 = vpop.f32.mrf.mxu0
        %v4011 = vadd.f32 %v3799, %v4010
        %4012 = vmatmul.f32.gmra.mxu0 %v3898
        %v4013 = vpop.f32.mrf.mxu0
        %v4014 = vadd.f32 %v3802, %v4013
        %4015 = vmatmul.f32.gmra.mxu0 %v3901
        %v4016 = vpop.f32.mrf.mxu0
        %v4017 = vadd.f32 %v3805, %v4016
        %4018 = vmatmul.f32.gmra.mxu0 %v3904
        %v4019 = vpop.f32.mrf.mxu0
        %v4020 = vadd.f32 %v3808, %v4019
        %4021 = vmatmul.f32.gmra.mxu0 %v3907
        %v4022 = vpop.f32.mrf.mxu0
        %v4023 = vadd.f32 %v3811, %v4022
        %4024 = vmatmul.f32.gmra.mxu0 %v3910
        %v4025 = vpop.f32.mrf.mxu0
        %v4026 = vadd.f32 %v3814, %v4025
        %4027 = vmatmul.f32.gmra.mxu0 %v3913
        %v4028 = vpop.f32.mrf.mxu0
        %v4029 = vadd.f32 %v3817, %v4028
        %4030 = vmatmul.f32.gmra.mxu0 %v3916
        %v4031 = vpop.f32.mrf.mxu0
        %v4032 = vadd.f32 %v3820, %v4031
        %4033 = vmatmul.f32.gmra.mxu0 %v3919
        %v4034 = vpop.f32.mrf.mxu0
        %v4035 = vadd.f32 %v3823, %v4034
        %4036 = vmatmul.f32.gmra.mxu0 %v3922
        %v4037 = vpop.f32.mrf.mxu0
        %v4038 = vadd.f32 %v3826, %v4037
        %4039 = vmatmul.f32.gmra.mxu0 %v3925
        %v4040 = vpop.f32.mrf.mxu0
        %v4041 = vadd.f32 %v3829, %v4040
        %4042 = vmatmul.f32.gmra.mxu0 %v3928
        %v4043 = vpop.f32.mrf.mxu0
        %v4044 = vadd.f32 %v3832, %v4043
        %4045 = vmatmul.f32.gmra.mxu0 %v3931
        %v4046 = vpop.f32.mrf.mxu0
        %v4047 = vadd.f32 %v3835, %v4046
        %4048 = vmatmul.f32.gmra.mxu0 %v3934
        %v4049 = vpop.f32.mrf.mxu0
        %v4050 = vadd.f32 %v3838, %v4049
        %4051 = vmatmul.f32.gmra.mxu0 %v3937
        %v4052 = vpop.f32.mrf.mxu0
        %v4053 = vadd.f32 %v3841, %v4052
        %4054 = vmatmul.f32.gmra.mxu0 %v3940
        %v4055 = vpop.f32.mrf.mxu0
        %v4056 = vadd.f32 %v3844, %v4055
        %4057 = vdwg.mxu0
        %v4058 = vld [vmem:[#allocation4 + $0x2] sm:$0xff]
        %v4059 = vld [vmem:[#allocation4 + $0xa] sm:$0xff]
        %v4060 = vld [vmem:[#allocation4 + $0x1a] sm:$0xff]
        %v4061 = vld [vmem:[#allocation4 + $0x22] sm:$0xff]
        %v4062 = vld [vmem:[#allocation4 + $0x32] sm:$0xff]
        %v4063 = vld [vmem:[#allocation4 + $0x3a] sm:$0xff]
        %v4064 = vld [vmem:[#allocation4 + $0x4a] sm:$0xff]
        %v4065 = vld [vmem:[#allocation4 + $0x52] sm:$0xff]
        %v4066 = vld [vmem:[#allocation4 + $0x62] sm:$0xff]
        %v4067 = vld [vmem:[#allocation4 + $0x6a] sm:$0xff]
        %v4068 = vld [vmem:[#allocation4 + $0x7a] sm:$0xff]
        %v4069 = vld [vmem:[#allocation4 + $0x82] sm:$0xff]
        %v4070 = vld [vmem:[#allocation4 + $0x92] sm:$0xff]
        %v4071 = vld [vmem:[#allocation4 + $0x9a] sm:$0xff]
        %v4072 = vld [vmem:[#allocation4 + $0xaa] sm:$0xff]
        %v4073 = vld [vmem:[#allocation4 + $0xb2] sm:$0xff]
        %v4074 = vld [vmem:[#allocation4 + $0xc2] sm:$0xff]
        %v4075 = vld [vmem:[#allocation4 + $0xca] sm:$0xff]
        %v4076 = vld [vmem:[#allocation4 + $0xda] sm:$0xff]
        %v4077 = vld [vmem:[#allocation4 + $0xe2] sm:$0xff]
        %v4078 = vld [vmem:[#allocation4 + $0xf2] sm:$0xff]
        %v4079 = vld [vmem:[#allocation4 + $0xfa] sm:$0xff]
        %v4080 = vld [vmem:[#allocation4 + $0x10a] sm:$0xff]
        %v4081 = vld [vmem:[#allocation4 + $0x112] sm:$0xff]
        %v4082 = vld [vmem:[#allocation4 + $0x122] sm:$0xff]
        %v4083 = vld [vmem:[#allocation4 + $0x12a] sm:$0xff]
        %v4084 = vld [vmem:[#allocation4 + $0x13a] sm:$0xff]
        %v4085 = vld [vmem:[#allocation4 + $0x142] sm:$0xff]
        %v4086 = vld [vmem:[#allocation4 + $0x152] sm:$0xff]
        %v4087 = vld [vmem:[#allocation4 + $0x15a] sm:$0xff]
        %v4088 = vld [vmem:[#allocation4 + $0x16a] sm:$0xff]
        %v4089 = vld [vmem:[#allocation4 + $0x172] sm:$0xff]
        %v4090 = vld [vmem:[%s5 + $0x8] sm:$0xf]
        %v4092 = vsel %vm422, %v4058, 0
        %v4095 = vsel %vm422, %v4059, 0
        %v4098 = vsel %vm422, %v4060, 0
        %v4101 = vsel %vm422, %v4061, 0
        %v4104 = vsel %vm422, %v4062, 0
        %v4107 = vsel %vm422, %v4063, 0
        %v4110 = vsel %vm422, %v4064, 0
        %v4113 = vsel %vm422, %v4065, 0
        %v4116 = vsel %vm422, %v4066, 0
        %v4119 = vsel %vm422, %v4067, 0
        %v4122 = vsel %vm422, %v4068, 0
        %v4125 = vsel %vm422, %v4069, 0
        %v4128 = vsel %vm422, %v4070, 0
        %v4131 = vsel %vm422, %v4071, 0
        %v4134 = vsel %vm422, %v4072, 0
        %v4137 = vsel %vm422, %v4073, 0
        %v4140 = vsel %vm422, %v4074, 0
        %v4143 = vsel %vm422, %v4075, 0
        %v4146 = vsel %vm422, %v4076, 0
        %v4149 = vsel %vm422, %v4077, 0
        %v4152 = vsel %vm422, %v4078, 0
        %v4155 = vsel %vm422, %v4079, 0
        %v4158 = vsel %vm422, %v4080, 0
        %v4161 = vsel %vm422, %v4081, 0
        %v4164 = vsel %vm422, %v4082, 0
        %v4167 = vsel %vm422, %v4083, 0
        %v4170 = vsel %vm422, %v4084, 0
        %v4173 = vsel %vm422, %v4085, 0
        %v4176 = vsel %vm422, %v4086, 0
        %v4179 = vsel %vm422, %v4087, 0
        %v4182 = vsel %vm422, %v4088, 0
        %v4185 = vsel %vm422, %v4089, 0
        %v4188 = vsel %vm519, %v4090, 0
        %4190 = vmatpush.msra.mxu0 0.0
        %4191 = vmatpush.msra.mxu0 0.0
        %4192 = vmatpush.msra.mxu0 0.0
        %4193 = vmatpush.msra.mxu0 0.0
        %4194 = vmatpush.msra.mxu0 0.0
        %4195 = vmatpush.msra.mxu0 0.0
        %4196 = vmatpush.msra.mxu0 0.0
        %4197 = vmatpush.msra.mxu0 0.0
        %4198 = vmatpush.msra.mxu0 0.0
        %4199 = vmatpush.msra.mxu0 0.0
        %4200 = vmatpush.msra.mxu0 0.0
        %4201 = vmatpush.msra.mxu0 0.0
        %4202 = vmatpush.msra.mxu0 0.0
        %4203 = vmatpush.msra.mxu0 0.0
        %4204 = vmatpush.msra.mxu0 0.0
        %4205 = vmatpush.msra.mxu0 %v4188
        %4206 = vmatmul.f32.gmra.mxu0 %v4092
        %v4207 = vpop.f32.mrf.mxu0
        %v4208 = vadd.f32 0.0, %v4207
        %4209 = vmatmul.f32.gmra.mxu0 %v4095
        %v4210 = vpop.f32.mrf.mxu0
        %v4211 = vadd.f32 0.0, %v4210
        %4212 = vmatmul.f32.gmra.mxu0 %v4098
        %v4213 = vpop.f32.mrf.mxu0
        %v4214 = vadd.f32 0.0, %v4213
        %4215 = vmatmul.f32.gmra.mxu0 %v4101
        %v4216 = vpop.f32.mrf.mxu0
        %v4217 = vadd.f32 0.0, %v4216
        %4218 = vmatmul.f32.gmra.mxu0 %v4104
        %v4219 = vpop.f32.mrf.mxu0
        %v4220 = vadd.f32 0.0, %v4219
        %4221 = vmatmul.f32.gmra.mxu0 %v4107
        %v4222 = vpop.f32.mrf.mxu0
        %v4223 = vadd.f32 0.0, %v4222
        %4224 = vmatmul.f32.gmra.mxu0 %v4110
        %v4225 = vpop.f32.mrf.mxu0
        %v4226 = vadd.f32 0.0, %v4225
        %4227 = vmatmul.f32.gmra.mxu0 %v4113
        %v4228 = vpop.f32.mrf.mxu0
        %v4229 = vadd.f32 0.0, %v4228
        %4230 = vmatmul.f32.gmra.mxu0 %v4116
        %v4231 = vpop.f32.mrf.mxu0
        %v4232 = vadd.f32 0.0, %v4231
        %4233 = vmatmul.f32.gmra.mxu0 %v4119
        %v4234 = vpop.f32.mrf.mxu0
        %v4235 = vadd.f32 0.0, %v4234
        %4236 = vmatmul.f32.gmra.mxu0 %v4122
        %v4237 = vpop.f32.mrf.mxu0
        %v4238 = vadd.f32 0.0, %v4237
        %4239 = vmatmul.f32.gmra.mxu0 %v4125
        %v4240 = vpop.f32.mrf.mxu0
        %v4241 = vadd.f32 0.0, %v4240
        %4242 = vmatmul.f32.gmra.mxu0 %v4128
        %v4243 = vpop.f32.mrf.mxu0
        %v4244 = vadd.f32 0.0, %v4243
        %4245 = vmatmul.f32.gmra.mxu0 %v4131
        %v4246 = vpop.f32.mrf.mxu0
        %v4247 = vadd.f32 0.0, %v4246
        %4248 = vmatmul.f32.gmra.mxu0 %v4134
        %v4249 = vpop.f32.mrf.mxu0
        %v4250 = vadd.f32 0.0, %v4249
        %4251 = vmatmul.f32.gmra.mxu0 %v4137
        %v4252 = vpop.f32.mrf.mxu0
        %v4253 = vadd.f32 0.0, %v4252
        %4254 = vmatmul.f32.gmra.mxu0 %v4140
        %v4255 = vpop.f32.mrf.mxu0
        %v4256 = vadd.f32 0.0, %v4255
        %4257 = vmatmul.f32.gmra.mxu0 %v4143
        %v4258 = vpop.f32.mrf.mxu0
        %v4259 = vadd.f32 0.0, %v4258
        %4260 = vmatmul.f32.gmra.mxu0 %v4146
        %v4261 = vpop.f32.mrf.mxu0
        %v4262 = vadd.f32 0.0, %v4261
        %4263 = vmatmul.f32.gmra.mxu0 %v4149
        %v4264 = vpop.f32.mrf.mxu0
        %v4265 = vadd.f32 0.0, %v4264
        %4266 = vmatmul.f32.gmra.mxu0 %v4152
        %v4267 = vpop.f32.mrf.mxu0
        %v4268 = vadd.f32 0.0, %v4267
        %4269 = vmatmul.f32.gmra.mxu0 %v4155
        %v4270 = vpop.f32.mrf.mxu0
        %v4271 = vadd.f32 0.0, %v4270
        %4272 = vmatmul.f32.gmra.mxu0 %v4158
        %v4273 = vpop.f32.mrf.mxu0
        %v4274 = vadd.f32 0.0, %v4273
        %4275 = vmatmul.f32.gmra.mxu0 %v4161
        %v4276 = vpop.f32.mrf.mxu0
        %v4277 = vadd.f32 0.0, %v4276
        %4278 = vmatmul.f32.gmra.mxu0 %v4164
        %v4279 = vpop.f32.mrf.mxu0
        %v4280 = vadd.f32 0.0, %v4279
        %4281 = vmatmul.f32.gmra.mxu0 %v4167
        %v4282 = vpop.f32.mrf.mxu0
        %v4283 = vadd.f32 0.0, %v4282
        %4284 = vmatmul.f32.gmra.mxu0 %v4170
        %v4285 = vpop.f32.mrf.mxu0
        %v4286 = vadd.f32 0.0, %v4285
        %4287 = vmatmul.f32.gmra.mxu0 %v4173
        %v4288 = vpop.f32.mrf.mxu0
        %v4289 = vadd.f32 0.0, %v4288
        %4290 = vmatmul.f32.gmra.mxu0 %v4176
        %v4291 = vpop.f32.mrf.mxu0
        %v4292 = vadd.f32 0.0, %v4291
        %4293 = vmatmul.f32.gmra.mxu0 %v4179
        %v4294 = vpop.f32.mrf.mxu0
        %v4295 = vadd.f32 0.0, %v4294
        %4296 = vmatmul.f32.gmra.mxu0 %v4182
        %v4297 = vpop.f32.mrf.mxu0
        %v4298 = vadd.f32 0.0, %v4297
        %4299 = vmatmul.f32.gmra.mxu0 %v4185
        %v4300 = vpop.f32.mrf.mxu0
        %v4301 = vadd.f32 0.0, %v4300
        %4302 = vdwg.mxu0
        %v4303 = vadd.f32 %v3963, %v4208
        %v4304 = vadd.f32 %v3966, %v4211
        %v4305 = vadd.f32 %v3969, %v4214
        %v4306 = vadd.f32 %v3972, %v4217
        %v4307 = vadd.f32 %v3975, %v4220
        %v4308 = vadd.f32 %v3978, %v4223
        %v4309 = vadd.f32 %v3981, %v4226
        %v4310 = vadd.f32 %v3984, %v4229
        %v4311 = vadd.f32 %v3987, %v4232
        %v4312 = vadd.f32 %v3990, %v4235
        %v4313 = vadd.f32 %v3993, %v4238
        %v4314 = vadd.f32 %v3996, %v4241
        %v4315 = vadd.f32 %v3999, %v4244
        %v4316 = vadd.f32 %v4002, %v4247
        %v4317 = vadd.f32 %v4005, %v4250
        %v4318 = vadd.f32 %v4008, %v4253
        %v4319 = vadd.f32 %v4011, %v4256
        %v4320 = vadd.f32 %v4014, %v4259
        %v4321 = vadd.f32 %v4017, %v4262
        %v4322 = vadd.f32 %v4020, %v4265
        %v4323 = vadd.f32 %v4023, %v4268
        %v4324 = vadd.f32 %v4026, %v4271
        %v4325 = vadd.f32 %v4029, %v4274
        %v4326 = vadd.f32 %v4032, %v4277
        %v4327 = vadd.f32 %v4035, %v4280
        %v4328 = vadd.f32 %v4038, %v4283
        %v4329 = vadd.f32 %v4041, %v4286
        %v4330 = vadd.f32 %v4044, %v4289
        %v4331 = vadd.f32 %v4047, %v4292
        %v4332 = vadd.f32 %v4050, %v4295
        %v4333 = vadd.f32 %v4053, %v4298
        %v4334 = vadd.f32 %v4056, %v4301
        %v4335 = vld [vmem:[%s3535] sm:$0xff]
        %v4336 = vld [vmem:[%s3535 + $0x8] sm:$0xff]
        %v4337 = vld [vmem:[%s3535 + $0x18] sm:$0xff]
        %v4338 = vld [vmem:[%s3535 + $0x20] sm:$0xff]
        %v4339 = vld [vmem:[%s3535 + $0x30] sm:$0xff]
        %v4340 = vld [vmem:[%s3535 + $0x38] sm:$0xff]
        %v4341 = vld [vmem:[%s3535 + $0x48] sm:$0xff]
        %v4342 = vld [vmem:[%s3535 + $0x50] sm:$0xff]
        %v4343 = vld [vmem:[%s3535 + $0x60] sm:$0xff]
        %v4344 = vld [vmem:[%s3535 + $0x68] sm:$0xff]
        %v4345 = vld [vmem:[%s3535 + $0x78] sm:$0xff]
        %v4346 = vld [vmem:[%s3535 + $0x80] sm:$0xff]
        %v4347 = vld [vmem:[%s3535 + $0x90] sm:$0xff]
        %v4348 = vld [vmem:[%s3535 + $0x98] sm:$0xff]
        %v4349 = vld [vmem:[%s3535 + $0xa8] sm:$0xff]
        %v4350 = vld [vmem:[%s3535 + $0xb0] sm:$0xff]
        %v4351 = vld [vmem:[%s3535 + $0xc0] sm:$0xff]
        %v4352 = vld [vmem:[%s3535 + $0xc8] sm:$0xff]
        %v4353 = vld [vmem:[%s3535 + $0xd8] sm:$0xff]
        %v4354 = vld [vmem:[%s3535 + $0xe0] sm:$0xff]
        %v4355 = vld [vmem:[%s3535 + $0xf0] sm:$0xff]
        %v4356 = vld [vmem:[%s3535 + $0xf8] sm:$0xff]
        %v4357 = vld [vmem:[%s3535 + $0x108] sm:$0xff]
        %v4358 = vld [vmem:[%s3535 + $0x110] sm:$0xff]
        %v4359 = vld [vmem:[%s3535 + $0x120] sm:$0xff]
        %v4360 = vld [vmem:[%s3535 + $0x128] sm:$0xff]
        %v4361 = vld [vmem:[%s3535 + $0x138] sm:$0xff]
        %v4362 = vld [vmem:[%s3535 + $0x140] sm:$0xff]
        %v4363 = vld [vmem:[%s3535 + $0x150] sm:$0xff]
        %v4364 = vld [vmem:[%s3535 + $0x158] sm:$0xff]
        %v4365 = vld [vmem:[%s3535 + $0x168] sm:$0xff]
        %v4366 = vld [vmem:[%s3535 + $0x170] sm:$0xff]
        %v4367 = vld [vmem:[%s5 + $0xc] sm:$0xf]
        %v4369 = vsel %vm422, %v4335, 0
        %v4372 = vsel %vm422, %v4336, 0
        %v4375 = vsel %vm422, %v4337, 0
        %v4378 = vsel %vm422, %v4338, 0
        %v4381 = vsel %vm422, %v4339, 0
        %v4384 = vsel %vm422, %v4340, 0
        %v4387 = vsel %vm422, %v4341, 0
        %v4390 = vsel %vm422, %v4342, 0
        %v4393 = vsel %vm422, %v4343, 0
        %v4396 = vsel %vm422, %v4344, 0
        %v4399 = vsel %vm422, %v4345, 0
        %v4402 = vsel %vm422, %v4346, 0
        %v4405 = vsel %vm422, %v4347, 0
        %v4408 = vsel %vm422, %v4348, 0
        %v4411 = vsel %vm422, %v4349, 0
        %v4414 = vsel %vm422, %v4350, 0
        %v4417 = vsel %vm422, %v4351, 0
        %v4420 = vsel %vm422, %v4352, 0
        %v4423 = vsel %vm422, %v4353, 0
        %v4426 = vsel %vm422, %v4354, 0
        %v4429 = vsel %vm422, %v4355, 0
        %v4432 = vsel %vm422, %v4356, 0
        %v4435 = vsel %vm422, %v4357, 0
        %v4438 = vsel %vm422, %v4358, 0
        %v4441 = vsel %vm422, %v4359, 0
        %v4444 = vsel %vm422, %v4360, 0
        %v4447 = vsel %vm422, %v4361, 0
        %v4450 = vsel %vm422, %v4362, 0
        %v4453 = vsel %vm422, %v4363, 0
        %v4456 = vsel %vm422, %v4364, 0
        %v4459 = vsel %vm422, %v4365, 0
        %v4462 = vsel %vm422, %v4366, 0
        %v4465 = vsel %vm519, %v4367, 0
        %4467 = vmatpush.msra.mxu0 0.0
        %4468 = vmatpush.msra.mxu0 0.0
        %4469 = vmatpush.msra.mxu0 0.0
        %4470 = vmatpush.msra.mxu0 0.0
        %4471 = vmatpush.msra.mxu0 0.0
        %4472 = vmatpush.msra.mxu0 0.0
        %4473 = vmatpush.msra.mxu0 0.0
        %4474 = vmatpush.msra.mxu0 0.0
        %4475 = vmatpush.msra.mxu0 0.0
        %4476 = vmatpush.msra.mxu0 0.0
        %4477 = vmatpush.msra.mxu0 0.0
        %4478 = vmatpush.msra.mxu0 0.0
        %4479 = vmatpush.msra.mxu0 0.0
        %4480 = vmatpush.msra.mxu0 0.0
        %4481 = vmatpush.msra.mxu0 0.0
        %4482 = vmatpush.msra.mxu0 %v4465
        %4483 = vmatmul.f32.gmra.mxu0 %v4369
        %v4484 = vpop.f32.mrf.mxu0
        %v4485 = vadd.f32 0.0, %v4484
        %4486 = vmatmul.f32.gmra.mxu0 %v4372
        %v4487 = vpop.f32.mrf.mxu0
        %v4488 = vadd.f32 0.0, %v4487
        %4489 = vmatmul.f32.gmra.mxu0 %v4375
        %v4490 = vpop.f32.mrf.mxu0
        %v4491 = vadd.f32 0.0, %v4490
        %4492 = vmatmul.f32.gmra.mxu0 %v4378
        %v4493 = vpop.f32.mrf.mxu0
        %v4494 = vadd.f32 0.0, %v4493
        %4495 = vmatmul.f32.gmra.mxu0 %v4381
        %v4496 = vpop.f32.mrf.mxu0
        %v4497 = vadd.f32 0.0, %v4496
        %4498 = vmatmul.f32.gmra.mxu0 %v4384
        %v4499 = vpop.f32.mrf.mxu0
        %v4500 = vadd.f32 0.0, %v4499
        %4501 = vmatmul.f32.gmra.mxu0 %v4387
        %v4502 = vpop.f32.mrf.mxu0
        %v4503 = vadd.f32 0.0, %v4502
        %4504 = vmatmul.f32.gmra.mxu0 %v4390
        %v4505 = vpop.f32.mrf.mxu0
        %v4506 = vadd.f32 0.0, %v4505
        %4507 = vmatmul.f32.gmra.mxu0 %v4393
        %v4508 = vpop.f32.mrf.mxu0
        %v4509 = vadd.f32 0.0, %v4508
        %4510 = vmatmul.f32.gmra.mxu0 %v4396
        %v4511 = vpop.f32.mrf.mxu0
        %v4512 = vadd.f32 0.0, %v4511
        %4513 = vmatmul.f32.gmra.mxu0 %v4399
        %v4514 = vpop.f32.mrf.mxu0
        %v4515 = vadd.f32 0.0, %v4514
        %4516 = vmatmul.f32.gmra.mxu0 %v4402
        %v4517 = vpop.f32.mrf.mxu0
        %v4518 = vadd.f32 0.0, %v4517
        %4519 = vmatmul.f32.gmra.mxu0 %v4405
        %v4520 = vpop.f32.mrf.mxu0
        %v4521 = vadd.f32 0.0, %v4520
        %4522 = vmatmul.f32.gmra.mxu0 %v4408
        %v4523 = vpop.f32.mrf.mxu0
        %v4524 = vadd.f32 0.0, %v4523
        %4525 = vmatmul.f32.gmra.mxu0 %v4411
        %v4526 = vpop.f32.mrf.mxu0
        %v4527 = vadd.f32 0.0, %v4526
        %4528 = vmatmul.f32.gmra.mxu0 %v4414
        %v4529 = vpop.f32.mrf.mxu0
        %v4530 = vadd.f32 0.0, %v4529
        %4531 = vmatmul.f32.gmra.mxu0 %v4417
        %v4532 = vpop.f32.mrf.mxu0
        %v4533 = vadd.f32 0.0, %v4532
        %4534 = vmatmul.f32.gmra.mxu0 %v4420
        %v4535 = vpop.f32.mrf.mxu0
        %v4536 = vadd.f32 0.0, %v4535
        %4537 = vmatmul.f32.gmra.mxu0 %v4423
        %v4538 = vpop.f32.mrf.mxu0
        %v4539 = vadd.f32 0.0, %v4538
        %4540 = vmatmul.f32.gmra.mxu0 %v4426
        %v4541 = vpop.f32.mrf.mxu0
        %v4542 = vadd.f32 0.0, %v4541
        %4543 = vmatmul.f32.gmra.mxu0 %v4429
        %v4544 = vpop.f32.mrf.mxu0
        %v4545 = vadd.f32 0.0, %v4544
        %4546 = vmatmul.f32.gmra.mxu0 %v4432
        %v4547 = vpop.f32.mrf.mxu0
        %v4548 = vadd.f32 0.0, %v4547
        %4549 = vmatmul.f32.gmra.mxu0 %v4435
        %v4550 = vpop.f32.mrf.mxu0
        %v4551 = vadd.f32 0.0, %v4550
        %4552 = vmatmul.f32.gmra.mxu0 %v4438
        %v4553 = vpop.f32.mrf.mxu0
        %v4554 = vadd.f32 0.0, %v4553
        %4555 = vmatmul.f32.gmra.mxu0 %v4441
        %v4556 = vpop.f32.mrf.mxu0
        %v4557 = vadd.f32 0.0, %v4556
        %4558 = vmatmul.f32.gmra.mxu0 %v4444
        %v4559 = vpop.f32.mrf.mxu0
        %v4560 = vadd.f32 0.0, %v4559
        %4561 = vmatmul.f32.gmra.mxu0 %v4447
        %v4562 = vpop.f32.mrf.mxu0
        %v4563 = vadd.f32 0.0, %v4562
        %4564 = vmatmul.f32.gmra.mxu0 %v4450
        %v4565 = vpop.f32.mrf.mxu0
        %v4566 = vadd.f32 0.0, %v4565
        %4567 = vmatmul.f32.gmra.mxu0 %v4453
        %v4568 = vpop.f32.mrf.mxu0
        %v4569 = vadd.f32 0.0, %v4568
        %4570 = vmatmul.f32.gmra.mxu0 %v4456
        %v4571 = vpop.f32.mrf.mxu0
        %v4572 = vadd.f32 0.0, %v4571
        %4573 = vmatmul.f32.gmra.mxu0 %v4459
        %v4574 = vpop.f32.mrf.mxu0
        %v4575 = vadd.f32 0.0, %v4574
        %4576 = vmatmul.f32.gmra.mxu0 %v4462
        %v4577 = vpop.f32.mrf.mxu0
        %v4578 = vadd.f32 0.0, %v4577
        %4579 = vdwg.mxu0
        %v4580 = vadd.f32 %v4303, %v4485
        %v4581 = vadd.f32 %v4304, %v4488
        %v4582 = vadd.f32 %v4305, %v4491
        %v4583 = vadd.f32 %v4306, %v4494
        %v4584 = vadd.f32 %v4307, %v4497
        %v4585 = vadd.f32 %v4308, %v4500
        %v4586 = vadd.f32 %v4309, %v4503
        %v4587 = vadd.f32 %v4310, %v4506
        %v4588 = vadd.f32 %v4311, %v4509
        %v4589 = vadd.f32 %v4312, %v4512
        %v4590 = vadd.f32 %v4313, %v4515
        %v4591 = vadd.f32 %v4314, %v4518
        %v4592 = vadd.f32 %v4315, %v4521
        %v4593 = vadd.f32 %v4316, %v4524
        %v4594 = vadd.f32 %v4317, %v4527
        %v4595 = vadd.f32 %v4318, %v4530
        %v4596 = vadd.f32 %v4319, %v4533
        %v4597 = vadd.f32 %v4320, %v4536
        %v4598 = vadd.f32 %v4321, %v4539
        %v4599 = vadd.f32 %v4322, %v4542
        %v4600 = vadd.f32 %v4323, %v4545
        %v4601 = vadd.f32 %v4324, %v4548
        %v4602 = vadd.f32 %v4325, %v4551
        %v4603 = vadd.f32 %v4326, %v4554
        %v4604 = vadd.f32 %v4327, %v4557
        %v4605 = vadd.f32 %v4328, %v4560
        %v4606 = vadd.f32 %v4329, %v4563
        %v4607 = vadd.f32 %v4330, %v4566
        %v4608 = vadd.f32 %v4331, %v4569
        %v4609 = vadd.f32 %v4332, %v4572
        %v4610 = vadd.f32 %v4333, %v4575
        %v4611 = vadd.f32 %v4334, %v4578
        %v4612 = vld [vmem:[%s3535 + $0x1] sm:$0xff]
        %v4613 = vld [vmem:[%s3535 + $0x9] sm:$0xff]
        %v4614 = vld [vmem:[%s3535 + $0x19] sm:$0xff]
        %v4615 = vld [vmem:[%s3535 + $0x21] sm:$0xff]
        %v4616 = vld [vmem:[%s3535 + $0x31] sm:$0xff]
        %v4617 = vld [vmem:[%s3535 + $0x39] sm:$0xff]
        %v4618 = vld [vmem:[%s3535 + $0x49] sm:$0xff]
        %v4619 = vld [vmem:[%s3535 + $0x51] sm:$0xff]
        %v4620 = vld [vmem:[%s3535 + $0x61] sm:$0xff]
        %v4621 = vld [vmem:[%s3535 + $0x69] sm:$0xff]
        %v4622 = vld [vmem:[%s3535 + $0x79] sm:$0xff]
        %v4623 = vld [vmem:[%s3535 + $0x81] sm:$0xff]
        %v4624 = vld [vmem:[%s3535 + $0x91] sm:$0xff]
        %v4625 = vld [vmem:[%s3535 + $0x99] sm:$0xff]
        %v4626 = vld [vmem:[%s3535 + $0xa9] sm:$0xff]
        %v4627 = vld [vmem:[%s3535 + $0xb1] sm:$0xff]
        %v4628 = vld [vmem:[%s3535 + $0xc1] sm:$0xff]
        %v4629 = vld [vmem:[%s3535 + $0xc9] sm:$0xff]
        %v4630 = vld [vmem:[%s3535 + $0xd9] sm:$0xff]
        %v4631 = vld [vmem:[%s3535 + $0xe1] sm:$0xff]
        %v4632 = vld [vmem:[%s3535 + $0xf1] sm:$0xff]
        %v4633 = vld [vmem:[%s3535 + $0xf9] sm:$0xff]
        %v4634 = vld [vmem:[%s3535 + $0x109] sm:$0xff]
        %v4635 = vld [vmem:[%s3535 + $0x111] sm:$0xff]
        %v4636 = vld [vmem:[%s3535 + $0x121] sm:$0xff]
        %v4637 = vld [vmem:[%s3535 + $0x129] sm:$0xff]
        %v4638 = vld [vmem:[%s3535 + $0x139] sm:$0xff]
        %v4639 = vld [vmem:[%s3535 + $0x141] sm:$0xff]
        %v4640 = vld [vmem:[%s3535 + $0x151] sm:$0xff]
        %v4641 = vld [vmem:[%s3535 + $0x159] sm:$0xff]
        %v4642 = vld [vmem:[%s3535 + $0x169] sm:$0xff]
        %v4643 = vld [vmem:[%s3535 + $0x171] sm:$0xff]
        %v4644 = vld [vmem:[%s5 + $0x10] sm:$0xf]
        %v4646 = vsel %vm422, %v4612, 0
        %v4649 = vsel %vm422, %v4613, 0
        %v4652 = vsel %vm422, %v4614, 0
        %v4655 = vsel %vm422, %v4615, 0
        %v4658 = vsel %vm422, %v4616, 0
        %v4661 = vsel %vm422, %v4617, 0
        %v4664 = vsel %vm422, %v4618, 0
        %v4667 = vsel %vm422, %v4619, 0
        %v4670 = vsel %vm422, %v4620, 0
        %v4673 = vsel %vm422, %v4621, 0
        %v4676 = vsel %vm422, %v4622, 0
        %v4679 = vsel %vm422, %v4623, 0
        %v4682 = vsel %vm422, %v4624, 0
        %v4685 = vsel %vm422, %v4625, 0
        %v4688 = vsel %vm422, %v4626, 0
        %v4691 = vsel %vm422, %v4627, 0
        %v4694 = vsel %vm422, %v4628, 0
        %v4697 = vsel %vm422, %v4629, 0
        %v4700 = vsel %vm422, %v4630, 0
        %v4703 = vsel %vm422, %v4631, 0
        %v4706 = vsel %vm422, %v4632, 0
        %v4709 = vsel %vm422, %v4633, 0
        %v4712 = vsel %vm422, %v4634, 0
        %v4715 = vsel %vm422, %v4635, 0
        %v4718 = vsel %vm422, %v4636, 0
        %v4721 = vsel %vm422, %v4637, 0
        %v4724 = vsel %vm422, %v4638, 0
        %v4727 = vsel %vm422, %v4639, 0
        %v4730 = vsel %vm422, %v4640, 0
        %v4733 = vsel %vm422, %v4641, 0
        %v4736 = vsel %vm422, %v4642, 0
        %v4739 = vsel %vm422, %v4643, 0
        %v4742 = vsel %vm519, %v4644, 0
        %4744 = vmatpush.msra.mxu0 0.0
        %4745 = vmatpush.msra.mxu0 0.0
        %4746 = vmatpush.msra.mxu0 0.0
        %4747 = vmatpush.msra.mxu0 0.0
        %4748 = vmatpush.msra.mxu0 0.0
        %4749 = vmatpush.msra.mxu0 0.0
        %4750 = vmatpush.msra.mxu0 0.0
        %4751 = vmatpush.msra.mxu0 0.0
        %4752 = vmatpush.msra.mxu0 0.0
        %4753 = vmatpush.msra.mxu0 0.0
        %4754 = vmatpush.msra.mxu0 0.0
        %4755 = vmatpush.msra.mxu0 0.0
        %4756 = vmatpush.msra.mxu0 0.0
        %4757 = vmatpush.msra.mxu0 0.0
        %4758 = vmatpush.msra.mxu0 0.0
        %4759 = vmatpush.msra.mxu0 %v4742
        %4760 = vmatmul.f32.gmra.mxu0 %v4646
        %v4761 = vpop.f32.mrf.mxu0
        %v4762 = vadd.f32 0.0, %v4761
        %4763 = vmatmul.f32.gmra.mxu0 %v4649
        %v4764 = vpop.f32.mrf.mxu0
        %v4765 = vadd.f32 0.0, %v4764
        %4766 = vmatmul.f32.gmra.mxu0 %v4652
        %v4767 = vpop.f32.mrf.mxu0
        %v4768 = vadd.f32 0.0, %v4767
        %4769 = vmatmul.f32.gmra.mxu0 %v4655
        %v4770 = vpop.f32.mrf.mxu0
        %v4771 = vadd.f32 0.0, %v4770
        %4772 = vmatmul.f32.gmra.mxu0 %v4658
        %v4773 = vpop.f32.mrf.mxu0
        %v4774 = vadd.f32 0.0, %v4773
        %4775 = vmatmul.f32.gmra.mxu0 %v4661
        %v4776 = vpop.f32.mrf.mxu0
        %v4777 = vadd.f32 0.0, %v4776
        %4778 = vmatmul.f32.gmra.mxu0 %v4664
        %v4779 = vpop.f32.mrf.mxu0
        %v4780 = vadd.f32 0.0, %v4779
        %4781 = vmatmul.f32.gmra.mxu0 %v4667
        %v4782 = vpop.f32.mrf.mxu0
        %v4783 = vadd.f32 0.0, %v4782
        %4784 = vmatmul.f32.gmra.mxu0 %v4670
        %v4785 = vpop.f32.mrf.mxu0
        %v4786 = vadd.f32 0.0, %v4785
        %4787 = vmatmul.f32.gmra.mxu0 %v4673
        %v4788 = vpop.f32.mrf.mxu0
        %v4789 = vadd.f32 0.0, %v4788
        %4790 = vmatmul.f32.gmra.mxu0 %v4676
        %v4791 = vpop.f32.mrf.mxu0
        %v4792 = vadd.f32 0.0, %v4791
        %4793 = vmatmul.f32.gmra.mxu0 %v4679
        %v4794 = vpop.f32.mrf.mxu0
        %v4795 = vadd.f32 0.0, %v4794
        %4796 = vmatmul.f32.gmra.mxu0 %v4682
        %v4797 = vpop.f32.mrf.mxu0
        %v4798 = vadd.f32 0.0, %v4797
        %4799 = vmatmul.f32.gmra.mxu0 %v4685
        %v4800 = vpop.f32.mrf.mxu0
        %v4801 = vadd.f32 0.0, %v4800
        %4802 = vmatmul.f32.gmra.mxu0 %v4688
        %v4803 = vpop.f32.mrf.mxu0
        %v4804 = vadd.f32 0.0, %v4803
        %4805 = vmatmul.f32.gmra.mxu0 %v4691
        %v4806 = vpop.f32.mrf.mxu0
        %v4807 = vadd.f32 0.0, %v4806
        %4808 = vmatmul.f32.gmra.mxu0 %v4694
        %v4809 = vpop.f32.mrf.mxu0
        %v4810 = vadd.f32 0.0, %v4809
        %4811 = vmatmul.f32.gmra.mxu0 %v4697
        %v4812 = vpop.f32.mrf.mxu0
        %v4813 = vadd.f32 0.0, %v4812
        %4814 = vmatmul.f32.gmra.mxu0 %v4700
        %v4815 = vpop.f32.mrf.mxu0
        %v4816 = vadd.f32 0.0, %v4815
        %4817 = vmatmul.f32.gmra.mxu0 %v4703
        %v4818 = vpop.f32.mrf.mxu0
        %v4819 = vadd.f32 0.0, %v4818
        %4820 = vmatmul.f32.gmra.mxu0 %v4706
        %v4821 = vpop.f32.mrf.mxu0
        %v4822 = vadd.f32 0.0, %v4821
        %4823 = vmatmul.f32.gmra.mxu0 %v4709
        %v4824 = vpop.f32.mrf.mxu0
        %v4825 = vadd.f32 0.0, %v4824
        %4826 = vmatmul.f32.gmra.mxu0 %v4712
        %v4827 = vpop.f32.mrf.mxu0
        %v4828 = vadd.f32 0.0, %v4827
        %4829 = vmatmul.f32.gmra.mxu0 %v4715
        %v4830 = vpop.f32.mrf.mxu0
        %v4831 = vadd.f32 0.0, %v4830
        %4832 = vmatmul.f32.gmra.mxu0 %v4718
        %v4833 = vpop.f32.mrf.mxu0
        %v4834 = vadd.f32 0.0, %v4833
        %4835 = vmatmul.f32.gmra.mxu0 %v4721
        %v4836 = vpop.f32.mrf.mxu0
        %v4837 = vadd.f32 0.0, %v4836
        %4838 = vmatmul.f32.gmra.mxu0 %v4724
        %v4839 = vpop.f32.mrf.mxu0
        %v4840 = vadd.f32 0.0, %v4839
        %4841 = vmatmul.f32.gmra.mxu0 %v4727
        %v4842 = vpop.f32.mrf.mxu0
        %v4843 = vadd.f32 0.0, %v4842
        %4844 = vmatmul.f32.gmra.mxu0 %v4730
        %v4845 = vpop.f32.mrf.mxu0
        %v4846 = vadd.f32 0.0, %v4845
        %4847 = vmatmul.f32.gmra.mxu0 %v4733
        %v4848 = vpop.f32.mrf.mxu0
        %v4849 = vadd.f32 0.0, %v4848
        %4850 = vmatmul.f32.gmra.mxu0 %v4736
        %v4851 = vpop.f32.mrf.mxu0
        %v4852 = vadd.f32 0.0, %v4851
        %4853 = vmatmul.f32.gmra.mxu0 %v4739
        %v4854 = vpop.f32.mrf.mxu0
        %v4855 = vadd.f32 0.0, %v4854
        %4856 = vdwg.mxu0
        %v4857 = vadd.f32 %v4580, %v4762
        %v4858 = vadd.f32 %v4581, %v4765
        %v4859 = vadd.f32 %v4582, %v4768
        %v4860 = vadd.f32 %v4583, %v4771
        %v4861 = vadd.f32 %v4584, %v4774
        %v4862 = vadd.f32 %v4585, %v4777
        %v4863 = vadd.f32 %v4586, %v4780
        %v4864 = vadd.f32 %v4587, %v4783
        %v4865 = vadd.f32 %v4588, %v4786
        %v4866 = vadd.f32 %v4589, %v4789
        %v4867 = vadd.f32 %v4590, %v4792
        %v4868 = vadd.f32 %v4591, %v4795
        %v4869 = vadd.f32 %v4592, %v4798
        %v4870 = vadd.f32 %v4593, %v4801
        %v4871 = vadd.f32 %v4594, %v4804
        %v4872 = vadd.f32 %v4595, %v4807
        %v4873 = vadd.f32 %v4596, %v4810
        %v4874 = vadd.f32 %v4597, %v4813
        %v4875 = vadd.f32 %v4598, %v4816
        %v4876 = vadd.f32 %v4599, %v4819
        %v4877 = vadd.f32 %v4600, %v4822
        %v4878 = vadd.f32 %v4601, %v4825
        %v4879 = vadd.f32 %v4602, %v4828
        %v4880 = vadd.f32 %v4603, %v4831
        %v4881 = vadd.f32 %v4604, %v4834
        %v4882 = vadd.f32 %v4605, %v4837
        %v4883 = vadd.f32 %v4606, %v4840
        %v4884 = vadd.f32 %v4607, %v4843
        %v4885 = vadd.f32 %v4608, %v4846
        %v4886 = vadd.f32 %v4609, %v4849
        %v4887 = vadd.f32 %v4610, %v4852
        %v4888 = vadd.f32 %v4611, %v4855
        %v4889 = vld [vmem:[%s3535 + $0x2] sm:$0xff]
        %v4890 = vld [vmem:[%s3535 + $0xa] sm:$0xff]
        %v4891 = vld [vmem:[%s3535 + $0x1a] sm:$0xff]
        %v4892 = vld [vmem:[%s3535 + $0x22] sm:$0xff]
        %v4893 = vld [vmem:[%s3535 + $0x32] sm:$0xff]
        %v4894 = vld [vmem:[%s3535 + $0x3a] sm:$0xff]
        %v4895 = vld [vmem:[%s3535 + $0x4a] sm:$0xff]
        %v4896 = vld [vmem:[%s3535 + $0x52] sm:$0xff]
        %v4897 = vld [vmem:[%s3535 + $0x62] sm:$0xff]
        %v4898 = vld [vmem:[%s3535 + $0x6a] sm:$0xff]
        %v4899 = vld [vmem:[%s3535 + $0x7a] sm:$0xff]
        %v4900 = vld [vmem:[%s3535 + $0x82] sm:$0xff]
        %v4901 = vld [vmem:[%s3535 + $0x92] sm:$0xff]
        %v4902 = vld [vmem:[%s3535 + $0x9a] sm:$0xff]
        %v4903 = vld [vmem:[%s3535 + $0xaa] sm:$0xff]
        %v4904 = vld [vmem:[%s3535 + $0xb2] sm:$0xff]
        %v4905 = vld [vmem:[%s3535 + $0xc2] sm:$0xff]
        %v4906 = vld [vmem:[%s3535 + $0xca] sm:$0xff]
        %v4907 = vld [vmem:[%s3535 + $0xda] sm:$0xff]
        %v4908 = vld [vmem:[%s3535 + $0xe2] sm:$0xff]
        %v4909 = vld [vmem:[%s3535 + $0xf2] sm:$0xff]
        %v4910 = vld [vmem:[%s3535 + $0xfa] sm:$0xff]
        %v4911 = vld [vmem:[%s3535 + $0x10a] sm:$0xff]
        %v4912 = vld [vmem:[%s3535 + $0x112] sm:$0xff]
        %v4913 = vld [vmem:[%s3535 + $0x122] sm:$0xff]
        %v4914 = vld [vmem:[%s3535 + $0x12a] sm:$0xff]
        %v4915 = vld [vmem:[%s3535 + $0x13a] sm:$0xff]
        %v4916 = vld [vmem:[%s3535 + $0x142] sm:$0xff]
        %v4917 = vld [vmem:[%s3535 + $0x152] sm:$0xff]
        %v4918 = vld [vmem:[%s3535 + $0x15a] sm:$0xff]
        %v4919 = vld [vmem:[%s3535 + $0x16a] sm:$0xff]
        %v4920 = vld [vmem:[%s3535 + $0x172] sm:$0xff]
        %v4921 = vld [vmem:[%s5 + $0x14] sm:$0xf]
        %v4923 = vsel %vm422, %v4889, 0
        %v4926 = vsel %vm422, %v4890, 0
        %v4929 = vsel %vm422, %v4891, 0
        %v4932 = vsel %vm422, %v4892, 0
        %v4935 = vsel %vm422, %v4893, 0
        %v4938 = vsel %vm422, %v4894, 0
        %v4941 = vsel %vm422, %v4895, 0
        %v4944 = vsel %vm422, %v4896, 0
        %v4947 = vsel %vm422, %v4897, 0
        %v4950 = vsel %vm422, %v4898, 0
        %v4953 = vsel %vm422, %v4899, 0
        %v4956 = vsel %vm422, %v4900, 0
        %v4959 = vsel %vm422, %v4901, 0
        %v4962 = vsel %vm422, %v4902, 0
        %v4965 = vsel %vm422, %v4903, 0
        %v4968 = vsel %vm422, %v4904, 0
        %v4971 = vsel %vm422, %v4905, 0
        %v4974 = vsel %vm422, %v4906, 0
        %v4977 = vsel %vm422, %v4907, 0
        %v4980 = vsel %vm422, %v4908, 0
        %v4983 = vsel %vm422, %v4909, 0
        %v4986 = vsel %vm422, %v4910, 0
        %v4989 = vsel %vm422, %v4911, 0
        %v4992 = vsel %vm422, %v4912, 0
        %v4995 = vsel %vm422, %v4913, 0
        %v4998 = vsel %vm422, %v4914, 0
        %v5001 = vsel %vm422, %v4915, 0
        %v5004 = vsel %vm422, %v4916, 0
        %v5007 = vsel %vm422, %v4917, 0
        %v5010 = vsel %vm422, %v4918, 0
        %v5013 = vsel %vm422, %v4919, 0
        %v5016 = vsel %vm422, %v4920, 0
        %v5019 = vsel %vm519, %v4921, 0
        %5021 = vmatpush.msra.mxu0 0.0
        %5022 = vmatpush.msra.mxu0 0.0
        %5023 = vmatpush.msra.mxu0 0.0
        %5024 = vmatpush.msra.mxu0 0.0
        %5025 = vmatpush.msra.mxu0 0.0
        %5026 = vmatpush.msra.mxu0 0.0
        %5027 = vmatpush.msra.mxu0 0.0
        %5028 = vmatpush.msra.mxu0 0.0
        %5029 = vmatpush.msra.mxu0 0.0
        %5030 = vmatpush.msra.mxu0 0.0
        %5031 = vmatpush.msra.mxu0 0.0
        %5032 = vmatpush.msra.mxu0 0.0
        %5033 = vmatpush.msra.mxu0 0.0
        %5034 = vmatpush.msra.mxu0 0.0
        %5035 = vmatpush.msra.mxu0 0.0
        %5036 = vmatpush.msra.mxu0 %v5019
        %5037 = vmatmul.f32.gmra.mxu0 %v4923
        %v5038 = vpop.f32.mrf.mxu0
        %v5039 = vadd.f32 0.0, %v5038
        %5040 = vmatmul.f32.gmra.mxu0 %v4926
        %v5041 = vpop.f32.mrf.mxu0
        %v5042 = vadd.f32 0.0, %v5041
        %5043 = vmatmul.f32.gmra.mxu0 %v4929
        %v5044 = vpop.f32.mrf.mxu0
        %v5045 = vadd.f32 0.0, %v5044
        %5046 = vmatmul.f32.gmra.mxu0 %v4932
        %v5047 = vpop.f32.mrf.mxu0
        %v5048 = vadd.f32 0.0, %v5047
        %5049 = vmatmul.f32.gmra.mxu0 %v4935
        %v5050 = vpop.f32.mrf.mxu0
        %v5051 = vadd.f32 0.0, %v5050
        %5052 = vmatmul.f32.gmra.mxu0 %v4938
        %v5053 = vpop.f32.mrf.mxu0
        %v5054 = vadd.f32 0.0, %v5053
        %5055 = vmatmul.f32.gmra.mxu0 %v4941
        %v5056 = vpop.f32.mrf.mxu0
        %v5057 = vadd.f32 0.0, %v5056
        %5058 = vmatmul.f32.gmra.mxu0 %v4944
        %v5059 = vpop.f32.mrf.mxu0
        %v5060 = vadd.f32 0.0, %v5059
        %5061 = vmatmul.f32.gmra.mxu0 %v4947
        %v5062 = vpop.f32.mrf.mxu0
        %v5063 = vadd.f32 0.0, %v5062
        %5064 = vmatmul.f32.gmra.mxu0 %v4950
        %v5065 = vpop.f32.mrf.mxu0
        %v5066 = vadd.f32 0.0, %v5065
        %5067 = vmatmul.f32.gmra.mxu0 %v4953
        %v5068 = vpop.f32.mrf.mxu0
        %v5069 = vadd.f32 0.0, %v5068
        %5070 = vmatmul.f32.gmra.mxu0 %v4956
        %v5071 = vpop.f32.mrf.mxu0
        %v5072 = vadd.f32 0.0, %v5071
        %5073 = vmatmul.f32.gmra.mxu0 %v4959
        %v5074 = vpop.f32.mrf.mxu0
        %v5075 = vadd.f32 0.0, %v5074
        %5076 = vmatmul.f32.gmra.mxu0 %v4962
        %v5077 = vpop.f32.mrf.mxu0
        %v5078 = vadd.f32 0.0, %v5077
        %5079 = vmatmul.f32.gmra.mxu0 %v4965
        %v5080 = vpop.f32.mrf.mxu0
        %v5081 = vadd.f32 0.0, %v5080
        %5082 = vmatmul.f32.gmra.mxu0 %v4968
        %v5083 = vpop.f32.mrf.mxu0
        %v5084 = vadd.f32 0.0, %v5083
        %5085 = vmatmul.f32.gmra.mxu0 %v4971
        %v5086 = vpop.f32.mrf.mxu0
        %v5087 = vadd.f32 0.0, %v5086
        %5088 = vmatmul.f32.gmra.mxu0 %v4974
        %v5089 = vpop.f32.mrf.mxu0
        %v5090 = vadd.f32 0.0, %v5089
        %5091 = vmatmul.f32.gmra.mxu0 %v4977
        %v5092 = vpop.f32.mrf.mxu0
        %v5093 = vadd.f32 0.0, %v5092
        %5094 = vmatmul.f32.gmra.mxu0 %v4980
        %v5095 = vpop.f32.mrf.mxu0
        %v5096 = vadd.f32 0.0, %v5095
        %5097 = vmatmul.f32.gmra.mxu0 %v4983
        %v5098 = vpop.f32.mrf.mxu0
        %v5099 = vadd.f32 0.0, %v5098
        %5100 = vmatmul.f32.gmra.mxu0 %v4986
        %v5101 = vpop.f32.mrf.mxu0
        %v5102 = vadd.f32 0.0, %v5101
        %5103 = vmatmul.f32.gmra.mxu0 %v4989
        %v5104 = vpop.f32.mrf.mxu0
        %v5105 = vadd.f32 0.0, %v5104
        %5106 = vmatmul.f32.gmra.mxu0 %v4992
        %v5107 = vpop.f32.mrf.mxu0
        %v5108 = vadd.f32 0.0, %v5107
        %5109 = vmatmul.f32.gmra.mxu0 %v4995
        %v5110 = vpop.f32.mrf.mxu0
        %v5111 = vadd.f32 0.0, %v5110
        %5112 = vmatmul.f32.gmra.mxu0 %v4998
        %v5113 = vpop.f32.mrf.mxu0
        %v5114 = vadd.f32 0.0, %v5113
        %5115 = vmatmul.f32.gmra.mxu0 %v5001
        %v5116 = vpop.f32.mrf.mxu0
        %v5117 = vadd.f32 0.0, %v5116
        %5118 = vmatmul.f32.gmra.mxu0 %v5004
        %v5119 = vpop.f32.mrf.mxu0
        %v5120 = vadd.f32 0.0, %v5119
        %5121 = vmatmul.f32.gmra.mxu0 %v5007
        %v5122 = vpop.f32.mrf.mxu0
        %v5123 = vadd.f32 0.0, %v5122
        %5124 = vmatmul.f32.gmra.mxu0 %v5010
        %v5125 = vpop.f32.mrf.mxu0
        %v5126 = vadd.f32 0.0, %v5125
        %5127 = vmatmul.f32.gmra.mxu0 %v5013
        %v5128 = vpop.f32.mrf.mxu0
        %v5129 = vadd.f32 0.0, %v5128
        %5130 = vmatmul.f32.gmra.mxu0 %v5016
        %v5131 = vpop.f32.mrf.mxu0
        %v5132 = vadd.f32 0.0, %v5131
        %5133 = vdwg.mxu0
        %v5134 = vadd.f32 %v4857, %v5039
        %v5135 = vadd.f32 %v4858, %v5042
        %v5136 = vadd.f32 %v4859, %v5045
        %v5137 = vadd.f32 %v4860, %v5048
        %v5138 = vadd.f32 %v4861, %v5051
        %v5139 = vadd.f32 %v4862, %v5054
        %v5140 = vadd.f32 %v4863, %v5057
        %v5141 = vadd.f32 %v4864, %v5060
        %v5142 = vadd.f32 %v4865, %v5063
        %v5143 = vadd.f32 %v4866, %v5066
        %v5144 = vadd.f32 %v4867, %v5069
        %v5145 = vadd.f32 %v4868, %v5072
        %v5146 = vadd.f32 %v4869, %v5075
        %v5147 = vadd.f32 %v4870, %v5078
        %v5148 = vadd.f32 %v4871, %v5081
        %v5149 = vadd.f32 %v4872, %v5084
        %v5150 = vadd.f32 %v4873, %v5087
        %v5151 = vadd.f32 %v4874, %v5090
        %v5152 = vadd.f32 %v4875, %v5093
        %v5153 = vadd.f32 %v4876, %v5096
        %v5154 = vadd.f32 %v4877, %v5099
        %v5155 = vadd.f32 %v4878, %v5102
        %v5156 = vadd.f32 %v4879, %v5105
        %v5157 = vadd.f32 %v4880, %v5108
        %v5158 = vadd.f32 %v4881, %v5111
        %v5159 = vadd.f32 %v4882, %v5114
        %v5160 = vadd.f32 %v4883, %v5117
        %v5161 = vadd.f32 %v4884, %v5120
        %v5162 = vadd.f32 %v4885, %v5123
        %v5163 = vadd.f32 %v4886, %v5126
        %v5164 = vadd.f32 %v4887, %v5129
        %v5165 = vadd.f32 %v4888, %v5132
        %s5166 = scalar_lea.vmem [#allocation4], 48
        %v5167 = vld [vmem:[%s5166] sm:$0xff]
        %v5168 = vld [vmem:[%s5166 + $0x8] sm:$0xff]
        %v5169 = vld [vmem:[%s5166 + $0x18] sm:$0xff]
        %v5170 = vld [vmem:[%s5166 + $0x20] sm:$0xff]
        %v5171 = vld [vmem:[%s5166 + $0x30] sm:$0xff]
        %v5172 = vld [vmem:[%s5166 + $0x38] sm:$0xff]
        %v5173 = vld [vmem:[%s5166 + $0x48] sm:$0xff]
        %v5174 = vld [vmem:[%s5166 + $0x50] sm:$0xff]
        %v5175 = vld [vmem:[%s5166 + $0x60] sm:$0xff]
        %v5176 = vld [vmem:[%s5166 + $0x68] sm:$0xff]
        %v5177 = vld [vmem:[%s5166 + $0x78] sm:$0xff]
        %v5178 = vld [vmem:[%s5166 + $0x80] sm:$0xff]
        %v5179 = vld [vmem:[%s5166 + $0x90] sm:$0xff]
        %v5180 = vld [vmem:[%s5166 + $0x98] sm:$0xff]
        %v5181 = vld [vmem:[%s5166 + $0xa8] sm:$0xff]
        %v5182 = vld [vmem:[%s5166 + $0xb0] sm:$0xff]
        %v5183 = vld [vmem:[%s5166 + $0xc0] sm:$0xff]
        %v5184 = vld [vmem:[%s5166 + $0xc8] sm:$0xff]
        %v5185 = vld [vmem:[%s5166 + $0xd8] sm:$0xff]
        %v5186 = vld [vmem:[%s5166 + $0xe0] sm:$0xff]
        %v5187 = vld [vmem:[%s5166 + $0xf0] sm:$0xff]
        %v5188 = vld [vmem:[%s5166 + $0xf8] sm:$0xff]
        %v5189 = vld [vmem:[%s5166 + $0x108] sm:$0xff]
        %v5190 = vld [vmem:[%s5166 + $0x110] sm:$0xff]
        %v5191 = vld [vmem:[%s5166 + $0x120] sm:$0xff]
        %v5192 = vld [vmem:[%s5166 + $0x128] sm:$0xff]
        %v5193 = vld [vmem:[%s5166 + $0x138] sm:$0xff]
        %v5194 = vld [vmem:[%s5166 + $0x140] sm:$0xff]
        %v5195 = vld [vmem:[%s5166 + $0x150] sm:$0xff]
        %v5196 = vld [vmem:[%s5166 + $0x158] sm:$0xff]
        %v5197 = vld [vmem:[%s5166 + $0x168] sm:$0xff]
        %v5198 = vld [vmem:[%s5166 + $0x170] sm:$0xff]
        %v5199 = vld [vmem:[%s5 + $0x18] sm:$0xf]
        %v5201 = vsel %vm422, %v5167, 0
        %v5204 = vsel %vm422, %v5168, 0
        %v5207 = vsel %vm422, %v5169, 0
        %v5210 = vsel %vm422, %v5170, 0
        %v5213 = vsel %vm422, %v5171, 0
        %v5216 = vsel %vm422, %v5172, 0
        %v5219 = vsel %vm422, %v5173, 0
        %v5222 = vsel %vm422, %v5174, 0
        %v5225 = vsel %vm422, %v5175, 0
        %v5228 = vsel %vm422, %v5176, 0
        %v5231 = vsel %vm422, %v5177, 0
        %v5234 = vsel %vm422, %v5178, 0
        %v5237 = vsel %vm422, %v5179, 0
        %v5240 = vsel %vm422, %v5180, 0
        %v5243 = vsel %vm422, %v5181, 0
        %v5246 = vsel %vm422, %v5182, 0
        %v5249 = vsel %vm422, %v5183, 0
        %v5252 = vsel %vm422, %v5184, 0
        %v5255 = vsel %vm422, %v5185, 0
        %v5258 = vsel %vm422, %v5186, 0
        %v5261 = vsel %vm422, %v5187, 0
        %v5264 = vsel %vm422, %v5188, 0
        %v5267 = vsel %vm422, %v5189, 0
        %v5270 = vsel %vm422, %v5190, 0
        %v5273 = vsel %vm422, %v5191, 0
        %v5276 = vsel %vm422, %v5192, 0
        %v5279 = vsel %vm422, %v5193, 0
        %v5282 = vsel %vm422, %v5194, 0
        %v5285 = vsel %vm422, %v5195, 0
        %v5288 = vsel %vm422, %v5196, 0
        %v5291 = vsel %vm422, %v5197, 0
        %v5294 = vsel %vm422, %v5198, 0
        %v5297 = vsel %vm519, %v5199, 0
        %5299 = vmatpush.msra.mxu0 0.0
        %5300 = vmatpush.msra.mxu0 0.0
        %5301 = vmatpush.msra.mxu0 0.0
        %5302 = vmatpush.msra.mxu0 0.0
        %5303 = vmatpush.msra.mxu0 0.0
        %5304 = vmatpush.msra.mxu0 0.0
        %5305 = vmatpush.msra.mxu0 0.0
        %5306 = vmatpush.msra.mxu0 0.0
        %5307 = vmatpush.msra.mxu0 0.0
        %5308 = vmatpush.msra.mxu0 0.0
        %5309 = vmatpush.msra.mxu0 0.0
        %5310 = vmatpush.msra.mxu0 0.0
        %5311 = vmatpush.msra.mxu0 0.0
        %5312 = vmatpush.msra.mxu0 0.0
        %5313 = vmatpush.msra.mxu0 0.0
        %5314 = vmatpush.msra.mxu0 %v5297
        %5315 = vmatmul.f32.gmra.mxu0 %v5201
        %v5316 = vpop.f32.mrf.mxu0
        %v5317 = vadd.f32 0.0, %v5316
        %5318 = vmatmul.f32.gmra.mxu0 %v5204
        %v5319 = vpop.f32.mrf.mxu0
        %v5320 = vadd.f32 0.0, %v5319
        %5321 = vmatmul.f32.gmra.mxu0 %v5207
        %v5322 = vpop.f32.mrf.mxu0
        %v5323 = vadd.f32 0.0, %v5322
        %5324 = vmatmul.f32.gmra.mxu0 %v5210
        %v5325 = vpop.f32.mrf.mxu0
        %v5326 = vadd.f32 0.0, %v5325
        %5327 = vmatmul.f32.gmra.mxu0 %v5213
        %v5328 = vpop.f32.mrf.mxu0
        %v5329 = vadd.f32 0.0, %v5328
        %5330 = vmatmul.f32.gmra.mxu0 %v5216
        %v5331 = vpop.f32.mrf.mxu0
        %v5332 = vadd.f32 0.0, %v5331
        %5333 = vmatmul.f32.gmra.mxu0 %v5219
        %v5334 = vpop.f32.mrf.mxu0
        %v5335 = vadd.f32 0.0, %v5334
        %5336 = vmatmul.f32.gmra.mxu0 %v5222
        %v5337 = vpop.f32.mrf.mxu0
        %v5338 = vadd.f32 0.0, %v5337
        %5339 = vmatmul.f32.gmra.mxu0 %v5225
        %v5340 = vpop.f32.mrf.mxu0
        %v5341 = vadd.f32 0.0, %v5340
        %5342 = vmatmul.f32.gmra.mxu0 %v5228
        %v5343 = vpop.f32.mrf.mxu0
        %v5344 = vadd.f32 0.0, %v5343
        %5345 = vmatmul.f32.gmra.mxu0 %v5231
        %v5346 = vpop.f32.mrf.mxu0
        %v5347 = vadd.f32 0.0, %v5346
        %5348 = vmatmul.f32.gmra.mxu0 %v5234
        %v5349 = vpop.f32.mrf.mxu0
        %v5350 = vadd.f32 0.0, %v5349
        %5351 = vmatmul.f32.gmra.mxu0 %v5237
        %v5352 = vpop.f32.mrf.mxu0
        %v5353 = vadd.f32 0.0, %v5352
        %5354 = vmatmul.f32.gmra.mxu0 %v5240
        %v5355 = vpop.f32.mrf.mxu0
        %v5356 = vadd.f32 0.0, %v5355
        %5357 = vmatmul.f32.gmra.mxu0 %v5243
        %v5358 = vpop.f32.mrf.mxu0
        %v5359 = vadd.f32 0.0, %v5358
        %5360 = vmatmul.f32.gmra.mxu0 %v5246
        %v5361 = vpop.f32.mrf.mxu0
        %v5362 = vadd.f32 0.0, %v5361
        %5363 = vmatmul.f32.gmra.mxu0 %v5249
        %v5364 = vpop.f32.mrf.mxu0
        %v5365 = vadd.f32 0.0, %v5364
        %5366 = vmatmul.f32.gmra.mxu0 %v5252
        %v5367 = vpop.f32.mrf.mxu0
        %v5368 = vadd.f32 0.0, %v5367
        %5369 = vmatmul.f32.gmra.mxu0 %v5255
        %v5370 = vpop.f32.mrf.mxu0
        %v5371 = vadd.f32 0.0, %v5370
        %5372 = vmatmul.f32.gmra.mxu0 %v5258
        %v5373 = vpop.f32.mrf.mxu0
        %v5374 = vadd.f32 0.0, %v5373
        %5375 = vmatmul.f32.gmra.mxu0 %v5261
        %v5376 = vpop.f32.mrf.mxu0
        %v5377 = vadd.f32 0.0, %v5376
        %5378 = vmatmul.f32.gmra.mxu0 %v5264
        %v5379 = vpop.f32.mrf.mxu0
        %v5380 = vadd.f32 0.0, %v5379
        %5381 = vmatmul.f32.gmra.mxu0 %v5267
        %v5382 = vpop.f32.mrf.mxu0
        %v5383 = vadd.f32 0.0, %v5382
        %5384 = vmatmul.f32.gmra.mxu0 %v5270
        %v5385 = vpop.f32.mrf.mxu0
        %v5386 = vadd.f32 0.0, %v5385
        %5387 = vmatmul.f32.gmra.mxu0 %v5273
        %v5388 = vpop.f32.mrf.mxu0
        %v5389 = vadd.f32 0.0, %v5388
        %5390 = vmatmul.f32.gmra.mxu0 %v5276
        %v5391 = vpop.f32.mrf.mxu0
        %v5392 = vadd.f32 0.0, %v5391
        %5393 = vmatmul.f32.gmra.mxu0 %v5279
        %v5394 = vpop.f32.mrf.mxu0
        %v5395 = vadd.f32 0.0, %v5394
        %5396 = vmatmul.f32.gmra.mxu0 %v5282
        %v5397 = vpop.f32.mrf.mxu0
        %v5398 = vadd.f32 0.0, %v5397
        %5399 = vmatmul.f32.gmra.mxu0 %v5285
        %v5400 = vpop.f32.mrf.mxu0
        %v5401 = vadd.f32 0.0, %v5400
        %5402 = vmatmul.f32.gmra.mxu0 %v5288
        %v5403 = vpop.f32.mrf.mxu0
        %v5404 = vadd.f32 0.0, %v5403
        %5405 = vmatmul.f32.gmra.mxu0 %v5291
        %v5406 = vpop.f32.mrf.mxu0
        %v5407 = vadd.f32 0.0, %v5406
        %5408 = vmatmul.f32.gmra.mxu0 %v5294
        %v5409 = vpop.f32.mrf.mxu0
        %v5410 = vadd.f32 0.0, %v5409
        %5411 = vdwg.mxu0
        %v5412 = vadd.f32 %v5134, %v5317
        %v5413 = vadd.f32 %v5135, %v5320
        %v5414 = vadd.f32 %v5136, %v5323
        %v5415 = vadd.f32 %v5137, %v5326
        %v5416 = vadd.f32 %v5138, %v5329
        %v5417 = vadd.f32 %v5139, %v5332
        %v5418 = vadd.f32 %v5140, %v5335
        %v5419 = vadd.f32 %v5141, %v5338
        %v5420 = vadd.f32 %v5142, %v5341
        %v5421 = vadd.f32 %v5143, %v5344
        %v5422 = vadd.f32 %v5144, %v5347
        %v5423 = vadd.f32 %v5145, %v5350
        %v5424 = vadd.f32 %v5146, %v5353
        %v5425 = vadd.f32 %v5147, %v5356
        %v5426 = vadd.f32 %v5148, %v5359
        %v5427 = vadd.f32 %v5149, %v5362
        %v5428 = vadd.f32 %v5150, %v5365
        %v5429 = vadd.f32 %v5151, %v5368
        %v5430 = vadd.f32 %v5152, %v5371
        %v5431 = vadd.f32 %v5153, %v5374
        %v5432 = vadd.f32 %v5154, %v5377
        %v5433 = vadd.f32 %v5155, %v5380
        %v5434 = vadd.f32 %v5156, %v5383
        %v5435 = vadd.f32 %v5157, %v5386
        %v5436 = vadd.f32 %v5158, %v5389
        %v5437 = vadd.f32 %v5159, %v5392
        %v5438 = vadd.f32 %v5160, %v5395
        %v5439 = vadd.f32 %v5161, %v5398
        %v5440 = vadd.f32 %v5162, %v5401
        %v5441 = vadd.f32 %v5163, %v5404
        %v5442 = vadd.f32 %v5164, %v5407
        %v5443 = vadd.f32 %v5165, %v5410
        %v5444 = vld [vmem:[%s5166 + $0x1] sm:$0xff]
        %v5445 = vld [vmem:[%s5166 + $0x9] sm:$0xff]
        %v5446 = vld [vmem:[%s5166 + $0x19] sm:$0xff]
        %v5447 = vld [vmem:[%s5166 + $0x21] sm:$0xff]
        %v5448 = vld [vmem:[%s5166 + $0x31] sm:$0xff]
        %v5449 = vld [vmem:[%s5166 + $0x39] sm:$0xff]
        %v5450 = vld [vmem:[%s5166 + $0x49] sm:$0xff]
        %v5451 = vld [vmem:[%s5166 + $0x51] sm:$0xff]
        %v5452 = vld [vmem:[%s5166 + $0x61] sm:$0xff]
        %v5453 = vld [vmem:[%s5166 + $0x69] sm:$0xff]
        %v5454 = vld [vmem:[%s5166 + $0x79] sm:$0xff]
        %v5455 = vld [vmem:[%s5166 + $0x81] sm:$0xff]
        %v5456 = vld [vmem:[%s5166 + $0x91] sm:$0xff]
        %v5457 = vld [vmem:[%s5166 + $0x99] sm:$0xff]
        %v5458 = vld [vmem:[%s5166 + $0xa9] sm:$0xff]
        %v5459 = vld [vmem:[%s5166 + $0xb1] sm:$0xff]
        %v5460 = vld [vmem:[%s5166 + $0xc1] sm:$0xff]
        %v5461 = vld [vmem:[%s5166 + $0xc9] sm:$0xff]
        %v5462 = vld [vmem:[%s5166 + $0xd9] sm:$0xff]
        %v5463 = vld [vmem:[%s5166 + $0xe1] sm:$0xff]
        %v5464 = vld [vmem:[%s5166 + $0xf1] sm:$0xff]
        %v5465 = vld [vmem:[%s5166 + $0xf9] sm:$0xff]
        %v5466 = vld [vmem:[%s5166 + $0x109] sm:$0xff]
        %v5467 = vld [vmem:[%s5166 + $0x111] sm:$0xff]
        %v5468 = vld [vmem:[%s5166 + $0x121] sm:$0xff]
        %v5469 = vld [vmem:[%s5166 + $0x129] sm:$0xff]
        %v5470 = vld [vmem:[%s5166 + $0x139] sm:$0xff]
        %v5471 = vld [vmem:[%s5166 + $0x141] sm:$0xff]
        %v5472 = vld [vmem:[%s5166 + $0x151] sm:$0xff]
        %v5473 = vld [vmem:[%s5166 + $0x159] sm:$0xff]
        %v5474 = vld [vmem:[%s5166 + $0x169] sm:$0xff]
        %v5475 = vld [vmem:[%s5166 + $0x171] sm:$0xff]
        %v5476 = vld [vmem:[%s5 + $0x1c] sm:$0xf]
        %v5478 = vsel %vm422, %v5444, 0
        %v5481 = vsel %vm422, %v5445, 0
        %v5484 = vsel %vm422, %v5446, 0
        %v5487 = vsel %vm422, %v5447, 0
        %v5490 = vsel %vm422, %v5448, 0
        %v5493 = vsel %vm422, %v5449, 0
        %v5496 = vsel %vm422, %v5450, 0
        %v5499 = vsel %vm422, %v5451, 0
        %v5502 = vsel %vm422, %v5452, 0
        %v5505 = vsel %vm422, %v5453, 0
        %v5508 = vsel %vm422, %v5454, 0
        %v5511 = vsel %vm422, %v5455, 0
        %v5514 = vsel %vm422, %v5456, 0
        %v5517 = vsel %vm422, %v5457, 0
        %v5520 = vsel %vm422, %v5458, 0
        %v5523 = vsel %vm422, %v5459, 0
        %v5526 = vsel %vm422, %v5460, 0
        %v5529 = vsel %vm422, %v5461, 0
        %v5532 = vsel %vm422, %v5462, 0
        %v5535 = vsel %vm422, %v5463, 0
        %v5538 = vsel %vm422, %v5464, 0
        %v5541 = vsel %vm422, %v5465, 0
        %v5544 = vsel %vm422, %v5466, 0
        %v5547 = vsel %vm422, %v5467, 0
        %v5550 = vsel %vm422, %v5468, 0
        %v5553 = vsel %vm422, %v5469, 0
        %v5556 = vsel %vm422, %v5470, 0
        %v5559 = vsel %vm422, %v5471, 0
        %v5562 = vsel %vm422, %v5472, 0
        %v5565 = vsel %vm422, %v5473, 0
        %v5568 = vsel %vm422, %v5474, 0
        %v5571 = vsel %vm422, %v5475, 0
        %v5574 = vsel %vm519, %v5476, 0
        %5576 = vmatpush.msra.mxu0 0.0
        %5577 = vmatpush.msra.mxu0 0.0
        %5578 = vmatpush.msra.mxu0 0.0
        %5579 = vmatpush.msra.mxu0 0.0
        %5580 = vmatpush.msra.mxu0 0.0
        %5581 = vmatpush.msra.mxu0 0.0
        %5582 = vmatpush.msra.mxu0 0.0
        %5583 = vmatpush.msra.mxu0 0.0
        %5584 = vmatpush.msra.mxu0 0.0
        %5585 = vmatpush.msra.mxu0 0.0
        %5586 = vmatpush.msra.mxu0 0.0
        %5587 = vmatpush.msra.mxu0 0.0
        %5588 = vmatpush.msra.mxu0 0.0
        %5589 = vmatpush.msra.mxu0 0.0
        %5590 = vmatpush.msra.mxu0 0.0
        %5591 = vmatpush.msra.mxu0 %v5574
        %5592 = vmatmul.f32.gmra.mxu0 %v5478
        %v5593 = vpop.f32.mrf.mxu0
        %v5594 = vadd.f32 0.0, %v5593
        %5595 = vmatmul.f32.gmra.mxu0 %v5481
        %v5596 = vpop.f32.mrf.mxu0
        %v5597 = vadd.f32 0.0, %v5596
        %5598 = vmatmul.f32.gmra.mxu0 %v5484
        %v5599 = vpop.f32.mrf.mxu0
        %v5600 = vadd.f32 0.0, %v5599
        %5601 = vmatmul.f32.gmra.mxu0 %v5487
        %v5602 = vpop.f32.mrf.mxu0
        %v5603 = vadd.f32 0.0, %v5602
        %5604 = vmatmul.f32.gmra.mxu0 %v5490
        %v5605 = vpop.f32.mrf.mxu0
        %v5606 = vadd.f32 0.0, %v5605
        %5607 = vmatmul.f32.gmra.mxu0 %v5493
        %v5608 = vpop.f32.mrf.mxu0
        %v5609 = vadd.f32 0.0, %v5608
        %5610 = vmatmul.f32.gmra.mxu0 %v5496
        %v5611 = vpop.f32.mrf.mxu0
        %v5612 = vadd.f32 0.0, %v5611
        %5613 = vmatmul.f32.gmra.mxu0 %v5499
        %v5614 = vpop.f32.mrf.mxu0
        %v5615 = vadd.f32 0.0, %v5614
        %5616 = vmatmul.f32.gmra.mxu0 %v5502
        %v5617 = vpop.f32.mrf.mxu0
        %v5618 = vadd.f32 0.0, %v5617
        %5619 = vmatmul.f32.gmra.mxu0 %v5505
        %v5620 = vpop.f32.mrf.mxu0
        %v5621 = vadd.f32 0.0, %v5620
        %5622 = vmatmul.f32.gmra.mxu0 %v5508
        %v5623 = vpop.f32.mrf.mxu0
        %v5624 = vadd.f32 0.0, %v5623
        %5625 = vmatmul.f32.gmra.mxu0 %v5511
        %v5626 = vpop.f32.mrf.mxu0
        %v5627 = vadd.f32 0.0, %v5626
        %5628 = vmatmul.f32.gmra.mxu0 %v5514
        %v5629 = vpop.f32.mrf.mxu0
        %v5630 = vadd.f32 0.0, %v5629
        %5631 = vmatmul.f32.gmra.mxu0 %v5517
        %v5632 = vpop.f32.mrf.mxu0
        %v5633 = vadd.f32 0.0, %v5632
        %5634 = vmatmul.f32.gmra.mxu0 %v5520
        %v5635 = vpop.f32.mrf.mxu0
        %v5636 = vadd.f32 0.0, %v5635
        %5637 = vmatmul.f32.gmra.mxu0 %v5523
        %v5638 = vpop.f32.mrf.mxu0
        %v5639 = vadd.f32 0.0, %v5638
        %5640 = vmatmul.f32.gmra.mxu0 %v5526
        %v5641 = vpop.f32.mrf.mxu0
        %v5642 = vadd.f32 0.0, %v5641
        %5643 = vmatmul.f32.gmra.mxu0 %v5529
        %v5644 = vpop.f32.mrf.mxu0
        %v5645 = vadd.f32 0.0, %v5644
        %5646 = vmatmul.f32.gmra.mxu0 %v5532
        %v5647 = vpop.f32.mrf.mxu0
        %v5648 = vadd.f32 0.0, %v5647
        %5649 = vmatmul.f32.gmra.mxu0 %v5535
        %v5650 = vpop.f32.mrf.mxu0
        %v5651 = vadd.f32 0.0, %v5650
        %5652 = vmatmul.f32.gmra.mxu0 %v5538
        %v5653 = vpop.f32.mrf.mxu0
        %v5654 = vadd.f32 0.0, %v5653
        %5655 = vmatmul.f32.gmra.mxu0 %v5541
        %v5656 = vpop.f32.mrf.mxu0
        %v5657 = vadd.f32 0.0, %v5656
        %5658 = vmatmul.f32.gmra.mxu0 %v5544
        %v5659 = vpop.f32.mrf.mxu0
        %v5660 = vadd.f32 0.0, %v5659
        %5661 = vmatmul.f32.gmra.mxu0 %v5547
        %v5662 = vpop.f32.mrf.mxu0
        %v5663 = vadd.f32 0.0, %v5662
        %5664 = vmatmul.f32.gmra.mxu0 %v5550
        %v5665 = vpop.f32.mrf.mxu0
        %v5666 = vadd.f32 0.0, %v5665
        %5667 = vmatmul.f32.gmra.mxu0 %v5553
        %v5668 = vpop.f32.mrf.mxu0
        %v5669 = vadd.f32 0.0, %v5668
        %5670 = vmatmul.f32.gmra.mxu0 %v5556
        %v5671 = vpop.f32.mrf.mxu0
        %v5672 = vadd.f32 0.0, %v5671
        %5673 = vmatmul.f32.gmra.mxu0 %v5559
        %v5674 = vpop.f32.mrf.mxu0
        %v5675 = vadd.f32 0.0, %v5674
        %5676 = vmatmul.f32.gmra.mxu0 %v5562
        %v5677 = vpop.f32.mrf.mxu0
        %v5678 = vadd.f32 0.0, %v5677
        %5679 = vmatmul.f32.gmra.mxu0 %v5565
        %v5680 = vpop.f32.mrf.mxu0
        %v5681 = vadd.f32 0.0, %v5680
        %5682 = vmatmul.f32.gmra.mxu0 %v5568
        %v5683 = vpop.f32.mrf.mxu0
        %v5684 = vadd.f32 0.0, %v5683
        %5685 = vmatmul.f32.gmra.mxu0 %v5571
        %v5686 = vpop.f32.mrf.mxu0
        %v5687 = vadd.f32 0.0, %v5686
        %5688 = vdwg.mxu0
        %v5689 = vadd.f32 %v5412, %v5594
        %v5690 = vadd.f32 %v5413, %v5597
        %v5691 = vadd.f32 %v5414, %v5600
        %v5692 = vadd.f32 %v5415, %v5603
        %v5693 = vadd.f32 %v5416, %v5606
        %v5694 = vadd.f32 %v5417, %v5609
        %v5695 = vadd.f32 %v5418, %v5612
        %v5696 = vadd.f32 %v5419, %v5615
        %v5697 = vadd.f32 %v5420, %v5618
        %v5698 = vadd.f32 %v5421, %v5621
        %v5699 = vadd.f32 %v5422, %v5624
        %v5700 = vadd.f32 %v5423, %v5627
        %v5701 = vadd.f32 %v5424, %v5630
        %v5702 = vadd.f32 %v5425, %v5633
        %v5703 = vadd.f32 %v5426, %v5636
        %v5704 = vadd.f32 %v5427, %v5639
        %v5705 = vadd.f32 %v5428, %v5642
        %v5706 = vadd.f32 %v5429, %v5645
        %v5707 = vadd.f32 %v5430, %v5648
        %v5708 = vadd.f32 %v5431, %v5651
        %v5709 = vadd.f32 %v5432, %v5654
        %v5710 = vadd.f32 %v5433, %v5657
        %v5711 = vadd.f32 %v5434, %v5660
        %v5712 = vadd.f32 %v5435, %v5663
        %v5713 = vadd.f32 %v5436, %v5666
        %v5714 = vadd.f32 %v5437, %v5669
        %v5715 = vadd.f32 %v5438, %v5672
        %v5716 = vadd.f32 %v5439, %v5675
        %v5717 = vadd.f32 %v5440, %v5678
        %v5718 = vadd.f32 %v5441, %v5681
        %v5719 = vadd.f32 %v5442, %v5684
        %v5720 = vadd.f32 %v5443, %v5687
        %v5721 = vld [vmem:[%s5166 + $0x2] sm:$0xff]
        %v5722 = vld [vmem:[%s5166 + $0xa] sm:$0xff]
        %v5723 = vld [vmem:[%s5166 + $0x1a] sm:$0xff]
        %v5724 = vld [vmem:[%s5166 + $0x22] sm:$0xff]
        %v5725 = vld [vmem:[%s5166 + $0x32] sm:$0xff]
        %v5726 = vld [vmem:[%s5166 + $0x3a] sm:$0xff]
        %v5727 = vld [vmem:[%s5166 + $0x4a] sm:$0xff]
        %v5728 = vld [vmem:[%s5166 + $0x52] sm:$0xff]
        %v5729 = vld [vmem:[%s5166 + $0x62] sm:$0xff]
        %v5730 = vld [vmem:[%s5166 + $0x6a] sm:$0xff]
        %v5731 = vld [vmem:[%s5166 + $0x7a] sm:$0xff]
        %v5732 = vld [vmem:[%s5166 + $0x82] sm:$0xff]
        %v5733 = vld [vmem:[%s5166 + $0x92] sm:$0xff]
        %v5734 = vld [vmem:[%s5166 + $0x9a] sm:$0xff]
        %v5735 = vld [vmem:[%s5166 + $0xaa] sm:$0xff]
        %v5736 = vld [vmem:[%s5166 + $0xb2] sm:$0xff]
        %v5737 = vld [vmem:[%s5166 + $0xc2] sm:$0xff]
        %v5738 = vld [vmem:[%s5166 + $0xca] sm:$0xff]
        %v5739 = vld [vmem:[%s5166 + $0xda] sm:$0xff]
        %v5740 = vld [vmem:[%s5166 + $0xe2] sm:$0xff]
        %v5741 = vld [vmem:[%s5166 + $0xf2] sm:$0xff]
        %v5742 = vld [vmem:[%s5166 + $0xfa] sm:$0xff]
        %v5743 = vld [vmem:[%s5166 + $0x10a] sm:$0xff]
        %v5744 = vld [vmem:[%s5166 + $0x112] sm:$0xff]
        %v5745 = vld [vmem:[%s5166 + $0x122] sm:$0xff]
        %v5746 = vld [vmem:[%s5166 + $0x12a] sm:$0xff]
        %v5747 = vld [vmem:[%s5166 + $0x13a] sm:$0xff]
        %v5748 = vld [vmem:[%s5166 + $0x142] sm:$0xff]
        %v5749 = vld [vmem:[%s5166 + $0x152] sm:$0xff]
        %v5750 = vld [vmem:[%s5166 + $0x15a] sm:$0xff]
        %v5751 = vld [vmem:[%s5166 + $0x16a] sm:$0xff]
        %v5752 = vld [vmem:[%s5166 + $0x172] sm:$0xff]
        %v5753 = vld [vmem:[%s5 + $0x20] sm:$0xf]
        %v5755 = vsel %vm422, %v5721, 0
        %v5758 = vsel %vm422, %v5722, 0
        %v5761 = vsel %vm422, %v5723, 0
        %v5764 = vsel %vm422, %v5724, 0
        %v5767 = vsel %vm422, %v5725, 0
        %v5770 = vsel %vm422, %v5726, 0
        %v5773 = vsel %vm422, %v5727, 0
        %v5776 = vsel %vm422, %v5728, 0
        %v5779 = vsel %vm422, %v5729, 0
        %v5782 = vsel %vm422, %v5730, 0
        %v5785 = vsel %vm422, %v5731, 0
        %v5788 = vsel %vm422, %v5732, 0
        %v5791 = vsel %vm422, %v5733, 0
        %v5794 = vsel %vm422, %v5734, 0
        %v5797 = vsel %vm422, %v5735, 0
        %v5800 = vsel %vm422, %v5736, 0
        %v5803 = vsel %vm422, %v5737, 0
        %v5806 = vsel %vm422, %v5738, 0
        %v5809 = vsel %vm422, %v5739, 0
        %v5812 = vsel %vm422, %v5740, 0
        %v5815 = vsel %vm422, %v5741, 0
        %v5818 = vsel %vm422, %v5742, 0
        %v5821 = vsel %vm422, %v5743, 0
        %v5824 = vsel %vm422, %v5744, 0
        %v5827 = vsel %vm422, %v5745, 0
        %v5830 = vsel %vm422, %v5746, 0
        %v5833 = vsel %vm422, %v5747, 0
        %v5836 = vsel %vm422, %v5748, 0
        %v5839 = vsel %vm422, %v5749, 0
        %v5842 = vsel %vm422, %v5750, 0
        %v5845 = vsel %vm422, %v5751, 0
        %v5848 = vsel %vm422, %v5752, 0
        %v5851 = vsel %vm519, %v5753, 0
        %5853 = vmatpush.msra.mxu0 0.0
        %5854 = vmatpush.msra.mxu0 0.0
        %5855 = vmatpush.msra.mxu0 0.0
        %5856 = vmatpush.msra.mxu0 0.0
        %5857 = vmatpush.msra.mxu0 0.0
        %5858 = vmatpush.msra.mxu0 0.0
        %5859 = vmatpush.msra.mxu0 0.0
        %5860 = vmatpush.msra.mxu0 0.0
        %5861 = vmatpush.msra.mxu0 0.0
        %5862 = vmatpush.msra.mxu0 0.0
        %5863 = vmatpush.msra.mxu0 0.0
        %5864 = vmatpush.msra.mxu0 0.0
        %5865 = vmatpush.msra.mxu0 0.0
        %5866 = vmatpush.msra.mxu0 0.0
        %5867 = vmatpush.msra.mxu0 0.0
        %5868 = vmatpush.msra.mxu0 %v5851
        %5869 = vmatmul.f32.gmra.mxu0 %v5755
        %v5870 = vpop.f32.mrf.mxu0
        %v5871 = vadd.f32 0.0, %v5870
        %5872 = vmatmul.f32.gmra.mxu0 %v5758
        %v5873 = vpop.f32.mrf.mxu0
        %v5874 = vadd.f32 0.0, %v5873
        %5875 = vmatmul.f32.gmra.mxu0 %v5761
        %v5876 = vpop.f32.mrf.mxu0
        %v5877 = vadd.f32 0.0, %v5876
        %5878 = vmatmul.f32.gmra.mxu0 %v5764
        %v5879 = vpop.f32.mrf.mxu0
        %v5880 = vadd.f32 0.0, %v5879
        %5881 = vmatmul.f32.gmra.mxu0 %v5767
        %v5882 = vpop.f32.mrf.mxu0
        %v5883 = vadd.f32 0.0, %v5882
        %5884 = vmatmul.f32.gmra.mxu0 %v5770
        %v5885 = vpop.f32.mrf.mxu0
        %v5886 = vadd.f32 0.0, %v5885
        %5887 = vmatmul.f32.gmra.mxu0 %v5773
        %v5888 = vpop.f32.mrf.mxu0
        %v5889 = vadd.f32 0.0, %v5888
        %5890 = vmatmul.f32.gmra.mxu0 %v5776
        %v5891 = vpop.f32.mrf.mxu0
        %v5892 = vadd.f32 0.0, %v5891
        %5893 = vmatmul.f32.gmra.mxu0 %v5779
        %v5894 = vpop.f32.mrf.mxu0
        %v5895 = vadd.f32 0.0, %v5894
        %5896 = vmatmul.f32.gmra.mxu0 %v5782
        %v5897 = vpop.f32.mrf.mxu0
        %v5898 = vadd.f32 0.0, %v5897
        %5899 = vmatmul.f32.gmra.mxu0 %v5785
        %v5900 = vpop.f32.mrf.mxu0
        %v5901 = vadd.f32 0.0, %v5900
        %5902 = vmatmul.f32.gmra.mxu0 %v5788
        %v5903 = vpop.f32.mrf.mxu0
        %v5904 = vadd.f32 0.0, %v5903
        %5905 = vmatmul.f32.gmra.mxu0 %v5791
        %v5906 = vpop.f32.mrf.mxu0
        %v5907 = vadd.f32 0.0, %v5906
        %5908 = vmatmul.f32.gmra.mxu0 %v5794
        %v5909 = vpop.f32.mrf.mxu0
        %v5910 = vadd.f32 0.0, %v5909
        %5911 = vmatmul.f32.gmra.mxu0 %v5797
        %v5912 = vpop.f32.mrf.mxu0
        %v5913 = vadd.f32 0.0, %v5912
        %5914 = vmatmul.f32.gmra.mxu0 %v5800
        %v5915 = vpop.f32.mrf.mxu0
        %v5916 = vadd.f32 0.0, %v5915
        %5917 = vmatmul.f32.gmra.mxu0 %v5803
        %v5918 = vpop.f32.mrf.mxu0
        %v5919 = vadd.f32 0.0, %v5918
        %5920 = vmatmul.f32.gmra.mxu0 %v5806
        %v5921 = vpop.f32.mrf.mxu0
        %v5922 = vadd.f32 0.0, %v5921
        %5923 = vmatmul.f32.gmra.mxu0 %v5809
        %v5924 = vpop.f32.mrf.mxu0
        %v5925 = vadd.f32 0.0, %v5924
        %5926 = vmatmul.f32.gmra.mxu0 %v5812
        %v5927 = vpop.f32.mrf.mxu0
        %v5928 = vadd.f32 0.0, %v5927
        %5929 = vmatmul.f32.gmra.mxu0 %v5815
        %v5930 = vpop.f32.mrf.mxu0
        %v5931 = vadd.f32 0.0, %v5930
        %5932 = vmatmul.f32.gmra.mxu0 %v5818
        %v5933 = vpop.f32.mrf.mxu0
        %v5934 = vadd.f32 0.0, %v5933
        %5935 = vmatmul.f32.gmra.mxu0 %v5821
        %v5936 = vpop.f32.mrf.mxu0
        %v5937 = vadd.f32 0.0, %v5936
        %5938 = vmatmul.f32.gmra.mxu0 %v5824
        %v5939 = vpop.f32.mrf.mxu0
        %v5940 = vadd.f32 0.0, %v5939
        %5941 = vmatmul.f32.gmra.mxu0 %v5827
        %v5942 = vpop.f32.mrf.mxu0
        %v5943 = vadd.f32 0.0, %v5942
        %5944 = vmatmul.f32.gmra.mxu0 %v5830
        %v5945 = vpop.f32.mrf.mxu0
        %v5946 = vadd.f32 0.0, %v5945
        %5947 = vmatmul.f32.gmra.mxu0 %v5833
        %v5948 = vpop.f32.mrf.mxu0
        %v5949 = vadd.f32 0.0, %v5948
        %5950 = vmatmul.f32.gmra.mxu0 %v5836
        %v5951 = vpop.f32.mrf.mxu0
        %v5952 = vadd.f32 0.0, %v5951
        %5953 = vmatmul.f32.gmra.mxu0 %v5839
        %v5954 = vpop.f32.mrf.mxu0
        %v5955 = vadd.f32 0.0, %v5954
        %5956 = vmatmul.f32.gmra.mxu0 %v5842
        %v5957 = vpop.f32.mrf.mxu0
        %v5958 = vadd.f32 0.0, %v5957
        %5959 = vmatmul.f32.gmra.mxu0 %v5845
        %v5960 = vpop.f32.mrf.mxu0
        %v5961 = vadd.f32 0.0, %v5960
        %5962 = vmatmul.f32.gmra.mxu0 %v5848
        %v5963 = vpop.f32.mrf.mxu0
        %v5964 = vadd.f32 0.0, %v5963
        %5965 = vdwg.mxu0
        %v5966 = vadd.f32 %v5689, %v5871
        %v5967 = vadd.f32 %v5690, %v5874
        %v5968 = vadd.f32 %v5691, %v5877
        %v5969 = vadd.f32 %v5692, %v5880
        %v5970 = vadd.f32 %v5693, %v5883
        %v5971 = vadd.f32 %v5694, %v5886
        %v5972 = vadd.f32 %v5695, %v5889
        %v5973 = vadd.f32 %v5696, %v5892
        %v5974 = vadd.f32 %v5697, %v5895
        %v5975 = vadd.f32 %v5698, %v5898
        %v5976 = vadd.f32 %v5699, %v5901
        %v5977 = vadd.f32 %v5700, %v5904
        %v5978 = vadd.f32 %v5701, %v5907
        %v5979 = vadd.f32 %v5702, %v5910
        %v5980 = vadd.f32 %v5703, %v5913
        %v5981 = vadd.f32 %v5704, %v5916
        %v5982 = vadd.f32 %v5705, %v5919
        %v5983 = vadd.f32 %v5706, %v5922
        %v5984 = vadd.f32 %v5707, %v5925
        %v5985 = vadd.f32 %v5708, %v5928
        %v5986 = vadd.f32 %v5709, %v5931
        %v5987 = vadd.f32 %v5710, %v5934
        %v5988 = vadd.f32 %v5711, %v5937
        %v5989 = vadd.f32 %v5712, %v5940
        %v5990 = vadd.f32 %v5713, %v5943
        %v5991 = vadd.f32 %v5714, %v5946
        %v5992 = vadd.f32 %v5715, %v5949
        %v5993 = vadd.f32 %v5716, %v5952
        %v5994 = vadd.f32 %v5717, %v5955
        %v5995 = vadd.f32 %v5718, %v5958
        %v5996 = vadd.f32 %v5719, %v5961
        %v5997 = vadd.f32 %v5720, %v5964
        %v5998 = vld [vmem:[%s6] sm:$0x1]
        %v6000 = vperm.slane %v5998, 0
        %v6002 = vadd.f32 %v5966, %v6000
        %v6003 = vadd.f32 %v5967, %v6000
        %v6004 = vadd.f32 %v5968, %v6000
        %v6005 = vadd.f32 %v5969, %v6000
        %v6006 = vadd.f32 %v5970, %v6000
        %v6007 = vadd.f32 %v5971, %v6000
        %v6008 = vadd.f32 %v5972, %v6000
        %v6009 = vadd.f32 %v5973, %v6000
        %v6010 = vadd.f32 %v5974, %v6000
        %v6011 = vadd.f32 %v5975, %v6000
        %v6012 = vadd.f32 %v5976, %v6000
        %v6013 = vadd.f32 %v5977, %v6000
        %v6014 = vadd.f32 %v5978, %v6000
        %v6015 = vadd.f32 %v5979, %v6000
        %v6016 = vadd.f32 %v5980, %v6000
        %v6017 = vadd.f32 %v5981, %v6000
        %v6018 = vadd.f32 %v5982, %v6000
        %v6019 = vadd.f32 %v5983, %v6000
        %v6020 = vadd.f32 %v5984, %v6000
        %v6021 = vadd.f32 %v5985, %v6000
        %v6022 = vadd.f32 %v5986, %v6000
        %v6023 = vadd.f32 %v5987, %v6000
        %v6024 = vadd.f32 %v5988, %v6000
        %v6025 = vadd.f32 %v5989, %v6000
        %v6026 = vadd.f32 %v5990, %v6000
        %v6027 = vadd.f32 %v5991, %v6000
        %v6028 = vadd.f32 %v5992, %v6000
        %v6029 = vadd.f32 %v5993, %v6000
        %v6030 = vadd.f32 %v5994, %v6000
        %v6031 = vadd.f32 %v5995, %v6000
        %v6032 = vadd.f32 %v5996, %v6000
        %v6033 = vadd.f32 %v5997, %v6000
        %v6034 = vmax.f32 %v6002, 0.0
        %v6035 = vmax.f32 %v6003, 0.0
        %v6036 = vmax.f32 %v6004, 0.0
        %v6037 = vmax.f32 %v6005, 0.0
        %v6038 = vmax.f32 %v6006, 0.0
        %v6039 = vmax.f32 %v6007, 0.0
        %v6040 = vmax.f32 %v6008, 0.0
        %v6041 = vmax.f32 %v6009, 0.0
        %v6042 = vmax.f32 %v6010, 0.0
        %v6043 = vmax.f32 %v6011, 0.0
        %v6044 = vmax.f32 %v6012, 0.0
        %v6045 = vmax.f32 %v6013, 0.0
        %v6046 = vmax.f32 %v6014, 0.0
        %v6047 = vmax.f32 %v6015, 0.0
        %v6048 = vmax.f32 %v6016, 0.0
        %v6049 = vmax.f32 %v6017, 0.0
        %v6050 = vmax.f32 %v6018, 0.0
        %v6051 = vmax.f32 %v6019, 0.0
        %v6052 = vmax.f32 %v6020, 0.0
        %v6053 = vmax.f32 %v6021, 0.0
        %v6054 = vmax.f32 %v6022, 0.0
        %v6055 = vmax.f32 %v6023, 0.0
        %v6056 = vmax.f32 %v6024, 0.0
        %v6057 = vmax.f32 %v6025, 0.0
        %v6058 = vmax.f32 %v6026, 0.0
        %v6059 = vmax.f32 %v6027, 0.0
        %v6060 = vmax.f32 %v6028, 0.0
        %v6061 = vmax.f32 %v6029, 0.0
        %v6062 = vmax.f32 %v6030, 0.0
        %v6063 = vmax.f32 %v6031, 0.0
        %v6064 = vmax.f32 %v6032, 0.0
        %v6065 = vmax.f32 %v6033, 0.0
        %6066 = vst.msk [vmem:[#allocation5] sm:$0xff] %vm668, 0.0
        %6067 = vst.msk [vmem:[#allocation5 + $0x8] sm:$0xff] %vm668, 0.0
        %6068 = vst.msk [vmem:[#allocation5 + $0x10] sm:$0x3] %vm671, 0.0
        %6069 = vst.msk [vmem:[#allocation5 + $0x18] sm:$0xff] %vm668, 0.0
        %6070 = vst.msk [vmem:[#allocation5 + $0x20] sm:$0xff] %vm668, 0.0
        %6071 = vst.msk [vmem:[#allocation5 + $0x28] sm:$0x3] %vm671, 0.0
        %6072 = vst.msk [vmem:[#allocation5 + $0x30] sm:$0xff] %vm668, 0.0
        %6073 = vst.msk [vmem:[#allocation5 + $0x38] sm:$0xff] %vm668, 0.0
        %6074 = vst.msk [vmem:[#allocation5 + $0x40] sm:$0x3] %vm671, 0.0
        %6075 = vst.msk [vmem:[#allocation5 + $0x48] sm:$0xff] %vm668, 0.0
        %6076 = vst.msk [vmem:[#allocation5 + $0x50] sm:$0xff] %vm668, 0.0
        %6077 = vst.msk [vmem:[#allocation5 + $0x58] sm:$0x3] %vm671, 0.0
        %6078 = vst.msk [vmem:[#allocation5 + $0x60] sm:$0xff] %vm668, 0.0
        %6079 = vst.msk [vmem:[#allocation5 + $0x68] sm:$0xff] %vm668, 0.0
        %6080 = vst.msk [vmem:[#allocation5 + $0x70] sm:$0x3] %vm671, 0.0
        %6081 = vst.msk [vmem:[#allocation5 + $0x78] sm:$0xff] %vm668, 0.0
        %6082 = vst.msk [vmem:[#allocation5 + $0x80] sm:$0xff] %vm668, 0.0
        %6083 = vst.msk [vmem:[#allocation5 + $0x88] sm:$0x3] %vm671, 0.0
        %6084 = vst.msk [vmem:[#allocation5 + $0x90] sm:$0xff] %vm668, 0.0
        %6085 = vst.msk [vmem:[#allocation5 + $0x98] sm:$0xff] %vm668, 0.0
        %6086 = vst.msk [vmem:[#allocation5 + $0xa0] sm:$0x3] %vm671, 0.0
        %6087 = vst.msk [vmem:[#allocation5 + $0xa8] sm:$0xff] %vm668, 0.0
        %6088 = vst.msk [vmem:[#allocation5 + $0xb0] sm:$0xff] %vm668, 0.0
        %6089 = vst.msk [vmem:[#allocation5 + $0xb8] sm:$0x3] %vm671, 0.0
        %6090 = vst.msk [vmem:[#allocation5 + $0xc0] sm:$0xff] %vm668, 0.0
        %6091 = vst.msk [vmem:[#allocation5 + $0xc8] sm:$0xff] %vm668, 0.0
        %6092 = vst.msk [vmem:[#allocation5 + $0xd0] sm:$0x3] %vm671, 0.0
        %6093 = vst.msk [vmem:[#allocation5 + $0xd8] sm:$0xff] %vm668, 0.0
        %6094 = vst.msk [vmem:[#allocation5 + $0xe0] sm:$0xff] %vm668, 0.0
        %6095 = vst.msk [vmem:[#allocation5 + $0xe8] sm:$0x3] %vm671, 0.0
        %6096 = vst.msk [vmem:[#allocation5 + $0xf0] sm:$0xff] %vm668, 0.0
        %6097 = vst.msk [vmem:[#allocation5 + $0xf8] sm:$0xff] %vm668, 0.0
        %6098 = vst.msk [vmem:[#allocation5 + $0x100] sm:$0x3] %vm671, 0.0
        %6099 = vst.msk [vmem:[#allocation5 + $0x108] sm:$0xff] %vm668, 0.0
        %6100 = vst.msk [vmem:[#allocation5 + $0x110] sm:$0xff] %vm668, 0.0
        %6101 = vst.msk [vmem:[#allocation5 + $0x118] sm:$0x3] %vm671, 0.0
        %6102 = vst.msk [vmem:[#allocation5 + $0x120] sm:$0xff] %vm668, 0.0
        %6103 = vst.msk [vmem:[#allocation5 + $0x128] sm:$0xff] %vm668, 0.0
        %6104 = vst.msk [vmem:[#allocation5 + $0x130] sm:$0x3] %vm671, 0.0
        %6105 = vst.msk [vmem:[#allocation5 + $0x138] sm:$0xff] %vm668, 0.0
        %6106 = vst.msk [vmem:[#allocation5 + $0x140] sm:$0xff] %vm668, 0.0
        %6107 = vst.msk [vmem:[#allocation5 + $0x148] sm:$0x3] %vm671, 0.0
        %6108 = vst.msk [vmem:[#allocation5 + $0x150] sm:$0xff] %vm668, 0.0
        %6109 = vst.msk [vmem:[#allocation5 + $0x158] sm:$0xff] %vm668, 0.0
        %6110 = vst.msk [vmem:[#allocation5 + $0x160] sm:$0x3] %vm671, 0.0
        %6111 = vst.msk [vmem:[#allocation5 + $0x168] sm:$0xff] %vm668, 0.0
        %6112 = vst.msk [vmem:[#allocation5 + $0x170] sm:$0xff] %vm668, 0.0
        %6113 = vst.msk [vmem:[#allocation5 + $0x178] sm:$0x3] %vm671, 0.0
        %6114 = vst.msk [vmem:[#allocation5 + $0x180] sm:$0xff] %vm668, 0.0
        %6115 = vst.msk [vmem:[#allocation5 + $0x188] sm:$0xff] %vm668, 0.0
        %6116 = vst.msk [vmem:[#allocation5 + $0x190] sm:$0x3] %vm671, 0.0
        %6117 = vst.msk [vmem:[#allocation5 + $0x198] sm:$0xff] %vm668, 0.0
        %6118 = vst.msk [vmem:[#allocation5 + $0x1a0] sm:$0xff] %vm668, 0.0
        %6119 = vst.msk [vmem:[#allocation5 + $0x1a8] sm:$0x3] %vm671, 0.0
        %s6120 = scalar_lea.vmem [#allocation5], 24
        %6121 = vst.msk [vmem:[%s6120 + $0x1] sm:$0xff] %vm668, %v6034
        %6122 = vst.msk [vmem:[%s6120 + $0x9] sm:$0xff] %vm668, %v6035
        %6123 = vst.msk [vmem:[%s6120 + $0x19] sm:$0xff] %vm668, %v6036
        %6124 = vst.msk [vmem:[%s6120 + $0x21] sm:$0xff] %vm668, %v6037
        %6125 = vst.msk [vmem:[%s6120 + $0x31] sm:$0xff] %vm668, %v6038
        %6126 = vst.msk [vmem:[%s6120 + $0x39] sm:$0xff] %vm668, %v6039
        %6127 = vst.msk [vmem:[%s6120 + $0x49] sm:$0xff] %vm668, %v6040
        %6128 = vst.msk [vmem:[%s6120 + $0x51] sm:$0xff] %vm668, %v6041
        %6129 = vst.msk [vmem:[%s6120 + $0x61] sm:$0xff] %vm668, %v6042
        %6130 = vst.msk [vmem:[%s6120 + $0x69] sm:$0xff] %vm668, %v6043
        %6131 = vst.msk [vmem:[%s6120 + $0x79] sm:$0xff] %vm668, %v6044
        %6132 = vst.msk [vmem:[%s6120 + $0x81] sm:$0xff] %vm668, %v6045
        %6133 = vst.msk [vmem:[%s6120 + $0x91] sm:$0xff] %vm668, %v6046
        %6134 = vst.msk [vmem:[%s6120 + $0x99] sm:$0xff] %vm668, %v6047
        %6135 = vst.msk [vmem:[%s6120 + $0xa9] sm:$0xff] %vm668, %v6048
        %6136 = vst.msk [vmem:[%s6120 + $0xb1] sm:$0xff] %vm668, %v6049
        %6137 = vst.msk [vmem:[%s6120 + $0xc1] sm:$0xff] %vm668, %v6050
        %6138 = vst.msk [vmem:[%s6120 + $0xc9] sm:$0xff] %vm668, %v6051
        %6139 = vst.msk [vmem:[%s6120 + $0xd9] sm:$0xff] %vm668, %v6052
        %6140 = vst.msk [vmem:[%s6120 + $0xe1] sm:$0xff] %vm668, %v6053
        %6141 = vst.msk [vmem:[%s6120 + $0xf1] sm:$0xff] %vm668, %v6054
        %6142 = vst.msk [vmem:[%s6120 + $0xf9] sm:$0xff] %vm668, %v6055
        %6143 = vst.msk [vmem:[%s6120 + $0x109] sm:$0xff] %vm668, %v6056
        %6144 = vst.msk [vmem:[%s6120 + $0x111] sm:$0xff] %vm668, %v6057
        %6145 = vst.msk [vmem:[%s6120 + $0x121] sm:$0xff] %vm668, %v6058
        %6146 = vst.msk [vmem:[%s6120 + $0x129] sm:$0xff] %vm668, %v6059
        %6147 = vst.msk [vmem:[%s6120 + $0x139] sm:$0xff] %vm668, %v6060
        %6148 = vst.msk [vmem:[%s6120 + $0x141] sm:$0xff] %vm668, %v6061
        %6149 = vst.msk [vmem:[%s6120 + $0x151] sm:$0xff] %vm668, %v6062
        %6150 = vst.msk [vmem:[%s6120 + $0x159] sm:$0xff] %vm668, %v6063
        %6151 = vst.msk [vmem:[%s6120 + $0x169] sm:$0xff] %vm668, %v6064
        %6152 = vst.msk [vmem:[%s6120 + $0x171] sm:$0xff] %vm668, %v6065
        %v6153 = vld [vmem:[#allocation5] sm:$0xff]
        %v6154 = vld [vmem:[#allocation5 + $0x8] sm:$0xff]
        %v6155 = vld [vmem:[#allocation5 + $0x18] sm:$0xff]
        %v6156 = vld [vmem:[#allocation5 + $0x20] sm:$0xff]
        %v6157 = vld [vmem:[#allocation5 + $0x30] sm:$0xff]
        %v6158 = vld [vmem:[#allocation5 + $0x38] sm:$0xff]
        %v6159 = vld [vmem:[#allocation5 + $0x48] sm:$0xff]
        %v6160 = vld [vmem:[#allocation5 + $0x50] sm:$0xff]
        %v6161 = vld [vmem:[#allocation5 + $0x60] sm:$0xff]
        %v6162 = vld [vmem:[#allocation5 + $0x68] sm:$0xff]
        %v6163 = vld [vmem:[#allocation5 + $0x78] sm:$0xff]
        %v6164 = vld [vmem:[#allocation5 + $0x80] sm:$0xff]
        %v6165 = vld [vmem:[#allocation5 + $0x90] sm:$0xff]
        %v6166 = vld [vmem:[#allocation5 + $0x98] sm:$0xff]
        %v6167 = vld [vmem:[#allocation5 + $0xa8] sm:$0xff]
        %v6168 = vld [vmem:[#allocation5 + $0xb0] sm:$0xff]
        %v6169 = vld [vmem:[#allocation5 + $0xc0] sm:$0xff]
        %v6170 = vld [vmem:[#allocation5 + $0xc8] sm:$0xff]
        %v6171 = vld [vmem:[#allocation5 + $0xd8] sm:$0xff]
        %v6172 = vld [vmem:[#allocation5 + $0xe0] sm:$0xff]
        %v6173 = vld [vmem:[#allocation5 + $0xf0] sm:$0xff]
        %v6174 = vld [vmem:[#allocation5 + $0xf8] sm:$0xff]
        %v6175 = vld [vmem:[#allocation5 + $0x108] sm:$0xff]
        %v6176 = vld [vmem:[#allocation5 + $0x110] sm:$0xff]
        %v6177 = vld [vmem:[#allocation5 + $0x120] sm:$0xff]
        %v6178 = vld [vmem:[#allocation5 + $0x128] sm:$0xff]
        %v6179 = vld [vmem:[#allocation5 + $0x138] sm:$0xff]
        %v6180 = vld [vmem:[#allocation5 + $0x140] sm:$0xff]
        %v6181 = vld [vmem:[#allocation5 + $0x150] sm:$0xff]
        %v6182 = vld [vmem:[#allocation5 + $0x158] sm:$0xff]
        %v6183 = vld [vmem:[#allocation5 + $0x168] sm:$0xff]
        %v6184 = vld [vmem:[#allocation5 + $0x170] sm:$0xff]
        %v6185 = vld [vmem:[%s7] sm:$0x3f]
        %v6186 = vld [vmem:[#allocation5 + $0x1] sm:$0xff]
        %v6187 = vld [vmem:[#allocation5 + $0x9] sm:$0xff]
        %v6188 = vld [vmem:[#allocation5 + $0x19] sm:$0xff]
        %v6189 = vld [vmem:[#allocation5 + $0x21] sm:$0xff]
        %v6190 = vld [vmem:[#allocation5 + $0x31] sm:$0xff]
        %v6191 = vld [vmem:[#allocation5 + $0x39] sm:$0xff]
        %v6192 = vld [vmem:[#allocation5 + $0x49] sm:$0xff]
        %v6193 = vld [vmem:[#allocation5 + $0x51] sm:$0xff]
        %v6194 = vld [vmem:[#allocation5 + $0x61] sm:$0xff]
        %v6195 = vld [vmem:[#allocation5 + $0x69] sm:$0xff]
        %v6196 = vld [vmem:[#allocation5 + $0x79] sm:$0xff]
        %v6197 = vld [vmem:[#allocation5 + $0x81] sm:$0xff]
        %v6198 = vld [vmem:[#allocation5 + $0x91] sm:$0xff]
        %v6199 = vld [vmem:[#allocation5 + $0x99] sm:$0xff]
        %v6200 = vld [vmem:[#allocation5 + $0xa9] sm:$0xff]
        %v6201 = vld [vmem:[#allocation5 + $0xb1] sm:$0xff]
        %v6202 = vld [vmem:[#allocation5 + $0xc1] sm:$0xff]
        %v6203 = vld [vmem:[#allocation5 + $0xc9] sm:$0xff]
        %v6204 = vld [vmem:[#allocation5 + $0xd9] sm:$0xff]
        %v6205 = vld [vmem:[#allocation5 + $0xe1] sm:$0xff]
        %v6206 = vld [vmem:[#allocation5 + $0xf1] sm:$0xff]
        %v6207 = vld [vmem:[#allocation5 + $0xf9] sm:$0xff]
        %v6208 = vld [vmem:[#allocation5 + $0x109] sm:$0xff]
        %v6209 = vld [vmem:[#allocation5 + $0x111] sm:$0xff]
        %v6210 = vld [vmem:[#allocation5 + $0x121] sm:$0xff]
        %v6211 = vld [vmem:[#allocation5 + $0x129] sm:$0xff]
        %v6212 = vld [vmem:[#allocation5 + $0x139] sm:$0xff]
        %v6213 = vld [vmem:[#allocation5 + $0x141] sm:$0xff]
        %v6214 = vld [vmem:[#allocation5 + $0x151] sm:$0xff]
        %v6215 = vld [vmem:[#allocation5 + $0x159] sm:$0xff]
        %v6216 = vld [vmem:[#allocation5 + $0x169] sm:$0xff]
        %v6217 = vld [vmem:[#allocation5 + $0x171] sm:$0xff]
        %v6218 = vld [vmem:[%s7 + $0x6] sm:$0x3f]
        %v6220 = vsel %vm668, %v6186, 0
        %v6223 = vsel %vm668, %v6187, 0
        %v6226 = vsel %vm668, %v6188, 0
        %v6229 = vsel %vm668, %v6189, 0
        %v6232 = vsel %vm668, %v6190, 0
        %v6235 = vsel %vm668, %v6191, 0
        %v6238 = vsel %vm668, %v6192, 0
        %v6241 = vsel %vm668, %v6193, 0
        %v6244 = vsel %vm668, %v6194, 0
        %v6247 = vsel %vm668, %v6195, 0
        %v6250 = vsel %vm668, %v6196, 0
        %v6253 = vsel %vm668, %v6197, 0
        %v6256 = vsel %vm668, %v6198, 0
        %v6259 = vsel %vm668, %v6199, 0
        %v6262 = vsel %vm668, %v6200, 0
        %v6265 = vsel %vm668, %v6201, 0
        %v6268 = vsel %vm668, %v6202, 0
        %v6271 = vsel %vm668, %v6203, 0
        %v6274 = vsel %vm668, %v6204, 0
        %v6277 = vsel %vm668, %v6205, 0
        %v6280 = vsel %vm668, %v6206, 0
        %v6283 = vsel %vm668, %v6207, 0
        %v6286 = vsel %vm668, %v6208, 0
        %v6289 = vsel %vm668, %v6209, 0
        %v6292 = vsel %vm668, %v6210, 0
        %v6295 = vsel %vm668, %v6211, 0
        %v6298 = vsel %vm668, %v6212, 0
        %v6301 = vsel %vm668, %v6213, 0
        %v6304 = vsel %vm668, %v6214, 0
        %v6307 = vsel %vm668, %v6215, 0
        %v6310 = vsel %vm668, %v6216, 0
        %v6313 = vsel %vm668, %v6217, 0
        %v6316 = vsel %vm1047, %v6218, 0
        %6318 = vmatpush.msra.mxu0 0.0
        %6319 = vmatpush.msra.mxu0 0.0
        %6320 = vmatpush.msra.mxu0 0.0
        %6321 = vmatpush.msra.mxu0 0.0
        %6322 = vmatpush.msra.mxu0 0.0
        %6323 = vmatpush.msra.mxu0 0.0
        %6324 = vmatpush.msra.mxu0 0.0
        %6325 = vmatpush.msra.mxu0 0.0
        %6326 = vmatpush.msra.mxu0 0.0
        %6327 = vmatpush.msra.mxu0 0.0
        %6328 = vmatpush.msra.mxu0 0.0
        %6329 = vmatpush.msra.mxu0 0.0
        %6330 = vmatpush.msra.mxu0 0.0
        %6331 = vmatpush.msra.mxu0 0.0
        %6332 = vmatpush.msra.mxu0 0.0
        %6333 = vmatpush.msra.mxu0 %v6316
        %6334 = vmatmul.f32.gmra.mxu0 %v6220
        %v6335 = vpop.f32.mrf.mxu0
        %v6336 = vadd.f32 0.0, %v6335
        %6337 = vmatmul.f32.gmra.mxu0 %v6223
        %v6338 = vpop.f32.mrf.mxu0
        %v6339 = vadd.f32 0.0, %v6338
        %6340 = vmatmul.f32.gmra.mxu0 %v6226
        %v6341 = vpop.f32.mrf.mxu0
        %v6342 = vadd.f32 0.0, %v6341
        %6343 = vmatmul.f32.gmra.mxu0 %v6229
        %v6344 = vpop.f32.mrf.mxu0
        %v6345 = vadd.f32 0.0, %v6344
        %6346 = vmatmul.f32.gmra.mxu0 %v6232
        %v6347 = vpop.f32.mrf.mxu0
        %v6348 = vadd.f32 0.0, %v6347
        %6349 = vmatmul.f32.gmra.mxu0 %v6235
        %v6350 = vpop.f32.mrf.mxu0
        %v6351 = vadd.f32 0.0, %v6350
        %6352 = vmatmul.f32.gmra.mxu0 %v6238
        %v6353 = vpop.f32.mrf.mxu0
        %v6354 = vadd.f32 0.0, %v6353
        %6355 = vmatmul.f32.gmra.mxu0 %v6241
        %v6356 = vpop.f32.mrf.mxu0
        %v6357 = vadd.f32 0.0, %v6356
        %6358 = vmatmul.f32.gmra.mxu0 %v6244
        %v6359 = vpop.f32.mrf.mxu0
        %v6360 = vadd.f32 0.0, %v6359
        %6361 = vmatmul.f32.gmra.mxu0 %v6247
        %v6362 = vpop.f32.mrf.mxu0
        %v6363 = vadd.f32 0.0, %v6362
        %6364 = vmatmul.f32.gmra.mxu0 %v6250
        %v6365 = vpop.f32.mrf.mxu0
        %v6366 = vadd.f32 0.0, %v6365
        %6367 = vmatmul.f32.gmra.mxu0 %v6253
        %v6368 = vpop.f32.mrf.mxu0
        %v6369 = vadd.f32 0.0, %v6368
        %6370 = vmatmul.f32.gmra.mxu0 %v6256
        %v6371 = vpop.f32.mrf.mxu0
        %v6372 = vadd.f32 0.0, %v6371
        %6373 = vmatmul.f32.gmra.mxu0 %v6259
        %v6374 = vpop.f32.mrf.mxu0
        %v6375 = vadd.f32 0.0, %v6374
        %6376 = vmatmul.f32.gmra.mxu0 %v6262
        %v6377 = vpop.f32.mrf.mxu0
        %v6378 = vadd.f32 0.0, %v6377
        %6379 = vmatmul.f32.gmra.mxu0 %v6265
        %v6380 = vpop.f32.mrf.mxu0
        %v6381 = vadd.f32 0.0, %v6380
        %6382 = vmatmul.f32.gmra.mxu0 %v6268
        %v6383 = vpop.f32.mrf.mxu0
        %v6384 = vadd.f32 0.0, %v6383
        %6385 = vmatmul.f32.gmra.mxu0 %v6271
        %v6386 = vpop.f32.mrf.mxu0
        %v6387 = vadd.f32 0.0, %v6386
        %6388 = vmatmul.f32.gmra.mxu0 %v6274
        %v6389 = vpop.f32.mrf.mxu0
        %v6390 = vadd.f32 0.0, %v6389
        %6391 = vmatmul.f32.gmra.mxu0 %v6277
        %v6392 = vpop.f32.mrf.mxu0
        %v6393 = vadd.f32 0.0, %v6392
        %6394 = vmatmul.f32.gmra.mxu0 %v6280
        %v6395 = vpop.f32.mrf.mxu0
        %v6396 = vadd.f32 0.0, %v6395
        %6397 = vmatmul.f32.gmra.mxu0 %v6283
        %v6398 = vpop.f32.mrf.mxu0
        %v6399 = vadd.f32 0.0, %v6398
        %6400 = vmatmul.f32.gmra.mxu0 %v6286
        %v6401 = vpop.f32.mrf.mxu0
        %v6402 = vadd.f32 0.0, %v6401
        %6403 = vmatmul.f32.gmra.mxu0 %v6289
        %v6404 = vpop.f32.mrf.mxu0
        %v6405 = vadd.f32 0.0, %v6404
        %6406 = vmatmul.f32.gmra.mxu0 %v6292
        %v6407 = vpop.f32.mrf.mxu0
        %v6408 = vadd.f32 0.0, %v6407
        %6409 = vmatmul.f32.gmra.mxu0 %v6295
        %v6410 = vpop.f32.mrf.mxu0
        %v6411 = vadd.f32 0.0, %v6410
        %6412 = vmatmul.f32.gmra.mxu0 %v6298
        %v6413 = vpop.f32.mrf.mxu0
        %v6414 = vadd.f32 0.0, %v6413
        %6415 = vmatmul.f32.gmra.mxu0 %v6301
        %v6416 = vpop.f32.mrf.mxu0
        %v6417 = vadd.f32 0.0, %v6416
        %6418 = vmatmul.f32.gmra.mxu0 %v6304
        %v6419 = vpop.f32.mrf.mxu0
        %v6420 = vadd.f32 0.0, %v6419
        %6421 = vmatmul.f32.gmra.mxu0 %v6307
        %v6422 = vpop.f32.mrf.mxu0
        %v6423 = vadd.f32 0.0, %v6422
        %6424 = vmatmul.f32.gmra.mxu0 %v6310
        %v6425 = vpop.f32.mrf.mxu0
        %v6426 = vadd.f32 0.0, %v6425
        %6427 = vmatmul.f32.gmra.mxu0 %v6313
        %v6428 = vpop.f32.mrf.mxu0
        %v6429 = vadd.f32 0.0, %v6428
        %6430 = vdwg.mxu0
        %v6432 = vsel %vm668, %v6153, 0
        %v6435 = vsel %vm668, %v6154, 0
        %v6438 = vsel %vm668, %v6155, 0
        %v6441 = vsel %vm668, %v6156, 0
        %v6444 = vsel %vm668, %v6157, 0
        %v6447 = vsel %vm668, %v6158, 0
        %v6450 = vsel %vm668, %v6159, 0
        %v6453 = vsel %vm668, %v6160, 0
        %v6456 = vsel %vm668, %v6161, 0
        %v6459 = vsel %vm668, %v6162, 0
        %v6462 = vsel %vm668, %v6163, 0
        %v6465 = vsel %vm668, %v6164, 0
        %v6468 = vsel %vm668, %v6165, 0
        %v6471 = vsel %vm668, %v6166, 0
        %v6474 = vsel %vm668, %v6167, 0
        %v6477 = vsel %vm668, %v6168, 0
        %v6480 = vsel %vm668, %v6169, 0
        %v6483 = vsel %vm668, %v6170, 0
        %v6486 = vsel %vm668, %v6171, 0
        %v6489 = vsel %vm668, %v6172, 0
        %v6492 = vsel %vm668, %v6173, 0
        %v6495 = vsel %vm668, %v6174, 0
        %v6498 = vsel %vm668, %v6175, 0
        %v6501 = vsel %vm668, %v6176, 0
        %v6504 = vsel %vm668, %v6177, 0
        %v6507 = vsel %vm668, %v6178, 0
        %v6510 = vsel %vm668, %v6179, 0
        %v6513 = vsel %vm668, %v6180, 0
        %v6516 = vsel %vm668, %v6181, 0
        %v6519 = vsel %vm668, %v6182, 0
        %v6522 = vsel %vm668, %v6183, 0
        %v6525 = vsel %vm668, %v6184, 0
        %v6528 = vsel %vm1047, %v6185, 0
        %6530 = vmatpush.msra.mxu0 0.0
        %6531 = vmatpush.msra.mxu0 0.0
        %6532 = vmatpush.msra.mxu0 0.0
        %6533 = vmatpush.msra.mxu0 0.0
        %6534 = vmatpush.msra.mxu0 0.0
        %6535 = vmatpush.msra.mxu0 0.0
        %6536 = vmatpush.msra.mxu0 0.0
        %6537 = vmatpush.msra.mxu0 0.0
        %6538 = vmatpush.msra.mxu0 0.0
        %6539 = vmatpush.msra.mxu0 0.0
        %6540 = vmatpush.msra.mxu0 0.0
        %6541 = vmatpush.msra.mxu0 0.0
        %6542 = vmatpush.msra.mxu0 0.0
        %6543 = vmatpush.msra.mxu0 0.0
        %6544 = vmatpush.msra.mxu0 0.0
        %6545 = vmatpush.msra.mxu0 %v6528
        %6546 = vmatmul.f32.gmra.mxu0 %v6432
        %v6547 = vpop.f32.mrf.mxu0
        %v6548 = vadd.f32 %v6336, %v6547
        %6549 = vmatmul.f32.gmra.mxu0 %v6435
        %v6550 = vpop.f32.mrf.mxu0
        %v6551 = vadd.f32 %v6339, %v6550
        %6552 = vmatmul.f32.gmra.mxu0 %v6438
        %v6553 = vpop.f32.mrf.mxu0
        %v6554 = vadd.f32 %v6342, %v6553
        %6555 = vmatmul.f32.gmra.mxu0 %v6441
        %v6556 = vpop.f32.mrf.mxu0
        %v6557 = vadd.f32 %v6345, %v6556
        %6558 = vmatmul.f32.gmra.mxu0 %v6444
        %v6559 = vpop.f32.mrf.mxu0
        %v6560 = vadd.f32 %v6348, %v6559
        %6561 = vmatmul.f32.gmra.mxu0 %v6447
        %v6562 = vpop.f32.mrf.mxu0
        %v6563 = vadd.f32 %v6351, %v6562
        %6564 = vmatmul.f32.gmra.mxu0 %v6450
        %v6565 = vpop.f32.mrf.mxu0
        %v6566 = vadd.f32 %v6354, %v6565
        %6567 = vmatmul.f32.gmra.mxu0 %v6453
        %v6568 = vpop.f32.mrf.mxu0
        %v6569 = vadd.f32 %v6357, %v6568
        %6570 = vmatmul.f32.gmra.mxu0 %v6456
        %v6571 = vpop.f32.mrf.mxu0
        %v6572 = vadd.f32 %v6360, %v6571
        %6573 = vmatmul.f32.gmra.mxu0 %v6459
        %v6574 = vpop.f32.mrf.mxu0
        %v6575 = vadd.f32 %v6363, %v6574
        %6576 = vmatmul.f32.gmra.mxu0 %v6462
        %v6577 = vpop.f32.mrf.mxu0
        %v6578 = vadd.f32 %v6366, %v6577
        %6579 = vmatmul.f32.gmra.mxu0 %v6465
        %v6580 = vpop.f32.mrf.mxu0
        %v6581 = vadd.f32 %v6369, %v6580
        %6582 = vmatmul.f32.gmra.mxu0 %v6468
        %v6583 = vpop.f32.mrf.mxu0
        %v6584 = vadd.f32 %v6372, %v6583
        %6585 = vmatmul.f32.gmra.mxu0 %v6471
        %v6586 = vpop.f32.mrf.mxu0
        %v6587 = vadd.f32 %v6375, %v6586
        %6588 = vmatmul.f32.gmra.mxu0 %v6474
        %v6589 = vpop.f32.mrf.mxu0
        %v6590 = vadd.f32 %v6378, %v6589
        %6591 = vmatmul.f32.gmra.mxu0 %v6477
        %v6592 = vpop.f32.mrf.mxu0
        %v6593 = vadd.f32 %v6381, %v6592
        %6594 = vmatmul.f32.gmra.mxu0 %v6480
        %v6595 = vpop.f32.mrf.mxu0
        %v6596 = vadd.f32 %v6384, %v6595
        %6597 = vmatmul.f32.gmra.mxu0 %v6483
        %v6598 = vpop.f32.mrf.mxu0
        %v6599 = vadd.f32 %v6387, %v6598
        %6600 = vmatmul.f32.gmra.mxu0 %v6486
        %v6601 = vpop.f32.mrf.mxu0
        %v6602 = vadd.f32 %v6390, %v6601
        %6603 = vmatmul.f32.gmra.mxu0 %v6489
        %v6604 = vpop.f32.mrf.mxu0
        %v6605 = vadd.f32 %v6393, %v6604
        %6606 = vmatmul.f32.gmra.mxu0 %v6492
        %v6607 = vpop.f32.mrf.mxu0
        %v6608 = vadd.f32 %v6396, %v6607
        %6609 = vmatmul.f32.gmra.mxu0 %v6495
        %v6610 = vpop.f32.mrf.mxu0
        %v6611 = vadd.f32 %v6399, %v6610
        %6612 = vmatmul.f32.gmra.mxu0 %v6498
        %v6613 = vpop.f32.mrf.mxu0
        %v6614 = vadd.f32 %v6402, %v6613
        %6615 = vmatmul.f32.gmra.mxu0 %v6501
        %v6616 = vpop.f32.mrf.mxu0
        %v6617 = vadd.f32 %v6405, %v6616
        %6618 = vmatmul.f32.gmra.mxu0 %v6504
        %v6619 = vpop.f32.mrf.mxu0
        %v6620 = vadd.f32 %v6408, %v6619
        %6621 = vmatmul.f32.gmra.mxu0 %v6507
        %v6622 = vpop.f32.mrf.mxu0
        %v6623 = vadd.f32 %v6411, %v6622
        %6624 = vmatmul.f32.gmra.mxu0 %v6510
        %v6625 = vpop.f32.mrf.mxu0
        %v6626 = vadd.f32 %v6414, %v6625
        %6627 = vmatmul.f32.gmra.mxu0 %v6513
        %v6628 = vpop.f32.mrf.mxu0
        %v6629 = vadd.f32 %v6417, %v6628
        %6630 = vmatmul.f32.gmra.mxu0 %v6516
        %v6631 = vpop.f32.mrf.mxu0
        %v6632 = vadd.f32 %v6420, %v6631
        %6633 = vmatmul.f32.gmra.mxu0 %v6519
        %v6634 = vpop.f32.mrf.mxu0
        %v6635 = vadd.f32 %v6423, %v6634
        %6636 = vmatmul.f32.gmra.mxu0 %v6522
        %v6637 = vpop.f32.mrf.mxu0
        %v6638 = vadd.f32 %v6426, %v6637
        %6639 = vmatmul.f32.gmra.mxu0 %v6525
        %v6640 = vpop.f32.mrf.mxu0
        %v6641 = vadd.f32 %v6429, %v6640
        %6642 = vdwg.mxu0
        %v6643 = vld [vmem:[#allocation5 + $0x2] sm:$0xff]
        %v6644 = vld [vmem:[#allocation5 + $0xa] sm:$0xff]
        %v6645 = vld [vmem:[#allocation5 + $0x1a] sm:$0xff]
        %v6646 = vld [vmem:[#allocation5 + $0x22] sm:$0xff]
        %v6647 = vld [vmem:[#allocation5 + $0x32] sm:$0xff]
        %v6648 = vld [vmem:[#allocation5 + $0x3a] sm:$0xff]
        %v6649 = vld [vmem:[#allocation5 + $0x4a] sm:$0xff]
        %v6650 = vld [vmem:[#allocation5 + $0x52] sm:$0xff]
        %v6651 = vld [vmem:[#allocation5 + $0x62] sm:$0xff]
        %v6652 = vld [vmem:[#allocation5 + $0x6a] sm:$0xff]
        %v6653 = vld [vmem:[#allocation5 + $0x7a] sm:$0xff]
        %v6654 = vld [vmem:[#allocation5 + $0x82] sm:$0xff]
        %v6655 = vld [vmem:[#allocation5 + $0x92] sm:$0xff]
        %v6656 = vld [vmem:[#allocation5 + $0x9a] sm:$0xff]
        %v6657 = vld [vmem:[#allocation5 + $0xaa] sm:$0xff]
        %v6658 = vld [vmem:[#allocation5 + $0xb2] sm:$0xff]
        %v6659 = vld [vmem:[#allocation5 + $0xc2] sm:$0xff]
        %v6660 = vld [vmem:[#allocation5 + $0xca] sm:$0xff]
        %v6661 = vld [vmem:[#allocation5 + $0xda] sm:$0xff]
        %v6662 = vld [vmem:[#allocation5 + $0xe2] sm:$0xff]
        %v6663 = vld [vmem:[#allocation5 + $0xf2] sm:$0xff]
        %v6664 = vld [vmem:[#allocation5 + $0xfa] sm:$0xff]
        %v6665 = vld [vmem:[#allocation5 + $0x10a] sm:$0xff]
        %v6666 = vld [vmem:[#allocation5 + $0x112] sm:$0xff]
        %v6667 = vld [vmem:[#allocation5 + $0x122] sm:$0xff]
        %v6668 = vld [vmem:[#allocation5 + $0x12a] sm:$0xff]
        %v6669 = vld [vmem:[#allocation5 + $0x13a] sm:$0xff]
        %v6670 = vld [vmem:[#allocation5 + $0x142] sm:$0xff]
        %v6671 = vld [vmem:[#allocation5 + $0x152] sm:$0xff]
        %v6672 = vld [vmem:[#allocation5 + $0x15a] sm:$0xff]
        %v6673 = vld [vmem:[#allocation5 + $0x16a] sm:$0xff]
        %v6674 = vld [vmem:[#allocation5 + $0x172] sm:$0xff]
        %v6675 = vld [vmem:[%s7 + $0xc] sm:$0x3f]
        %v6677 = vsel %vm668, %v6643, 0
        %v6680 = vsel %vm668, %v6644, 0
        %v6683 = vsel %vm668, %v6645, 0
        %v6686 = vsel %vm668, %v6646, 0
        %v6689 = vsel %vm668, %v6647, 0
        %v6692 = vsel %vm668, %v6648, 0
        %v6695 = vsel %vm668, %v6649, 0
        %v6698 = vsel %vm668, %v6650, 0
        %v6701 = vsel %vm668, %v6651, 0
        %v6704 = vsel %vm668, %v6652, 0
        %v6707 = vsel %vm668, %v6653, 0
        %v6710 = vsel %vm668, %v6654, 0
        %v6713 = vsel %vm668, %v6655, 0
        %v6716 = vsel %vm668, %v6656, 0
        %v6719 = vsel %vm668, %v6657, 0
        %v6722 = vsel %vm668, %v6658, 0
        %v6725 = vsel %vm668, %v6659, 0
        %v6728 = vsel %vm668, %v6660, 0
        %v6731 = vsel %vm668, %v6661, 0
        %v6734 = vsel %vm668, %v6662, 0
        %v6737 = vsel %vm668, %v6663, 0
        %v6740 = vsel %vm668, %v6664, 0
        %v6743 = vsel %vm668, %v6665, 0
        %v6746 = vsel %vm668, %v6666, 0
        %v6749 = vsel %vm668, %v6667, 0
        %v6752 = vsel %vm668, %v6668, 0
        %v6755 = vsel %vm668, %v6669, 0
        %v6758 = vsel %vm668, %v6670, 0
        %v6761 = vsel %vm668, %v6671, 0
        %v6764 = vsel %vm668, %v6672, 0
        %v6767 = vsel %vm668, %v6673, 0
        %v6770 = vsel %vm668, %v6674, 0
        %v6773 = vsel %vm1047, %v6675, 0
        %6775 = vmatpush.msra.mxu0 0.0
        %6776 = vmatpush.msra.mxu0 0.0
        %6777 = vmatpush.msra.mxu0 0.0
        %6778 = vmatpush.msra.mxu0 0.0
        %6779 = vmatpush.msra.mxu0 0.0
        %6780 = vmatpush.msra.mxu0 0.0
        %6781 = vmatpush.msra.mxu0 0.0
        %6782 = vmatpush.msra.mxu0 0.0
        %6783 = vmatpush.msra.mxu0 0.0
        %6784 = vmatpush.msra.mxu0 0.0
        %6785 = vmatpush.msra.mxu0 0.0
        %6786 = vmatpush.msra.mxu0 0.0
        %6787 = vmatpush.msra.mxu0 0.0
        %6788 = vmatpush.msra.mxu0 0.0
        %6789 = vmatpush.msra.mxu0 0.0
        %6790 = vmatpush.msra.mxu0 %v6773
        %6791 = vmatmul.f32.gmra.mxu0 %v6677
        %v6792 = vpop.f32.mrf.mxu0
        %v6793 = vadd.f32 0.0, %v6792
        %6794 = vmatmul.f32.gmra.mxu0 %v6680
        %v6795 = vpop.f32.mrf.mxu0
        %v6796 = vadd.f32 0.0, %v6795
        %6797 = vmatmul.f32.gmra.mxu0 %v6683
        %v6798 = vpop.f32.mrf.mxu0
        %v6799 = vadd.f32 0.0, %v6798
        %6800 = vmatmul.f32.gmra.mxu0 %v6686
        %v6801 = vpop.f32.mrf.mxu0
        %v6802 = vadd.f32 0.0, %v6801
        %6803 = vmatmul.f32.gmra.mxu0 %v6689
        %v6804 = vpop.f32.mrf.mxu0
        %v6805 = vadd.f32 0.0, %v6804
        %6806 = vmatmul.f32.gmra.mxu0 %v6692
        %v6807 = vpop.f32.mrf.mxu0
        %v6808 = vadd.f32 0.0, %v6807
        %6809 = vmatmul.f32.gmra.mxu0 %v6695
        %v6810 = vpop.f32.mrf.mxu0
        %v6811 = vadd.f32 0.0, %v6810
        %6812 = vmatmul.f32.gmra.mxu0 %v6698
        %v6813 = vpop.f32.mrf.mxu0
        %v6814 = vadd.f32 0.0, %v6813
        %6815 = vmatmul.f32.gmra.mxu0 %v6701
        %v6816 = vpop.f32.mrf.mxu0
        %v6817 = vadd.f32 0.0, %v6816
        %6818 = vmatmul.f32.gmra.mxu0 %v6704
        %v6819 = vpop.f32.mrf.mxu0
        %v6820 = vadd.f32 0.0, %v6819
        %6821 = vmatmul.f32.gmra.mxu0 %v6707
        %v6822 = vpop.f32.mrf.mxu0
        %v6823 = vadd.f32 0.0, %v6822
        %6824 = vmatmul.f32.gmra.mxu0 %v6710
        %v6825 = vpop.f32.mrf.mxu0
        %v6826 = vadd.f32 0.0, %v6825
        %6827 = vmatmul.f32.gmra.mxu0 %v6713
        %v6828 = vpop.f32.mrf.mxu0
        %v6829 = vadd.f32 0.0, %v6828
        %6830 = vmatmul.f32.gmra.mxu0 %v6716
        %v6831 = vpop.f32.mrf.mxu0
        %v6832 = vadd.f32 0.0, %v6831
        %6833 = vmatmul.f32.gmra.mxu0 %v6719
        %v6834 = vpop.f32.mrf.mxu0
        %v6835 = vadd.f32 0.0, %v6834
        %6836 = vmatmul.f32.gmra.mxu0 %v6722
        %v6837 = vpop.f32.mrf.mxu0
        %v6838 = vadd.f32 0.0, %v6837
        %6839 = vmatmul.f32.gmra.mxu0 %v6725
        %v6840 = vpop.f32.mrf.mxu0
        %v6841 = vadd.f32 0.0, %v6840
        %6842 = vmatmul.f32.gmra.mxu0 %v6728
        %v6843 = vpop.f32.mrf.mxu0
        %v6844 = vadd.f32 0.0, %v6843
        %6845 = vmatmul.f32.gmra.mxu0 %v6731
        %v6846 = vpop.f32.mrf.mxu0
        %v6847 = vadd.f32 0.0, %v6846
        %6848 = vmatmul.f32.gmra.mxu0 %v6734
        %v6849 = vpop.f32.mrf.mxu0
        %v6850 = vadd.f32 0.0, %v6849
        %6851 = vmatmul.f32.gmra.mxu0 %v6737
        %v6852 = vpop.f32.mrf.mxu0
        %v6853 = vadd.f32 0.0, %v6852
        %6854 = vmatmul.f32.gmra.mxu0 %v6740
        %v6855 = vpop.f32.mrf.mxu0
        %v6856 = vadd.f32 0.0, %v6855
        %6857 = vmatmul.f32.gmra.mxu0 %v6743
        %v6858 = vpop.f32.mrf.mxu0
        %v6859 = vadd.f32 0.0, %v6858
        %6860 = vmatmul.f32.gmra.mxu0 %v6746
        %v6861 = vpop.f32.mrf.mxu0
        %v6862 = vadd.f32 0.0, %v6861
        %6863 = vmatmul.f32.gmra.mxu0 %v6749
        %v6864 = vpop.f32.mrf.mxu0
        %v6865 = vadd.f32 0.0, %v6864
        %6866 = vmatmul.f32.gmra.mxu0 %v6752
        %v6867 = vpop.f32.mrf.mxu0
        %v6868 = vadd.f32 0.0, %v6867
        %6869 = vmatmul.f32.gmra.mxu0 %v6755
        %v6870 = vpop.f32.mrf.mxu0
        %v6871 = vadd.f32 0.0, %v6870
        %6872 = vmatmul.f32.gmra.mxu0 %v6758
        %v6873 = vpop.f32.mrf.mxu0
        %v6874 = vadd.f32 0.0, %v6873
        %6875 = vmatmul.f32.gmra.mxu0 %v6761
        %v6876 = vpop.f32.mrf.mxu0
        %v6877 = vadd.f32 0.0, %v6876
        %6878 = vmatmul.f32.gmra.mxu0 %v6764
        %v6879 = vpop.f32.mrf.mxu0
        %v6880 = vadd.f32 0.0, %v6879
        %6881 = vmatmul.f32.gmra.mxu0 %v6767
        %v6882 = vpop.f32.mrf.mxu0
        %v6883 = vadd.f32 0.0, %v6882
        %6884 = vmatmul.f32.gmra.mxu0 %v6770
        %v6885 = vpop.f32.mrf.mxu0
        %v6886 = vadd.f32 0.0, %v6885
        %6887 = vdwg.mxu0
        %v6888 = vadd.f32 %v6548, %v6793
        %v6889 = vadd.f32 %v6551, %v6796
        %v6890 = vadd.f32 %v6554, %v6799
        %v6891 = vadd.f32 %v6557, %v6802
        %v6892 = vadd.f32 %v6560, %v6805
        %v6893 = vadd.f32 %v6563, %v6808
        %v6894 = vadd.f32 %v6566, %v6811
        %v6895 = vadd.f32 %v6569, %v6814
        %v6896 = vadd.f32 %v6572, %v6817
        %v6897 = vadd.f32 %v6575, %v6820
        %v6898 = vadd.f32 %v6578, %v6823
        %v6899 = vadd.f32 %v6581, %v6826
        %v6900 = vadd.f32 %v6584, %v6829
        %v6901 = vadd.f32 %v6587, %v6832
        %v6902 = vadd.f32 %v6590, %v6835
        %v6903 = vadd.f32 %v6593, %v6838
        %v6904 = vadd.f32 %v6596, %v6841
        %v6905 = vadd.f32 %v6599, %v6844
        %v6906 = vadd.f32 %v6602, %v6847
        %v6907 = vadd.f32 %v6605, %v6850
        %v6908 = vadd.f32 %v6608, %v6853
        %v6909 = vadd.f32 %v6611, %v6856
        %v6910 = vadd.f32 %v6614, %v6859
        %v6911 = vadd.f32 %v6617, %v6862
        %v6912 = vadd.f32 %v6620, %v6865
        %v6913 = vadd.f32 %v6623, %v6868
        %v6914 = vadd.f32 %v6626, %v6871
        %v6915 = vadd.f32 %v6629, %v6874
        %v6916 = vadd.f32 %v6632, %v6877
        %v6917 = vadd.f32 %v6635, %v6880
        %v6918 = vadd.f32 %v6638, %v6883
        %v6919 = vadd.f32 %v6641, %v6886
        %v6920 = vld [vmem:[%s6120] sm:$0xff]
        %v6921 = vld [vmem:[%s6120 + $0x8] sm:$0xff]
        %v6922 = vld [vmem:[%s6120 + $0x18] sm:$0xff]
        %v6923 = vld [vmem:[%s6120 + $0x20] sm:$0xff]
        %v6924 = vld [vmem:[%s6120 + $0x30] sm:$0xff]
        %v6925 = vld [vmem:[%s6120 + $0x38] sm:$0xff]
        %v6926 = vld [vmem:[%s6120 + $0x48] sm:$0xff]
        %v6927 = vld [vmem:[%s6120 + $0x50] sm:$0xff]
        %v6928 = vld [vmem:[%s6120 + $0x60] sm:$0xff]
        %v6929 = vld [vmem:[%s6120 + $0x68] sm:$0xff]
        %v6930 = vld [vmem:[%s6120 + $0x78] sm:$0xff]
        %v6931 = vld [vmem:[%s6120 + $0x80] sm:$0xff]
        %v6932 = vld [vmem:[%s6120 + $0x90] sm:$0xff]
        %v6933 = vld [vmem:[%s6120 + $0x98] sm:$0xff]
        %v6934 = vld [vmem:[%s6120 + $0xa8] sm:$0xff]
        %v6935 = vld [vmem:[%s6120 + $0xb0] sm:$0xff]
        %v6936 = vld [vmem:[%s6120 + $0xc0] sm:$0xff]
        %v6937 = vld [vmem:[%s6120 + $0xc8] sm:$0xff]
        %v6938 = vld [vmem:[%s6120 + $0xd8] sm:$0xff]
        %v6939 = vld [vmem:[%s6120 + $0xe0] sm:$0xff]
        %v6940 = vld [vmem:[%s6120 + $0xf0] sm:$0xff]
        %v6941 = vld [vmem:[%s6120 + $0xf8] sm:$0xff]
        %v6942 = vld [vmem:[%s6120 + $0x108] sm:$0xff]
        %v6943 = vld [vmem:[%s6120 + $0x110] sm:$0xff]
        %v6944 = vld [vmem:[%s6120 + $0x120] sm:$0xff]
        %v6945 = vld [vmem:[%s6120 + $0x128] sm:$0xff]
        %v6946 = vld [vmem:[%s6120 + $0x138] sm:$0xff]
        %v6947 = vld [vmem:[%s6120 + $0x140] sm:$0xff]
        %v6948 = vld [vmem:[%s6120 + $0x150] sm:$0xff]
        %v6949 = vld [vmem:[%s6120 + $0x158] sm:$0xff]
        %v6950 = vld [vmem:[%s6120 + $0x168] sm:$0xff]
        %v6951 = vld [vmem:[%s6120 + $0x170] sm:$0xff]
        %v6952 = vld [vmem:[%s7 + $0x12] sm:$0x3f]
        %v6954 = vsel %vm668, %v6920, 0
        %v6957 = vsel %vm668, %v6921, 0
        %v6960 = vsel %vm668, %v6922, 0
        %v6963 = vsel %vm668, %v6923, 0
        %v6966 = vsel %vm668, %v6924, 0
        %v6969 = vsel %vm668, %v6925, 0
        %v6972 = vsel %vm668, %v6926, 0
        %v6975 = vsel %vm668, %v6927, 0
        %v6978 = vsel %vm668, %v6928, 0
        %v6981 = vsel %vm668, %v6929, 0
        %v6984 = vsel %vm668, %v6930, 0
        %v6987 = vsel %vm668, %v6931, 0
        %v6990 = vsel %vm668, %v6932, 0
        %v6993 = vsel %vm668, %v6933, 0
        %v6996 = vsel %vm668, %v6934, 0
        %v6999 = vsel %vm668, %v6935, 0
        %v7002 = vsel %vm668, %v6936, 0
        %v7005 = vsel %vm668, %v6937, 0
        %v7008 = vsel %vm668, %v6938, 0
        %v7011 = vsel %vm668, %v6939, 0
        %v7014 = vsel %vm668, %v6940, 0
        %v7017 = vsel %vm668, %v6941, 0
        %v7020 = vsel %vm668, %v6942, 0
        %v7023 = vsel %vm668, %v6943, 0
        %v7026 = vsel %vm668, %v6944, 0
        %v7029 = vsel %vm668, %v6945, 0
        %v7032 = vsel %vm668, %v6946, 0
        %v7035 = vsel %vm668, %v6947, 0
        %v7038 = vsel %vm668, %v6948, 0
        %v7041 = vsel %vm668, %v6949, 0
        %v7044 = vsel %vm668, %v6950, 0
        %v7047 = vsel %vm668, %v6951, 0
        %v7050 = vsel %vm1047, %v6952, 0
        %7052 = vmatpush.msra.mxu0 0.0
        %7053 = vmatpush.msra.mxu0 0.0
        %7054 = vmatpush.msra.mxu0 0.0
        %7055 = vmatpush.msra.mxu0 0.0
        %7056 = vmatpush.msra.mxu0 0.0
        %7057 = vmatpush.msra.mxu0 0.0
        %7058 = vmatpush.msra.mxu0 0.0
        %7059 = vmatpush.msra.mxu0 0.0
        %7060 = vmatpush.msra.mxu0 0.0
        %7061 = vmatpush.msra.mxu0 0.0
        %7062 = vmatpush.msra.mxu0 0.0
        %7063 = vmatpush.msra.mxu0 0.0
        %7064 = vmatpush.msra.mxu0 0.0
        %7065 = vmatpush.msra.mxu0 0.0
        %7066 = vmatpush.msra.mxu0 0.0
        %7067 = vmatpush.msra.mxu0 %v7050
        %7068 = vmatmul.f32.gmra.mxu0 %v6954
        %v7069 = vpop.f32.mrf.mxu0
        %v7070 = vadd.f32 0.0, %v7069
        %7071 = vmatmul.f32.gmra.mxu0 %v6957
        %v7072 = vpop.f32.mrf.mxu0
        %v7073 = vadd.f32 0.0, %v7072
        %7074 = vmatmul.f32.gmra.mxu0 %v6960
        %v7075 = vpop.f32.mrf.mxu0
        %v7076 = vadd.f32 0.0, %v7075
        %7077 = vmatmul.f32.gmra.mxu0 %v6963
        %v7078 = vpop.f32.mrf.mxu0
        %v7079 = vadd.f32 0.0, %v7078
        %7080 = vmatmul.f32.gmra.mxu0 %v6966
        %v7081 = vpop.f32.mrf.mxu0
        %v7082 = vadd.f32 0.0, %v7081
        %7083 = vmatmul.f32.gmra.mxu0 %v6969
        %v7084 = vpop.f32.mrf.mxu0
        %v7085 = vadd.f32 0.0, %v7084
        %7086 = vmatmul.f32.gmra.mxu0 %v6972
        %v7087 = vpop.f32.mrf.mxu0
        %v7088 = vadd.f32 0.0, %v7087
        %7089 = vmatmul.f32.gmra.mxu0 %v6975
        %v7090 = vpop.f32.mrf.mxu0
        %v7091 = vadd.f32 0.0, %v7090
        %7092 = vmatmul.f32.gmra.mxu0 %v6978
        %v7093 = vpop.f32.mrf.mxu0
        %v7094 = vadd.f32 0.0, %v7093
        %7095 = vmatmul.f32.gmra.mxu0 %v6981
        %v7096 = vpop.f32.mrf.mxu0
        %v7097 = vadd.f32 0.0, %v7096
        %7098 = vmatmul.f32.gmra.mxu0 %v6984
        %v7099 = vpop.f32.mrf.mxu0
        %v7100 = vadd.f32 0.0, %v7099
        %7101 = vmatmul.f32.gmra.mxu0 %v6987
        %v7102 = vpop.f32.mrf.mxu0
        %v7103 = vadd.f32 0.0, %v7102
        %7104 = vmatmul.f32.gmra.mxu0 %v6990
        %v7105 = vpop.f32.mrf.mxu0
        %v7106 = vadd.f32 0.0, %v7105
        %7107 = vmatmul.f32.gmra.mxu0 %v6993
        %v7108 = vpop.f32.mrf.mxu0
        %v7109 = vadd.f32 0.0, %v7108
        %7110 = vmatmul.f32.gmra.mxu0 %v6996
        %v7111 = vpop.f32.mrf.mxu0
        %v7112 = vadd.f32 0.0, %v7111
        %7113 = vmatmul.f32.gmra.mxu0 %v6999
        %v7114 = vpop.f32.mrf.mxu0
        %v7115 = vadd.f32 0.0, %v7114
        %7116 = vmatmul.f32.gmra.mxu0 %v7002
        %v7117 = vpop.f32.mrf.mxu0
        %v7118 = vadd.f32 0.0, %v7117
        %7119 = vmatmul.f32.gmra.mxu0 %v7005
        %v7120 = vpop.f32.mrf.mxu0
        %v7121 = vadd.f32 0.0, %v7120
        %7122 = vmatmul.f32.gmra.mxu0 %v7008
        %v7123 = vpop.f32.mrf.mxu0
        %v7124 = vadd.f32 0.0, %v7123
        %7125 = vmatmul.f32.gmra.mxu0 %v7011
        %v7126 = vpop.f32.mrf.mxu0
        %v7127 = vadd.f32 0.0, %v7126
        %7128 = vmatmul.f32.gmra.mxu0 %v7014
        %v7129 = vpop.f32.mrf.mxu0
        %v7130 = vadd.f32 0.0, %v7129
        %7131 = vmatmul.f32.gmra.mxu0 %v7017
        %v7132 = vpop.f32.mrf.mxu0
        %v7133 = vadd.f32 0.0, %v7132
        %7134 = vmatmul.f32.gmra.mxu0 %v7020
        %v7135 = vpop.f32.mrf.mxu0
        %v7136 = vadd.f32 0.0, %v7135
        %7137 = vmatmul.f32.gmra.mxu0 %v7023
        %v7138 = vpop.f32.mrf.mxu0
        %v7139 = vadd.f32 0.0, %v7138
        %7140 = vmatmul.f32.gmra.mxu0 %v7026
        %v7141 = vpop.f32.mrf.mxu0
        %v7142 = vadd.f32 0.0, %v7141
        %7143 = vmatmul.f32.gmra.mxu0 %v7029
        %v7144 = vpop.f32.mrf.mxu0
        %v7145 = vadd.f32 0.0, %v7144
        %7146 = vmatmul.f32.gmra.mxu0 %v7032
        %v7147 = vpop.f32.mrf.mxu0
        %v7148 = vadd.f32 0.0, %v7147
        %7149 = vmatmul.f32.gmra.mxu0 %v7035
        %v7150 = vpop.f32.mrf.mxu0
        %v7151 = vadd.f32 0.0, %v7150
        %7152 = vmatmul.f32.gmra.mxu0 %v7038
        %v7153 = vpop.f32.mrf.mxu0
        %v7154 = vadd.f32 0.0, %v7153
        %7155 = vmatmul.f32.gmra.mxu0 %v7041
        %v7156 = vpop.f32.mrf.mxu0
        %v7157 = vadd.f32 0.0, %v7156
        %7158 = vmatmul.f32.gmra.mxu0 %v7044
        %v7159 = vpop.f32.mrf.mxu0
        %v7160 = vadd.f32 0.0, %v7159
        %7161 = vmatmul.f32.gmra.mxu0 %v7047
        %v7162 = vpop.f32.mrf.mxu0
        %v7163 = vadd.f32 0.0, %v7162
        %7164 = vdwg.mxu0
        %v7165 = vadd.f32 %v6888, %v7070
        %v7166 = vadd.f32 %v6889, %v7073
        %v7167 = vadd.f32 %v6890, %v7076
        %v7168 = vadd.f32 %v6891, %v7079
        %v7169 = vadd.f32 %v6892, %v7082
        %v7170 = vadd.f32 %v6893, %v7085
        %v7171 = vadd.f32 %v6894, %v7088
        %v7172 = vadd.f32 %v6895, %v7091
        %v7173 = vadd.f32 %v6896, %v7094
        %v7174 = vadd.f32 %v6897, %v7097
        %v7175 = vadd.f32 %v6898, %v7100
        %v7176 = vadd.f32 %v6899, %v7103
        %v7177 = vadd.f32 %v6900, %v7106
        %v7178 = vadd.f32 %v6901, %v7109
        %v7179 = vadd.f32 %v6902, %v7112
        %v7180 = vadd.f32 %v6903, %v7115
        %v7181 = vadd.f32 %v6904, %v7118
        %v7182 = vadd.f32 %v6905, %v7121
        %v7183 = vadd.f32 %v6906, %v7124
        %v7184 = vadd.f32 %v6907, %v7127
        %v7185 = vadd.f32 %v6908, %v7130
        %v7186 = vadd.f32 %v6909, %v7133
        %v7187 = vadd.f32 %v6910, %v7136
        %v7188 = vadd.f32 %v6911, %v7139
        %v7189 = vadd.f32 %v6912, %v7142
        %v7190 = vadd.f32 %v6913, %v7145
        %v7191 = vadd.f32 %v6914, %v7148
        %v7192 = vadd.f32 %v6915, %v7151
        %v7193 = vadd.f32 %v6916, %v7154
        %v7194 = vadd.f32 %v6917, %v7157
        %v7195 = vadd.f32 %v6918, %v7160
        %v7196 = vadd.f32 %v6919, %v7163
        %v7197 = vld [vmem:[%s6120 + $0x1] sm:$0xff]
        %v7198 = vld [vmem:[%s6120 + $0x9] sm:$0xff]
        %v7199 = vld [vmem:[%s6120 + $0x19] sm:$0xff]
        %v7200 = vld [vmem:[%s6120 + $0x21] sm:$0xff]
        %v7201 = vld [vmem:[%s6120 + $0x31] sm:$0xff]
        %v7202 = vld [vmem:[%s6120 + $0x39] sm:$0xff]
        %v7203 = vld [vmem:[%s6120 + $0x49] sm:$0xff]
        %v7204 = vld [vmem:[%s6120 + $0x51] sm:$0xff]
        %v7205 = vld [vmem:[%s6120 + $0x61] sm:$0xff]
        %v7206 = vld [vmem:[%s6120 + $0x69] sm:$0xff]
        %v7207 = vld [vmem:[%s6120 + $0x79] sm:$0xff]
        %v7208 = vld [vmem:[%s6120 + $0x81] sm:$0xff]
        %v7209 = vld [vmem:[%s6120 + $0x91] sm:$0xff]
        %v7210 = vld [vmem:[%s6120 + $0x99] sm:$0xff]
        %v7211 = vld [vmem:[%s6120 + $0xa9] sm:$0xff]
        %v7212 = vld [vmem:[%s6120 + $0xb1] sm:$0xff]
        %v7213 = vld [vmem:[%s6120 + $0xc1] sm:$0xff]
        %v7214 = vld [vmem:[%s6120 + $0xc9] sm:$0xff]
        %v7215 = vld [vmem:[%s6120 + $0xd9] sm:$0xff]
        %v7216 = vld [vmem:[%s6120 + $0xe1] sm:$0xff]
        %v7217 = vld [vmem:[%s6120 + $0xf1] sm:$0xff]
        %v7218 = vld [vmem:[%s6120 + $0xf9] sm:$0xff]
        %v7219 = vld [vmem:[%s6120 + $0x109] sm:$0xff]
        %v7220 = vld [vmem:[%s6120 + $0x111] sm:$0xff]
        %v7221 = vld [vmem:[%s6120 + $0x121] sm:$0xff]
        %v7222 = vld [vmem:[%s6120 + $0x129] sm:$0xff]
        %v7223 = vld [vmem:[%s6120 + $0x139] sm:$0xff]
        %v7224 = vld [vmem:[%s6120 + $0x141] sm:$0xff]
        %v7225 = vld [vmem:[%s6120 + $0x151] sm:$0xff]
        %v7226 = vld [vmem:[%s6120 + $0x159] sm:$0xff]
        %v7227 = vld [vmem:[%s6120 + $0x169] sm:$0xff]
        %v7228 = vld [vmem:[%s6120 + $0x171] sm:$0xff]
        %v7229 = vld [vmem:[%s7 + $0x18] sm:$0x3f]
        %v7231 = vsel %vm668, %v7197, 0
        %v7234 = vsel %vm668, %v7198, 0
        %v7237 = vsel %vm668, %v7199, 0
        %v7240 = vsel %vm668, %v7200, 0
        %v7243 = vsel %vm668, %v7201, 0
        %v7246 = vsel %vm668, %v7202, 0
        %v7249 = vsel %vm668, %v7203, 0
        %v7252 = vsel %vm668, %v7204, 0
        %v7255 = vsel %vm668, %v7205, 0
        %v7258 = vsel %vm668, %v7206, 0
        %v7261 = vsel %vm668, %v7207, 0
        %v7264 = vsel %vm668, %v7208, 0
        %v7267 = vsel %vm668, %v7209, 0
        %v7270 = vsel %vm668, %v7210, 0
        %v7273 = vsel %vm668, %v7211, 0
        %v7276 = vsel %vm668, %v7212, 0
        %v7279 = vsel %vm668, %v7213, 0
        %v7282 = vsel %vm668, %v7214, 0
        %v7285 = vsel %vm668, %v7215, 0
        %v7288 = vsel %vm668, %v7216, 0
        %v7291 = vsel %vm668, %v7217, 0
        %v7294 = vsel %vm668, %v7218, 0
        %v7297 = vsel %vm668, %v7219, 0
        %v7300 = vsel %vm668, %v7220, 0
        %v7303 = vsel %vm668, %v7221, 0
        %v7306 = vsel %vm668, %v7222, 0
        %v7309 = vsel %vm668, %v7223, 0
        %v7312 = vsel %vm668, %v7224, 0
        %v7315 = vsel %vm668, %v7225, 0
        %v7318 = vsel %vm668, %v7226, 0
        %v7321 = vsel %vm668, %v7227, 0
        %v7324 = vsel %vm668, %v7228, 0
        %v7327 = vsel %vm1047, %v7229, 0
        %7329 = vmatpush.msra.mxu0 0.0
        %7330 = vmatpush.msra.mxu0 0.0
        %7331 = vmatpush.msra.mxu0 0.0
        %7332 = vmatpush.msra.mxu0 0.0
        %7333 = vmatpush.msra.mxu0 0.0
        %7334 = vmatpush.msra.mxu0 0.0
        %7335 = vmatpush.msra.mxu0 0.0
        %7336 = vmatpush.msra.mxu0 0.0
        %7337 = vmatpush.msra.mxu0 0.0
        %7338 = vmatpush.msra.mxu0 0.0
        %7339 = vmatpush.msra.mxu0 0.0
        %7340 = vmatpush.msra.mxu0 0.0
        %7341 = vmatpush.msra.mxu0 0.0
        %7342 = vmatpush.msra.mxu0 0.0
        %7343 = vmatpush.msra.mxu0 0.0
        %7344 = vmatpush.msra.mxu0 %v7327
        %7345 = vmatmul.f32.gmra.mxu0 %v7231
        %v7346 = vpop.f32.mrf.mxu0
        %v7347 = vadd.f32 0.0, %v7346
        %7348 = vmatmul.f32.gmra.mxu0 %v7234
        %v7349 = vpop.f32.mrf.mxu0
        %v7350 = vadd.f32 0.0, %v7349
        %7351 = vmatmul.f32.gmra.mxu0 %v7237
        %v7352 = vpop.f32.mrf.mxu0
        %v7353 = vadd.f32 0.0, %v7352
        %7354 = vmatmul.f32.gmra.mxu0 %v7240
        %v7355 = vpop.f32.mrf.mxu0
        %v7356 = vadd.f32 0.0, %v7355
        %7357 = vmatmul.f32.gmra.mxu0 %v7243
        %v7358 = vpop.f32.mrf.mxu0
        %v7359 = vadd.f32 0.0, %v7358
        %7360 = vmatmul.f32.gmra.mxu0 %v7246
        %v7361 = vpop.f32.mrf.mxu0
        %v7362 = vadd.f32 0.0, %v7361
        %7363 = vmatmul.f32.gmra.mxu0 %v7249
        %v7364 = vpop.f32.mrf.mxu0
        %v7365 = vadd.f32 0.0, %v7364
        %7366 = vmatmul.f32.gmra.mxu0 %v7252
        %v7367 = vpop.f32.mrf.mxu0
        %v7368 = vadd.f32 0.0, %v7367
        %7369 = vmatmul.f32.gmra.mxu0 %v7255
        %v7370 = vpop.f32.mrf.mxu0
        %v7371 = vadd.f32 0.0, %v7370
        %7372 = vmatmul.f32.gmra.mxu0 %v7258
        %v7373 = vpop.f32.mrf.mxu0
        %v7374 = vadd.f32 0.0, %v7373
        %7375 = vmatmul.f32.gmra.mxu0 %v7261
        %v7376 = vpop.f32.mrf.mxu0
        %v7377 = vadd.f32 0.0, %v7376
        %7378 = vmatmul.f32.gmra.mxu0 %v7264
        %v7379 = vpop.f32.mrf.mxu0
        %v7380 = vadd.f32 0.0, %v7379
        %7381 = vmatmul.f32.gmra.mxu0 %v7267
        %v7382 = vpop.f32.mrf.mxu0
        %v7383 = vadd.f32 0.0, %v7382
        %7384 = vmatmul.f32.gmra.mxu0 %v7270
        %v7385 = vpop.f32.mrf.mxu0
        %v7386 = vadd.f32 0.0, %v7385
        %7387 = vmatmul.f32.gmra.mxu0 %v7273
        %v7388 = vpop.f32.mrf.mxu0
        %v7389 = vadd.f32 0.0, %v7388
        %7390 = vmatmul.f32.gmra.mxu0 %v7276
        %v7391 = vpop.f32.mrf.mxu0
        %v7392 = vadd.f32 0.0, %v7391
        %7393 = vmatmul.f32.gmra.mxu0 %v7279
        %v7394 = vpop.f32.mrf.mxu0
        %v7395 = vadd.f32 0.0, %v7394
        %7396 = vmatmul.f32.gmra.mxu0 %v7282
        %v7397 = vpop.f32.mrf.mxu0
        %v7398 = vadd.f32 0.0, %v7397
        %7399 = vmatmul.f32.gmra.mxu0 %v7285
        %v7400 = vpop.f32.mrf.mxu0
        %v7401 = vadd.f32 0.0, %v7400
        %7402 = vmatmul.f32.gmra.mxu0 %v7288
        %v7403 = vpop.f32.mrf.mxu0
        %v7404 = vadd.f32 0.0, %v7403
        %7405 = vmatmul.f32.gmra.mxu0 %v7291
        %v7406 = vpop.f32.mrf.mxu0
        %v7407 = vadd.f32 0.0, %v7406
        %7408 = vmatmul.f32.gmra.mxu0 %v7294
        %v7409 = vpop.f32.mrf.mxu0
        %v7410 = vadd.f32 0.0, %v7409
        %7411 = vmatmul.f32.gmra.mxu0 %v7297
        %v7412 = vpop.f32.mrf.mxu0
        %v7413 = vadd.f32 0.0, %v7412
        %7414 = vmatmul.f32.gmra.mxu0 %v7300
        %v7415 = vpop.f32.mrf.mxu0
        %v7416 = vadd.f32 0.0, %v7415
        %7417 = vmatmul.f32.gmra.mxu0 %v7303
        %v7418 = vpop.f32.mrf.mxu0
        %v7419 = vadd.f32 0.0, %v7418
        %7420 = vmatmul.f32.gmra.mxu0 %v7306
        %v7421 = vpop.f32.mrf.mxu0
        %v7422 = vadd.f32 0.0, %v7421
        %7423 = vmatmul.f32.gmra.mxu0 %v7309
        %v7424 = vpop.f32.mrf.mxu0
        %v7425 = vadd.f32 0.0, %v7424
        %7426 = vmatmul.f32.gmra.mxu0 %v7312
        %v7427 = vpop.f32.mrf.mxu0
        %v7428 = vadd.f32 0.0, %v7427
        %7429 = vmatmul.f32.gmra.mxu0 %v7315
        %v7430 = vpop.f32.mrf.mxu0
        %v7431 = vadd.f32 0.0, %v7430
        %7432 = vmatmul.f32.gmra.mxu0 %v7318
        %v7433 = vpop.f32.mrf.mxu0
        %v7434 = vadd.f32 0.0, %v7433
        %7435 = vmatmul.f32.gmra.mxu0 %v7321
        %v7436 = vpop.f32.mrf.mxu0
        %v7437 = vadd.f32 0.0, %v7436
        %7438 = vmatmul.f32.gmra.mxu0 %v7324
        %v7439 = vpop.f32.mrf.mxu0
        %v7440 = vadd.f32 0.0, %v7439
        %7441 = vdwg.mxu0
        %v7442 = vadd.f32 %v7165, %v7347
        %v7443 = vadd.f32 %v7166, %v7350
        %v7444 = vadd.f32 %v7167, %v7353
        %v7445 = vadd.f32 %v7168, %v7356
        %v7446 = vadd.f32 %v7169, %v7359
        %v7447 = vadd.f32 %v7170, %v7362
        %v7448 = vadd.f32 %v7171, %v7365
        %v7449 = vadd.f32 %v7172, %v7368
        %v7450 = vadd.f32 %v7173, %v7371
        %v7451 = vadd.f32 %v7174, %v7374
        %v7452 = vadd.f32 %v7175, %v7377
        %v7453 = vadd.f32 %v7176, %v7380
        %v7454 = vadd.f32 %v7177, %v7383
        %v7455 = vadd.f32 %v7178, %v7386
        %v7456 = vadd.f32 %v7179, %v7389
        %v7457 = vadd.f32 %v7180, %v7392
        %v7458 = vadd.f32 %v7181, %v7395
        %v7459 = vadd.f32 %v7182, %v7398
        %v7460 = vadd.f32 %v7183, %v7401
        %v7461 = vadd.f32 %v7184, %v7404
        %v7462 = vadd.f32 %v7185, %v7407
        %v7463 = vadd.f32 %v7186, %v7410
        %v7464 = vadd.f32 %v7187, %v7413
        %v7465 = vadd.f32 %v7188, %v7416
        %v7466 = vadd.f32 %v7189, %v7419
        %v7467 = vadd.f32 %v7190, %v7422
        %v7468 = vadd.f32 %v7191, %v7425
        %v7469 = vadd.f32 %v7192, %v7428
        %v7470 = vadd.f32 %v7193, %v7431
        %v7471 = vadd.f32 %v7194, %v7434
        %v7472 = vadd.f32 %v7195, %v7437
        %v7473 = vadd.f32 %v7196, %v7440
        %v7474 = vld [vmem:[%s6120 + $0x2] sm:$0xff]
        %v7475 = vld [vmem:[%s6120 + $0xa] sm:$0xff]
        %v7476 = vld [vmem:[%s6120 + $0x1a] sm:$0xff]
        %v7477 = vld [vmem:[%s6120 + $0x22] sm:$0xff]
        %v7478 = vld [vmem:[%s6120 + $0x32] sm:$0xff]
        %v7479 = vld [vmem:[%s6120 + $0x3a] sm:$0xff]
        %v7480 = vld [vmem:[%s6120 + $0x4a] sm:$0xff]
        %v7481 = vld [vmem:[%s6120 + $0x52] sm:$0xff]
        %v7482 = vld [vmem:[%s6120 + $0x62] sm:$0xff]
        %v7483 = vld [vmem:[%s6120 + $0x6a] sm:$0xff]
        %v7484 = vld [vmem:[%s6120 + $0x7a] sm:$0xff]
        %v7485 = vld [vmem:[%s6120 + $0x82] sm:$0xff]
        %v7486 = vld [vmem:[%s6120 + $0x92] sm:$0xff]
        %v7487 = vld [vmem:[%s6120 + $0x9a] sm:$0xff]
        %v7488 = vld [vmem:[%s6120 + $0xaa] sm:$0xff]
        %v7489 = vld [vmem:[%s6120 + $0xb2] sm:$0xff]
        %v7490 = vld [vmem:[%s6120 + $0xc2] sm:$0xff]
        %v7491 = vld [vmem:[%s6120 + $0xca] sm:$0xff]
        %v7492 = vld [vmem:[%s6120 + $0xda] sm:$0xff]
        %v7493 = vld [vmem:[%s6120 + $0xe2] sm:$0xff]
        %v7494 = vld [vmem:[%s6120 + $0xf2] sm:$0xff]
        %v7495 = vld [vmem:[%s6120 + $0xfa] sm:$0xff]
        %v7496 = vld [vmem:[%s6120 + $0x10a] sm:$0xff]
        %v7497 = vld [vmem:[%s6120 + $0x112] sm:$0xff]
        %v7498 = vld [vmem:[%s6120 + $0x122] sm:$0xff]
        %v7499 = vld [vmem:[%s6120 + $0x12a] sm:$0xff]
        %v7500 = vld [vmem:[%s6120 + $0x13a] sm:$0xff]
        %v7501 = vld [vmem:[%s6120 + $0x142] sm:$0xff]
        %v7502 = vld [vmem:[%s6120 + $0x152] sm:$0xff]
        %v7503 = vld [vmem:[%s6120 + $0x15a] sm:$0xff]
        %v7504 = vld [vmem:[%s6120 + $0x16a] sm:$0xff]
        %v7505 = vld [vmem:[%s6120 + $0x172] sm:$0xff]
        %v7506 = vld [vmem:[%s7 + $0x1e] sm:$0x3f]
        %v7508 = vsel %vm668, %v7474, 0
        %v7511 = vsel %vm668, %v7475, 0
        %v7514 = vsel %vm668, %v7476, 0
        %v7517 = vsel %vm668, %v7477, 0
        %v7520 = vsel %vm668, %v7478, 0
        %v7523 = vsel %vm668, %v7479, 0
        %v7526 = vsel %vm668, %v7480, 0
        %v7529 = vsel %vm668, %v7481, 0
        %v7532 = vsel %vm668, %v7482, 0
        %v7535 = vsel %vm668, %v7483, 0
        %v7538 = vsel %vm668, %v7484, 0
        %v7541 = vsel %vm668, %v7485, 0
        %v7544 = vsel %vm668, %v7486, 0
        %v7547 = vsel %vm668, %v7487, 0
        %v7550 = vsel %vm668, %v7488, 0
        %v7553 = vsel %vm668, %v7489, 0
        %v7556 = vsel %vm668, %v7490, 0
        %v7559 = vsel %vm668, %v7491, 0
        %v7562 = vsel %vm668, %v7492, 0
        %v7565 = vsel %vm668, %v7493, 0
        %v7568 = vsel %vm668, %v7494, 0
        %v7571 = vsel %vm668, %v7495, 0
        %v7574 = vsel %vm668, %v7496, 0
        %v7577 = vsel %vm668, %v7497, 0
        %v7580 = vsel %vm668, %v7498, 0
        %v7583 = vsel %vm668, %v7499, 0
        %v7586 = vsel %vm668, %v7500, 0
        %v7589 = vsel %vm668, %v7501, 0
        %v7592 = vsel %vm668, %v7502, 0
        %v7595 = vsel %vm668, %v7503, 0
        %v7598 = vsel %vm668, %v7504, 0
        %v7601 = vsel %vm668, %v7505, 0
        %v7604 = vsel %vm1047, %v7506, 0
        %7606 = vmatpush.msra.mxu0 0.0
        %7607 = vmatpush.msra.mxu0 0.0
        %7608 = vmatpush.msra.mxu0 0.0
        %7609 = vmatpush.msra.mxu0 0.0
        %7610 = vmatpush.msra.mxu0 0.0
        %7611 = vmatpush.msra.mxu0 0.0
        %7612 = vmatpush.msra.mxu0 0.0
        %7613 = vmatpush.msra.mxu0 0.0
        %7614 = vmatpush.msra.mxu0 0.0
        %7615 = vmatpush.msra.mxu0 0.0
        %7616 = vmatpush.msra.mxu0 0.0
        %7617 = vmatpush.msra.mxu0 0.0
        %7618 = vmatpush.msra.mxu0 0.0
        %7619 = vmatpush.msra.mxu0 0.0
        %7620 = vmatpush.msra.mxu0 0.0
        %7621 = vmatpush.msra.mxu0 %v7604
        %7622 = vmatmul.f32.gmra.mxu0 %v7508
        %v7623 = vpop.f32.mrf.mxu0
        %v7624 = vadd.f32 0.0, %v7623
        %7625 = vmatmul.f32.gmra.mxu0 %v7511
        %v7626 = vpop.f32.mrf.mxu0
        %v7627 = vadd.f32 0.0, %v7626
        %7628 = vmatmul.f32.gmra.mxu0 %v7514
        %v7629 = vpop.f32.mrf.mxu0
        %v7630 = vadd.f32 0.0, %v7629
        %7631 = vmatmul.f32.gmra.mxu0 %v7517
        %v7632 = vpop.f32.mrf.mxu0
        %v7633 = vadd.f32 0.0, %v7632
        %7634 = vmatmul.f32.gmra.mxu0 %v7520
        %v7635 = vpop.f32.mrf.mxu0
        %v7636 = vadd.f32 0.0, %v7635
        %7637 = vmatmul.f32.gmra.mxu0 %v7523
        %v7638 = vpop.f32.mrf.mxu0
        %v7639 = vadd.f32 0.0, %v7638
        %7640 = vmatmul.f32.gmra.mxu0 %v7526
        %v7641 = vpop.f32.mrf.mxu0
        %v7642 = vadd.f32 0.0, %v7641
        %7643 = vmatmul.f32.gmra.mxu0 %v7529
        %v7644 = vpop.f32.mrf.mxu0
        %v7645 = vadd.f32 0.0, %v7644
        %7646 = vmatmul.f32.gmra.mxu0 %v7532
        %v7647 = vpop.f32.mrf.mxu0
        %v7648 = vadd.f32 0.0, %v7647
        %7649 = vmatmul.f32.gmra.mxu0 %v7535
        %v7650 = vpop.f32.mrf.mxu0
        %v7651 = vadd.f32 0.0, %v7650
        %7652 = vmatmul.f32.gmra.mxu0 %v7538
        %v7653 = vpop.f32.mrf.mxu0
        %v7654 = vadd.f32 0.0, %v7653
        %7655 = vmatmul.f32.gmra.mxu0 %v7541
        %v7656 = vpop.f32.mrf.mxu0
        %v7657 = vadd.f32 0.0, %v7656
        %7658 = vmatmul.f32.gmra.mxu0 %v7544
        %v7659 = vpop.f32.mrf.mxu0
        %v7660 = vadd.f32 0.0, %v7659
        %7661 = vmatmul.f32.gmra.mxu0 %v7547
        %v7662 = vpop.f32.mrf.mxu0
        %v7663 = vadd.f32 0.0, %v7662
        %7664 = vmatmul.f32.gmra.mxu0 %v7550
        %v7665 = vpop.f32.mrf.mxu0
        %v7666 = vadd.f32 0.0, %v7665
        %7667 = vmatmul.f32.gmra.mxu0 %v7553
        %v7668 = vpop.f32.mrf.mxu0
        %v7669 = vadd.f32 0.0, %v7668
        %7670 = vmatmul.f32.gmra.mxu0 %v7556
        %v7671 = vpop.f32.mrf.mxu0
        %v7672 = vadd.f32 0.0, %v7671
        %7673 = vmatmul.f32.gmra.mxu0 %v7559
        %v7674 = vpop.f32.mrf.mxu0
        %v7675 = vadd.f32 0.0, %v7674
        %7676 = vmatmul.f32.gmra.mxu0 %v7562
        %v7677 = vpop.f32.mrf.mxu0
        %v7678 = vadd.f32 0.0, %v7677
        %7679 = vmatmul.f32.gmra.mxu0 %v7565
        %v7680 = vpop.f32.mrf.mxu0
        %v7681 = vadd.f32 0.0, %v7680
        %7682 = vmatmul.f32.gmra.mxu0 %v7568
        %v7683 = vpop.f32.mrf.mxu0
        %v7684 = vadd.f32 0.0, %v7683
        %7685 = vmatmul.f32.gmra.mxu0 %v7571
        %v7686 = vpop.f32.mrf.mxu0
        %v7687 = vadd.f32 0.0, %v7686
        %7688 = vmatmul.f32.gmra.mxu0 %v7574
        %v7689 = vpop.f32.mrf.mxu0
        %v7690 = vadd.f32 0.0, %v7689
        %7691 = vmatmul.f32.gmra.mxu0 %v7577
        %v7692 = vpop.f32.mrf.mxu0
        %v7693 = vadd.f32 0.0, %v7692
        %7694 = vmatmul.f32.gmra.mxu0 %v7580
        %v7695 = vpop.f32.mrf.mxu0
        %v7696 = vadd.f32 0.0, %v7695
        %7697 = vmatmul.f32.gmra.mxu0 %v7583
        %v7698 = vpop.f32.mrf.mxu0
        %v7699 = vadd.f32 0.0, %v7698
        %7700 = vmatmul.f32.gmra.mxu0 %v7586
        %v7701 = vpop.f32.mrf.mxu0
        %v7702 = vadd.f32 0.0, %v7701
        %7703 = vmatmul.f32.gmra.mxu0 %v7589
        %v7704 = vpop.f32.mrf.mxu0
        %v7705 = vadd.f32 0.0, %v7704
        %7706 = vmatmul.f32.gmra.mxu0 %v7592
        %v7707 = vpop.f32.mrf.mxu0
        %v7708 = vadd.f32 0.0, %v7707
        %7709 = vmatmul.f32.gmra.mxu0 %v7595
        %v7710 = vpop.f32.mrf.mxu0
        %v7711 = vadd.f32 0.0, %v7710
        %7712 = vmatmul.f32.gmra.mxu0 %v7598
        %v7713 = vpop.f32.mrf.mxu0
        %v7714 = vadd.f32 0.0, %v7713
        %7715 = vmatmul.f32.gmra.mxu0 %v7601
        %v7716 = vpop.f32.mrf.mxu0
        %v7717 = vadd.f32 0.0, %v7716
        %7718 = vdwg.mxu0
        %v7719 = vadd.f32 %v7442, %v7624
        %v7720 = vadd.f32 %v7443, %v7627
        %v7721 = vadd.f32 %v7444, %v7630
        %v7722 = vadd.f32 %v7445, %v7633
        %v7723 = vadd.f32 %v7446, %v7636
        %v7724 = vadd.f32 %v7447, %v7639
        %v7725 = vadd.f32 %v7448, %v7642
        %v7726 = vadd.f32 %v7449, %v7645
        %v7727 = vadd.f32 %v7450, %v7648
        %v7728 = vadd.f32 %v7451, %v7651
        %v7729 = vadd.f32 %v7452, %v7654
        %v7730 = vadd.f32 %v7453, %v7657
        %v7731 = vadd.f32 %v7454, %v7660
        %v7732 = vadd.f32 %v7455, %v7663
        %v7733 = vadd.f32 %v7456, %v7666
        %v7734 = vadd.f32 %v7457, %v7669
        %v7735 = vadd.f32 %v7458, %v7672
        %v7736 = vadd.f32 %v7459, %v7675
        %v7737 = vadd.f32 %v7460, %v7678
        %v7738 = vadd.f32 %v7461, %v7681
        %v7739 = vadd.f32 %v7462, %v7684
        %v7740 = vadd.f32 %v7463, %v7687
        %v7741 = vadd.f32 %v7464, %v7690
        %v7742 = vadd.f32 %v7465, %v7693
        %v7743 = vadd.f32 %v7466, %v7696
        %v7744 = vadd.f32 %v7467, %v7699
        %v7745 = vadd.f32 %v7468, %v7702
        %v7746 = vadd.f32 %v7469, %v7705
        %v7747 = vadd.f32 %v7470, %v7708
        %v7748 = vadd.f32 %v7471, %v7711
        %v7749 = vadd.f32 %v7472, %v7714
        %v7750 = vadd.f32 %v7473, %v7717
        %s7751 = scalar_lea.vmem [#allocation5], 48
        %v7752 = vld [vmem:[%s7751] sm:$0xff]
        %v7753 = vld [vmem:[%s7751 + $0x8] sm:$0xff]
        %v7754 = vld [vmem:[%s7751 + $0x18] sm:$0xff]
        %v7755 = vld [vmem:[%s7751 + $0x20] sm:$0xff]
        %v7756 = vld [vmem:[%s7751 + $0x30] sm:$0xff]
        %v7757 = vld [vmem:[%s7751 + $0x38] sm:$0xff]
        %v7758 = vld [vmem:[%s7751 + $0x48] sm:$0xff]
        %v7759 = vld [vmem:[%s7751 + $0x50] sm:$0xff]
        %v7760 = vld [vmem:[%s7751 + $0x60] sm:$0xff]
        %v7761 = vld [vmem:[%s7751 + $0x68] sm:$0xff]
        %v7762 = vld [vmem:[%s7751 + $0x78] sm:$0xff]
        %v7763 = vld [vmem:[%s7751 + $0x80] sm:$0xff]
        %v7764 = vld [vmem:[%s7751 + $0x90] sm:$0xff]
        %v7765 = vld [vmem:[%s7751 + $0x98] sm:$0xff]
        %v7766 = vld [vmem:[%s7751 + $0xa8] sm:$0xff]
        %v7767 = vld [vmem:[%s7751 + $0xb0] sm:$0xff]
        %v7768 = vld [vmem:[%s7751 + $0xc0] sm:$0xff]
        %v7769 = vld [vmem:[%s7751 + $0xc8] sm:$0xff]
        %v7770 = vld [vmem:[%s7751 + $0xd8] sm:$0xff]
        %v7771 = vld [vmem:[%s7751 + $0xe0] sm:$0xff]
        %v7772 = vld [vmem:[%s7751 + $0xf0] sm:$0xff]
        %v7773 = vld [vmem:[%s7751 + $0xf8] sm:$0xff]
        %v7774 = vld [vmem:[%s7751 + $0x108] sm:$0xff]
        %v7775 = vld [vmem:[%s7751 + $0x110] sm:$0xff]
        %v7776 = vld [vmem:[%s7751 + $0x120] sm:$0xff]
        %v7777 = vld [vmem:[%s7751 + $0x128] sm:$0xff]
        %v7778 = vld [vmem:[%s7751 + $0x138] sm:$0xff]
        %v7779 = vld [vmem:[%s7751 + $0x140] sm:$0xff]
        %v7780 = vld [vmem:[%s7751 + $0x150] sm:$0xff]
        %v7781 = vld [vmem:[%s7751 + $0x158] sm:$0xff]
        %v7782 = vld [vmem:[%s7751 + $0x168] sm:$0xff]
        %v7783 = vld [vmem:[%s7751 + $0x170] sm:$0xff]
        %v7784 = vld [vmem:[%s7 + $0x24] sm:$0x3f]
        %v7786 = vsel %vm668, %v7752, 0
        %v7789 = vsel %vm668, %v7753, 0
        %v7792 = vsel %vm668, %v7754, 0
        %v7795 = vsel %vm668, %v7755, 0
        %v7798 = vsel %vm668, %v7756, 0
        %v7801 = vsel %vm668, %v7757, 0
        %v7804 = vsel %vm668, %v7758, 0
        %v7807 = vsel %vm668, %v7759, 0
        %v7810 = vsel %vm668, %v7760, 0
        %v7813 = vsel %vm668, %v7761, 0
        %v7816 = vsel %vm668, %v7762, 0
        %v7819 = vsel %vm668, %v7763, 0
        %v7822 = vsel %vm668, %v7764, 0
        %v7825 = vsel %vm668, %v7765, 0
        %v7828 = vsel %vm668, %v7766, 0
        %v7831 = vsel %vm668, %v7767, 0
        %v7834 = vsel %vm668, %v7768, 0
        %v7837 = vsel %vm668, %v7769, 0
        %v7840 = vsel %vm668, %v7770, 0
        %v7843 = vsel %vm668, %v7771, 0
        %v7846 = vsel %vm668, %v7772, 0
        %v7849 = vsel %vm668, %v7773, 0
        %v7852 = vsel %vm668, %v7774, 0
        %v7855 = vsel %vm668, %v7775, 0
        %v7858 = vsel %vm668, %v7776, 0
        %v7861 = vsel %vm668, %v7777, 0
        %v7864 = vsel %vm668, %v7778, 0
        %v7867 = vsel %vm668, %v7779, 0
        %v7870 = vsel %vm668, %v7780, 0
        %v7873 = vsel %vm668, %v7781, 0
        %v7876 = vsel %vm668, %v7782, 0
        %v7879 = vsel %vm668, %v7783, 0
        %v7882 = vsel %vm1047, %v7784, 0
        %7884 = vmatpush.msra.mxu0 0.0
        %7885 = vmatpush.msra.mxu0 0.0
        %7886 = vmatpush.msra.mxu0 0.0
        %7887 = vmatpush.msra.mxu0 0.0
        %7888 = vmatpush.msra.mxu0 0.0
        %7889 = vmatpush.msra.mxu0 0.0
        %7890 = vmatpush.msra.mxu0 0.0
        %7891 = vmatpush.msra.mxu0 0.0
        %7892 = vmatpush.msra.mxu0 0.0
        %7893 = vmatpush.msra.mxu0 0.0
        %7894 = vmatpush.msra.mxu0 0.0
        %7895 = vmatpush.msra.mxu0 0.0
        %7896 = vmatpush.msra.mxu0 0.0
        %7897 = vmatpush.msra.mxu0 0.0
        %7898 = vmatpush.msra.mxu0 0.0
        %7899 = vmatpush.msra.mxu0 %v7882
        %7900 = vmatmul.f32.gmra.mxu0 %v7786
        %v7901 = vpop.f32.mrf.mxu0
        %v7902 = vadd.f32 0.0, %v7901
        %7903 = vmatmul.f32.gmra.mxu0 %v7789
        %v7904 = vpop.f32.mrf.mxu0
        %v7905 = vadd.f32 0.0, %v7904
        %7906 = vmatmul.f32.gmra.mxu0 %v7792
        %v7907 = vpop.f32.mrf.mxu0
        %v7908 = vadd.f32 0.0, %v7907
        %7909 = vmatmul.f32.gmra.mxu0 %v7795
        %v7910 = vpop.f32.mrf.mxu0
        %v7911 = vadd.f32 0.0, %v7910
        %7912 = vmatmul.f32.gmra.mxu0 %v7798
        %v7913 = vpop.f32.mrf.mxu0
        %v7914 = vadd.f32 0.0, %v7913
        %7915 = vmatmul.f32.gmra.mxu0 %v7801
        %v7916 = vpop.f32.mrf.mxu0
        %v7917 = vadd.f32 0.0, %v7916
        %7918 = vmatmul.f32.gmra.mxu0 %v7804
        %v7919 = vpop.f32.mrf.mxu0
        %v7920 = vadd.f32 0.0, %v7919
        %7921 = vmatmul.f32.gmra.mxu0 %v7807
        %v7922 = vpop.f32.mrf.mxu0
        %v7923 = vadd.f32 0.0, %v7922
        %7924 = vmatmul.f32.gmra.mxu0 %v7810
        %v7925 = vpop.f32.mrf.mxu0
        %v7926 = vadd.f32 0.0, %v7925
        %7927 = vmatmul.f32.gmra.mxu0 %v7813
        %v7928 = vpop.f32.mrf.mxu0
        %v7929 = vadd.f32 0.0, %v7928
        %7930 = vmatmul.f32.gmra.mxu0 %v7816
        %v7931 = vpop.f32.mrf.mxu0
        %v7932 = vadd.f32 0.0, %v7931
        %7933 = vmatmul.f32.gmra.mxu0 %v7819
        %v7934 = vpop.f32.mrf.mxu0
        %v7935 = vadd.f32 0.0, %v7934
        %7936 = vmatmul.f32.gmra.mxu0 %v7822
        %v7937 = vpop.f32.mrf.mxu0
        %v7938 = vadd.f32 0.0, %v7937
        %7939 = vmatmul.f32.gmra.mxu0 %v7825
        %v7940 = vpop.f32.mrf.mxu0
        %v7941 = vadd.f32 0.0, %v7940
        %7942 = vmatmul.f32.gmra.mxu0 %v7828
        %v7943 = vpop.f32.mrf.mxu0
        %v7944 = vadd.f32 0.0, %v7943
        %7945 = vmatmul.f32.gmra.mxu0 %v7831
        %v7946 = vpop.f32.mrf.mxu0
        %v7947 = vadd.f32 0.0, %v7946
        %7948 = vmatmul.f32.gmra.mxu0 %v7834
        %v7949 = vpop.f32.mrf.mxu0
        %v7950 = vadd.f32 0.0, %v7949
        %7951 = vmatmul.f32.gmra.mxu0 %v7837
        %v7952 = vpop.f32.mrf.mxu0
        %v7953 = vadd.f32 0.0, %v7952
        %7954 = vmatmul.f32.gmra.mxu0 %v7840
        %v7955 = vpop.f32.mrf.mxu0
        %v7956 = vadd.f32 0.0, %v7955
        %7957 = vmatmul.f32.gmra.mxu0 %v7843
        %v7958 = vpop.f32.mrf.mxu0
        %v7959 = vadd.f32 0.0, %v7958
        %7960 = vmatmul.f32.gmra.mxu0 %v7846
        %v7961 = vpop.f32.mrf.mxu0
        %v7962 = vadd.f32 0.0, %v7961
        %7963 = vmatmul.f32.gmra.mxu0 %v7849
        %v7964 = vpop.f32.mrf.mxu0
        %v7965 = vadd.f32 0.0, %v7964
        %7966 = vmatmul.f32.gmra.mxu0 %v7852
        %v7967 = vpop.f32.mrf.mxu0
        %v7968 = vadd.f32 0.0, %v7967
        %7969 = vmatmul.f32.gmra.mxu0 %v7855
        %v7970 = vpop.f32.mrf.mxu0
        %v7971 = vadd.f32 0.0, %v7970
        %7972 = vmatmul.f32.gmra.mxu0 %v7858
        %v7973 = vpop.f32.mrf.mxu0
        %v7974 = vadd.f32 0.0, %v7973
        %7975 = vmatmul.f32.gmra.mxu0 %v7861
        %v7976 = vpop.f32.mrf.mxu0
        %v7977 = vadd.f32 0.0, %v7976
        %7978 = vmatmul.f32.gmra.mxu0 %v7864
        %v7979 = vpop.f32.mrf.mxu0
        %v7980 = vadd.f32 0.0, %v7979
        %7981 = vmatmul.f32.gmra.mxu0 %v7867
        %v7982 = vpop.f32.mrf.mxu0
        %v7983 = vadd.f32 0.0, %v7982
        %7984 = vmatmul.f32.gmra.mxu0 %v7870
        %v7985 = vpop.f32.mrf.mxu0
        %v7986 = vadd.f32 0.0, %v7985
        %7987 = vmatmul.f32.gmra.mxu0 %v7873
        %v7988 = vpop.f32.mrf.mxu0
        %v7989 = vadd.f32 0.0, %v7988
        %7990 = vmatmul.f32.gmra.mxu0 %v7876
        %v7991 = vpop.f32.mrf.mxu0
        %v7992 = vadd.f32 0.0, %v7991
        %7993 = vmatmul.f32.gmra.mxu0 %v7879
        %v7994 = vpop.f32.mrf.mxu0
        %v7995 = vadd.f32 0.0, %v7994
        %7996 = vdwg.mxu0
        %v7997 = vadd.f32 %v7719, %v7902
        %v7998 = vadd.f32 %v7720, %v7905
        %v7999 = vadd.f32 %v7721, %v7908
        %v8000 = vadd.f32 %v7722, %v7911
        %v8001 = vadd.f32 %v7723, %v7914
        %v8002 = vadd.f32 %v7724, %v7917
        %v8003 = vadd.f32 %v7725, %v7920
        %v8004 = vadd.f32 %v7726, %v7923
        %v8005 = vadd.f32 %v7727, %v7926
        %v8006 = vadd.f32 %v7728, %v7929
        %v8007 = vadd.f32 %v7729, %v7932
        %v8008 = vadd.f32 %v7730, %v7935
        %v8009 = vadd.f32 %v7731, %v7938
        %v8010 = vadd.f32 %v7732, %v7941
        %v8011 = vadd.f32 %v7733, %v7944
        %v8012 = vadd.f32 %v7734, %v7947
        %v8013 = vadd.f32 %v7735, %v7950
        %v8014 = vadd.f32 %v7736, %v7953
        %v8015 = vadd.f32 %v7737, %v7956
        %v8016 = vadd.f32 %v7738, %v7959
        %v8017 = vadd.f32 %v7739, %v7962
        %v8018 = vadd.f32 %v7740, %v7965
        %v8019 = vadd.f32 %v7741, %v7968
        %v8020 = vadd.f32 %v7742, %v7971
        %v8021 = vadd.f32 %v7743, %v7974
        %v8022 = vadd.f32 %v7744, %v7977
        %v8023 = vadd.f32 %v7745, %v7980
        %v8024 = vadd.f32 %v7746, %v7983
        %v8025 = vadd.f32 %v7747, %v7986
        %v8026 = vadd.f32 %v7748, %v7989
        %v8027 = vadd.f32 %v7749, %v7992
        %v8028 = vadd.f32 %v7750, %v7995
        %v8029 = vld [vmem:[%s7751 + $0x1] sm:$0xff]
        %v8030 = vld [vmem:[%s7751 + $0x9] sm:$0xff]
        %v8031 = vld [vmem:[%s7751 + $0x19] sm:$0xff]
        %v8032 = vld [vmem:[%s7751 + $0x21] sm:$0xff]
        %v8033 = vld [vmem:[%s7751 + $0x31] sm:$0xff]
        %v8034 = vld [vmem:[%s7751 + $0x39] sm:$0xff]
        %v8035 = vld [vmem:[%s7751 + $0x49] sm:$0xff]
        %v8036 = vld [vmem:[%s7751 + $0x51] sm:$0xff]
        %v8037 = vld [vmem:[%s7751 + $0x61] sm:$0xff]
        %v8038 = vld [vmem:[%s7751 + $0x69] sm:$0xff]
        %v8039 = vld [vmem:[%s7751 + $0x79] sm:$0xff]
        %v8040 = vld [vmem:[%s7751 + $0x81] sm:$0xff]
        %v8041 = vld [vmem:[%s7751 + $0x91] sm:$0xff]
        %v8042 = vld [vmem:[%s7751 + $0x99] sm:$0xff]
        %v8043 = vld [vmem:[%s7751 + $0xa9] sm:$0xff]
        %v8044 = vld [vmem:[%s7751 + $0xb1] sm:$0xff]
        %v8045 = vld [vmem:[%s7751 + $0xc1] sm:$0xff]
        %v8046 = vld [vmem:[%s7751 + $0xc9] sm:$0xff]
        %v8047 = vld [vmem:[%s7751 + $0xd9] sm:$0xff]
        %v8048 = vld [vmem:[%s7751 + $0xe1] sm:$0xff]
        %v8049 = vld [vmem:[%s7751 + $0xf1] sm:$0xff]
        %v8050 = vld [vmem:[%s7751 + $0xf9] sm:$0xff]
        %v8051 = vld [vmem:[%s7751 + $0x109] sm:$0xff]
        %v8052 = vld [vmem:[%s7751 + $0x111] sm:$0xff]
        %v8053 = vld [vmem:[%s7751 + $0x121] sm:$0xff]
        %v8054 = vld [vmem:[%s7751 + $0x129] sm:$0xff]
        %v8055 = vld [vmem:[%s7751 + $0x139] sm:$0xff]
        %v8056 = vld [vmem:[%s7751 + $0x141] sm:$0xff]
        %v8057 = vld [vmem:[%s7751 + $0x151] sm:$0xff]
        %v8058 = vld [vmem:[%s7751 + $0x159] sm:$0xff]
        %v8059 = vld [vmem:[%s7751 + $0x169] sm:$0xff]
        %v8060 = vld [vmem:[%s7751 + $0x171] sm:$0xff]
        %v8061 = vld [vmem:[%s7 + $0x2a] sm:$0x3f]
        %v8063 = vsel %vm668, %v8029, 0
        %v8066 = vsel %vm668, %v8030, 0
        %v8069 = vsel %vm668, %v8031, 0
        %v8072 = vsel %vm668, %v8032, 0
        %v8075 = vsel %vm668, %v8033, 0
        %v8078 = vsel %vm668, %v8034, 0
        %v8081 = vsel %vm668, %v8035, 0
        %v8084 = vsel %vm668, %v8036, 0
        %v8087 = vsel %vm668, %v8037, 0
        %v8090 = vsel %vm668, %v8038, 0
        %v8093 = vsel %vm668, %v8039, 0
        %v8096 = vsel %vm668, %v8040, 0
        %v8099 = vsel %vm668, %v8041, 0
        %v8102 = vsel %vm668, %v8042, 0
        %v8105 = vsel %vm668, %v8043, 0
        %v8108 = vsel %vm668, %v8044, 0
        %v8111 = vsel %vm668, %v8045, 0
        %v8114 = vsel %vm668, %v8046, 0
        %v8117 = vsel %vm668, %v8047, 0
        %v8120 = vsel %vm668, %v8048, 0
        %v8123 = vsel %vm668, %v8049, 0
        %v8126 = vsel %vm668, %v8050, 0
        %v8129 = vsel %vm668, %v8051, 0
        %v8132 = vsel %vm668, %v8052, 0
        %v8135 = vsel %vm668, %v8053, 0
        %v8138 = vsel %vm668, %v8054, 0
        %v8141 = vsel %vm668, %v8055, 0
        %v8144 = vsel %vm668, %v8056, 0
        %v8147 = vsel %vm668, %v8057, 0
        %v8150 = vsel %vm668, %v8058, 0
        %v8153 = vsel %vm668, %v8059, 0
        %v8156 = vsel %vm668, %v8060, 0
        %v8159 = vsel %vm1047, %v8061, 0
        %8161 = vmatpush.msra.mxu0 0.0
        %8162 = vmatpush.msra.mxu0 0.0
        %8163 = vmatpush.msra.mxu0 0.0
        %8164 = vmatpush.msra.mxu0 0.0
        %8165 = vmatpush.msra.mxu0 0.0
        %8166 = vmatpush.msra.mxu0 0.0
        %8167 = vmatpush.msra.mxu0 0.0
        %8168 = vmatpush.msra.mxu0 0.0
        %8169 = vmatpush.msra.mxu0 0.0
        %8170 = vmatpush.msra.mxu0 0.0
        %8171 = vmatpush.msra.mxu0 0.0
        %8172 = vmatpush.msra.mxu0 0.0
        %8173 = vmatpush.msra.mxu0 0.0
        %8174 = vmatpush.msra.mxu0 0.0
        %8175 = vmatpush.msra.mxu0 0.0
        %8176 = vmatpush.msra.mxu0 %v8159
        %8177 = vmatmul.f32.gmra.mxu0 %v8063
        %v8178 = vpop.f32.mrf.mxu0
        %v8179 = vadd.f32 0.0, %v8178
        %8180 = vmatmul.f32.gmra.mxu0 %v8066
        %v8181 = vpop.f32.mrf.mxu0
        %v8182 = vadd.f32 0.0, %v8181
        %8183 = vmatmul.f32.gmra.mxu0 %v8069
        %v8184 = vpop.f32.mrf.mxu0
        %v8185 = vadd.f32 0.0, %v8184
        %8186 = vmatmul.f32.gmra.mxu0 %v8072
        %v8187 = vpop.f32.mrf.mxu0
        %v8188 = vadd.f32 0.0, %v8187
        %8189 = vmatmul.f32.gmra.mxu0 %v8075
        %v8190 = vpop.f32.mrf.mxu0
        %v8191 = vadd.f32 0.0, %v8190
        %8192 = vmatmul.f32.gmra.mxu0 %v8078
        %v8193 = vpop.f32.mrf.mxu0
        %v8194 = vadd.f32 0.0, %v8193
        %8195 = vmatmul.f32.gmra.mxu0 %v8081
        %v8196 = vpop.f32.mrf.mxu0
        %v8197 = vadd.f32 0.0, %v8196
        %8198 = vmatmul.f32.gmra.mxu0 %v8084
        %v8199 = vpop.f32.mrf.mxu0
        %v8200 = vadd.f32 0.0, %v8199
        %8201 = vmatmul.f32.gmra.mxu0 %v8087
        %v8202 = vpop.f32.mrf.mxu0
        %v8203 = vadd.f32 0.0, %v8202
        %8204 = vmatmul.f32.gmra.mxu0 %v8090
        %v8205 = vpop.f32.mrf.mxu0
        %v8206 = vadd.f32 0.0, %v8205
        %8207 = vmatmul.f32.gmra.mxu0 %v8093
        %v8208 = vpop.f32.mrf.mxu0
        %v8209 = vadd.f32 0.0, %v8208
        %8210 = vmatmul.f32.gmra.mxu0 %v8096
        %v8211 = vpop.f32.mrf.mxu0
        %v8212 = vadd.f32 0.0, %v8211
        %8213 = vmatmul.f32.gmra.mxu0 %v8099
        %v8214 = vpop.f32.mrf.mxu0
        %v8215 = vadd.f32 0.0, %v8214
        %8216 = vmatmul.f32.gmra.mxu0 %v8102
        %v8217 = vpop.f32.mrf.mxu0
        %v8218 = vadd.f32 0.0, %v8217
        %8219 = vmatmul.f32.gmra.mxu0 %v8105
        %v8220 = vpop.f32.mrf.mxu0
        %v8221 = vadd.f32 0.0, %v8220
        %8222 = vmatmul.f32.gmra.mxu0 %v8108
        %v8223 = vpop.f32.mrf.mxu0
        %v8224 = vadd.f32 0.0, %v8223
        %8225 = vmatmul.f32.gmra.mxu0 %v8111
        %v8226 = vpop.f32.mrf.mxu0
        %v8227 = vadd.f32 0.0, %v8226
        %8228 = vmatmul.f32.gmra.mxu0 %v8114
        %v8229 = vpop.f32.mrf.mxu0
        %v8230 = vadd.f32 0.0, %v8229
        %8231 = vmatmul.f32.gmra.mxu0 %v8117
        %v8232 = vpop.f32.mrf.mxu0
        %v8233 = vadd.f32 0.0, %v8232
        %8234 = vmatmul.f32.gmra.mxu0 %v8120
        %v8235 = vpop.f32.mrf.mxu0
        %v8236 = vadd.f32 0.0, %v8235
        %8237 = vmatmul.f32.gmra.mxu0 %v8123
        %v8238 = vpop.f32.mrf.mxu0
        %v8239 = vadd.f32 0.0, %v8238
        %8240 = vmatmul.f32.gmra.mxu0 %v8126
        %v8241 = vpop.f32.mrf.mxu0
        %v8242 = vadd.f32 0.0, %v8241
        %8243 = vmatmul.f32.gmra.mxu0 %v8129
        %v8244 = vpop.f32.mrf.mxu0
        %v8245 = vadd.f32 0.0, %v8244
        %8246 = vmatmul.f32.gmra.mxu0 %v8132
        %v8247 = vpop.f32.mrf.mxu0
        %v8248 = vadd.f32 0.0, %v8247
        %8249 = vmatmul.f32.gmra.mxu0 %v8135
        %v8250 = vpop.f32.mrf.mxu0
        %v8251 = vadd.f32 0.0, %v8250
        %8252 = vmatmul.f32.gmra.mxu0 %v8138
        %v8253 = vpop.f32.mrf.mxu0
        %v8254 = vadd.f32 0.0, %v8253
        %8255 = vmatmul.f32.gmra.mxu0 %v8141
        %v8256 = vpop.f32.mrf.mxu0
        %v8257 = vadd.f32 0.0, %v8256
        %8258 = vmatmul.f32.gmra.mxu0 %v8144
        %v8259 = vpop.f32.mrf.mxu0
        %v8260 = vadd.f32 0.0, %v8259
        %8261 = vmatmul.f32.gmra.mxu0 %v8147
        %v8262 = vpop.f32.mrf.mxu0
        %v8263 = vadd.f32 0.0, %v8262
        %8264 = vmatmul.f32.gmra.mxu0 %v8150
        %v8265 = vpop.f32.mrf.mxu0
        %v8266 = vadd.f32 0.0, %v8265
        %8267 = vmatmul.f32.gmra.mxu0 %v8153
        %v8268 = vpop.f32.mrf.mxu0
        %v8269 = vadd.f32 0.0, %v8268
        %8270 = vmatmul.f32.gmra.mxu0 %v8156
        %v8271 = vpop.f32.mrf.mxu0
        %v8272 = vadd.f32 0.0, %v8271
        %8273 = vdwg.mxu0
        %v8274 = vadd.f32 %v7997, %v8179
        %v8275 = vadd.f32 %v7998, %v8182
        %v8276 = vadd.f32 %v7999, %v8185
        %v8277 = vadd.f32 %v8000, %v8188
        %v8278 = vadd.f32 %v8001, %v8191
        %v8279 = vadd.f32 %v8002, %v8194
        %v8280 = vadd.f32 %v8003, %v8197
        %v8281 = vadd.f32 %v8004, %v8200
        %v8282 = vadd.f32 %v8005, %v8203
        %v8283 = vadd.f32 %v8006, %v8206
        %v8284 = vadd.f32 %v8007, %v8209
        %v8285 = vadd.f32 %v8008, %v8212
        %v8286 = vadd.f32 %v8009, %v8215
        %v8287 = vadd.f32 %v8010, %v8218
        %v8288 = vadd.f32 %v8011, %v8221
        %v8289 = vadd.f32 %v8012, %v8224
        %v8290 = vadd.f32 %v8013, %v8227
        %v8291 = vadd.f32 %v8014, %v8230
        %v8292 = vadd.f32 %v8015, %v8233
        %v8293 = vadd.f32 %v8016, %v8236
        %v8294 = vadd.f32 %v8017, %v8239
        %v8295 = vadd.f32 %v8018, %v8242
        %v8296 = vadd.f32 %v8019, %v8245
        %v8297 = vadd.f32 %v8020, %v8248
        %v8298 = vadd.f32 %v8021, %v8251
        %v8299 = vadd.f32 %v8022, %v8254
        %v8300 = vadd.f32 %v8023, %v8257
        %v8301 = vadd.f32 %v8024, %v8260
        %v8302 = vadd.f32 %v8025, %v8263
        %v8303 = vadd.f32 %v8026, %v8266
        %v8304 = vadd.f32 %v8027, %v8269
        %v8305 = vadd.f32 %v8028, %v8272
        %v8306 = vld [vmem:[%s7751 + $0x2] sm:$0xff]
        %v8307 = vld [vmem:[%s7751 + $0xa] sm:$0xff]
        %v8308 = vld [vmem:[%s7751 + $0x1a] sm:$0xff]
        %v8309 = vld [vmem:[%s7751 + $0x22] sm:$0xff]
        %v8310 = vld [vmem:[%s7751 + $0x32] sm:$0xff]
        %v8311 = vld [vmem:[%s7751 + $0x3a] sm:$0xff]
        %v8312 = vld [vmem:[%s7751 + $0x4a] sm:$0xff]
        %v8313 = vld [vmem:[%s7751 + $0x52] sm:$0xff]
        %v8314 = vld [vmem:[%s7751 + $0x62] sm:$0xff]
        %v8315 = vld [vmem:[%s7751 + $0x6a] sm:$0xff]
        %v8316 = vld [vmem:[%s7751 + $0x7a] sm:$0xff]
        %v8317 = vld [vmem:[%s7751 + $0x82] sm:$0xff]
        %v8318 = vld [vmem:[%s7751 + $0x92] sm:$0xff]
        %v8319 = vld [vmem:[%s7751 + $0x9a] sm:$0xff]
        %v8320 = vld [vmem:[%s7751 + $0xaa] sm:$0xff]
        %v8321 = vld [vmem:[%s7751 + $0xb2] sm:$0xff]
        %v8322 = vld [vmem:[%s7751 + $0xc2] sm:$0xff]
        %v8323 = vld [vmem:[%s7751 + $0xca] sm:$0xff]
        %v8324 = vld [vmem:[%s7751 + $0xda] sm:$0xff]
        %v8325 = vld [vmem:[%s7751 + $0xe2] sm:$0xff]
        %v8326 = vld [vmem:[%s7751 + $0xf2] sm:$0xff]
        %v8327 = vld [vmem:[%s7751 + $0xfa] sm:$0xff]
        %v8328 = vld [vmem:[%s7751 + $0x10a] sm:$0xff]
        %v8329 = vld [vmem:[%s7751 + $0x112] sm:$0xff]
        %v8330 = vld [vmem:[%s7751 + $0x122] sm:$0xff]
        %v8331 = vld [vmem:[%s7751 + $0x12a] sm:$0xff]
        %v8332 = vld [vmem:[%s7751 + $0x13a] sm:$0xff]
        %v8333 = vld [vmem:[%s7751 + $0x142] sm:$0xff]
        %v8334 = vld [vmem:[%s7751 + $0x152] sm:$0xff]
        %v8335 = vld [vmem:[%s7751 + $0x15a] sm:$0xff]
        %v8336 = vld [vmem:[%s7751 + $0x16a] sm:$0xff]
        %v8337 = vld [vmem:[%s7751 + $0x172] sm:$0xff]
        %v8338 = vld [vmem:[%s7 + $0x30] sm:$0x3f]
        %v8340 = vsel %vm668, %v8306, 0
        %v8343 = vsel %vm668, %v8307, 0
        %v8346 = vsel %vm668, %v8308, 0
        %v8349 = vsel %vm668, %v8309, 0
        %v8352 = vsel %vm668, %v8310, 0
        %v8355 = vsel %vm668, %v8311, 0
        %v8358 = vsel %vm668, %v8312, 0
        %v8361 = vsel %vm668, %v8313, 0
        %v8364 = vsel %vm668, %v8314, 0
        %v8367 = vsel %vm668, %v8315, 0
        %v8370 = vsel %vm668, %v8316, 0
        %v8373 = vsel %vm668, %v8317, 0
        %v8376 = vsel %vm668, %v8318, 0
        %v8379 = vsel %vm668, %v8319, 0
        %v8382 = vsel %vm668, %v8320, 0
        %v8385 = vsel %vm668, %v8321, 0
        %v8388 = vsel %vm668, %v8322, 0
        %v8391 = vsel %vm668, %v8323, 0
        %v8394 = vsel %vm668, %v8324, 0
        %v8397 = vsel %vm668, %v8325, 0
        %v8400 = vsel %vm668, %v8326, 0
        %v8403 = vsel %vm668, %v8327, 0
        %v8406 = vsel %vm668, %v8328, 0
        %v8409 = vsel %vm668, %v8329, 0
        %v8412 = vsel %vm668, %v8330, 0
        %v8415 = vsel %vm668, %v8331, 0
        %v8418 = vsel %vm668, %v8332, 0
        %v8421 = vsel %vm668, %v8333, 0
        %v8424 = vsel %vm668, %v8334, 0
        %v8427 = vsel %vm668, %v8335, 0
        %v8430 = vsel %vm668, %v8336, 0
        %v8433 = vsel %vm668, %v8337, 0
        %v8436 = vsel %vm1047, %v8338, 0
        %8438 = vmatpush.msra.mxu0 0.0
        %8439 = vmatpush.msra.mxu0 0.0
        %8440 = vmatpush.msra.mxu0 0.0
        %8441 = vmatpush.msra.mxu0 0.0
        %8442 = vmatpush.msra.mxu0 0.0
        %8443 = vmatpush.msra.mxu0 0.0
        %8444 = vmatpush.msra.mxu0 0.0
        %8445 = vmatpush.msra.mxu0 0.0
        %8446 = vmatpush.msra.mxu0 0.0
        %8447 = vmatpush.msra.mxu0 0.0
        %8448 = vmatpush.msra.mxu0 0.0
        %8449 = vmatpush.msra.mxu0 0.0
        %8450 = vmatpush.msra.mxu0 0.0
        %8451 = vmatpush.msra.mxu0 0.0
        %8452 = vmatpush.msra.mxu0 0.0
        %8453 = vmatpush.msra.mxu0 %v8436
        %8454 = vmatmul.f32.gmra.mxu0 %v8340
        %v8455 = vpop.f32.mrf.mxu0
        %v8456 = vadd.f32 0.0, %v8455
        %8457 = vmatmul.f32.gmra.mxu0 %v8343
        %v8458 = vpop.f32.mrf.mxu0
        %v8459 = vadd.f32 0.0, %v8458
        %8460 = vmatmul.f32.gmra.mxu0 %v8346
        %v8461 = vpop.f32.mrf.mxu0
        %v8462 = vadd.f32 0.0, %v8461
        %8463 = vmatmul.f32.gmra.mxu0 %v8349
        %v8464 = vpop.f32.mrf.mxu0
        %v8465 = vadd.f32 0.0, %v8464
        %8466 = vmatmul.f32.gmra.mxu0 %v8352
        %v8467 = vpop.f32.mrf.mxu0
        %v8468 = vadd.f32 0.0, %v8467
        %8469 = vmatmul.f32.gmra.mxu0 %v8355
        %v8470 = vpop.f32.mrf.mxu0
        %v8471 = vadd.f32 0.0, %v8470
        %8472 = vmatmul.f32.gmra.mxu0 %v8358
        %v8473 = vpop.f32.mrf.mxu0
        %v8474 = vadd.f32 0.0, %v8473
        %8475 = vmatmul.f32.gmra.mxu0 %v8361
        %v8476 = vpop.f32.mrf.mxu0
        %v8477 = vadd.f32 0.0, %v8476
        %8478 = vmatmul.f32.gmra.mxu0 %v8364
        %v8479 = vpop.f32.mrf.mxu0
        %v8480 = vadd.f32 0.0, %v8479
        %8481 = vmatmul.f32.gmra.mxu0 %v8367
        %v8482 = vpop.f32.mrf.mxu0
        %v8483 = vadd.f32 0.0, %v8482
        %8484 = vmatmul.f32.gmra.mxu0 %v8370
        %v8485 = vpop.f32.mrf.mxu0
        %v8486 = vadd.f32 0.0, %v8485
        %8487 = vmatmul.f32.gmra.mxu0 %v8373
        %v8488 = vpop.f32.mrf.mxu0
        %v8489 = vadd.f32 0.0, %v8488
        %8490 = vmatmul.f32.gmra.mxu0 %v8376
        %v8491 = vpop.f32.mrf.mxu0
        %v8492 = vadd.f32 0.0, %v8491
        %8493 = vmatmul.f32.gmra.mxu0 %v8379
        %v8494 = vpop.f32.mrf.mxu0
        %v8495 = vadd.f32 0.0, %v8494
        %8496 = vmatmul.f32.gmra.mxu0 %v8382
        %v8497 = vpop.f32.mrf.mxu0
        %v8498 = vadd.f32 0.0, %v8497
        %8499 = vmatmul.f32.gmra.mxu0 %v8385
        %v8500 = vpop.f32.mrf.mxu0
        %v8501 = vadd.f32 0.0, %v8500
        %8502 = vmatmul.f32.gmra.mxu0 %v8388
        %v8503 = vpop.f32.mrf.mxu0
        %v8504 = vadd.f32 0.0, %v8503
        %8505 = vmatmul.f32.gmra.mxu0 %v8391
        %v8506 = vpop.f32.mrf.mxu0
        %v8507 = vadd.f32 0.0, %v8506
        %8508 = vmatmul.f32.gmra.mxu0 %v8394
        %v8509 = vpop.f32.mrf.mxu0
        %v8510 = vadd.f32 0.0, %v8509
        %8511 = vmatmul.f32.gmra.mxu0 %v8397
        %v8512 = vpop.f32.mrf.mxu0
        %v8513 = vadd.f32 0.0, %v8512
        %8514 = vmatmul.f32.gmra.mxu0 %v8400
        %v8515 = vpop.f32.mrf.mxu0
        %v8516 = vadd.f32 0.0, %v8515
        %8517 = vmatmul.f32.gmra.mxu0 %v8403
        %v8518 = vpop.f32.mrf.mxu0
        %v8519 = vadd.f32 0.0, %v8518
        %8520 = vmatmul.f32.gmra.mxu0 %v8406
        %v8521 = vpop.f32.mrf.mxu0
        %v8522 = vadd.f32 0.0, %v8521
        %8523 = vmatmul.f32.gmra.mxu0 %v8409
        %v8524 = vpop.f32.mrf.mxu0
        %v8525 = vadd.f32 0.0, %v8524
        %8526 = vmatmul.f32.gmra.mxu0 %v8412
        %v8527 = vpop.f32.mrf.mxu0
        %v8528 = vadd.f32 0.0, %v8527
        %8529 = vmatmul.f32.gmra.mxu0 %v8415
        %v8530 = vpop.f32.mrf.mxu0
        %v8531 = vadd.f32 0.0, %v8530
        %8532 = vmatmul.f32.gmra.mxu0 %v8418
        %v8533 = vpop.f32.mrf.mxu0
        %v8534 = vadd.f32 0.0, %v8533
        %8535 = vmatmul.f32.gmra.mxu0 %v8421
        %v8536 = vpop.f32.mrf.mxu0
        %v8537 = vadd.f32 0.0, %v8536
        %8538 = vmatmul.f32.gmra.mxu0 %v8424
        %v8539 = vpop.f32.mrf.mxu0
        %v8540 = vadd.f32 0.0, %v8539
        %8541 = vmatmul.f32.gmra.mxu0 %v8427
        %v8542 = vpop.f32.mrf.mxu0
        %v8543 = vadd.f32 0.0, %v8542
        %8544 = vmatmul.f32.gmra.mxu0 %v8430
        %v8545 = vpop.f32.mrf.mxu0
        %v8546 = vadd.f32 0.0, %v8545
        %8547 = vmatmul.f32.gmra.mxu0 %v8433
        %v8548 = vpop.f32.mrf.mxu0
        %v8549 = vadd.f32 0.0, %v8548
        %8550 = vdwg.mxu0
        %v8551 = vadd.f32 %v8274, %v8456
        %v8552 = vadd.f32 %v8275, %v8459
        %v8553 = vadd.f32 %v8276, %v8462
        %v8554 = vadd.f32 %v8277, %v8465
        %v8555 = vadd.f32 %v8278, %v8468
        %v8556 = vadd.f32 %v8279, %v8471
        %v8557 = vadd.f32 %v8280, %v8474
        %v8558 = vadd.f32 %v8281, %v8477
        %v8559 = vadd.f32 %v8282, %v8480
        %v8560 = vadd.f32 %v8283, %v8483
        %v8561 = vadd.f32 %v8284, %v8486
        %v8562 = vadd.f32 %v8285, %v8489
        %v8563 = vadd.f32 %v8286, %v8492
        %v8564 = vadd.f32 %v8287, %v8495
        %v8565 = vadd.f32 %v8288, %v8498
        %v8566 = vadd.f32 %v8289, %v8501
        %v8567 = vadd.f32 %v8290, %v8504
        %v8568 = vadd.f32 %v8291, %v8507
        %v8569 = vadd.f32 %v8292, %v8510
        %v8570 = vadd.f32 %v8293, %v8513
        %v8571 = vadd.f32 %v8294, %v8516
        %v8572 = vadd.f32 %v8295, %v8519
        %v8573 = vadd.f32 %v8296, %v8522
        %v8574 = vadd.f32 %v8297, %v8525
        %v8575 = vadd.f32 %v8298, %v8528
        %v8576 = vadd.f32 %v8299, %v8531
        %v8577 = vadd.f32 %v8300, %v8534
        %v8578 = vadd.f32 %v8301, %v8537
        %v8579 = vadd.f32 %v8302, %v8540
        %v8580 = vadd.f32 %v8303, %v8543
        %v8581 = vadd.f32 %v8304, %v8546
        %v8582 = vadd.f32 %v8305, %v8549
        %v8583 = vld [vmem:[%s8] sm:$0x1]
        %v8585 = vperm.slane %v8583, 0
        %v8587 = vadd.f32 %v8551, %v8585
        %v8588 = vadd.f32 %v8552, %v8585
        %v8589 = vadd.f32 %v8553, %v8585
        %v8590 = vadd.f32 %v8554, %v8585
        %v8591 = vadd.f32 %v8555, %v8585
        %v8592 = vadd.f32 %v8556, %v8585
        %v8593 = vadd.f32 %v8557, %v8585
        %v8594 = vadd.f32 %v8558, %v8585
        %v8595 = vadd.f32 %v8559, %v8585
        %v8596 = vadd.f32 %v8560, %v8585
        %v8597 = vadd.f32 %v8561, %v8585
        %v8598 = vadd.f32 %v8562, %v8585
        %v8599 = vadd.f32 %v8563, %v8585
        %v8600 = vadd.f32 %v8564, %v8585
        %v8601 = vadd.f32 %v8565, %v8585
        %v8602 = vadd.f32 %v8566, %v8585
        %v8603 = vadd.f32 %v8567, %v8585
        %v8604 = vadd.f32 %v8568, %v8585
        %v8605 = vadd.f32 %v8569, %v8585
        %v8606 = vadd.f32 %v8570, %v8585
        %v8607 = vadd.f32 %v8571, %v8585
        %v8608 = vadd.f32 %v8572, %v8585
        %v8609 = vadd.f32 %v8573, %v8585
        %v8610 = vadd.f32 %v8574, %v8585
        %v8611 = vadd.f32 %v8575, %v8585
        %v8612 = vadd.f32 %v8576, %v8585
        %v8613 = vadd.f32 %v8577, %v8585
        %v8614 = vadd.f32 %v8578, %v8585
        %v8615 = vadd.f32 %v8579, %v8585
        %v8616 = vadd.f32 %v8580, %v8585
        %v8617 = vadd.f32 %v8581, %v8585
        %v8618 = vadd.f32 %v8582, %v8585
        %v8619 = vmax.f32 %v8587, 0.0
        %v8620 = vmax.f32 %v8588, 0.0
        %v8621 = vmax.f32 %v8589, 0.0
        %v8622 = vmax.f32 %v8590, 0.0
        %v8623 = vmax.f32 %v8591, 0.0
        %v8624 = vmax.f32 %v8592, 0.0
        %v8625 = vmax.f32 %v8593, 0.0
        %v8626 = vmax.f32 %v8594, 0.0
        %v8627 = vmax.f32 %v8595, 0.0
        %v8628 = vmax.f32 %v8596, 0.0
        %v8629 = vmax.f32 %v8597, 0.0
        %v8630 = vmax.f32 %v8598, 0.0
        %v8631 = vmax.f32 %v8599, 0.0
        %v8632 = vmax.f32 %v8600, 0.0
        %v8633 = vmax.f32 %v8601, 0.0
        %v8634 = vmax.f32 %v8602, 0.0
        %v8635 = vmax.f32 %v8603, 0.0
        %v8636 = vmax.f32 %v8604, 0.0
        %v8637 = vmax.f32 %v8605, 0.0
        %v8638 = vmax.f32 %v8606, 0.0
        %v8639 = vmax.f32 %v8607, 0.0
        %v8640 = vmax.f32 %v8608, 0.0
        %v8641 = vmax.f32 %v8609, 0.0
        %v8642 = vmax.f32 %v8610, 0.0
        %v8643 = vmax.f32 %v8611, 0.0
        %v8644 = vmax.f32 %v8612, 0.0
        %v8645 = vmax.f32 %v8613, 0.0
        %v8646 = vmax.f32 %v8614, 0.0
        %v8647 = vmax.f32 %v8615, 0.0
        %v8648 = vmax.f32 %v8616, 0.0
        %v8649 = vmax.f32 %v8617, 0.0
        %v8650 = vmax.f32 %v8618, 0.0
        %8651 = vst.msk [vmem:[#allocation2] sm:$0xff] %vm422, -inf
        %8652 = vst.msk [vmem:[#allocation2 + $0x8] sm:$0xff] %vm422, -inf
        %8653 = vst.msk [vmem:[#allocation2 + $0x10] sm:$0x3] %vm3386, -inf
        %8654 = vst.msk [vmem:[#allocation2 + $0x18] sm:$0xff] %vm422, -inf
        %8655 = vst.msk [vmem:[#allocation2 + $0x20] sm:$0xff] %vm422, -inf
        %8656 = vst.msk [vmem:[#allocation2 + $0x28] sm:$0x3] %vm3386, -inf
        %8657 = vst.msk [vmem:[#allocation2 + $0x30] sm:$0xff] %vm422, -inf
        %8658 = vst.msk [vmem:[#allocation2 + $0x38] sm:$0xff] %vm422, -inf
        %8659 = vst.msk [vmem:[#allocation2 + $0x40] sm:$0x3] %vm3386, -inf
        %8660 = vst.msk [vmem:[#allocation2 + $0x48] sm:$0xff] %vm422, -inf
        %8661 = vst.msk [vmem:[#allocation2 + $0x50] sm:$0xff] %vm422, -inf
        %8662 = vst.msk [vmem:[#allocation2 + $0x58] sm:$0x3] %vm3386, -inf
        %8663 = vst.msk [vmem:[#allocation2 + $0x60] sm:$0xff] %vm422, -inf
        %8664 = vst.msk [vmem:[#allocation2 + $0x68] sm:$0xff] %vm422, -inf
        %8665 = vst.msk [vmem:[#allocation2 + $0x70] sm:$0x3] %vm3386, -inf
        %8666 = vst.msk [vmem:[#allocation2 + $0x78] sm:$0xff] %vm422, -inf
        %8667 = vst.msk [vmem:[#allocation2 + $0x80] sm:$0xff] %vm422, -inf
        %8668 = vst.msk [vmem:[#allocation2 + $0x88] sm:$0x3] %vm3386, -inf
        %8669 = vst.msk [vmem:[#allocation2 + $0x90] sm:$0xff] %vm422, -inf
        %8670 = vst.msk [vmem:[#allocation2 + $0x98] sm:$0xff] %vm422, -inf
        %8671 = vst.msk [vmem:[#allocation2 + $0xa0] sm:$0x3] %vm3386, -inf
        %8672 = vst.msk [vmem:[#allocation2 + $0xa8] sm:$0xff] %vm422, -inf
        %8673 = vst.msk [vmem:[#allocation2 + $0xb0] sm:$0xff] %vm422, -inf
        %8674 = vst.msk [vmem:[#allocation2 + $0xb8] sm:$0x3] %vm3386, -inf
        %8675 = vst.msk [vmem:[#allocation2 + $0xc0] sm:$0xff] %vm422, -inf
        %8676 = vst.msk [vmem:[#allocation2 + $0xc8] sm:$0xff] %vm422, -inf
        %8677 = vst.msk [vmem:[#allocation2 + $0xd0] sm:$0x3] %vm3386, -inf
        %8678 = vst.msk [vmem:[#allocation2 + $0xd8] sm:$0xff] %vm422, -inf
        %8679 = vst.msk [vmem:[#allocation2 + $0xe0] sm:$0xff] %vm422, -inf
        %8680 = vst.msk [vmem:[#allocation2 + $0xe8] sm:$0x3] %vm3386, -inf
        %8681 = vst.msk [vmem:[#allocation2 + $0xf0] sm:$0xff] %vm422, -inf
        %8682 = vst.msk [vmem:[#allocation2 + $0xf8] sm:$0xff] %vm422, -inf
        %8683 = vst.msk [vmem:[#allocation2 + $0x100] sm:$0x3] %vm3386, -inf
        %8684 = vst.msk [vmem:[#allocation2 + $0x108] sm:$0xff] %vm422, -inf
        %8685 = vst.msk [vmem:[#allocation2 + $0x110] sm:$0xff] %vm422, -inf
        %8686 = vst.msk [vmem:[#allocation2 + $0x118] sm:$0x3] %vm3386, -inf
        %8687 = vst.msk [vmem:[#allocation2 + $0x120] sm:$0xff] %vm422, -inf
        %8688 = vst.msk [vmem:[#allocation2 + $0x128] sm:$0xff] %vm422, -inf
        %8689 = vst.msk [vmem:[#allocation2 + $0x130] sm:$0x3] %vm3386, -inf
        %8690 = vst.msk [vmem:[#allocation2 + $0x138] sm:$0xff] %vm422, -inf
        %8691 = vst.msk [vmem:[#allocation2 + $0x140] sm:$0xff] %vm422, -inf
        %8692 = vst.msk [vmem:[#allocation2 + $0x148] sm:$0x3] %vm3386, -inf
        %8693 = vst.msk [vmem:[#allocation2 + $0x150] sm:$0xff] %vm422, -inf
        %8694 = vst.msk [vmem:[#allocation2 + $0x158] sm:$0xff] %vm422, -inf
        %8695 = vst.msk [vmem:[#allocation2 + $0x160] sm:$0x3] %vm3386, -inf
        %8696 = vst.msk [vmem:[#allocation2 + $0x168] sm:$0xff] %vm422, -inf
        %8697 = vst.msk [vmem:[#allocation2 + $0x170] sm:$0xff] %vm422, -inf
        %8698 = vst.msk [vmem:[#allocation2 + $0x178] sm:$0x3] %vm3386, -inf
        %8699 = vst.msk [vmem:[#allocation2 + $0x180] sm:$0xff] %vm422, -inf
        %8700 = vst.msk [vmem:[#allocation2 + $0x188] sm:$0xff] %vm422, -inf
        %8701 = vst.msk [vmem:[#allocation2 + $0x190] sm:$0x3] %vm3386, -inf
        %8702 = vst.msk [vmem:[#allocation2 + $0x198] sm:$0xff] %vm422, -inf
        %8703 = vst.msk [vmem:[#allocation2 + $0x1a0] sm:$0xff] %vm422, -inf
        %8704 = vst.msk [vmem:[#allocation2 + $0x1a8] sm:$0x3] %vm3386, -inf
        %s8705 = scalar_lea.vmem [#allocation2], 24
        %8706 = vst.msk [vmem:[%s8705 + $0x1] sm:$0xff] %vm422, %v385
        %8707 = vst.msk [vmem:[%s8705 + $0x9] sm:$0xff] %vm422, %v386
        %8708 = vst.msk [vmem:[%s8705 + $0x19] sm:$0xff] %vm422, %v387
        %8709 = vst.msk [vmem:[%s8705 + $0x21] sm:$0xff] %vm422, %v388
        %8710 = vst.msk [vmem:[%s8705 + $0x31] sm:$0xff] %vm422, %v389
        %8711 = vst.msk [vmem:[%s8705 + $0x39] sm:$0xff] %vm422, %v390
        %8712 = vst.msk [vmem:[%s8705 + $0x49] sm:$0xff] %vm422, %v391
        %8713 = vst.msk [vmem:[%s8705 + $0x51] sm:$0xff] %vm422, %v392
        %8714 = vst.msk [vmem:[%s8705 + $0x61] sm:$0xff] %vm422, %v393
        %8715 = vst.msk [vmem:[%s8705 + $0x69] sm:$0xff] %vm422, %v394
        %8716 = vst.msk [vmem:[%s8705 + $0x79] sm:$0xff] %vm422, %v395
        %8717 = vst.msk [vmem:[%s8705 + $0x81] sm:$0xff] %vm422, %v396
        %8718 = vst.msk [vmem:[%s8705 + $0x91] sm:$0xff] %vm422, %v397
        %8719 = vst.msk [vmem:[%s8705 + $0x99] sm:$0xff] %vm422, %v398
        %8720 = vst.msk [vmem:[%s8705 + $0xa9] sm:$0xff] %vm422, %v399
        %8721 = vst.msk [vmem:[%s8705 + $0xb1] sm:$0xff] %vm422, %v400
        %8722 = vst.msk [vmem:[%s8705 + $0xc1] sm:$0xff] %vm422, %v401
        %8723 = vst.msk [vmem:[%s8705 + $0xc9] sm:$0xff] %vm422, %v402
        %8724 = vst.msk [vmem:[%s8705 + $0xd9] sm:$0xff] %vm422, %v403
        %8725 = vst.msk [vmem:[%s8705 + $0xe1] sm:$0xff] %vm422, %v404
        %8726 = vst.msk [vmem:[%s8705 + $0xf1] sm:$0xff] %vm422, %v405
        %8727 = vst.msk [vmem:[%s8705 + $0xf9] sm:$0xff] %vm422, %v406
        %8728 = vst.msk [vmem:[%s8705 + $0x109] sm:$0xff] %vm422, %v407
        %8729 = vst.msk [vmem:[%s8705 + $0x111] sm:$0xff] %vm422, %v408
        %8730 = vst.msk [vmem:[%s8705 + $0x121] sm:$0xff] %vm422, %v409
        %8731 = vst.msk [vmem:[%s8705 + $0x129] sm:$0xff] %vm422, %v410
        %8732 = vst.msk [vmem:[%s8705 + $0x139] sm:$0xff] %vm422, %v411
        %8733 = vst.msk [vmem:[%s8705 + $0x141] sm:$0xff] %vm422, %v412
        %8734 = vst.msk [vmem:[%s8705 + $0x151] sm:$0xff] %vm422, %v413
        %8735 = vst.msk [vmem:[%s8705 + $0x159] sm:$0xff] %vm422, %v414
        %8736 = vst.msk [vmem:[%s8705 + $0x169] sm:$0xff] %vm422, %v415
        %8737 = vst.msk [vmem:[%s8705 + $0x171] sm:$0xff] %vm422, %v416
        %v8738 = vld [vmem:[#allocation2] sm:$0xff]
        %v8739 = vld [vmem:[#allocation2 + $0x8] sm:$0xff]
        %v8740 = vld [vmem:[#allocation2 + $0x18] sm:$0xff]
        %v8741 = vld [vmem:[#allocation2 + $0x20] sm:$0xff]
        %v8742 = vld [vmem:[#allocation2 + $0x30] sm:$0xff]
        %v8743 = vld [vmem:[#allocation2 + $0x38] sm:$0xff]
        %v8744 = vld [vmem:[#allocation2 + $0x48] sm:$0xff]
        %v8745 = vld [vmem:[#allocation2 + $0x50] sm:$0xff]
        %v8746 = vld [vmem:[#allocation2 + $0x60] sm:$0xff]
        %v8747 = vld [vmem:[#allocation2 + $0x68] sm:$0xff]
        %v8748 = vld [vmem:[#allocation2 + $0x78] sm:$0xff]
        %v8749 = vld [vmem:[#allocation2 + $0x80] sm:$0xff]
        %v8750 = vld [vmem:[#allocation2 + $0x90] sm:$0xff]
        %v8751 = vld [vmem:[#allocation2 + $0x98] sm:$0xff]
        %v8752 = vld [vmem:[#allocation2 + $0xa8] sm:$0xff]
        %v8753 = vld [vmem:[#allocation2 + $0xb0] sm:$0xff]
        %v8754 = vld [vmem:[#allocation2 + $0xc0] sm:$0xff]
        %v8755 = vld [vmem:[#allocation2 + $0xc8] sm:$0xff]
        %v8756 = vld [vmem:[#allocation2 + $0xd8] sm:$0xff]
        %v8757 = vld [vmem:[#allocation2 + $0xe0] sm:$0xff]
        %v8758 = vld [vmem:[#allocation2 + $0xf0] sm:$0xff]
        %v8759 = vld [vmem:[#allocation2 + $0xf8] sm:$0xff]
        %v8760 = vld [vmem:[#allocation2 + $0x108] sm:$0xff]
        %v8761 = vld [vmem:[#allocation2 + $0x110] sm:$0xff]
        %v8762 = vld [vmem:[#allocation2 + $0x120] sm:$0xff]
        %v8763 = vld [vmem:[#allocation2 + $0x128] sm:$0xff]
        %v8764 = vld [vmem:[#allocation2 + $0x138] sm:$0xff]
        %v8765 = vld [vmem:[#allocation2 + $0x140] sm:$0xff]
        %v8766 = vld [vmem:[#allocation2 + $0x150] sm:$0xff]
        %v8767 = vld [vmem:[#allocation2 + $0x158] sm:$0xff]
        %v8768 = vld [vmem:[#allocation2 + $0x168] sm:$0xff]
        %v8769 = vld [vmem:[#allocation2 + $0x170] sm:$0xff]
        %v8770 = vmax.f32 %v385, %v8738
        %v8771 = vmax.f32 %v386, %v8739
        %v8772 = vmax.f32 %v387, %v8740
        %v8773 = vmax.f32 %v388, %v8741
        %v8774 = vmax.f32 %v389, %v8742
        %v8775 = vmax.f32 %v390, %v8743
        %v8776 = vmax.f32 %v391, %v8744
        %v8777 = vmax.f32 %v392, %v8745
        %v8778 = vmax.f32 %v393, %v8746
        %v8779 = vmax.f32 %v394, %v8747
        %v8780 = vmax.f32 %v395, %v8748
        %v8781 = vmax.f32 %v396, %v8749
        %v8782 = vmax.f32 %v397, %v8750
        %v8783 = vmax.f32 %v398, %v8751
        %v8784 = vmax.f32 %v399, %v8752
        %v8785 = vmax.f32 %v400, %v8753
        %v8786 = vmax.f32 %v401, %v8754
        %v8787 = vmax.f32 %v402, %v8755
        %v8788 = vmax.f32 %v403, %v8756
        %v8789 = vmax.f32 %v404, %v8757
        %v8790 = vmax.f32 %v405, %v8758
        %v8791 = vmax.f32 %v406, %v8759
        %v8792 = vmax.f32 %v407, %v8760
        %v8793 = vmax.f32 %v408, %v8761
        %v8794 = vmax.f32 %v409, %v8762
        %v8795 = vmax.f32 %v410, %v8763
        %v8796 = vmax.f32 %v411, %v8764
        %v8797 = vmax.f32 %v412, %v8765
        %v8798 = vmax.f32 %v413, %v8766
        %v8799 = vmax.f32 %v414, %v8767
        %v8800 = vmax.f32 %v415, %v8768
        %v8801 = vmax.f32 %v416, %v8769
        %v8802 = vld [vmem:[#allocation2 + $0x1] sm:$0xff]
        %v8803 = vld [vmem:[#allocation2 + $0x9] sm:$0xff]
        %v8804 = vld [vmem:[#allocation2 + $0x19] sm:$0xff]
        %v8805 = vld [vmem:[#allocation2 + $0x21] sm:$0xff]
        %v8806 = vld [vmem:[#allocation2 + $0x31] sm:$0xff]
        %v8807 = vld [vmem:[#allocation2 + $0x39] sm:$0xff]
        %v8808 = vld [vmem:[#allocation2 + $0x49] sm:$0xff]
        %v8809 = vld [vmem:[#allocation2 + $0x51] sm:$0xff]
        %v8810 = vld [vmem:[#allocation2 + $0x61] sm:$0xff]
        %v8811 = vld [vmem:[#allocation2 + $0x69] sm:$0xff]
        %v8812 = vld [vmem:[#allocation2 + $0x79] sm:$0xff]
        %v8813 = vld [vmem:[#allocation2 + $0x81] sm:$0xff]
        %v8814 = vld [vmem:[#allocation2 + $0x91] sm:$0xff]
        %v8815 = vld [vmem:[#allocation2 + $0x99] sm:$0xff]
        %v8816 = vld [vmem:[#allocation2 + $0xa9] sm:$0xff]
        %v8817 = vld [vmem:[#allocation2 + $0xb1] sm:$0xff]
        %v8818 = vld [vmem:[#allocation2 + $0xc1] sm:$0xff]
        %v8819 = vld [vmem:[#allocation2 + $0xc9] sm:$0xff]
        %v8820 = vld [vmem:[#allocation2 + $0xd9] sm:$0xff]
        %v8821 = vld [vmem:[#allocation2 + $0xe1] sm:$0xff]
        %v8822 = vld [vmem:[#allocation2 + $0xf1] sm:$0xff]
        %v8823 = vld [vmem:[#allocation2 + $0xf9] sm:$0xff]
        %v8824 = vld [vmem:[#allocation2 + $0x109] sm:$0xff]
        %v8825 = vld [vmem:[#allocation2 + $0x111] sm:$0xff]
        %v8826 = vld [vmem:[#allocation2 + $0x121] sm:$0xff]
        %v8827 = vld [vmem:[#allocation2 + $0x129] sm:$0xff]
        %v8828 = vld [vmem:[#allocation2 + $0x139] sm:$0xff]
        %v8829 = vld [vmem:[#allocation2 + $0x141] sm:$0xff]
        %v8830 = vld [vmem:[#allocation2 + $0x151] sm:$0xff]
        %v8831 = vld [vmem:[#allocation2 + $0x159] sm:$0xff]
        %v8832 = vld [vmem:[#allocation2 + $0x169] sm:$0xff]
        %v8833 = vld [vmem:[#allocation2 + $0x171] sm:$0xff]
        %v8834 = vmax.f32 %v8770, %v8802
        %v8835 = vmax.f32 %v8771, %v8803
        %v8836 = vmax.f32 %v8772, %v8804
        %v8837 = vmax.f32 %v8773, %v8805
        %v8838 = vmax.f32 %v8774, %v8806
        %v8839 = vmax.f32 %v8775, %v8807
        %v8840 = vmax.f32 %v8776, %v8808
        %v8841 = vmax.f32 %v8777, %v8809
        %v8842 = vmax.f32 %v8778, %v8810
        %v8843 = vmax.f32 %v8779, %v8811
        %v8844 = vmax.f32 %v8780, %v8812
        %v8845 = vmax.f32 %v8781, %v8813
        %v8846 = vmax.f32 %v8782, %v8814
        %v8847 = vmax.f32 %v8783, %v8815
        %v8848 = vmax.f32 %v8784, %v8816
        %v8849 = vmax.f32 %v8785, %v8817
        %v8850 = vmax.f32 %v8786, %v8818
        %v8851 = vmax.f32 %v8787, %v8819
        %v8852 = vmax.f32 %v8788, %v8820
        %v8853 = vmax.f32 %v8789, %v8821
        %v8854 = vmax.f32 %v8790, %v8822
        %v8855 = vmax.f32 %v8791, %v8823
        %v8856 = vmax.f32 %v8792, %v8824
        %v8857 = vmax.f32 %v8793, %v8825
        %v8858 = vmax.f32 %v8794, %v8826
        %v8859 = vmax.f32 %v8795, %v8827
        %v8860 = vmax.f32 %v8796, %v8828
        %v8861 = vmax.f32 %v8797, %v8829
        %v8862 = vmax.f32 %v8798, %v8830
        %v8863 = vmax.f32 %v8799, %v8831
        %v8864 = vmax.f32 %v8800, %v8832
        %v8865 = vmax.f32 %v8801, %v8833
        %v8866 = vld [vmem:[#allocation2 + $0x2] sm:$0xff]
        %v8867 = vld [vmem:[#allocation2 + $0xa] sm:$0xff]
        %v8868 = vld [vmem:[#allocation2 + $0x1a] sm:$0xff]
        %v8869 = vld [vmem:[#allocation2 + $0x22] sm:$0xff]
        %v8870 = vld [vmem:[#allocation2 + $0x32] sm:$0xff]
        %v8871 = vld [vmem:[#allocation2 + $0x3a] sm:$0xff]
        %v8872 = vld [vmem:[#allocation2 + $0x4a] sm:$0xff]
        %v8873 = vld [vmem:[#allocation2 + $0x52] sm:$0xff]
        %v8874 = vld [vmem:[#allocation2 + $0x62] sm:$0xff]
        %v8875 = vld [vmem:[#allocation2 + $0x6a] sm:$0xff]
        %v8876 = vld [vmem:[#allocation2 + $0x7a] sm:$0xff]
        %v8877 = vld [vmem:[#allocation2 + $0x82] sm:$0xff]
        %v8878 = vld [vmem:[#allocation2 + $0x92] sm:$0xff]
        %v8879 = vld [vmem:[#allocation2 + $0x9a] sm:$0xff]
        %v8880 = vld [vmem:[#allocation2 + $0xaa] sm:$0xff]
        %v8881 = vld [vmem:[#allocation2 + $0xb2] sm:$0xff]
        %v8882 = vld [vmem:[#allocation2 + $0xc2] sm:$0xff]
        %v8883 = vld [vmem:[#allocation2 + $0xca] sm:$0xff]
        %v8884 = vld [vmem:[#allocation2 + $0xda] sm:$0xff]
        %v8885 = vld [vmem:[#allocation2 + $0xe2] sm:$0xff]
        %v8886 = vld [vmem:[#allocation2 + $0xf2] sm:$0xff]
        %v8887 = vld [vmem:[#allocation2 + $0xfa] sm:$0xff]
        %v8888 = vld [vmem:[#allocation2 + $0x10a] sm:$0xff]
        %v8889 = vld [vmem:[#allocation2 + $0x112] sm:$0xff]
        %v8890 = vld [vmem:[#allocation2 + $0x122] sm:$0xff]
        %v8891 = vld [vmem:[#allocation2 + $0x12a] sm:$0xff]
        %v8892 = vld [vmem:[#allocation2 + $0x13a] sm:$0xff]
        %v8893 = vld [vmem:[#allocation2 + $0x142] sm:$0xff]
        %v8894 = vld [vmem:[#allocation2 + $0x152] sm:$0xff]
        %v8895 = vld [vmem:[#allocation2 + $0x15a] sm:$0xff]
        %v8896 = vld [vmem:[#allocation2 + $0x16a] sm:$0xff]
        %v8897 = vld [vmem:[#allocation2 + $0x172] sm:$0xff]
        %v8898 = vmax.f32 %v8834, %v8866
        %v8899 = vmax.f32 %v8835, %v8867
        %v8900 = vmax.f32 %v8836, %v8868
        %v8901 = vmax.f32 %v8837, %v8869
        %v8902 = vmax.f32 %v8838, %v8870
        %v8903 = vmax.f32 %v8839, %v8871
        %v8904 = vmax.f32 %v8840, %v8872
        %v8905 = vmax.f32 %v8841, %v8873
        %v8906 = vmax.f32 %v8842, %v8874
        %v8907 = vmax.f32 %v8843, %v8875
        %v8908 = vmax.f32 %v8844, %v8876
        %v8909 = vmax.f32 %v8845, %v8877
        %v8910 = vmax.f32 %v8846, %v8878
        %v8911 = vmax.f32 %v8847, %v8879
        %v8912 = vmax.f32 %v8848, %v8880
        %v8913 = vmax.f32 %v8849, %v8881
        %v8914 = vmax.f32 %v8850, %v8882
        %v8915 = vmax.f32 %v8851, %v8883
        %v8916 = vmax.f32 %v8852, %v8884
        %v8917 = vmax.f32 %v8853, %v8885
        %v8918 = vmax.f32 %v8854, %v8886
        %v8919 = vmax.f32 %v8855, %v8887
        %v8920 = vmax.f32 %v8856, %v8888
        %v8921 = vmax.f32 %v8857, %v8889
        %v8922 = vmax.f32 %v8858, %v8890
        %v8923 = vmax.f32 %v8859, %v8891
        %v8924 = vmax.f32 %v8860, %v8892
        %v8925 = vmax.f32 %v8861, %v8893
        %v8926 = vmax.f32 %v8862, %v8894
        %v8927 = vmax.f32 %v8863, %v8895
        %v8928 = vmax.f32 %v8864, %v8896
        %v8929 = vmax.f32 %v8865, %v8897
        %v8930 = vld [vmem:[%s8705] sm:$0xff]
        %v8931 = vld [vmem:[%s8705 + $0x8] sm:$0xff]
        %v8932 = vld [vmem:[%s8705 + $0x18] sm:$0xff]
        %v8933 = vld [vmem:[%s8705 + $0x20] sm:$0xff]
        %v8934 = vld [vmem:[%s8705 + $0x30] sm:$0xff]
        %v8935 = vld [vmem:[%s8705 + $0x38] sm:$0xff]
        %v8936 = vld [vmem:[%s8705 + $0x48] sm:$0xff]
        %v8937 = vld [vmem:[%s8705 + $0x50] sm:$0xff]
        %v8938 = vld [vmem:[%s8705 + $0x60] sm:$0xff]
        %v8939 = vld [vmem:[%s8705 + $0x68] sm:$0xff]
        %v8940 = vld [vmem:[%s8705 + $0x78] sm:$0xff]
        %v8941 = vld [vmem:[%s8705 + $0x80] sm:$0xff]
        %v8942 = vld [vmem:[%s8705 + $0x90] sm:$0xff]
        %v8943 = vld [vmem:[%s8705 + $0x98] sm:$0xff]
        %v8944 = vld [vmem:[%s8705 + $0xa8] sm:$0xff]
        %v8945 = vld [vmem:[%s8705 + $0xb0] sm:$0xff]
        %v8946 = vld [vmem:[%s8705 + $0xc0] sm:$0xff]
        %v8947 = vld [vmem:[%s8705 + $0xc8] sm:$0xff]
        %v8948 = vld [vmem:[%s8705 + $0xd8] sm:$0xff]
        %v8949 = vld [vmem:[%s8705 + $0xe0] sm:$0xff]
        %v8950 = vld [vmem:[%s8705 + $0xf0] sm:$0xff]
        %v8951 = vld [vmem:[%s8705 + $0xf8] sm:$0xff]
        %v8952 = vld [vmem:[%s8705 + $0x108] sm:$0xff]
        %v8953 = vld [vmem:[%s8705 + $0x110] sm:$0xff]
        %v8954 = vld [vmem:[%s8705 + $0x120] sm:$0xff]
        %v8955 = vld [vmem:[%s8705 + $0x128] sm:$0xff]
        %v8956 = vld [vmem:[%s8705 + $0x138] sm:$0xff]
        %v8957 = vld [vmem:[%s8705 + $0x140] sm:$0xff]
        %v8958 = vld [vmem:[%s8705 + $0x150] sm:$0xff]
        %v8959 = vld [vmem:[%s8705 + $0x158] sm:$0xff]
        %v8960 = vld [vmem:[%s8705 + $0x168] sm:$0xff]
        %v8961 = vld [vmem:[%s8705 + $0x170] sm:$0xff]
        %v8962 = vmax.f32 %v8898, %v8930
        %v8963 = vmax.f32 %v8899, %v8931
        %v8964 = vmax.f32 %v8900, %v8932
        %v8965 = vmax.f32 %v8901, %v8933
        %v8966 = vmax.f32 %v8902, %v8934
        %v8967 = vmax.f32 %v8903, %v8935
        %v8968 = vmax.f32 %v8904, %v8936
        %v8969 = vmax.f32 %v8905, %v8937
        %v8970 = vmax.f32 %v8906, %v8938
        %v8971 = vmax.f32 %v8907, %v8939
        %v8972 = vmax.f32 %v8908, %v8940
        %v8973 = vmax.f32 %v8909, %v8941
        %v8974 = vmax.f32 %v8910, %v8942
        %v8975 = vmax.f32 %v8911, %v8943
        %v8976 = vmax.f32 %v8912, %v8944
        %v8977 = vmax.f32 %v8913, %v8945
        %v8978 = vmax.f32 %v8914, %v8946
        %v8979 = vmax.f32 %v8915, %v8947
        %v8980 = vmax.f32 %v8916, %v8948
        %v8981 = vmax.f32 %v8917, %v8949
        %v8982 = vmax.f32 %v8918, %v8950
        %v8983 = vmax.f32 %v8919, %v8951
        %v8984 = vmax.f32 %v8920, %v8952
        %v8985 = vmax.f32 %v8921, %v8953
        %v8986 = vmax.f32 %v8922, %v8954
        %v8987 = vmax.f32 %v8923, %v8955
        %v8988 = vmax.f32 %v8924, %v8956
        %v8989 = vmax.f32 %v8925, %v8957
        %v8990 = vmax.f32 %v8926, %v8958
        %v8991 = vmax.f32 %v8927, %v8959
        %v8992 = vmax.f32 %v8928, %v8960
        %v8993 = vmax.f32 %v8929, %v8961
        %v8994 = vld [vmem:[%s8705 + $0x2] sm:$0xff]
        %v8995 = vld [vmem:[%s8705 + $0xa] sm:$0xff]
        %v8996 = vld [vmem:[%s8705 + $0x1a] sm:$0xff]
        %v8997 = vld [vmem:[%s8705 + $0x22] sm:$0xff]
        %v8998 = vld [vmem:[%s8705 + $0x32] sm:$0xff]
        %v8999 = vld [vmem:[%s8705 + $0x3a] sm:$0xff]
        %v9000 = vld [vmem:[%s8705 + $0x4a] sm:$0xff]
        %v9001 = vld [vmem:[%s8705 + $0x52] sm:$0xff]
        %v9002 = vld [vmem:[%s8705 + $0x62] sm:$0xff]
        %v9003 = vld [vmem:[%s8705 + $0x6a] sm:$0xff]
        %v9004 = vld [vmem:[%s8705 + $0x7a] sm:$0xff]
        %v9005 = vld [vmem:[%s8705 + $0x82] sm:$0xff]
        %v9006 = vld [vmem:[%s8705 + $0x92] sm:$0xff]
        %v9007 = vld [vmem:[%s8705 + $0x9a] sm:$0xff]
        %v9008 = vld [vmem:[%s8705 + $0xaa] sm:$0xff]
        %v9009 = vld [vmem:[%s8705 + $0xb2] sm:$0xff]
        %v9010 = vld [vmem:[%s8705 + $0xc2] sm:$0xff]
        %v9011 = vld [vmem:[%s8705 + $0xca] sm:$0xff]
        %v9012 = vld [vmem:[%s8705 + $0xda] sm:$0xff]
        %v9013 = vld [vmem:[%s8705 + $0xe2] sm:$0xff]
        %v9014 = vld [vmem:[%s8705 + $0xf2] sm:$0xff]
        %v9015 = vld [vmem:[%s8705 + $0xfa] sm:$0xff]
        %v9016 = vld [vmem:[%s8705 + $0x10a] sm:$0xff]
        %v9017 = vld [vmem:[%s8705 + $0x112] sm:$0xff]
        %v9018 = vld [vmem:[%s8705 + $0x122] sm:$0xff]
        %v9019 = vld [vmem:[%s8705 + $0x12a] sm:$0xff]
        %v9020 = vld [vmem:[%s8705 + $0x13a] sm:$0xff]
        %v9021 = vld [vmem:[%s8705 + $0x142] sm:$0xff]
        %v9022 = vld [vmem:[%s8705 + $0x152] sm:$0xff]
        %v9023 = vld [vmem:[%s8705 + $0x15a] sm:$0xff]
        %v9024 = vld [vmem:[%s8705 + $0x16a] sm:$0xff]
        %v9025 = vld [vmem:[%s8705 + $0x172] sm:$0xff]
        %v9026 = vmax.f32 %v8962, %v8994
        %v9027 = vmax.f32 %v8963, %v8995
        %v9028 = vmax.f32 %v8964, %v8996
        %v9029 = vmax.f32 %v8965, %v8997
        %v9030 = vmax.f32 %v8966, %v8998
        %v9031 = vmax.f32 %v8967, %v8999
        %v9032 = vmax.f32 %v8968, %v9000
        %v9033 = vmax.f32 %v8969, %v9001
        %v9034 = vmax.f32 %v8970, %v9002
        %v9035 = vmax.f32 %v8971, %v9003
        %v9036 = vmax.f32 %v8972, %v9004
        %v9037 = vmax.f32 %v8973, %v9005
        %v9038 = vmax.f32 %v8974, %v9006
        %v9039 = vmax.f32 %v8975, %v9007
        %v9040 = vmax.f32 %v8976, %v9008
        %v9041 = vmax.f32 %v8977, %v9009
        %v9042 = vmax.f32 %v8978, %v9010
        %v9043 = vmax.f32 %v8979, %v9011
        %v9044 = vmax.f32 %v8980, %v9012
        %v9045 = vmax.f32 %v8981, %v9013
        %v9046 = vmax.f32 %v8982, %v9014
        %v9047 = vmax.f32 %v8983, %v9015
        %v9048 = vmax.f32 %v8984, %v9016
        %v9049 = vmax.f32 %v8985, %v9017
        %v9050 = vmax.f32 %v8986, %v9018
        %v9051 = vmax.f32 %v8987, %v9019
        %v9052 = vmax.f32 %v8988, %v9020
        %v9053 = vmax.f32 %v8989, %v9021
        %v9054 = vmax.f32 %v8990, %v9022
        %v9055 = vmax.f32 %v8991, %v9023
        %v9056 = vmax.f32 %v8992, %v9024
        %v9057 = vmax.f32 %v8993, %v9025
        %s9058 = scalar_lea.vmem [#allocation2], 48
        %v9059 = vld [vmem:[%s9058] sm:$0xff]
        %v9060 = vld [vmem:[%s9058 + $0x8] sm:$0xff]
        %v9061 = vld [vmem:[%s9058 + $0x18] sm:$0xff]
        %v9062 = vld [vmem:[%s9058 + $0x20] sm:$0xff]
        %v9063 = vld [vmem:[%s9058 + $0x30] sm:$0xff]
        %v9064 = vld [vmem:[%s9058 + $0x38] sm:$0xff]
        %v9065 = vld [vmem:[%s9058 + $0x48] sm:$0xff]
        %v9066 = vld [vmem:[%s9058 + $0x50] sm:$0xff]
        %v9067 = vld [vmem:[%s9058 + $0x60] sm:$0xff]
        %v9068 = vld [vmem:[%s9058 + $0x68] sm:$0xff]
        %v9069 = vld [vmem:[%s9058 + $0x78] sm:$0xff]
        %v9070 = vld [vmem:[%s9058 + $0x80] sm:$0xff]
        %v9071 = vld [vmem:[%s9058 + $0x90] sm:$0xff]
        %v9072 = vld [vmem:[%s9058 + $0x98] sm:$0xff]
        %v9073 = vld [vmem:[%s9058 + $0xa8] sm:$0xff]
        %v9074 = vld [vmem:[%s9058 + $0xb0] sm:$0xff]
        %v9075 = vld [vmem:[%s9058 + $0xc0] sm:$0xff]
        %v9076 = vld [vmem:[%s9058 + $0xc8] sm:$0xff]
        %v9077 = vld [vmem:[%s9058 + $0xd8] sm:$0xff]
        %v9078 = vld [vmem:[%s9058 + $0xe0] sm:$0xff]
        %v9079 = vld [vmem:[%s9058 + $0xf0] sm:$0xff]
        %v9080 = vld [vmem:[%s9058 + $0xf8] sm:$0xff]
        %v9081 = vld [vmem:[%s9058 + $0x108] sm:$0xff]
        %v9082 = vld [vmem:[%s9058 + $0x110] sm:$0xff]
        %v9083 = vld [vmem:[%s9058 + $0x120] sm:$0xff]
        %v9084 = vld [vmem:[%s9058 + $0x128] sm:$0xff]
        %v9085 = vld [vmem:[%s9058 + $0x138] sm:$0xff]
        %v9086 = vld [vmem:[%s9058 + $0x140] sm:$0xff]
        %v9087 = vld [vmem:[%s9058 + $0x150] sm:$0xff]
        %v9088 = vld [vmem:[%s9058 + $0x158] sm:$0xff]
        %v9089 = vld [vmem:[%s9058 + $0x168] sm:$0xff]
        %v9090 = vld [vmem:[%s9058 + $0x170] sm:$0xff]
        %v9091 = vmax.f32 %v9026, %v9059
        %v9092 = vmax.f32 %v9027, %v9060
        %v9093 = vmax.f32 %v9028, %v9061
        %v9094 = vmax.f32 %v9029, %v9062
        %v9095 = vmax.f32 %v9030, %v9063
        %v9096 = vmax.f32 %v9031, %v9064
        %v9097 = vmax.f32 %v9032, %v9065
        %v9098 = vmax.f32 %v9033, %v9066
        %v9099 = vmax.f32 %v9034, %v9067
        %v9100 = vmax.f32 %v9035, %v9068
        %v9101 = vmax.f32 %v9036, %v9069
        %v9102 = vmax.f32 %v9037, %v9070
        %v9103 = vmax.f32 %v9038, %v9071
        %v9104 = vmax.f32 %v9039, %v9072
        %v9105 = vmax.f32 %v9040, %v9073
        %v9106 = vmax.f32 %v9041, %v9074
        %v9107 = vmax.f32 %v9042, %v9075
        %v9108 = vmax.f32 %v9043, %v9076
        %v9109 = vmax.f32 %v9044, %v9077
        %v9110 = vmax.f32 %v9045, %v9078
        %v9111 = vmax.f32 %v9046, %v9079
        %v9112 = vmax.f32 %v9047, %v9080
        %v9113 = vmax.f32 %v9048, %v9081
        %v9114 = vmax.f32 %v9049, %v9082
        %v9115 = vmax.f32 %v9050, %v9083
        %v9116 = vmax.f32 %v9051, %v9084
        %v9117 = vmax.f32 %v9052, %v9085
        %v9118 = vmax.f32 %v9053, %v9086
        %v9119 = vmax.f32 %v9054, %v9087
        %v9120 = vmax.f32 %v9055, %v9088
        %v9121 = vmax.f32 %v9056, %v9089
        %v9122 = vmax.f32 %v9057, %v9090
        %v9123 = vld [vmem:[%s9058 + $0x1] sm:$0xff]
        %v9124 = vld [vmem:[%s9058 + $0x9] sm:$0xff]
        %v9125 = vld [vmem:[%s9058 + $0x19] sm:$0xff]
        %v9126 = vld [vmem:[%s9058 + $0x21] sm:$0xff]
        %v9127 = vld [vmem:[%s9058 + $0x31] sm:$0xff]
        %v9128 = vld [vmem:[%s9058 + $0x39] sm:$0xff]
        %v9129 = vld [vmem:[%s9058 + $0x49] sm:$0xff]
        %v9130 = vld [vmem:[%s9058 + $0x51] sm:$0xff]
        %v9131 = vld [vmem:[%s9058 + $0x61] sm:$0xff]
        %v9132 = vld [vmem:[%s9058 + $0x69] sm:$0xff]
        %v9133 = vld [vmem:[%s9058 + $0x79] sm:$0xff]
        %v9134 = vld [vmem:[%s9058 + $0x81] sm:$0xff]
        %v9135 = vld [vmem:[%s9058 + $0x91] sm:$0xff]
        %v9136 = vld [vmem:[%s9058 + $0x99] sm:$0xff]
        %v9137 = vld [vmem:[%s9058 + $0xa9] sm:$0xff]
        %v9138 = vld [vmem:[%s9058 + $0xb1] sm:$0xff]
        %v9139 = vld [vmem:[%s9058 + $0xc1] sm:$0xff]
        %v9140 = vld [vmem:[%s9058 + $0xc9] sm:$0xff]
        %v9141 = vld [vmem:[%s9058 + $0xd9] sm:$0xff]
        %v9142 = vld [vmem:[%s9058 + $0xe1] sm:$0xff]
        %v9143 = vld [vmem:[%s9058 + $0xf1] sm:$0xff]
        %v9144 = vld [vmem:[%s9058 + $0xf9] sm:$0xff]
        %v9145 = vld [vmem:[%s9058 + $0x109] sm:$0xff]
        %v9146 = vld [vmem:[%s9058 + $0x111] sm:$0xff]
        %v9147 = vld [vmem:[%s9058 + $0x121] sm:$0xff]
        %v9148 = vld [vmem:[%s9058 + $0x129] sm:$0xff]
        %v9149 = vld [vmem:[%s9058 + $0x139] sm:$0xff]
        %v9150 = vld [vmem:[%s9058 + $0x141] sm:$0xff]
        %v9151 = vld [vmem:[%s9058 + $0x151] sm:$0xff]
        %v9152 = vld [vmem:[%s9058 + $0x159] sm:$0xff]
        %v9153 = vld [vmem:[%s9058 + $0x169] sm:$0xff]
        %v9154 = vld [vmem:[%s9058 + $0x171] sm:$0xff]
        %v9155 = vmax.f32 %v9091, %v9123
        %v9156 = vmax.f32 %v9092, %v9124
        %v9157 = vmax.f32 %v9093, %v9125
        %v9158 = vmax.f32 %v9094, %v9126
        %v9159 = vmax.f32 %v9095, %v9127
        %v9160 = vmax.f32 %v9096, %v9128
        %v9161 = vmax.f32 %v9097, %v9129
        %v9162 = vmax.f32 %v9098, %v9130
        %v9163 = vmax.f32 %v9099, %v9131
        %v9164 = vmax.f32 %v9100, %v9132
        %v9165 = vmax.f32 %v9101, %v9133
        %v9166 = vmax.f32 %v9102, %v9134
        %v9167 = vmax.f32 %v9103, %v9135
        %v9168 = vmax.f32 %v9104, %v9136
        %v9169 = vmax.f32 %v9105, %v9137
        %v9170 = vmax.f32 %v9106, %v9138
        %v9171 = vmax.f32 %v9107, %v9139
        %v9172 = vmax.f32 %v9108, %v9140
        %v9173 = vmax.f32 %v9109, %v9141
        %v9174 = vmax.f32 %v9110, %v9142
        %v9175 = vmax.f32 %v9111, %v9143
        %v9176 = vmax.f32 %v9112, %v9144
        %v9177 = vmax.f32 %v9113, %v9145
        %v9178 = vmax.f32 %v9114, %v9146
        %v9179 = vmax.f32 %v9115, %v9147
        %v9180 = vmax.f32 %v9116, %v9148
        %v9181 = vmax.f32 %v9117, %v9149
        %v9182 = vmax.f32 %v9118, %v9150
        %v9183 = vmax.f32 %v9119, %v9151
        %v9184 = vmax.f32 %v9120, %v9152
        %v9185 = vmax.f32 %v9121, %v9153
        %v9186 = vmax.f32 %v9122, %v9154
        %v9187 = vld [vmem:[%s9058 + $0x2] sm:$0xff]
        %v9188 = vld [vmem:[%s9058 + $0xa] sm:$0xff]
        %v9189 = vld [vmem:[%s9058 + $0x1a] sm:$0xff]
        %v9190 = vld [vmem:[%s9058 + $0x22] sm:$0xff]
        %v9191 = vld [vmem:[%s9058 + $0x32] sm:$0xff]
        %v9192 = vld [vmem:[%s9058 + $0x3a] sm:$0xff]
        %v9193 = vld [vmem:[%s9058 + $0x4a] sm:$0xff]
        %v9194 = vld [vmem:[%s9058 + $0x52] sm:$0xff]
        %v9195 = vld [vmem:[%s9058 + $0x62] sm:$0xff]
        %v9196 = vld [vmem:[%s9058 + $0x6a] sm:$0xff]
        %v9197 = vld [vmem:[%s9058 + $0x7a] sm:$0xff]
        %v9198 = vld [vmem:[%s9058 + $0x82] sm:$0xff]
        %v9199 = vld [vmem:[%s9058 + $0x92] sm:$0xff]
        %v9200 = vld [vmem:[%s9058 + $0x9a] sm:$0xff]
        %v9201 = vld [vmem:[%s9058 + $0xaa] sm:$0xff]
        %v9202 = vld [vmem:[%s9058 + $0xb2] sm:$0xff]
        %v9203 = vld [vmem:[%s9058 + $0xc2] sm:$0xff]
        %v9204 = vld [vmem:[%s9058 + $0xca] sm:$0xff]
        %v9205 = vld [vmem:[%s9058 + $0xda] sm:$0xff]
        %v9206 = vld [vmem:[%s9058 + $0xe2] sm:$0xff]
        %v9207 = vld [vmem:[%s9058 + $0xf2] sm:$0xff]
        %v9208 = vld [vmem:[%s9058 + $0xfa] sm:$0xff]
        %v9209 = vld [vmem:[%s9058 + $0x10a] sm:$0xff]
        %v9210 = vld [vmem:[%s9058 + $0x112] sm:$0xff]
        %v9211 = vld [vmem:[%s9058 + $0x122] sm:$0xff]
        %v9212 = vld [vmem:[%s9058 + $0x12a] sm:$0xff]
        %v9213 = vld [vmem:[%s9058 + $0x13a] sm:$0xff]
        %v9214 = vld [vmem:[%s9058 + $0x142] sm:$0xff]
        %v9215 = vld [vmem:[%s9058 + $0x152] sm:$0xff]
        %v9216 = vld [vmem:[%s9058 + $0x15a] sm:$0xff]
        %v9217 = vld [vmem:[%s9058 + $0x16a] sm:$0xff]
        %v9218 = vld [vmem:[%s9058 + $0x172] sm:$0xff]
        %v9219 = vmax.f32 %v9155, %v9187
        %v9220 = vmax.f32 %v9156, %v9188
        %v9221 = vmax.f32 %v9157, %v9189
        %v9222 = vmax.f32 %v9158, %v9190
        %v9223 = vmax.f32 %v9159, %v9191
        %v9224 = vmax.f32 %v9160, %v9192
        %v9225 = vmax.f32 %v9161, %v9193
        %v9226 = vmax.f32 %v9162, %v9194
        %v9227 = vmax.f32 %v9163, %v9195
        %v9228 = vmax.f32 %v9164, %v9196
        %v9229 = vmax.f32 %v9165, %v9197
        %v9230 = vmax.f32 %v9166, %v9198
        %v9231 = vmax.f32 %v9167, %v9199
        %v9232 = vmax.f32 %v9168, %v9200
        %v9233 = vmax.f32 %v9169, %v9201
        %v9234 = vmax.f32 %v9170, %v9202
        %v9235 = vmax.f32 %v9171, %v9203
        %v9236 = vmax.f32 %v9172, %v9204
        %v9237 = vmax.f32 %v9173, %v9205
        %v9238 = vmax.f32 %v9174, %v9206
        %v9239 = vmax.f32 %v9175, %v9207
        %v9240 = vmax.f32 %v9176, %v9208
        %v9241 = vmax.f32 %v9177, %v9209
        %v9242 = vmax.f32 %v9178, %v9210
        %v9243 = vmax.f32 %v9179, %v9211
        %v9244 = vmax.f32 %v9180, %v9212
        %v9245 = vmax.f32 %v9181, %v9213
        %v9246 = vmax.f32 %v9182, %v9214
        %v9247 = vmax.f32 %v9183, %v9215
        %v9248 = vmax.f32 %v9184, %v9216
        %v9249 = vmax.f32 %v9185, %v9217
        %v9250 = vmax.f32 %v9186, %v9218
        %v9251 = vld [vmem:[%s9] sm:$0xf]
        %v9252 = vld [vmem:[%s10] sm:$0x1]
        %v9254 = vperm.slane %v9252, 0
        %v9257 = vsel %vm422, %v9219, 0
        %v9260 = vsel %vm422, %v9220, 0
        %v9263 = vsel %vm422, %v9221, 0
        %v9266 = vsel %vm422, %v9222, 0
        %v9269 = vsel %vm422, %v9223, 0
        %v9272 = vsel %vm422, %v9224, 0
        %v9275 = vsel %vm422, %v9225, 0
        %v9278 = vsel %vm422, %v9226, 0
        %v9281 = vsel %vm422, %v9227, 0
        %v9284 = vsel %vm422, %v9228, 0
        %v9287 = vsel %vm422, %v9229, 0
        %v9290 = vsel %vm422, %v9230, 0
        %v9293 = vsel %vm422, %v9231, 0
        %v9296 = vsel %vm422, %v9232, 0
        %v9299 = vsel %vm422, %v9233, 0
        %v9302 = vsel %vm422, %v9234, 0
        %v9305 = vsel %vm422, %v9235, 0
        %v9308 = vsel %vm422, %v9236, 0
        %v9311 = vsel %vm422, %v9237, 0
        %v9314 = vsel %vm422, %v9238, 0
        %v9317 = vsel %vm422, %v9239, 0
        %v9320 = vsel %vm422, %v9240, 0
        %v9323 = vsel %vm422, %v9241, 0
        %v9326 = vsel %vm422, %v9242, 0
        %v9329 = vsel %vm422, %v9243, 0
        %v9332 = vsel %vm422, %v9244, 0
        %v9335 = vsel %vm422, %v9245, 0
        %v9338 = vsel %vm422, %v9246, 0
        %v9341 = vsel %vm422, %v9247, 0
        %v9344 = vsel %vm422, %v9248, 0
        %v9347 = vsel %vm422, %v9249, 0
        %v9350 = vsel %vm422, %v9250, 0
        %v9353 = vsel %vm519, %v9251, 0
        %9355 = vmatpush.msra.mxu0 0.0
        %9356 = vmatpush.msra.mxu0 0.0
        %9357 = vmatpush.msra.mxu0 0.0
        %9358 = vmatpush.msra.mxu0 0.0
        %9359 = vmatpush.msra.mxu0 0.0
        %9360 = vmatpush.msra.mxu0 0.0
        %9361 = vmatpush.msra.mxu0 0.0
        %9362 = vmatpush.msra.mxu0 0.0
        %9363 = vmatpush.msra.mxu0 0.0
        %9364 = vmatpush.msra.mxu0 0.0
        %9365 = vmatpush.msra.mxu0 0.0
        %9366 = vmatpush.msra.mxu0 0.0
        %9367 = vmatpush.msra.mxu0 0.0
        %9368 = vmatpush.msra.mxu0 0.0
        %9369 = vmatpush.msra.mxu0 0.0
        %9370 = vmatpush.msra.mxu0 %v9353
        %9371 = vmatmul.f32.gmra.mxu0 %v9257
        %v9372 = vpop.f32.mrf.mxu0
        %v9373 = vadd.f32 %v9254, %v9372
        %9374 = vmatmul.f32.gmra.mxu0 %v9260
        %v9375 = vpop.f32.mrf.mxu0
        %v9376 = vadd.f32 %v9254, %v9375
        %9377 = vmatmul.f32.gmra.mxu0 %v9263
        %v9378 = vpop.f32.mrf.mxu0
        %v9379 = vadd.f32 %v9254, %v9378
        %9380 = vmatmul.f32.gmra.mxu0 %v9266
        %v9381 = vpop.f32.mrf.mxu0
        %v9382 = vadd.f32 %v9254, %v9381
        %9383 = vmatmul.f32.gmra.mxu0 %v9269
        %v9384 = vpop.f32.mrf.mxu0
        %v9385 = vadd.f32 %v9254, %v9384
        %9386 = vmatmul.f32.gmra.mxu0 %v9272
        %v9387 = vpop.f32.mrf.mxu0
        %v9388 = vadd.f32 %v9254, %v9387
        %9389 = vmatmul.f32.gmra.mxu0 %v9275
        %v9390 = vpop.f32.mrf.mxu0
        %v9391 = vadd.f32 %v9254, %v9390
        %9392 = vmatmul.f32.gmra.mxu0 %v9278
        %v9393 = vpop.f32.mrf.mxu0
        %v9394 = vadd.f32 %v9254, %v9393
        %9395 = vmatmul.f32.gmra.mxu0 %v9281
        %v9396 = vpop.f32.mrf.mxu0
        %v9397 = vadd.f32 %v9254, %v9396
        %9398 = vmatmul.f32.gmra.mxu0 %v9284
        %v9399 = vpop.f32.mrf.mxu0
        %v9400 = vadd.f32 %v9254, %v9399
        %9401 = vmatmul.f32.gmra.mxu0 %v9287
        %v9402 = vpop.f32.mrf.mxu0
        %v9403 = vadd.f32 %v9254, %v9402
        %9404 = vmatmul.f32.gmra.mxu0 %v9290
        %v9405 = vpop.f32.mrf.mxu0
        %v9406 = vadd.f32 %v9254, %v9405
        %9407 = vmatmul.f32.gmra.mxu0 %v9293
        %v9408 = vpop.f32.mrf.mxu0
        %v9409 = vadd.f32 %v9254, %v9408
        %9410 = vmatmul.f32.gmra.mxu0 %v9296
        %v9411 = vpop.f32.mrf.mxu0
        %v9412 = vadd.f32 %v9254, %v9411
        %9413 = vmatmul.f32.gmra.mxu0 %v9299
        %v9414 = vpop.f32.mrf.mxu0
        %v9415 = vadd.f32 %v9254, %v9414
        %9416 = vmatmul.f32.gmra.mxu0 %v9302
        %v9417 = vpop.f32.mrf.mxu0
        %v9418 = vadd.f32 %v9254, %v9417
        %9419 = vmatmul.f32.gmra.mxu0 %v9305
        %v9420 = vpop.f32.mrf.mxu0
        %v9421 = vadd.f32 %v9254, %v9420
        %9422 = vmatmul.f32.gmra.mxu0 %v9308
        %v9423 = vpop.f32.mrf.mxu0
        %v9424 = vadd.f32 %v9254, %v9423
        %9425 = vmatmul.f32.gmra.mxu0 %v9311
        %v9426 = vpop.f32.mrf.mxu0
        %v9427 = vadd.f32 %v9254, %v9426
        %9428 = vmatmul.f32.gmra.mxu0 %v9314
        %v9429 = vpop.f32.mrf.mxu0
        %v9430 = vadd.f32 %v9254, %v9429
        %9431 = vmatmul.f32.gmra.mxu0 %v9317
        %v9432 = vpop.f32.mrf.mxu0
        %v9433 = vadd.f32 %v9254, %v9432
        %9434 = vmatmul.f32.gmra.mxu0 %v9320
        %v9435 = vpop.f32.mrf.mxu0
        %v9436 = vadd.f32 %v9254, %v9435
        %9437 = vmatmul.f32.gmra.mxu0 %v9323
        %v9438 = vpop.f32.mrf.mxu0
        %v9439 = vadd.f32 %v9254, %v9438
        %9440 = vmatmul.f32.gmra.mxu0 %v9326
        %v9441 = vpop.f32.mrf.mxu0
        %v9442 = vadd.f32 %v9254, %v9441
        %9443 = vmatmul.f32.gmra.mxu0 %v9329
        %v9444 = vpop.f32.mrf.mxu0
        %v9445 = vadd.f32 %v9254, %v9444
        %9446 = vmatmul.f32.gmra.mxu0 %v9332
        %v9447 = vpop.f32.mrf.mxu0
        %v9448 = vadd.f32 %v9254, %v9447
        %9449 = vmatmul.f32.gmra.mxu0 %v9335
        %v9450 = vpop.f32.mrf.mxu0
        %v9451 = vadd.f32 %v9254, %v9450
        %9452 = vmatmul.f32.gmra.mxu0 %v9338
        %v9453 = vpop.f32.mrf.mxu0
        %v9454 = vadd.f32 %v9254, %v9453
        %9455 = vmatmul.f32.gmra.mxu0 %v9341
        %v9456 = vpop.f32.mrf.mxu0
        %v9457 = vadd.f32 %v9254, %v9456
        %9458 = vmatmul.f32.gmra.mxu0 %v9344
        %v9459 = vpop.f32.mrf.mxu0
        %v9460 = vadd.f32 %v9254, %v9459
        %9461 = vmatmul.f32.gmra.mxu0 %v9347
        %v9462 = vpop.f32.mrf.mxu0
        %v9463 = vadd.f32 %v9254, %v9462
        %9464 = vmatmul.f32.gmra.mxu0 %v9350
        %v9465 = vpop.f32.mrf.mxu0
        %v9466 = vadd.f32 %v9254, %v9465
        %9467 = vdwg.mxu0
        %v9468 = vmax.f32 %v9373, 0.0
        %v9469 = vmax.f32 %v9376, 0.0
        %v9470 = vmax.f32 %v9379, 0.0
        %v9471 = vmax.f32 %v9382, 0.0
        %v9472 = vmax.f32 %v9385, 0.0
        %v9473 = vmax.f32 %v9388, 0.0
        %v9474 = vmax.f32 %v9391, 0.0
        %v9475 = vmax.f32 %v9394, 0.0
        %v9476 = vmax.f32 %v9397, 0.0
        %v9477 = vmax.f32 %v9400, 0.0
        %v9478 = vmax.f32 %v9403, 0.0
        %v9479 = vmax.f32 %v9406, 0.0
        %v9480 = vmax.f32 %v9409, 0.0
        %v9481 = vmax.f32 %v9412, 0.0
        %v9482 = vmax.f32 %v9415, 0.0
        %v9483 = vmax.f32 %v9418, 0.0
        %v9484 = vmax.f32 %v9421, 0.0
        %v9485 = vmax.f32 %v9424, 0.0
        %v9486 = vmax.f32 %v9427, 0.0
        %v9487 = vmax.f32 %v9430, 0.0
        %v9488 = vmax.f32 %v9433, 0.0
        %v9489 = vmax.f32 %v9436, 0.0
        %v9490 = vmax.f32 %v9439, 0.0
        %v9491 = vmax.f32 %v9442, 0.0
        %v9492 = vmax.f32 %v9445, 0.0
        %v9493 = vmax.f32 %v9448, 0.0
        %v9494 = vmax.f32 %v9451, 0.0
        %v9495 = vmax.f32 %v9454, 0.0
        %v9496 = vmax.f32 %v9457, 0.0
        %v9497 = vmax.f32 %v9460, 0.0
        %v9498 = vmax.f32 %v9463, 0.0
        %v9499 = vmax.f32 %v9466, 0.0
        %vm9500 = vcmask 64512
        %9501 = vst.msk [vmem:[%s379] sm:$0xff] %vm9500, %v636
        %9502 = vst.msk [vmem:[%s379 + $0x8] sm:$0xff] %vm9500, %v637
        %9503 = vst.msk [vmem:[%s379 + $0x10] sm:$0xff] %vm9500, %v638
        %9504 = vst.msk [vmem:[%s379 + $0x18] sm:$0xff] %vm9500, %v639
        %9505 = vst.msk [vmem:[%s379 + $0x20] sm:$0xff] %vm9500, %v640
        %9506 = vst.msk [vmem:[%s379 + $0x28] sm:$0xff] %vm9500, %v641
        %9507 = vst.msk [vmem:[%s379 + $0x30] sm:$0xff] %vm9500, %v642
        %9508 = vst.msk [vmem:[%s379 + $0x38] sm:$0xff] %vm9500, %v643
        %9509 = vst.msk [vmem:[%s379 + $0x40] sm:$0xff] %vm9500, %v644
        %9510 = vst.msk [vmem:[%s379 + $0x48] sm:$0xff] %vm9500, %v645
        %9511 = vst.msk [vmem:[%s379 + $0x50] sm:$0xff] %vm9500, %v646
        %9512 = vst.msk [vmem:[%s379 + $0x58] sm:$0xff] %vm9500, %v647
        %9513 = vst.msk [vmem:[%s379 + $0x60] sm:$0xff] %vm9500, %v648
        %9514 = vst.msk [vmem:[%s379 + $0x68] sm:$0xff] %vm9500, %v649
        %9515 = vst.msk [vmem:[%s379 + $0x70] sm:$0xff] %vm9500, %v650
        %9516 = vst.msk [vmem:[%s379 + $0x78] sm:$0xff] %vm9500, %v651
        %9517 = vst.msk [vmem:[%s379 + $0x80] sm:$0xff] %vm9500, %v652
        %9518 = vst.msk [vmem:[%s379 + $0x88] sm:$0xff] %vm9500, %v653
        %9519 = vst.msk [vmem:[%s379 + $0x90] sm:$0xff] %vm9500, %v654
        %9520 = vst.msk [vmem:[%s379 + $0x98] sm:$0xff] %vm9500, %v655
        %9521 = vst.msk [vmem:[%s379 + $0xa0] sm:$0xff] %vm9500, %v656
        %9522 = vst.msk [vmem:[%s379 + $0xa8] sm:$0xff] %vm9500, %v657
        %9523 = vst.msk [vmem:[%s379 + $0xb0] sm:$0xff] %vm9500, %v658
        %9524 = vst.msk [vmem:[%s379 + $0xb8] sm:$0xff] %vm9500, %v659
        %9525 = vst.msk [vmem:[%s379 + $0xc0] sm:$0xff] %vm9500, %v660
        %9526 = vst.msk [vmem:[%s379 + $0xc8] sm:$0xff] %vm9500, %v661
        %9527 = vst.msk [vmem:[%s379 + $0xd0] sm:$0xff] %vm9500, %v662
        %9528 = vst.msk [vmem:[%s379 + $0xd8] sm:$0xff] %vm9500, %v663
        %9529 = vst.msk [vmem:[%s379 + $0xe0] sm:$0xff] %vm9500, %v664
        %9530 = vst.msk [vmem:[%s379 + $0xe8] sm:$0xff] %vm9500, %v665
        %9531 = vst.msk [vmem:[%s379 + $0xf0] sm:$0xff] %vm9500, %v666
        %9532 = vst.msk [vmem:[%s379 + $0xf8] sm:$0xff] %vm9500, %v667
        %9565 = vrot.lane.b32.xlu0 %v3352, 8
        %v9566 = vpop.permute.xlu0 %9565
        %9567 = vrot.lane.b32.xlu0 %v3353, 8
        %v9568 = vpop.permute.xlu0 %9567
        %9569 = vrot.lane.b32.xlu0 %v3354, 8
        %v9570 = vpop.permute.xlu0 %9569
        %9571 = vrot.lane.b32.xlu0 %v3355, 8
        %v9572 = vpop.permute.xlu0 %9571
        %9573 = vrot.lane.b32.xlu0 %v3356, 8
        %v9574 = vpop.permute.xlu0 %9573
        %9575 = vrot.lane.b32.xlu0 %v3357, 8
        %v9576 = vpop.permute.xlu0 %9575
        %9577 = vrot.lane.b32.xlu0 %v3358, 8
        %v9578 = vpop.permute.xlu0 %9577
        %9579 = vrot.lane.b32.xlu0 %v3359, 8
        %v9580 = vpop.permute.xlu0 %9579
        %9581 = vrot.lane.b32.xlu0 %v3360, 8
        %v9582 = vpop.permute.xlu0 %9581
        %9583 = vrot.lane.b32.xlu0 %v3361, 8
        %v9584 = vpop.permute.xlu0 %9583
        %9585 = vrot.lane.b32.xlu0 %v3362, 8
        %v9586 = vpop.permute.xlu0 %9585
        %9587 = vrot.lane.b32.xlu0 %v3363, 8
        %v9588 = vpop.permute.xlu0 %9587
        %9589 = vrot.lane.b32.xlu0 %v3364, 8
        %v9590 = vpop.permute.xlu0 %9589
        %9591 = vrot.lane.b32.xlu0 %v3365, 8
        %v9592 = vpop.permute.xlu0 %9591
        %9593 = vrot.lane.b32.xlu0 %v3366, 8
        %v9594 = vpop.permute.xlu0 %9593
        %9595 = vrot.lane.b32.xlu0 %v3367, 8
        %v9596 = vpop.permute.xlu0 %9595
        %9597 = vrot.lane.b32.xlu0 %v3368, 8
        %v9598 = vpop.permute.xlu0 %9597
        %9599 = vrot.lane.b32.xlu0 %v3369, 8
        %v9600 = vpop.permute.xlu0 %9599
        %9601 = vrot.lane.b32.xlu0 %v3370, 8
        %v9602 = vpop.permute.xlu0 %9601
        %9603 = vrot.lane.b32.xlu0 %v3371, 8
        %v9604 = vpop.permute.xlu0 %9603
        %9605 = vrot.lane.b32.xlu0 %v3372, 8
        %v9606 = vpop.permute.xlu0 %9605
        %9607 = vrot.lane.b32.xlu0 %v3373, 8
        %v9608 = vpop.permute.xlu0 %9607
        %9609 = vrot.lane.b32.xlu0 %v3374, 8
        %v9610 = vpop.permute.xlu0 %9609
        %9611 = vrot.lane.b32.xlu0 %v3375, 8
        %v9612 = vpop.permute.xlu0 %9611
        %9613 = vrot.lane.b32.xlu0 %v3376, 8
        %v9614 = vpop.permute.xlu0 %9613
        %9615 = vrot.lane.b32.xlu0 %v3377, 8
        %v9616 = vpop.permute.xlu0 %9615
        %9617 = vrot.lane.b32.xlu0 %v3378, 8
        %v9618 = vpop.permute.xlu0 %9617
        %9619 = vrot.lane.b32.xlu0 %v3379, 8
        %v9620 = vpop.permute.xlu0 %9619
        %9621 = vrot.lane.b32.xlu0 %v3380, 8
        %v9622 = vpop.permute.xlu0 %9621
        %9623 = vrot.lane.b32.xlu0 %v3381, 8
        %v9624 = vpop.permute.xlu0 %9623
        %9625 = vrot.lane.b32.xlu0 %v3382, 8
        %v9626 = vpop.permute.xlu0 %9625
        %9627 = vrot.lane.b32.xlu0 %v3383, 8
        %v9628 = vpop.permute.xlu0 %9627
        %vm9661 = vcmask 130112
        %9662 = vst.msk [vmem:[%s379] sm:$0xff] %vm9661, %v9566
        %9663 = vst.msk [vmem:[%s379 + $0x8] sm:$0xff] %vm9661, %v9568
        %9664 = vst.msk [vmem:[%s379 + $0x10] sm:$0xff] %vm9661, %v9570
        %9665 = vst.msk [vmem:[%s379 + $0x18] sm:$0xff] %vm9661, %v9572
        %9666 = vst.msk [vmem:[%s379 + $0x20] sm:$0xff] %vm9661, %v9574
        %9667 = vst.msk [vmem:[%s379 + $0x28] sm:$0xff] %vm9661, %v9576
        %9668 = vst.msk [vmem:[%s379 + $0x30] sm:$0xff] %vm9661, %v9578
        %9669 = vst.msk [vmem:[%s379 + $0x38] sm:$0xff] %vm9661, %v9580
        %9670 = vst.msk [vmem:[%s379 + $0x40] sm:$0xff] %vm9661, %v9582
        %9671 = vst.msk [vmem:[%s379 + $0x48] sm:$0xff] %vm9661, %v9584
        %9672 = vst.msk [vmem:[%s379 + $0x50] sm:$0xff] %vm9661, %v9586
        %9673 = vst.msk [vmem:[%s379 + $0x58] sm:$0xff] %vm9661, %v9588
        %9674 = vst.msk [vmem:[%s379 + $0x60] sm:$0xff] %vm9661, %v9590
        %9675 = vst.msk [vmem:[%s379 + $0x68] sm:$0xff] %vm9661, %v9592
        %9676 = vst.msk [vmem:[%s379 + $0x70] sm:$0xff] %vm9661, %v9594
        %9677 = vst.msk [vmem:[%s379 + $0x78] sm:$0xff] %vm9661, %v9596
        %9678 = vst.msk [vmem:[%s379 + $0x80] sm:$0xff] %vm9661, %v9598
        %9679 = vst.msk [vmem:[%s379 + $0x88] sm:$0xff] %vm9661, %v9600
        %9680 = vst.msk [vmem:[%s379 + $0x90] sm:$0xff] %vm9661, %v9602
        %9681 = vst.msk [vmem:[%s379 + $0x98] sm:$0xff] %vm9661, %v9604
        %9682 = vst.msk [vmem:[%s379 + $0xa0] sm:$0xff] %vm9661, %v9606
        %9683 = vst.msk [vmem:[%s379 + $0xa8] sm:$0xff] %vm9661, %v9608
        %9684 = vst.msk [vmem:[%s379 + $0xb0] sm:$0xff] %vm9661, %v9610
        %9685 = vst.msk [vmem:[%s379 + $0xb8] sm:$0xff] %vm9661, %v9612
        %9686 = vst.msk [vmem:[%s379 + $0xc0] sm:$0xff] %vm9661, %v9614
        %9687 = vst.msk [vmem:[%s379 + $0xc8] sm:$0xff] %vm9661, %v9616
        %9688 = vst.msk [vmem:[%s379 + $0xd0] sm:$0xff] %vm9661, %v9618
        %9689 = vst.msk [vmem:[%s379 + $0xd8] sm:$0xff] %vm9661, %v9620
        %9690 = vst.msk [vmem:[%s379 + $0xe0] sm:$0xff] %vm9661, %v9622
        %9691 = vst.msk [vmem:[%s379 + $0xe8] sm:$0xff] %vm9661, %v9624
        %9692 = vst.msk [vmem:[%s379 + $0xf0] sm:$0xff] %vm9661, %v9626
        %9693 = vst.msk [vmem:[%s379 + $0xf8] sm:$0xff] %vm9661, %v9628
        %9726 = vrot.lane.b32.xlu0 %v8619, 16
        %v9727 = vpop.permute.xlu0 %9726
        %9728 = vrot.lane.b32.xlu0 %v8620, 16
        %v9729 = vpop.permute.xlu0 %9728
        %9730 = vrot.lane.b32.xlu0 %v8621, 16
        %v9731 = vpop.permute.xlu0 %9730
        %9732 = vrot.lane.b32.xlu0 %v8622, 16
        %v9733 = vpop.permute.xlu0 %9732
        %9734 = vrot.lane.b32.xlu0 %v8623, 16
        %v9735 = vpop.permute.xlu0 %9734
        %9736 = vrot.lane.b32.xlu0 %v8624, 16
        %v9737 = vpop.permute.xlu0 %9736
        %9738 = vrot.lane.b32.xlu0 %v8625, 16
        %v9739 = vpop.permute.xlu0 %9738
        %9740 = vrot.lane.b32.xlu0 %v8626, 16
        %v9741 = vpop.permute.xlu0 %9740
        %9742 = vrot.lane.b32.xlu0 %v8627, 16
        %v9743 = vpop.permute.xlu0 %9742
        %9744 = vrot.lane.b32.xlu0 %v8628, 16
        %v9745 = vpop.permute.xlu0 %9744
        %9746 = vrot.lane.b32.xlu0 %v8629, 16
        %v9747 = vpop.permute.xlu0 %9746
        %9748 = vrot.lane.b32.xlu0 %v8630, 16
        %v9749 = vpop.permute.xlu0 %9748
        %9750 = vrot.lane.b32.xlu0 %v8631, 16
        %v9751 = vpop.permute.xlu0 %9750
        %9752 = vrot.lane.b32.xlu0 %v8632, 16
        %v9753 = vpop.permute.xlu0 %9752
        %9754 = vrot.lane.b32.xlu0 %v8633, 16
        %v9755 = vpop.permute.xlu0 %9754
        %9756 = vrot.lane.b32.xlu0 %v8634, 16
        %v9757 = vpop.permute.xlu0 %9756
        %9758 = vrot.lane.b32.xlu0 %v8635, 16
        %v9759 = vpop.permute.xlu0 %9758
        %9760 = vrot.lane.b32.xlu0 %v8636, 16
        %v9761 = vpop.permute.xlu0 %9760
        %9762 = vrot.lane.b32.xlu0 %v8637, 16
        %v9763 = vpop.permute.xlu0 %9762
        %9764 = vrot.lane.b32.xlu0 %v8638, 16
        %v9765 = vpop.permute.xlu0 %9764
        %9766 = vrot.lane.b32.xlu0 %v8639, 16
        %v9767 = vpop.permute.xlu0 %9766
        %9768 = vrot.lane.b32.xlu0 %v8640, 16
        %v9769 = vpop.permute.xlu0 %9768
        %9770 = vrot.lane.b32.xlu0 %v8641, 16
        %v9771 = vpop.permute.xlu0 %9770
        %9772 = vrot.lane.b32.xlu0 %v8642, 16
        %v9773 = vpop.permute.xlu0 %9772
        %9774 = vrot.lane.b32.xlu0 %v8643, 16
        %v9775 = vpop.permute.xlu0 %9774
        %9776 = vrot.lane.b32.xlu0 %v8644, 16
        %v9777 = vpop.permute.xlu0 %9776
        %9778 = vrot.lane.b32.xlu0 %v8645, 16
        %v9779 = vpop.permute.xlu0 %9778
        %9780 = vrot.lane.b32.xlu0 %v8646, 16
        %v9781 = vpop.permute.xlu0 %9780
        %9782 = vrot.lane.b32.xlu0 %v8647, 16
        %v9783 = vpop.permute.xlu0 %9782
        %9784 = vrot.lane.b32.xlu0 %v8648, 16
        %v9785 = vpop.permute.xlu0 %9784
        %9786 = vrot.lane.b32.xlu0 %v8649, 16
        %v9787 = vpop.permute.xlu0 %9786
        %9788 = vrot.lane.b32.xlu0 %v8650, 16
        %v9789 = vpop.permute.xlu0 %9788
        %vm9822 = vcmask 179328
        %9823 = vst.msk [vmem:[%s379] sm:$0xff] %vm9822, %v9727
        %9824 = vst.msk [vmem:[%s379 + $0x8] sm:$0xff] %vm9822, %v9729
        %9825 = vst.msk [vmem:[%s379 + $0x10] sm:$0xff] %vm9822, %v9731
        %9826 = vst.msk [vmem:[%s379 + $0x18] sm:$0xff] %vm9822, %v9733
        %9827 = vst.msk [vmem:[%s379 + $0x20] sm:$0xff] %vm9822, %v9735
        %9828 = vst.msk [vmem:[%s379 + $0x28] sm:$0xff] %vm9822, %v9737
        %9829 = vst.msk [vmem:[%s379 + $0x30] sm:$0xff] %vm9822, %v9739
        %9830 = vst.msk [vmem:[%s379 + $0x38] sm:$0xff] %vm9822, %v9741
        %9831 = vst.msk [vmem:[%s379 + $0x40] sm:$0xff] %vm9822, %v9743
        %9832 = vst.msk [vmem:[%s379 + $0x48] sm:$0xff] %vm9822, %v9745
        %9833 = vst.msk [vmem:[%s379 + $0x50] sm:$0xff] %vm9822, %v9747
        %9834 = vst.msk [vmem:[%s379 + $0x58] sm:$0xff] %vm9822, %v9749
        %9835 = vst.msk [vmem:[%s379 + $0x60] sm:$0xff] %vm9822, %v9751
        %9836 = vst.msk [vmem:[%s379 + $0x68] sm:$0xff] %vm9822, %v9753
        %9837 = vst.msk [vmem:[%s379 + $0x70] sm:$0xff] %vm9822, %v9755
        %9838 = vst.msk [vmem:[%s379 + $0x78] sm:$0xff] %vm9822, %v9757
        %9839 = vst.msk [vmem:[%s379 + $0x80] sm:$0xff] %vm9822, %v9759
        %9840 = vst.msk [vmem:[%s379 + $0x88] sm:$0xff] %vm9822, %v9761
        %9841 = vst.msk [vmem:[%s379 + $0x90] sm:$0xff] %vm9822, %v9763
        %9842 = vst.msk [vmem:[%s379 + $0x98] sm:$0xff] %vm9822, %v9765
        %9843 = vst.msk [vmem:[%s379 + $0xa0] sm:$0xff] %vm9822, %v9767
        %9844 = vst.msk [vmem:[%s379 + $0xa8] sm:$0xff] %vm9822, %v9769
        %9845 = vst.msk [vmem:[%s379 + $0xb0] sm:$0xff] %vm9822, %v9771
        %9846 = vst.msk [vmem:[%s379 + $0xb8] sm:$0xff] %vm9822, %v9773
        %9847 = vst.msk [vmem:[%s379 + $0xc0] sm:$0xff] %vm9822, %v9775
        %9848 = vst.msk [vmem:[%s379 + $0xc8] sm:$0xff] %vm9822, %v9777
        %9849 = vst.msk [vmem:[%s379 + $0xd0] sm:$0xff] %vm9822, %v9779
        %9850 = vst.msk [vmem:[%s379 + $0xd8] sm:$0xff] %vm9822, %v9781
        %9851 = vst.msk [vmem:[%s379 + $0xe0] sm:$0xff] %vm9822, %v9783
        %9852 = vst.msk [vmem:[%s379 + $0xe8] sm:$0xff] %vm9822, %v9785
        %9853 = vst.msk [vmem:[%s379 + $0xf0] sm:$0xff] %vm9822, %v9787
        %9854 = vst.msk [vmem:[%s379 + $0xf8] sm:$0xff] %vm9822, %v9789
        %9887 = vrot.lane.b32.xlu0 %v9468, 22
        %v9888 = vpop.permute.xlu0 %9887
        %9889 = vrot.lane.b32.xlu0 %v9469, 22
        %v9890 = vpop.permute.xlu0 %9889
        %9891 = vrot.lane.b32.xlu0 %v9470, 22
        %v9892 = vpop.permute.xlu0 %9891
        %9893 = vrot.lane.b32.xlu0 %v9471, 22
        %v9894 = vpop.permute.xlu0 %9893
        %9895 = vrot.lane.b32.xlu0 %v9472, 22
        %v9896 = vpop.permute.xlu0 %9895
        %9897 = vrot.lane.b32.xlu0 %v9473, 22
        %v9898 = vpop.permute.xlu0 %9897
        %9899 = vrot.lane.b32.xlu0 %v9474, 22
        %v9900 = vpop.permute.xlu0 %9899
        %9901 = vrot.lane.b32.xlu0 %v9475, 22
        %v9902 = vpop.permute.xlu0 %9901
        %9903 = vrot.lane.b32.xlu0 %v9476, 22
        %v9904 = vpop.permute.xlu0 %9903
        %9905 = vrot.lane.b32.xlu0 %v9477, 22
        %v9906 = vpop.permute.xlu0 %9905
        %9907 = vrot.lane.b32.xlu0 %v9478, 22
        %v9908 = vpop.permute.xlu0 %9907
        %9909 = vrot.lane.b32.xlu0 %v9479, 22
        %v9910 = vpop.permute.xlu0 %9909
        %9911 = vrot.lane.b32.xlu0 %v9480, 22
        %v9912 = vpop.permute.xlu0 %9911
        %9913 = vrot.lane.b32.xlu0 %v9481, 22
        %v9914 = vpop.permute.xlu0 %9913
        %9915 = vrot.lane.b32.xlu0 %v9482, 22
        %v9916 = vpop.permute.xlu0 %9915
        %9917 = vrot.lane.b32.xlu0 %v9483, 22
        %v9918 = vpop.permute.xlu0 %9917
        %9919 = vrot.lane.b32.xlu0 %v9484, 22
        %v9920 = vpop.permute.xlu0 %9919
        %9921 = vrot.lane.b32.xlu0 %v9485, 22
        %v9922 = vpop.permute.xlu0 %9921
        %9923 = vrot.lane.b32.xlu0 %v9486, 22
        %v9924 = vpop.permute.xlu0 %9923
        %9925 = vrot.lane.b32.xlu0 %v9487, 22
        %v9926 = vpop.permute.xlu0 %9925
        %9927 = vrot.lane.b32.xlu0 %v9488, 22
        %v9928 = vpop.permute.xlu0 %9927
        %9929 = vrot.lane.b32.xlu0 %v9489, 22
        %v9930 = vpop.permute.xlu0 %9929
        %9931 = vrot.lane.b32.xlu0 %v9490, 22
        %v9932 = vpop.permute.xlu0 %9931
        %9933 = vrot.lane.b32.xlu0 %v9491, 22
        %v9934 = vpop.permute.xlu0 %9933
        %9935 = vrot.lane.b32.xlu0 %v9492, 22
        %v9936 = vpop.permute.xlu0 %9935
        %9937 = vrot.lane.b32.xlu0 %v9493, 22
        %v9938 = vpop.permute.xlu0 %9937
        %9939 = vrot.lane.b32.xlu0 %v9494, 22
        %v9940 = vpop.permute.xlu0 %9939
        %9941 = vrot.lane.b32.xlu0 %v9495, 22
        %v9942 = vpop.permute.xlu0 %9941
        %9943 = vrot.lane.b32.xlu0 %v9496, 22
        %v9944 = vpop.permute.xlu0 %9943
        %9945 = vrot.lane.b32.xlu0 %v9497, 22
        %v9946 = vpop.permute.xlu0 %9945
        %9947 = vrot.lane.b32.xlu0 %v9498, 22
        %v9948 = vpop.permute.xlu0 %9947
        %9949 = vrot.lane.b32.xlu0 %v9499, 22
        %v9950 = vpop.permute.xlu0 %9949
        %vm9983 = vcmask 212144
        %9984 = vst.msk [vmem:[%s379] sm:$0xff] %vm9983, %v9888
        %9985 = vst.msk [vmem:[%s379 + $0x8] sm:$0xff] %vm9983, %v9890
        %9986 = vst.msk [vmem:[%s379 + $0x10] sm:$0xff] %vm9983, %v9892
        %9987 = vst.msk [vmem:[%s379 + $0x18] sm:$0xff] %vm9983, %v9894
        %9988 = vst.msk [vmem:[%s379 + $0x20] sm:$0xff] %vm9983, %v9896
        %9989 = vst.msk [vmem:[%s379 + $0x28] sm:$0xff] %vm9983, %v9898
        %9990 = vst.msk [vmem:[%s379 + $0x30] sm:$0xff] %vm9983, %v9900
        %9991 = vst.msk [vmem:[%s379 + $0x38] sm:$0xff] %vm9983, %v9902
        %9992 = vst.msk [vmem:[%s379 + $0x40] sm:$0xff] %vm9983, %v9904
        %9993 = vst.msk [vmem:[%s379 + $0x48] sm:$0xff] %vm9983, %v9906
        %9994 = vst.msk [vmem:[%s379 + $0x50] sm:$0xff] %vm9983, %v9908
        %9995 = vst.msk [vmem:[%s379 + $0x58] sm:$0xff] %vm9983, %v9910
        %9996 = vst.msk [vmem:[%s379 + $0x60] sm:$0xff] %vm9983, %v9912
        %9997 = vst.msk [vmem:[%s379 + $0x68] sm:$0xff] %vm9983, %v9914
        %9998 = vst.msk [vmem:[%s379 + $0x70] sm:$0xff] %vm9983, %v9916
        %9999 = vst.msk [vmem:[%s379 + $0x78] sm:$0xff] %vm9983, %v9918
        %10000 = vst.msk [vmem:[%s379 + $0x80] sm:$0xff] %vm9983, %v9920
        %10001 = vst.msk [vmem:[%s379 + $0x88] sm:$0xff] %vm9983, %v9922
        %10002 = vst.msk [vmem:[%s379 + $0x90] sm:$0xff] %vm9983, %v9924
        %10003 = vst.msk [vmem:[%s379 + $0x98] sm:$0xff] %vm9983, %v9926
        %10004 = vst.msk [vmem:[%s379 + $0xa0] sm:$0xff] %vm9983, %v9928
        %10005 = vst.msk [vmem:[%s379 + $0xa8] sm:$0xff] %vm9983, %v9930
        %10006 = vst.msk [vmem:[%s379 + $0xb0] sm:$0xff] %vm9983, %v9932
        %10007 = vst.msk [vmem:[%s379 + $0xb8] sm:$0xff] %vm9983, %v9934
        %10008 = vst.msk [vmem:[%s379 + $0xc0] sm:$0xff] %vm9983, %v9936
        %10009 = vst.msk [vmem:[%s379 + $0xc8] sm:$0xff] %vm9983, %v9938
        %10010 = vst.msk [vmem:[%s379 + $0xd0] sm:$0xff] %vm9983, %v9940
        %10011 = vst.msk [vmem:[%s379 + $0xd8] sm:$0xff] %vm9983, %v9942
        %10012 = vst.msk [vmem:[%s379 + $0xe0] sm:$0xff] %vm9983, %v9944
        %10013 = vst.msk [vmem:[%s379 + $0xe8] sm:$0xff] %vm9983, %v9946
        %10014 = vst.msk [vmem:[%s379 + $0xf0] sm:$0xff] %vm9983, %v9948
        %10015 = vst.msk [vmem:[%s379 + $0xf8] sm:$0xff] %vm9983, %v9950
        %s10016 = sand.u32 %s269, 1
        %s10017 = scalar_lea.sflag [#allocation7], %s10016
        %s10018 = sand.u32 %s269, 1
        %s10019 = smul.addr %s10018, 256
        %s10020 = scalar_lea.vmem [#allocation6], %s10019
        // Predicated region
        $region65: #{inception_v2_block.1} parent=63 // pred_check
          %p10021 = pneg %p279
        $region66: #{inception_v2_block.1} parent=63 // pred_check_branch
          %10023 = sbr.rel (%p10021) target = $region68
        $region67: #{inception_v2_block.1} parent=63 // pred_region
          %10025 = vsyncadd %s10017, 0
          %s10026 = smul.addr %s25, 32
          %s10027 = smul.addr %s10026, 8
          %s10028 = scalar_lea.hbm %s11, %s10027
          %s10029 = sshll.u32 %s10020, 4
          %s10030 = int_to_ptr.vmem [resolvable:$true] %s10029
          %s10031 = sshll.u32 %s10028, 4
          %s10032 = int_to_ptr.hbm [resolvable:$true] %s10031
          %10037 = dma.vmem_to_hbm [thread:$0]  %s10030, 4096, %s10032, %s10017, 128, 128, 8
        $region68: #{inception_v2_block.1} parent=63 // pred_fallthru
          _
      $region64: #{inception_v2_block.1} parent=5 // pred_fallthru
        _
      %p10038 = scmp.le.s32.totalorder 2, %s20
      // Predicated region
      $region69: #{inception_v2_block.1} parent=5 // pred_check
        %p10039 = pneg %p10038
      $region70: #{inception_v2_block.1} parent=5 // pred_check_branch
        %10041 = sbr.rel (%p10039) target = $region72
      $region71: #{inception_v2_block.1} parent=5 // pred_region
        %s10042 = ssub.s32 %s20, 2
        // Predicated region
        $region73: #{inception_v2_block.1} parent=71 // pred_check
          %p10043 = pneg %p285
        $region74: #{inception_v2_block.1} parent=71 // pred_check_branch
          %10045 = sbr.rel (%p10043) target = $region76
        $region75: #{inception_v2_block.1} parent=71 // pred_region
          %s10046 = sand.u32 %s270, 1
          %s10047 = scalar_lea.sflag [#allocation7], %s10046
          %s10048 = sand.u32 %s270, 1
          %s10049 = smul.addr %s10048, 256
          %s10050 = scalar_lea.vmem [#allocation6], %s10049
          %10052 = dma.done %s10047, 4096
        $region76: #{inception_v2_block.1} parent=71 // pred_fallthru
          _
      $region72: #{inception_v2_block.1} parent=5 // pred_fallthru
        _
    $region6: #{inception_v2_block.1} parent=1 // loop_footer
      %s24 = sadd.s32 1, %s20
    $region7: #{inception_v2_block.1} parent=1 // loop_footer_branch
      %19 = sbr.rel target = $region3
    $region8: #{inception_v2_block.1} parent=1 // loop_exit
      _
    %10053 = vsyncpa [#allocation7], 1
    %s10054 = scalar_lea.sflag [#allocation7], 1
    %10055 = vsyncpa %s10054, 1

</llo_original>
